<compile_context>
chip_gen: v6e
topology: v6e:2x2x1
jax: 0.10.0
libtpu: 0.0.40
codegen_flags: <defaults>
</compile_context>

<pallas_src>
import functools

import jax
import jax.numpy as jnp
from jax.experimental import pallas as pl
from jax.experimental.pallas import tpu as pltpu

NUM_EXPERTS = 4
_SQRT_HALF = 0.7071067811865476

# conv0: 5x5, pad 2, dil 1   |   conv_spatial: 7x7, pad 9, dil 3
K0, P0, D0 = 5, 2, 1
K1, P1, D1 = 7, 9, 3


def _round_up(x, m):
    return ((x + m - 1) // m) * m


# Interior W offsets inside the padded scratch, rounded up to the sublane size
# (8) so the per-step interior stores are sublane-aligned (unmasked vst).
OFF0 = _round_up(P0, 8)      # 8
OFF1 = _round_up(P1, 8)      # 16


# ----------------------------------------------------------------------------
# In-kernel exact (erf-based) GELU.  Abramowitz & Stegun 7.1.26 rational
# approximation (max abs err ~1.5e-7).  exp and the divide ride the EUP
# (pl.reciprocal(approx=True) + one Newton step for f32 accuracy).
# ----------------------------------------------------------------------------
def _erf_approx(x):
    a1, a2, a3, a4, a5 = (0.254829592, -0.284496736, 1.421413741,
                          -1.453152027, 1.061405429)
    p = 0.3275911
    sgn = jnp.where(x >= 0.0, 1.0, -1.0)
    ax = jnp.abs(x)
    d = 1.0 + p * ax
    t = pl.reciprocal(d, approx=True)
    t = t * (2.0 - d * t)                      # Newton refinement -> ~f32 exact
    poly = ((((a5 * t + a4) * t + a3) * t + a2) * t + a1) * t
    return sgn * (1.0 - poly * jnp.exp(-ax * ax))


def _gelu(x):
    return 0.5 * x * (1.0 + _erf_approx(x * _SQRT_HALF))


# ----------------------------------------------------------------------------
# In-kernel helpers
# ----------------------------------------------------------------------------
def _gap_hw(x):
    """(H, W, C) -> (1, C) mean over H, W."""
    return jnp.mean(jnp.mean(x, axis=0), axis=0, keepdims=True)


def _mix_experts(gap, fcw_ref, fcb_ref, ew_ref, eb_ref, w_out_ref, b_out_ref,
                 num_experts):
    """CondConv routing: one fused reduce for all expert logits, one sigmoid,
    then mix the expert taps/biases and stage them into VMEM scratch."""
    ntaps, c = ew_ref.shape[1], ew_ref.shape[2]
    # (E, C) * (1, C) -> sum over C: one cross-lane reduce for ALL experts.
    logits = jnp.sum(fcw_ref[...] * gap, axis=1, keepdims=True)      # (E, 1)
    r = 1.0 / (1.0 + jnp.exp(-(logits + fcb_ref[...])))              # (E, 1)
    w = jnp.zeros((ntaps, c), jnp.float32)
    b = jnp.zeros((1, c), jnp.float32)
    for e in range(num_experts):
        r_e = r[e:e + 1, :]                                          # (1, 1)
        w = w + r_e * ew_ref[e]                                      # (ntaps, C)
        b = b + r_e * eb_ref[e:e + 1, :]                             # (1, C)
    w_out_ref[...] = w
    b_out_ref[...] = b


def _zero_halo(pad_ref, p, off_w, h, w):
    """Zero only the padding halo (interior is overwritten every step)."""
    hp, wp, c = pad_ref.shape
    dt = pad_ref.dtype
    pad_ref[0:p, :, :] = jnp.zeros((p, wp, c), dt)                    # top rows
    pad_ref[p + h:, :, :] = jnp.zeros((hp - p - h, wp, c), dt)        # bottom rows
    pad_ref[p:p + h, 0:off_w, :] = jnp.zeros((h, off_w, c), dt)       # left cols
    pad_ref[p:p + h, off_w + w:, :] = jnp.zeros((h, wp - off_w - w, c), dt)


def _dwconv(xp_ref, w_ref, b_ref, h, w, ksize, dil, pad, off_w):
    """Depthwise conv reading the padded scratch Ref directly.

    Ref-sliced column windows (plain offset loads) are reused across the row
    taps; the mixed taps are read one (1, C) row at a time from VMEM scratch.
    """
    c = xp_ref.shape[2]
    acc = jnp.zeros((h, w, c), jnp.float32)
    for j in range(ksize):
        cs = off_w - pad + j * dil                 # static column start
        col = xp_ref[:, cs:cs + w, :]              # (H + (k-1)*dil_eff, W, C)
        for i in range(ksize):
            tap = w_ref[i * ksize + j:i * ksize + j + 1, :]           # (1, C)
            acc = acc + col[i * dil:i * dil + h, :, :] * tap
    return acc + b_ref[...]


# ----------------------------------------------------------------------------
# Fused per-sample kernel
# ----------------------------------------------------------------------------
def _lka_dynamic_fused_kernel(x_ref, fc0w_ref, fc0b_ref, ew0_ref, eb0_ref,
                              fc1w_ref, fc1b_ref, ew1_ref, eb1_ref,
                              pww_ref, pwb_ref, out_ref,
                              xpad_ref, apad_ref,
                              w0_ref, b0_ref, w1_ref, b1_ref,
                              *, num_experts):
    H, W, C = out_ref.shape[1], out_ref.shape[2], out_ref.shape[3]
    x = x_ref[0]                                              # (H, W, C) == u

    # ---- CondConv #1 routing (on-chip; no extra HBM read of x) ----
    gap0 = _gap_hw(x)
    _mix_experts(gap0, fc0w_ref, fc0b_ref, ew0_ref, eb0_ref,
                 w0_ref, b0_ref, num_experts)

    # ---- 5x5 depthwise conv + GELU (halo-only zero, aligned interior) ----
    _zero_halo(xpad_ref, P0, OFF0, H, W)
    xpad_ref[P0:P0 + H, OFF0:OFF0 + W, :] = x
    attn = _dwconv(xpad_ref, w0_ref, b0_ref, H, W, K0, D0, P0, OFF0)
    attn = _gelu(attn)                                        # (H, W, C)

    # ---- CondConv #2 routing from GAP(attn); attn never leaves VMEM ----
    gap1 = _gap_hw(attn)
    _mix_experts(gap1, fc1w_ref, fc1b_ref, ew1_ref, eb1_ref,
                 w1_ref, b1_ref, num_experts)

    # ---- 7x7 dilated depthwise conv + GELU ----
    _zero_halo(apad_ref, P1, OFF1, H, W)
    apad_ref[P1:P1 + H, OFF1:OFF1 + W, :] = attn
    g = _dwconv(apad_ref, w1_ref, b1_ref, H, W, K1, D1, P1, OFF1)
    g = _gelu(g)                                              # (H, W, C)

    # ---- static 1x1 conv on the MXU + u * attn ----
    # W is a multiple of 8 in practice, so this reshape is a sublane-aligned
    # leading-dim merge (no relayout copy); C is a multiple of 128.
    g2d = g.reshape(H * W, C)
    res = (jnp.dot(g2d, pww_ref[...], preferred_element_type=jnp.float32)
           + pwb_ref[...]).reshape(H, W, C)
    out_ref[0] = (x * res).astype(out_ref.dtype)


# ----------------------------------------------------------------------------
# LKA_dynamic forward (NCHW in / NCHW out, like the PyTorch module)
# ----------------------------------------------------------------------------
def lka_dynamic_forward(x_nchw, params):
    x = jnp.transpose(x_nchw, (0, 2, 3, 1)).astype(jnp.float32)   # NHWC
    B, H, W, C = x.shape
    E = params["experts_w0"].shape[0]
    Cp = _round_up(C, 128)                        # lane-dense channel axis

    def padc(a):
        a = a.astype(jnp.float32)
        if a.shape[-1] == Cp:
            return a
        widths = [(0, 0)] * (a.ndim - 1) + [(0, Cp - a.shape[-1])]
        return jnp.pad(a, widths)

    xp = padc(x)
    fc0_w, fc1_w = padc(params["fc0_w"]), padc(params["fc1_w"])
    ew0, eb0 = padc(params["experts_w0"]), padc(params["experts_b0"])
    ew1, eb1 = padc(params["experts_w1"]), padc(params["experts_b1"])
    pw_b = padc(params["pw_b"])
    pw_w = params["pw_w"].astype(jnp.float32)
    if C != Cp:
        pw_w = jnp.pad(pw_w, ((0, Cp - C), (0, Cp - C)))
    fc0_b = params["fc0_b"].reshape(E, 1).astype(jnp.float32)
    fc1_b = params["fc1_b"].reshape(E, 1).astype(jnp.float32)

    # Padded-scratch geometry: sublane-aligned interior, W rounded to 8.
    H0P, W0P = H + 2 * P0, _round_up(OFF0 + W + P0, 8)
    H1P, W1P = H + 2 * P1, _round_up(OFF1 + W + P1, 8)

    # ---- per-generation VMEM budget (v5e/v6e: 128 MiB, v7x: 64 MiB) ----
    param_elems = (2 * E * Cp + 2 * E
                   + E * K0 * K0 * Cp + E * Cp
                   + E * K1 * K1 * Cp + E * Cp
                   + Cp * Cp + Cp)
    block_elems = 2 * H * W * Cp                      # one input + one output block
    scratch_elems = (H0P * W0P + H1P * W1P + (K0 * K0 + K1 * K1 + 2)) * Cp
    est_bytes = 4 * (2 * (param_elems + block_elems) + scratch_elems)
    try:
        phys = getattr(pltpu.get_tpu_info(), "vmem_capacity_bytes",
                       64 * 1024 * 1024)
    except Exception:
        phys = 64 * 1024 * 1024                       # conservative fallback
    vmem_limit = max(int(1.25 * est_bytes), 8 * 1024 * 1024)
    vmem_limit = min(vmem_limit, int(0.85 * phys))

    kernel = functools.partial(_lka_dynamic_fused_kernel, num_experts=E)
    out = pl.pallas_call(
        kernel,
        grid=(B,),
        in_specs=[
            pl.BlockSpec((1, H, W, Cp), lambda b: (b, 0, 0, 0)),   # x (== u)
            pl.BlockSpec((E, Cp), lambda b: (0, 0)),               # fc0_w
            pl.BlockSpec((E, 1), lambda b: (0, 0)),                # fc0_b
            pl.BlockSpec((E, K0 * K0, Cp), lambda b: (0, 0, 0)),   # experts_w0
            pl.BlockSpec((E, Cp), lambda b: (0, 0)),               # experts_b0
            pl.BlockSpec((E, Cp), lambda b: (0, 0)),               # fc1_w
            pl.BlockSpec((E, 1), lambda b: (0, 0)),                # fc1_b
            pl.BlockSpec((E, K1 * K1, Cp), lambda b: (0, 0, 0)),   # experts_w1
            pl.BlockSpec((E, Cp), lambda b: (0, 0)),               # experts_b1
            pl.BlockSpec((Cp, Cp), lambda b: (0, 0)),              # pw_w
            pl.BlockSpec((1, Cp), lambda b: (0, 0)),               # pw_b
        ],
        out_specs=pl.BlockSpec((1, H, W, Cp), lambda b: (b, 0, 0, 0)),
        out_shape=jax.ShapeDtypeStruct((B, H, W, Cp), jnp.float32),
        scratch_shapes=[
            pltpu.VMEM((H0P, W0P, Cp), jnp.float32),   # padded x
            pltpu.VMEM((H1P, W1P, Cp), jnp.float32),   # padded attn
            pltpu.VMEM((K0 * K0, Cp), jnp.float32),    # mixed 5x5 taps
            pltpu.VMEM((1, Cp), jnp.float32),          # mixed 5x5 bias
            pltpu.VMEM((K1 * K1, Cp), jnp.float32),    # mixed 7x7 taps
            pltpu.VMEM((1, Cp), jnp.float32),          # mixed 7x7 bias
        ],
        compiler_params=pltpu.CompilerParams(
            dimension_semantics=("parallel",),          # batch across TCs on v7x
            vmem_limit_bytes=vmem_limit,
        ),
    )(xp, fc0_w, fc0_b, ew0, eb0, fc1_w, fc1_b, ew1, eb1, pw_w, pw_b)

    out = out[:, :, :, :C]                              # strip channel padding
    return jnp.transpose(out, (0, 3, 1, 2))             # NCHW


def init_params(key, dim, num_experts=NUM_EXPERTS):
    ks = jax.random.split(key, 10)
    n = lambda k, shape, s=0.1: s * jax.random.normal(k, shape, jnp.float32)
    return {
        "experts_w0": n(ks[0], (num_experts, 25, dim)),   # 5x5 depthwise experts
        "experts_b0": n(ks[1], (num_experts, dim)),
        "fc0_w": n(ks[2], (num_experts, dim)),
        "fc0_b": jnp.zeros((num_experts,), jnp.float32),
        "experts_w1": n(ks[3], (num_experts, 49, dim)),   # 7x7 depthwise experts
        "experts_b1": n(ks[4], (num_experts, dim)),
        "fc1_w": n(ks[5], (num_experts, dim)),
        "fc1_b": jnp.zeros((num_experts,), jnp.float32),
        "pw_w": n(ks[6], (dim, dim)),                     # 1x1 conv [in, out]
        "pw_b": n(ks[7], (1, dim)),
    }


# ----------------------------------------------------------------------------
# Pure-JAX reference (mirrors the PyTorch NCHW semantics) for validation.
# ----------------------------------------------------------------------------
def _reference(x_nchw, params):
    B, C, H, W = x_nchw.shape

    def cond_dwconv(x, experts_w, experts_b, fc_w, fc_b, ksize, pad, dil):
        gap = jnp.mean(x, axis=(2, 3))                               # (B, C)
        r = jax.nn.sigmoid(gap @ fc_w.T + fc_b)                      # (B, E)
        w = jnp.einsum("be,ekc->bkc", r, experts_w)                  # (B, K*K, C)
        w = jnp.transpose(w.reshape(B, ksize, ksize, C), (0, 3, 1, 2))[:, :, None]
        b = r @ experts_b                                            # (B, C)

        def one(xb, wb, bb):
            y = jax.lax.conv_general_dilated(
                xb[None], wb, window_strides=(1, 1),
                padding=[(pad, pad), (pad, pad)],
                rhs_dilation=(dil, dil),
                dimension_numbers=("NCHW", "OIHW", "NCHW"),
                feature_group_count=C)
            return y[0] + bb[:, None, None]

        return jax.vmap(one)(x, w, b)

    attn = cond_dwconv(x_nchw, params["experts_w0"], params["experts_b0"],
                       params["fc0_w"], params["fc0_b"], 5, 2, 1)
    attn = jax.nn.gelu(attn, approximate=False)
    attn = cond_dwconv(attn, params["experts_w1"], params["experts_b1"],
                       params["fc1_w"], params["fc1_b"], 7, 9, 3)
    attn = jax.nn.gelu(attn, approximate=False)
    attn = (jnp.einsum("bchw,cd->bdhw", attn, params["pw_w"])
            + params["pw_b"][0][None, :, None, None])
    return x_nchw * attn


if __name__ == "__main__":
    key = jax.random.PRNGKey(0)
    kx, kp = jax.random.split(key)
    B, C, H, W = 2, 4, 16, 16
    x = jax.random.normal(kx, (B, C, H, W), jnp.float32)
    params = init_params(kp, C)

    out = lka_dynamic_forward(x, params)
    out = jax.block_until_ready(out)

    assert out.shape == (B, C, H, W)
    assert bool(jnp.all(jnp.isfinite(out)))

    ref = _reference(x, params)
    err = float(jnp.max(jnp.abs(out - ref)))
    assert err < 1e-3, f"max abs error vs reference: {err}"

    print("KERNEL_OK")
</pallas_src>

<mosaic_0001>
module attributes {stable_mosaic.version = 11 : i64} {
  func.func @_lka_dynamic_fused_kernel(%arg0: i32, %arg1: memref<1x16x16x128xf32, #tpu.memory_space<vmem>>, %arg2: memref<4x128xf32, #tpu.memory_space<vmem>>, %arg3: memref<4x1xf32, #tpu.memory_space<vmem>>, %arg4: memref<4x25x128xf32, #tpu.memory_space<vmem>>, %arg5: memref<4x128xf32, #tpu.memory_space<vmem>>, %arg6: memref<4x128xf32, #tpu.memory_space<vmem>>, %arg7: memref<4x1xf32, #tpu.memory_space<vmem>>, %arg8: memref<4x49x128xf32, #tpu.memory_space<vmem>>, %arg9: memref<4x128xf32, #tpu.memory_space<vmem>>, %arg10: memref<128x128xf32, #tpu.memory_space<vmem>>, %arg11: memref<1x128xf32, #tpu.memory_space<vmem>>, %arg12: memref<1x16x16x128xf32, #tpu.memory_space<vmem>>, %arg13: memref<20x32x128xf32, #tpu.memory_space<vmem>>, %arg14: memref<34x48x128xf32, #tpu.memory_space<vmem>>, %arg15: memref<25x128xf32, #tpu.memory_space<vmem>>, %arg16: memref<1x128xf32, #tpu.memory_space<vmem>>, %arg17: memref<49x128xf32, #tpu.memory_space<vmem>>, %arg18: memref<1x128xf32, #tpu.memory_space<vmem>>) attributes {dimension_semantics = [#tpu.dimension_semantics<parallel>], iteration_bounds = array<i64: 2>, scalar_prefetch = 0 : i64, scratch_operands = 6 : i64, tpu.core_type = #tpu.core_type<tc>, window_params = [{transform_indices = @transform_0, window_bounds = array<i64: 1, 16, 16, 128>}, {pipeline_mode = #tpu.pipeline_mode<synchronous>, transform_indices = @transform_1, window_bounds = array<i64: 4, 128>}, {pipeline_mode = #tpu.pipeline_mode<synchronous>, transform_indices = @transform_2, window_bounds = array<i64: 4, 1>}, {pipeline_mode = #tpu.pipeline_mode<synchronous>, transform_indices = @transform_3, window_bounds = array<i64: 4, 25, 128>}, {pipeline_mode = #tpu.pipeline_mode<synchronous>, transform_indices = @transform_4, window_bounds = array<i64: 4, 128>}, {pipeline_mode = #tpu.pipeline_mode<synchronous>, transform_indices = @transform_5, window_bounds = array<i64: 4, 128>}, {pipeline_mode = #tpu.pipeline_mode<synchronous>, transform_indices = @transform_6, window_bounds = array<i64: 4, 1>}, {pipeline_mode = #tpu.pipeline_mode<synchronous>, transform_indices = @transform_7, window_bounds = array<i64: 4, 49, 128>}, {pipeline_mode = #tpu.pipeline_mode<synchronous>, transform_indices = @transform_8, window_bounds = array<i64: 4, 128>}, {pipeline_mode = #tpu.pipeline_mode<synchronous>, transform_indices = @transform_9, window_bounds = array<i64: 128, 128>}, {pipeline_mode = #tpu.pipeline_mode<synchronous>, transform_indices = @transform_10, window_bounds = array<i64: 1, 128>}, {transform_indices = @transform_11, window_bounds = array<i64: 1, 16, 16, 128>}]} {
    %c0 = arith.constant 0 : index
    %c0_0 = arith.constant 0 : index
    %c0_1 = arith.constant 0 : index
    %c0_2 = arith.constant 0 : index
    %0 = vector.load %arg1[%c0, %c0_0, %c0_1, %c0_2] : memref<1x16x16x128xf32, #tpu.memory_space<vmem>>, vector<1x16x16x128xf32>
    %1 = vector.shape_cast %0 : vector<1x16x16x128xf32> to vector<16x16x128xf32>
    %cst = arith.constant dense<0.000000e+00> : vector<16x128xf32>
    %2 = vector.multi_reduction <add>, %1, %cst [0] : vector<16x16x128xf32> to vector<16x128xf32>
    %cst_3 = arith.constant 1.600000e+01 : f32
    %3 = vector.broadcast %cst_3 : f32 to vector<16x128xf32>
    %4 = arith.divf %2, %3 : vector<16x128xf32>
    %cst_4 = arith.constant dense<0.000000e+00> : vector<128xf32>
    %5 = vector.multi_reduction <add>, %4, %cst_4 [0] : vector<16x128xf32> to vector<128xf32>
    %6 = vector.shape_cast %5 : vector<128xf32> to vector<1x128xf32>
    %cst_5 = arith.constant 1.600000e+01 : f32
    %7 = vector.broadcast %cst_5 : f32 to vector<1x128xf32>
    %8 = arith.divf %6, %7 : vector<1x128xf32>
    %c0_6 = arith.constant 0 : index
    %c0_7 = arith.constant 0 : index
    %9 = vector.load %arg2[%c0_6, %c0_7] : memref<4x128xf32, #tpu.memory_space<vmem>>, vector<4x128xf32>
    %10 = vector.broadcast %8 : vector<1x128xf32> to vector<4x128xf32>
    %11 = arith.mulf %9, %10 : vector<4x128xf32>
    %cst_8 = arith.constant dense<0.000000e+00> : vector<4xf32>
    %12 = vector.multi_reduction <add>, %11, %cst_8 [1] : vector<4x128xf32> to vector<4xf32>
    %13 = vector.shape_cast %12 : vector<4xf32> to vector<4x1xf32>
    %c0_9 = arith.constant 0 : index
    %c0_10 = arith.constant 0 : index
    %14 = vector.load %arg3[%c0_9, %c0_10] : memref<4x1xf32, #tpu.memory_space<vmem>>, vector<4x1xf32>
    %15 = arith.addf %13, %14 : vector<4x1xf32>
    %cst_11 = arith.constant 0.000000e+00 : f32
    %16 = vector.broadcast %cst_11 : f32 to vector<4x1xf32>
    %17 = arith.subf %16, %15 : vector<4x1xf32>
    %18 = math.exp %17 : vector<4x1xf32>
    %cst_12 = arith.constant 1.000000e+00 : f32
    %19 = vector.broadcast %cst_12 : f32 to vector<4x1xf32>
    %20 = arith.addf %19, %18 : vector<4x1xf32>
    %cst_13 = arith.constant 1.000000e+00 : f32
    %21 = vector.broadcast %cst_13 : f32 to vector<4x1xf32>
    %22 = arith.divf %21, %20 : vector<4x1xf32>
    %cst_14 = arith.constant 0.000000e+00 : f32
    %23 = vector.broadcast %cst_14 : f32 to vector<25x128xf32>
    %cst_15 = arith.constant 0.000000e+00 : f32
    %24 = vector.broadcast %cst_15 : f32 to vector<1x128xf32>
    %25 = vector.extract_strided_slice %22 {offsets = [0, 0], sizes = [1, 1], strides = [1, 1]} : vector<4x1xf32> to vector<1x1xf32>
    %c0_16 = arith.constant 0 : index
    %c0_17 = arith.constant 0 : index
    %c0_18 = arith.constant 0 : index
    %26 = vector.load %arg4[%c0_16, %c0_17, %c0_18] : memref<4x25x128xf32, #tpu.memory_space<vmem>>, vector<1x25x128xf32>
    %27 = vector.shape_cast %26 : vector<1x25x128xf32> to vector<25x128xf32>
    %28 = vector.broadcast %25 : vector<1x1xf32> to vector<25x128xf32>
    %29 = arith.mulf %28, %27 : vector<25x128xf32>
    %30 = arith.addf %23, %29 : vector<25x128xf32>
    %c0_19 = arith.constant 0 : index
    %c0_20 = arith.constant 0 : index
    %31 = vector.load %arg5[%c0_19, %c0_20] : memref<4x128xf32, #tpu.memory_space<vmem>>, vector<1x128xf32>
    %32 = vector.broadcast %25 : vector<1x1xf32> to vector<1x128xf32>
    %33 = arith.mulf %32, %31 : vector<1x128xf32>
    %34 = arith.addf %24, %33 : vector<1x128xf32>
    %35 = vector.extract_strided_slice %22 {offsets = [1, 0], sizes = [1, 1], strides = [1, 1]} : vector<4x1xf32> to vector<1x1xf32>
    %c1 = arith.constant 1 : index
    %c0_21 = arith.constant 0 : index
    %c0_22 = arith.constant 0 : index
    %36 = vector.load %arg4[%c1, %c0_21, %c0_22] : memref<4x25x128xf32, #tpu.memory_space<vmem>>, vector<1x25x128xf32>
    %37 = vector.shape_cast %36 : vector<1x25x128xf32> to vector<25x128xf32>
    %38 = vector.broadcast %35 : vector<1x1xf32> to vector<25x128xf32>
    %39 = arith.mulf %38, %37 : vector<25x128xf32>
    %40 = arith.addf %30, %39 : vector<25x128xf32>
    %c1_23 = arith.constant 1 : index
    %c0_24 = arith.constant 0 : index
    %41 = vector.load %arg5[%c1_23, %c0_24] : memref<4x128xf32, #tpu.memory_space<vmem>>, vector<1x128xf32>
    %42 = vector.broadcast %35 : vector<1x1xf32> to vector<1x128xf32>
    %43 = arith.mulf %42, %41 : vector<1x128xf32>
    %44 = arith.addf %34, %43 : vector<1x128xf32>
    %45 = vector.extract_strided_slice %22 {offsets = [2, 0], sizes = [1, 1], strides = [1, 1]} : vector<4x1xf32> to vector<1x1xf32>
    %c2 = arith.constant 2 : index
    %c0_25 = arith.constant 0 : index
    %c0_26 = arith.constant 0 : index
    %46 = vector.load %arg4[%c2, %c0_25, %c0_26] : memref<4x25x128xf32, #tpu.memory_space<vmem>>, vector<1x25x128xf32>
    %47 = vector.shape_cast %46 : vector<1x25x128xf32> to vector<25x128xf32>
    %48 = vector.broadcast %45 : vector<1x1xf32> to vector<25x128xf32>
    %49 = arith.mulf %48, %47 : vector<25x128xf32>
    %50 = arith.addf %40, %49 : vector<25x128xf32>
    %c2_27 = arith.constant 2 : index
    %c0_28 = arith.constant 0 : index
    %51 = vector.load %arg5[%c2_27, %c0_28] : memref<4x128xf32, #tpu.memory_space<vmem>>, vector<1x128xf32>
    %52 = vector.broadcast %45 : vector<1x1xf32> to vector<1x128xf32>
    %53 = arith.mulf %52, %51 : vector<1x128xf32>
    %54 = arith.addf %44, %53 : vector<1x128xf32>
    %55 = vector.extract_strided_slice %22 {offsets = [3, 0], sizes = [1, 1], strides = [1, 1]} : vector<4x1xf32> to vector<1x1xf32>
    %c3 = arith.constant 3 : index
    %c0_29 = arith.constant 0 : index
    %c0_30 = arith.constant 0 : index
    %56 = vector.load %arg4[%c3, %c0_29, %c0_30] : memref<4x25x128xf32, #tpu.memory_space<vmem>>, vector<1x25x128xf32>
    %57 = vector.shape_cast %56 : vector<1x25x128xf32> to vector<25x128xf32>
    %58 = vector.broadcast %55 : vector<1x1xf32> to vector<25x128xf32>
    %59 = arith.mulf %58, %57 : vector<25x128xf32>
    %60 = arith.addf %50, %59 : vector<25x128xf32>
    %c3_31 = arith.constant 3 : index
    %c0_32 = arith.constant 0 : index
    %61 = vector.load %arg5[%c3_31, %c0_32] : memref<4x128xf32, #tpu.memory_space<vmem>>, vector<1x128xf32>
    %62 = vector.broadcast %55 : vector<1x1xf32> to vector<1x128xf32>
    %63 = arith.mulf %62, %61 : vector<1x128xf32>
    %64 = arith.addf %54, %63 : vector<1x128xf32>
    %c0_33 = arith.constant 0 : index
    %c0_34 = arith.constant 0 : index
    %65 = vector.load %arg15[%c0_33, %c0_34] : memref<25x128xf32, #tpu.memory_space<vmem>>, vector<25x128xf32>
    tpu.vector_store %arg15[%c0_33, %c0_34], %60 {strides = array<i32>} : memref<25x128xf32, #tpu.memory_space<vmem>>, vector<25x128xf32>,
    %c0_35 = arith.constant 0 : index
    %c0_36 = arith.constant 0 : index
    %66 = vector.load %arg16[%c0_35, %c0_36] : memref<1x128xf32, #tpu.memory_space<vmem>>, vector<1x128xf32>
    tpu.vector_store %arg16[%c0_35, %c0_36], %64 {strides = array<i32>} : memref<1x128xf32, #tpu.memory_space<vmem>>, vector<1x128xf32>,
    %cst_37 = arith.constant 0.000000e+00 : f32
    %67 = vector.broadcast %cst_37 : f32 to vector<2x32x128xf32>
    %c0_38 = arith.constant 0 : index
    %c0_39 = arith.constant 0 : index
    %c0_40 = arith.constant 0 : index
    %68 = vector.load %arg13[%c0_38, %c0_39, %c0_40] : memref<20x32x128xf32, #tpu.memory_space<vmem>>, vector<2x32x128xf32>
    tpu.vector_store %arg13[%c0_38, %c0_39, %c0_40], %67 {strides = array<i32>} : memref<20x32x128xf32, #tpu.memory_space<vmem>>, vector<2x32x128xf32>,
    %cst_41 = arith.constant 0.000000e+00 : f32
    %69 = vector.broadcast %cst_41 : f32 to vector<2x32x128xf32>
    %c18 = arith.constant 18 : index
    %c0_42 = arith.constant 0 : index
    %c0_43 = arith.constant 0 : index
    %70 = vector.load %arg13[%c18, %c0_42, %c0_43] : memref<20x32x128xf32, #tpu.memory_space<vmem>>, vector<2x32x128xf32>
    tpu.vector_store %arg13[%c18, %c0_42, %c0_43], %69 {strides = array<i32>} : memref<20x32x128xf32, #tpu.memory_space<vmem>>, vector<2x32x128xf32>,
    %cst_44 = arith.constant 0.000000e+00 : f32
    %71 = vector.broadcast %cst_44 : f32 to vector<16x8x128xf32>
    %c2_45 = arith.constant 2 : index
    %c0_46 = arith.constant 0 : index
    %c0_47 = arith.constant 0 : index
    %72 = vector.load %arg13[%c2_45, %c0_46, %c0_47] : memref<20x32x128xf32, #tpu.memory_space<vmem>>, vector<16x8x128xf32>
    tpu.vector_store %arg13[%c2_45, %c0_46, %c0_47], %71 {strides = array<i32>} : memref<20x32x128xf32, #tpu.memory_space<vmem>>, vector<16x8x128xf32>,
    %cst_48 = arith.constant 0.000000e+00 : f32
    %73 = vector.broadcast %cst_48 : f32 to vector<16x8x128xf32>
    %c2_49 = arith.constant 2 : index
    %c24 = arith.constant 24 : index
    %c0_50 = arith.constant 0 : index
    %74 = vector.load %arg13[%c2_49, %c24, %c0_50] : memref<20x32x128xf32, #tpu.memory_space<vmem>>, vector<16x8x128xf32>
    tpu.vector_store %arg13[%c2_49, %c24, %c0_50], %73 {strides = array<i32>} : memref<20x32x128xf32, #tpu.memory_space<vmem>>, vector<16x8x128xf32>,
    %c2_51 = arith.constant 2 : index
    %c8 = arith.constant 8 : index
    %c0_52 = arith.constant 0 : index
    %75 = vector.load %arg13[%c2_51, %c8, %c0_52] : memref<20x32x128xf32, #tpu.memory_space<vmem>>, vector<16x16x128xf32>
    tpu.vector_store %arg13[%c2_51, %c8, %c0_52], %1 {strides = array<i32>} : memref<20x32x128xf32, #tpu.memory_space<vmem>>, vector<16x16x128xf32>,
    %cst_53 = arith.constant 0.000000e+00 : f32
    %76 = vector.broadcast %cst_53 : f32 to vector<16x16x128xf32>
    %c0_54 = arith.constant 0 : index
    %c6 = arith.constant 6 : index
    %c0_55 = arith.constant 0 : index
    %77 = vector.load %arg13[%c0_54, %c6, %c0_55] : memref<20x32x128xf32, #tpu.memory_space<vmem>>, vector<20x16x128xf32>
    %c0_56 = arith.constant 0 : index
    %c0_57 = arith.constant 0 : index
    %78 = vector.load %arg15[%c0_56, %c0_57] : memref<25x128xf32, #tpu.memory_space<vmem>>, vector<1x128xf32>
    %79 = vector.extract_strided_slice %77 {offsets = [0, 0, 0], sizes = [16, 16, 128], strides = [1, 1, 1]} : vector<20x16x128xf32> to vector<16x16x128xf32>
    %80 = vector.shape_cast %78 : vector<1x128xf32> to vector<1x1x128xf32>
    %81 = vector.broadcast %80 : vector<1x1x128xf32> to vector<16x16x128xf32>
    %82 = arith.mulf %79, %81 : vector<16x16x128xf32>
    %83 = arith.addf %76, %82 : vector<16x16x128xf32>
    %c5 = arith.constant 5 : index
    %c0_58 = arith.constant 0 : index
    %84 = vector.load %arg15[%c5, %c0_58] : memref<25x128xf32, #tpu.memory_space<vmem>>, vector<1x128xf32>
    %85 = vector.extract_strided_slice %77 {offsets = [1, 0, 0], sizes = [16, 16, 128], strides = [1, 1, 1]} : vector<20x16x128xf32> to vector<16x16x128xf32>
    %86 = vector.shape_cast %84 : vector<1x128xf32> to vector<1x1x128xf32>
    %87 = vector.broadcast %86 : vector<1x1x128xf32> to vector<16x16x128xf32>
    %88 = arith.mulf %85, %87 : vector<16x16x128xf32>
    %89 = arith.addf %83, %88 : vector<16x16x128xf32>
    %c10 = arith.constant 10 : index
    %c0_59 = arith.constant 0 : index
    %90 = vector.load %arg15[%c10, %c0_59] : memref<25x128xf32, #tpu.memory_space<vmem>>, vector<1x128xf32>
    %91 = vector.extract_strided_slice %77 {offsets = [2, 0, 0], sizes = [16, 16, 128], strides = [1, 1, 1]} : vector<20x16x128xf32> to vector<16x16x128xf32>
    %92 = vector.shape_cast %90 : vector<1x128xf32> to vector<1x1x128xf32>
    %93 = vector.broadcast %92 : vector<1x1x128xf32> to vector<16x16x128xf32>
    %94 = arith.mulf %91, %93 : vector<16x16x128xf32>
    %95 = arith.addf %89, %94 : vector<16x16x128xf32>
    %c15 = arith.constant 15 : index
    %c0_60 = arith.constant 0 : index
    %96 = vector.load %arg15[%c15, %c0_60] : memref<25x128xf32, #tpu.memory_space<vmem>>, vector<1x128xf32>
    %97 = vector.extract_strided_slice %77 {offsets = [3, 0, 0], sizes = [16, 16, 128], strides = [1, 1, 1]} : vector<20x16x128xf32> to vector<16x16x128xf32>
    %98 = vector.shape_cast %96 : vector<1x128xf32> to vector<1x1x128xf32>
    %99 = vector.broadcast %98 : vector<1x1x128xf32> to vector<16x16x128xf32>
    %100 = arith.mulf %97, %99 : vector<16x16x128xf32>
    %101 = arith.addf %95, %100 : vector<16x16x128xf32>
    %c20 = arith.constant 20 : index
    %c0_61 = arith.constant 0 : index
    %102 = vector.load %arg15[%c20, %c0_61] : memref<25x128xf32, #tpu.memory_space<vmem>>, vector<1x128xf32>
    %103 = vector.extract_strided_slice %77 {offsets = [4, 0, 0], sizes = [16, 16, 128], strides = [1, 1, 1]} : vector<20x16x128xf32> to vector<16x16x128xf32>
    %104 = vector.shape_cast %102 : vector<1x128xf32> to vector<1x1x128xf32>
    %105 = vector.broadcast %104 : vector<1x1x128xf32> to vector<16x16x128xf32>
    %106 = arith.mulf %103, %105 : vector<16x16x128xf32>
    %107 = arith.addf %101, %106 : vector<16x16x128xf32>
    %c0_62 = arith.constant 0 : index
    %c7 = arith.constant 7 : index
    %c0_63 = arith.constant 0 : index
    %108 = vector.load %arg13[%c0_62, %c7, %c0_63] : memref<20x32x128xf32, #tpu.memory_space<vmem>>, vector<20x16x128xf32>
    %c1_64 = arith.constant 1 : index
    %c0_65 = arith.constant 0 : index
    %109 = vector.load %arg15[%c1_64, %c0_65] : memref<25x128xf32, #tpu.memory_space<vmem>>, vector<1x128xf32>
    %110 = vector.extract_strided_slice %108 {offsets = [0, 0, 0], sizes = [16, 16, 128], strides = [1, 1, 1]} : vector<20x16x128xf32> to vector<16x16x128xf32>
    %111 = vector.shape_cast %109 : vector<1x128xf32> to vector<1x1x128xf32>
    %112 = vector.broadcast %111 : vector<1x1x128xf32> to vector<16x16x128xf32>
    %113 = arith.mulf %110, %112 : vector<16x16x128xf32>
    %114 = arith.addf %107, %113 : vector<16x16x128xf32>
    %c6_66 = arith.constant 6 : index
    %c0_67 = arith.constant 0 : index
    %115 = vector.load %arg15[%c6_66, %c0_67] : memref<25x128xf32, #tpu.memory_space<vmem>>, vector<1x128xf32>
    %116 = vector.extract_strided_slice %108 {offsets = [1, 0, 0], sizes = [16, 16, 128], strides = [1, 1, 1]} : vector<20x16x128xf32> to vector<16x16x128xf32>
    %117 = vector.shape_cast %115 : vector<1x128xf32> to vector<1x1x128xf32>
    %118 = vector.broadcast %117 : vector<1x1x128xf32> to vector<16x16x128xf32>
    %119 = arith.mulf %116, %118 : vector<16x16x128xf32>
    %120 = arith.addf %114, %119 : vector<16x16x128xf32>
    %c11 = arith.constant 11 : index
    %c0_68 = arith.constant 0 : index
    %121 = vector.load %arg15[%c11, %c0_68] : memref<25x128xf32, #tpu.memory_space<vmem>>, vector<1x128xf32>
    %122 = vector.extract_strided_slice %108 {offsets = [2, 0, 0], sizes = [16, 16, 128], strides = [1, 1, 1]} : vector<20x16x128xf32> to vector<16x16x128xf32>
    %123 = vector.shape_cast %121 : vector<1x128xf32> to vector<1x1x128xf32>
    %124 = vector.broadcast %123 : vector<1x1x128xf32> to vector<16x16x128xf32>
    %125 = arith.mulf %122, %124 : vector<16x16x128xf32>
    %126 = arith.addf %120, %125 : vector<16x16x128xf32>
    %c16 = arith.constant 16 : index
    %c0_69 = arith.constant 0 : index
    %127 = vector.load %arg15[%c16, %c0_69] : memref<25x128xf32, #tpu.memory_space<vmem>>, vector<1x128xf32>
    %128 = vector.extract_strided_slice %108 {offsets = [3, 0, 0], sizes = [16, 16, 128], strides = [1, 1, 1]} : vector<20x16x128xf32> to vector<16x16x128xf32>
    %129 = vector.shape_cast %127 : vector<1x128xf32> to vector<1x1x128xf32>
    %130 = vector.broadcast %129 : vector<1x1x128xf32> to vector<16x16x128xf32>
    %131 = arith.mulf %128, %130 : vector<16x16x128xf32>
    %132 = arith.addf %126, %131 : vector<16x16x128xf32>
    %c21 = arith.constant 21 : index
    %c0_70 = arith.constant 0 : index
    %133 = vector.load %arg15[%c21, %c0_70] : memref<25x128xf32, #tpu.memory_space<vmem>>, vector<1x128xf32>
    %134 = vector.extract_strided_slice %108 {offsets = [4, 0, 0], sizes = [16, 16, 128], strides = [1, 1, 1]} : vector<20x16x128xf32> to vector<16x16x128xf32>
    %135 = vector.shape_cast %133 : vector<1x128xf32> to vector<1x1x128xf32>
    %136 = vector.broadcast %135 : vector<1x1x128xf32> to vector<16x16x128xf32>
    %137 = arith.mulf %134, %136 : vector<16x16x128xf32>
    %138 = arith.addf %132, %137 : vector<16x16x128xf32>
    %c0_71 = arith.constant 0 : index
    %c8_72 = arith.constant 8 : index
    %c0_73 = arith.constant 0 : index
    %139 = vector.load %arg13[%c0_71, %c8_72, %c0_73] : memref<20x32x128xf32, #tpu.memory_space<vmem>>, vector<20x16x128xf32>
    %c2_74 = arith.constant 2 : index
    %c0_75 = arith.constant 0 : index
    %140 = vector.load %arg15[%c2_74, %c0_75] : memref<25x128xf32, #tpu.memory_space<vmem>>, vector<1x128xf32>
    %141 = vector.extract_strided_slice %139 {offsets = [0, 0, 0], sizes = [16, 16, 128], strides = [1, 1, 1]} : vector<20x16x128xf32> to vector<16x16x128xf32>
    %142 = vector.shape_cast %140 : vector<1x128xf32> to vector<1x1x128xf32>
    %143 = vector.broadcast %142 : vector<1x1x128xf32> to vector<16x16x128xf32>
    %144 = arith.mulf %141, %143 : vector<16x16x128xf32>
    %145 = arith.addf %138, %144 : vector<16x16x128xf32>
    %c7_76 = arith.constant 7 : index
    %c0_77 = arith.constant 0 : index
    %146 = vector.load %arg15[%c7_76, %c0_77] : memref<25x128xf32, #tpu.memory_space<vmem>>, vector<1x128xf32>
    %147 = vector.extract_strided_slice %139 {offsets = [1, 0, 0], sizes = [16, 16, 128], strides = [1, 1, 1]} : vector<20x16x128xf32> to vector<16x16x128xf32>
    %148 = vector.shape_cast %146 : vector<1x128xf32> to vector<1x1x128xf32>
    %149 = vector.broadcast %148 : vector<1x1x128xf32> to vector<16x16x128xf32>
    %150 = arith.mulf %147, %149 : vector<16x16x128xf32>
    %151 = arith.addf %145, %150 : vector<16x16x128xf32>
    %c12 = arith.constant 12 : index
    %c0_78 = arith.constant 0 : index
    %152 = vector.load %arg15[%c12, %c0_78] : memref<25x128xf32, #tpu.memory_space<vmem>>, vector<1x128xf32>
    %153 = vector.extract_strided_slice %139 {offsets = [2, 0, 0], sizes = [16, 16, 128], strides = [1, 1, 1]} : vector<20x16x128xf32> to vector<16x16x128xf32>
    %154 = vector.shape_cast %152 : vector<1x128xf32> to vector<1x1x128xf32>
    %155 = vector.broadcast %154 : vector<1x1x128xf32> to vector<16x16x128xf32>
    %156 = arith.mulf %153, %155 : vector<16x16x128xf32>
    %157 = arith.addf %151, %156 : vector<16x16x128xf32>
    %c17 = arith.constant 17 : index
    %c0_79 = arith.constant 0 : index
    %158 = vector.load %arg15[%c17, %c0_79] : memref<25x128xf32, #tpu.memory_space<vmem>>, vector<1x128xf32>
    %159 = vector.extract_strided_slice %139 {offsets = [3, 0, 0], sizes = [16, 16, 128], strides = [1, 1, 1]} : vector<20x16x128xf32> to vector<16x16x128xf32>
    %160 = vector.shape_cast %158 : vector<1x128xf32> to vector<1x1x128xf32>
    %161 = vector.broadcast %160 : vector<1x1x128xf32> to vector<16x16x128xf32>
    %162 = arith.mulf %159, %161 : vector<16x16x128xf32>
    %163 = arith.addf %157, %162 : vector<16x16x128xf32>
    %c22 = arith.constant 22 : index
    %c0_80 = arith.constant 0 : index
    %164 = vector.load %arg15[%c22, %c0_80] : memref<25x128xf32, #tpu.memory_space<vmem>>, vector<1x128xf32>
    %165 = vector.extract_strided_slice %139 {offsets = [4, 0, 0], sizes = [16, 16, 128], strides = [1, 1, 1]} : vector<20x16x128xf32> to vector<16x16x128xf32>
    %166 = vector.shape_cast %164 : vector<1x128xf32> to vector<1x1x128xf32>
    %167 = vector.broadcast %166 : vector<1x1x128xf32> to vector<16x16x128xf32>
    %168 = arith.mulf %165, %167 : vector<16x16x128xf32>
    %169 = arith.addf %163, %168 : vector<16x16x128xf32>
    %c0_81 = arith.constant 0 : index
    %c9 = arith.constant 9 : index
    %c0_82 = arith.constant 0 : index
    %170 = vector.load %arg13[%c0_81, %c9, %c0_82] : memref<20x32x128xf32, #tpu.memory_space<vmem>>, vector<20x16x128xf32>
    %c3_83 = arith.constant 3 : index
    %c0_84 = arith.constant 0 : index
    %171 = vector.load %arg15[%c3_83, %c0_84] : memref<25x128xf32, #tpu.memory_space<vmem>>, vector<1x128xf32>
    %172 = vector.extract_strided_slice %170 {offsets = [0, 0, 0], sizes = [16, 16, 128], strides = [1, 1, 1]} : vector<20x16x128xf32> to vector<16x16x128xf32>
    %173 = vector.shape_cast %171 : vector<1x128xf32> to vector<1x1x128xf32>
    %174 = vector.broadcast %173 : vector<1x1x128xf32> to vector<16x16x128xf32>
    %175 = arith.mulf %172, %174 : vector<16x16x128xf32>
    %176 = arith.addf %169, %175 : vector<16x16x128xf32>
    %c8_85 = arith.constant 8 : index
    %c0_86 = arith.constant 0 : index
    %177 = vector.load %arg15[%c8_85, %c0_86] : memref<25x128xf32, #tpu.memory_space<vmem>>, vector<1x128xf32>
    %178 = vector.extract_strided_slice %170 {offsets = [1, 0, 0], sizes = [16, 16, 128], strides = [1, 1, 1]} : vector<20x16x128xf32> to vector<16x16x128xf32>
    %179 = vector.shape_cast %177 : vector<1x128xf32> to vector<1x1x128xf32>
    %180 = vector.broadcast %179 : vector<1x1x128xf32> to vector<16x16x128xf32>
    %181 = arith.mulf %178, %180 : vector<16x16x128xf32>
    %182 = arith.addf %176, %181 : vector<16x16x128xf32>
    %c13 = arith.constant 13 : index
    %c0_87 = arith.constant 0 : index
    %183 = vector.load %arg15[%c13, %c0_87] : memref<25x128xf32, #tpu.memory_space<vmem>>, vector<1x128xf32>
    %184 = vector.extract_strided_slice %170 {offsets = [2, 0, 0], sizes = [16, 16, 128], strides = [1, 1, 1]} : vector<20x16x128xf32> to vector<16x16x128xf32>
    %185 = vector.shape_cast %183 : vector<1x128xf32> to vector<1x1x128xf32>
    %186 = vector.broadcast %185 : vector<1x1x128xf32> to vector<16x16x128xf32>
    %187 = arith.mulf %184, %186 : vector<16x16x128xf32>
    %188 = arith.addf %182, %187 : vector<16x16x128xf32>
    %c18_88 = arith.constant 18 : index
    %c0_89 = arith.constant 0 : index
    %189 = vector.load %arg15[%c18_88, %c0_89] : memref<25x128xf32, #tpu.memory_space<vmem>>, vector<1x128xf32>
    %190 = vector.extract_strided_slice %170 {offsets = [3, 0, 0], sizes = [16, 16, 128], strides = [1, 1, 1]} : vector<20x16x128xf32> to vector<16x16x128xf32>
    %191 = vector.shape_cast %189 : vector<1x128xf32> to vector<1x1x128xf32>
    %192 = vector.broadcast %191 : vector<1x1x128xf32> to vector<16x16x128xf32>
    %193 = arith.mulf %190, %192 : vector<16x16x128xf32>
    %194 = arith.addf %188, %193 : vector<16x16x128xf32>
    %c23 = arith.constant 23 : index
    %c0_90 = arith.constant 0 : index
    %195 = vector.load %arg15[%c23, %c0_90] : memref<25x128xf32, #tpu.memory_space<vmem>>, vector<1x128xf32>
    %196 = vector.extract_strided_slice %170 {offsets = [4, 0, 0], sizes = [16, 16, 128], strides = [1, 1, 1]} : vector<20x16x128xf32> to vector<16x16x128xf32>
    %197 = vector.shape_cast %195 : vector<1x128xf32> to vector<1x1x128xf32>
    %198 = vector.broadcast %197 : vector<1x1x128xf32> to vector<16x16x128xf32>
    %199 = arith.mulf %196, %198 : vector<16x16x128xf32>
    %200 = arith.addf %194, %199 : vector<16x16x128xf32>
    %c0_91 = arith.constant 0 : index
    %c10_92 = arith.constant 10 : index
    %c0_93 = arith.constant 0 : index
    %201 = vector.load %arg13[%c0_91, %c10_92, %c0_93] : memref<20x32x128xf32, #tpu.memory_space<vmem>>, vector<20x16x128xf32>
    %c4 = arith.constant 4 : index
    %c0_94 = arith.constant 0 : index
    %202 = vector.load %arg15[%c4, %c0_94] : memref<25x128xf32, #tpu.memory_space<vmem>>, vector<1x128xf32>
    %203 = vector.extract_strided_slice %201 {offsets = [0, 0, 0], sizes = [16, 16, 128], strides = [1, 1, 1]} : vector<20x16x128xf32> to vector<16x16x128xf32>
    %204 = vector.shape_cast %202 : vector<1x128xf32> to vector<1x1x128xf32>
    %205 = vector.broadcast %204 : vector<1x1x128xf32> to vector<16x16x128xf32>
    %206 = arith.mulf %203, %205 : vector<16x16x128xf32>
    %207 = arith.addf %200, %206 : vector<16x16x128xf32>
    %c9_95 = arith.constant 9 : index
    %c0_96 = arith.constant 0 : index
    %208 = vector.load %arg15[%c9_95, %c0_96] : memref<25x128xf32, #tpu.memory_space<vmem>>, vector<1x128xf32>
    %209 = vector.extract_strided_slice %201 {offsets = [1, 0, 0], sizes = [16, 16, 128], strides = [1, 1, 1]} : vector<20x16x128xf32> to vector<16x16x128xf32>
    %210 = vector.shape_cast %208 : vector<1x128xf32> to vector<1x1x128xf32>
    %211 = vector.broadcast %210 : vector<1x1x128xf32> to vector<16x16x128xf32>
    %212 = arith.mulf %209, %211 : vector<16x16x128xf32>
    %213 = arith.addf %207, %212 : vector<16x16x128xf32>
    %c14 = arith.constant 14 : index
    %c0_97 = arith.constant 0 : index
    %214 = vector.load %arg15[%c14, %c0_97] : memref<25x128xf32, #tpu.memory_space<vmem>>, vector<1x128xf32>
    %215 = vector.extract_strided_slice %201 {offsets = [2, 0, 0], sizes = [16, 16, 128], strides = [1, 1, 1]} : vector<20x16x128xf32> to vector<16x16x128xf32>
    %216 = vector.shape_cast %214 : vector<1x128xf32> to vector<1x1x128xf32>
    %217 = vector.broadcast %216 : vector<1x1x128xf32> to vector<16x16x128xf32>
    %218 = arith.mulf %215, %217 : vector<16x16x128xf32>
    %219 = arith.addf %213, %218 : vector<16x16x128xf32>
    %c19 = arith.constant 19 : index
    %c0_98 = arith.constant 0 : index
    %220 = vector.load %arg15[%c19, %c0_98] : memref<25x128xf32, #tpu.memory_space<vmem>>, vector<1x128xf32>
    %221 = vector.extract_strided_slice %201 {offsets = [3, 0, 0], sizes = [16, 16, 128], strides = [1, 1, 1]} : vector<20x16x128xf32> to vector<16x16x128xf32>
    %222 = vector.shape_cast %220 : vector<1x128xf32> to vector<1x1x128xf32>
    %223 = vector.broadcast %222 : vector<1x1x128xf32> to vector<16x16x128xf32>
    %224 = arith.mulf %221, %223 : vector<16x16x128xf32>
    %225 = arith.addf %219, %224 : vector<16x16x128xf32>
    %c24_99 = arith.constant 24 : index
    %c0_100 = arith.constant 0 : index
    %226 = vector.load %arg15[%c24_99, %c0_100] : memref<25x128xf32, #tpu.memory_space<vmem>>, vector<1x128xf32>
    %227 = vector.extract_strided_slice %201 {offsets = [4, 0, 0], sizes = [16, 16, 128], strides = [1, 1, 1]} : vector<20x16x128xf32> to vector<16x16x128xf32>
    %228 = vector.shape_cast %226 : vector<1x128xf32> to vector<1x1x128xf32>
    %229 = vector.broadcast %228 : vector<1x1x128xf32> to vector<16x16x128xf32>
    %230 = arith.mulf %227, %229 : vector<16x16x128xf32>
    %231 = arith.addf %225, %230 : vector<16x16x128xf32>
    %c0_101 = arith.constant 0 : index
    %c0_102 = arith.constant 0 : index
    %232 = vector.load %arg16[%c0_101, %c0_102] : memref<1x128xf32, #tpu.memory_space<vmem>>, vector<1x128xf32>
    %233 = vector.shape_cast %232 : vector<1x128xf32> to vector<1x1x128xf32>
    %234 = vector.broadcast %233 : vector<1x1x128xf32> to vector<16x16x128xf32>
    %235 = arith.addf %231, %234 : vector<16x16x128xf32>
    %cst_103 = arith.constant 5.000000e-01 : f32
    %236 = vector.broadcast %cst_103 : f32 to vector<16x16x128xf32>
    %237 = arith.mulf %236, %235 : vector<16x16x128xf32>
    %cst_104 = arith.constant 0.707106769 : f32
    %238 = vector.broadcast %cst_104 : f32 to vector<16x16x128xf32>
    %239 = arith.mulf %235, %238 : vector<16x16x128xf32>
    %cst_105 = arith.constant 0.000000e+00 : f32
    %240 = vector.broadcast %cst_105 : f32 to vector<16x16x128xf32>
    %241 = arith.cmpf oge, %239, %240 : vector<16x16x128xf32>
    %cst_106 = arith.constant 1.000000e+00 : f32
    %cst_107 = arith.constant -1.000000e+00 : f32
    %242 = vector.broadcast %cst_106 : f32 to vector<16x16x128xf32>
    %243 = vector.broadcast %cst_107 : f32 to vector<16x16x128xf32>
    %244 = arith.select %241, %242, %243 : vector<16x16x128xi1>, vector<16x16x128xf32>
    %245 = math.absf %239 : vector<16x16x128xf32>
    %cst_108 = arith.constant 0.327591091 : f32
    %246 = vector.broadcast %cst_108 : f32 to vector<16x16x128xf32>
    %247 = arith.mulf %246, %245 : vector<16x16x128xf32>
    %cst_109 = arith.constant 1.000000e+00 : f32
    %248 = vector.broadcast %cst_109 : f32 to vector<16x16x128xf32>
    %249 = arith.addf %248, %247 : vector<16x16x128xf32>
    %250 = tpu.reciprocal %249 {approx = true} : vector<16x16x128xf32> -> vector<16x16x128xf32>
    %251 = arith.mulf %249, %250 : vector<16x16x128xf32>
    %cst_110 = arith.constant 2.000000e+00 : f32
    %252 = vector.broadcast %cst_110 : f32 to vector<16x16x128xf32>
    %253 = arith.subf %252, %251 : vector<16x16x128xf32>
    %254 = arith.mulf %250, %253 : vector<16x16x128xf32>
    %cst_111 = arith.constant 1.06140542 : f32
    %255 = vector.broadcast %cst_111 : f32 to vector<16x16x128xf32>
    %256 = arith.mulf %255, %254 : vector<16x16x128xf32>
    %cst_112 = arith.constant -1.45315206 : f32
    %257 = vector.broadcast %cst_112 : f32 to vector<16x16x128xf32>
    %258 = arith.addf %256, %257 : vector<16x16x128xf32>
    %259 = arith.mulf %258, %254 : vector<16x16x128xf32>
    %cst_113 = arith.constant 1.42141378 : f32
    %260 = vector.broadcast %cst_113 : f32 to vector<16x16x128xf32>
    %261 = arith.addf %259, %260 : vector<16x16x128xf32>
    %262 = arith.mulf %261, %254 : vector<16x16x128xf32>
    %cst_114 = arith.constant -0.284496725 : f32
    %263 = vector.broadcast %cst_114 : f32 to vector<16x16x128xf32>
    %264 = arith.addf %262, %263 : vector<16x16x128xf32>
    %265 = arith.mulf %264, %254 : vector<16x16x128xf32>
    %cst_115 = arith.constant 0.254829586 : f32
    %266 = vector.broadcast %cst_115 : f32 to vector<16x16x128xf32>
    %267 = arith.addf %265, %266 : vector<16x16x128xf32>
    %268 = arith.mulf %267, %254 : vector<16x16x128xf32>
    %cst_116 = arith.constant 0.000000e+00 : f32
    %269 = vector.broadcast %cst_116 : f32 to vector<16x16x128xf32>
    %270 = arith.subf %269, %245 : vector<16x16x128xf32>
    %271 = arith.mulf %270, %245 : vector<16x16x128xf32>
    %272 = math.exp %271 : vector<16x16x128xf32>
    %273 = arith.mulf %268, %272 : vector<16x16x128xf32>
    %cst_117 = arith.constant 1.000000e+00 : f32
    %274 = vector.broadcast %cst_117 : f32 to vector<16x16x128xf32>
    %275 = arith.subf %274, %273 : vector<16x16x128xf32>
    %276 = arith.mulf %244, %275 : vector<16x16x128xf32>
    %cst_118 = arith.constant 1.000000e+00 : f32
    %277 = vector.broadcast %cst_118 : f32 to vector<16x16x128xf32>
    %278 = arith.addf %277, %276 : vector<16x16x128xf32>
    %279 = arith.mulf %237, %278 : vector<16x16x128xf32>
    %cst_119 = arith.constant dense<0.000000e+00> : vector<16x128xf32>
    %280 = vector.multi_reduction <add>, %279, %cst_119 [0] : vector<16x16x128xf32> to vector<16x128xf32>
    %cst_120 = arith.constant 1.600000e+01 : f32
    %281 = vector.broadcast %cst_120 : f32 to vector<16x128xf32>
    %282 = arith.divf %280, %281 : vector<16x128xf32>
    %cst_121 = arith.constant dense<0.000000e+00> : vector<128xf32>
    %283 = vector.multi_reduction <add>, %282, %cst_121 [0] : vector<16x128xf32> to vector<128xf32>
    %284 = vector.shape_cast %283 : vector<128xf32> to vector<1x128xf32>
    %cst_122 = arith.constant 1.600000e+01 : f32
    %285 = vector.broadcast %cst_122 : f32 to vector<1x128xf32>
    %286 = arith.divf %284, %285 : vector<1x128xf32>
    %c0_123 = arith.constant 0 : index
    %c0_124 = arith.constant 0 : index
    %287 = vector.load %arg6[%c0_123, %c0_124] : memref<4x128xf32, #tpu.memory_space<vmem>>, vector<4x128xf32>
    %288 = vector.broadcast %286 : vector<1x128xf32> to vector<4x128xf32>
    %289 = arith.mulf %287, %288 : vector<4x128xf32>
    %cst_125 = arith.constant dense<0.000000e+00> : vector<4xf32>
    %290 = vector.multi_reduction <add>, %289, %cst_125 [1] : vector<4x128xf32> to vector<4xf32>
    %291 = vector.shape_cast %290 : vector<4xf32> to vector<4x1xf32>
    %c0_126 = arith.constant 0 : index
    %c0_127 = arith.constant 0 : index
    %292 = vector.load %arg7[%c0_126, %c0_127] : memref<4x1xf32, #tpu.memory_space<vmem>>, vector<4x1xf32>
    %293 = arith.addf %291, %292 : vector<4x1xf32>
    %cst_128 = arith.constant 0.000000e+00 : f32
    %294 = vector.broadcast %cst_128 : f32 to vector<4x1xf32>
    %295 = arith.subf %294, %293 : vector<4x1xf32>
    %296 = math.exp %295 : vector<4x1xf32>
    %cst_129 = arith.constant 1.000000e+00 : f32
    %297 = vector.broadcast %cst_129 : f32 to vector<4x1xf32>
    %298 = arith.addf %297, %296 : vector<4x1xf32>
    %cst_130 = arith.constant 1.000000e+00 : f32
    %299 = vector.broadcast %cst_130 : f32 to vector<4x1xf32>
    %300 = arith.divf %299, %298 : vector<4x1xf32>
    %cst_131 = arith.constant 0.000000e+00 : f32
    %301 = vector.broadcast %cst_131 : f32 to vector<49x128xf32>
    %cst_132 = arith.constant 0.000000e+00 : f32
    %302 = vector.broadcast %cst_132 : f32 to vector<1x128xf32>
    %303 = vector.extract_strided_slice %300 {offsets = [0, 0], sizes = [1, 1], strides = [1, 1]} : vector<4x1xf32> to vector<1x1xf32>
    %c0_133 = arith.constant 0 : index
    %c0_134 = arith.constant 0 : index
    %c0_135 = arith.constant 0 : index
    %304 = vector.load %arg8[%c0_133, %c0_134, %c0_135] : memref<4x49x128xf32, #tpu.memory_space<vmem>>, vector<1x49x128xf32>
    %305 = vector.shape_cast %304 : vector<1x49x128xf32> to vector<49x128xf32>
    %306 = vector.broadcast %303 : vector<1x1xf32> to vector<49x128xf32>
    %307 = arith.mulf %306, %305 : vector<49x128xf32>
    %308 = arith.addf %301, %307 : vector<49x128xf32>
    %c0_136 = arith.constant 0 : index
    %c0_137 = arith.constant 0 : index
    %309 = vector.load %arg9[%c0_136, %c0_137] : memref<4x128xf32, #tpu.memory_space<vmem>>, vector<1x128xf32>
    %310 = vector.broadcast %303 : vector<1x1xf32> to vector<1x128xf32>
    %311 = arith.mulf %310, %309 : vector<1x128xf32>
    %312 = arith.addf %302, %311 : vector<1x128xf32>
    %313 = vector.extract_strided_slice %300 {offsets = [1, 0], sizes = [1, 1], strides = [1, 1]} : vector<4x1xf32> to vector<1x1xf32>
    %c1_138 = arith.constant 1 : index
    %c0_139 = arith.constant 0 : index
    %c0_140 = arith.constant 0 : index
    %314 = vector.load %arg8[%c1_138, %c0_139, %c0_140] : memref<4x49x128xf32, #tpu.memory_space<vmem>>, vector<1x49x128xf32>
    %315 = vector.shape_cast %314 : vector<1x49x128xf32> to vector<49x128xf32>
    %316 = vector.broadcast %313 : vector<1x1xf32> to vector<49x128xf32>
    %317 = arith.mulf %316, %315 : vector<49x128xf32>
    %318 = arith.addf %308, %317 : vector<49x128xf32>
    %c1_141 = arith.constant 1 : index
    %c0_142 = arith.constant 0 : index
    %319 = vector.load %arg9[%c1_141, %c0_142] : memref<4x128xf32, #tpu.memory_space<vmem>>, vector<1x128xf32>
    %320 = vector.broadcast %313 : vector<1x1xf32> to vector<1x128xf32>
    %321 = arith.mulf %320, %319 : vector<1x128xf32>
    %322 = arith.addf %312, %321 : vector<1x128xf32>
    %323 = vector.extract_strided_slice %300 {offsets = [2, 0], sizes = [1, 1], strides = [1, 1]} : vector<4x1xf32> to vector<1x1xf32>
    %c2_143 = arith.constant 2 : index
    %c0_144 = arith.constant 0 : index
    %c0_145 = arith.constant 0 : index
    %324 = vector.load %arg8[%c2_143, %c0_144, %c0_145] : memref<4x49x128xf32, #tpu.memory_space<vmem>>, vector<1x49x128xf32>
    %325 = vector.shape_cast %324 : vector<1x49x128xf32> to vector<49x128xf32>
    %326 = vector.broadcast %323 : vector<1x1xf32> to vector<49x128xf32>
    %327 = arith.mulf %326, %325 : vector<49x128xf32>
    %328 = arith.addf %318, %327 : vector<49x128xf32>
    %c2_146 = arith.constant 2 : index
    %c0_147 = arith.constant 0 : index
    %329 = vector.load %arg9[%c2_146, %c0_147] : memref<4x128xf32, #tpu.memory_space<vmem>>, vector<1x128xf32>
    %330 = vector.broadcast %323 : vector<1x1xf32> to vector<1x128xf32>
    %331 = arith.mulf %330, %329 : vector<1x128xf32>
    %332 = arith.addf %322, %331 : vector<1x128xf32>
    %333 = vector.extract_strided_slice %300 {offsets = [3, 0], sizes = [1, 1], strides = [1, 1]} : vector<4x1xf32> to vector<1x1xf32>
    %c3_148 = arith.constant 3 : index
    %c0_149 = arith.constant 0 : index
    %c0_150 = arith.constant 0 : index
    %334 = vector.load %arg8[%c3_148, %c0_149, %c0_150] : memref<4x49x128xf32, #tpu.memory_space<vmem>>, vector<1x49x128xf32>
    %335 = vector.shape_cast %334 : vector<1x49x128xf32> to vector<49x128xf32>
    %336 = vector.broadcast %333 : vector<1x1xf32> to vector<49x128xf32>
    %337 = arith.mulf %336, %335 : vector<49x128xf32>
    %338 = arith.addf %328, %337 : vector<49x128xf32>
    %c3_151 = arith.constant 3 : index
    %c0_152 = arith.constant 0 : index
    %339 = vector.load %arg9[%c3_151, %c0_152] : memref<4x128xf32, #tpu.memory_space<vmem>>, vector<1x128xf32>
    %340 = vector.broadcast %333 : vector<1x1xf32> to vector<1x128xf32>
    %341 = arith.mulf %340, %339 : vector<1x128xf32>
    %342 = arith.addf %332, %341 : vector<1x128xf32>
    %c0_153 = arith.constant 0 : index
    %c0_154 = arith.constant 0 : index
    %343 = vector.load %arg17[%c0_153, %c0_154] : memref<49x128xf32, #tpu.memory_space<vmem>>, vector<49x128xf32>
    tpu.vector_store %arg17[%c0_153, %c0_154], %338 {strides = array<i32>} : memref<49x128xf32, #tpu.memory_space<vmem>>, vector<49x128xf32>,
    %c0_155 = arith.constant 0 : index
    %c0_156 = arith.constant 0 : index
    %344 = vector.load %arg18[%c0_155, %c0_156] : memref<1x128xf32, #tpu.memory_space<vmem>>, vector<1x128xf32>
    tpu.vector_store %arg18[%c0_155, %c0_156], %342 {strides = array<i32>} : memref<1x128xf32, #tpu.memory_space<vmem>>, vector<1x128xf32>,
    %cst_157 = arith.constant 0.000000e+00 : f32
    %345 = vector.broadcast %cst_157 : f32 to vector<9x48x128xf32>
    %c0_158 = arith.constant 0 : index
    %c0_159 = arith.constant 0 : index
    %c0_160 = arith.constant 0 : index
    %346 = vector.load %arg14[%c0_158, %c0_159, %c0_160] : memref<34x48x128xf32, #tpu.memory_space<vmem>>, vector<9x48x128xf32>
    tpu.vector_store %arg14[%c0_158, %c0_159, %c0_160], %345 {strides = array<i32>} : memref<34x48x128xf32, #tpu.memory_space<vmem>>, vector<9x48x128xf32>,
    %cst_161 = arith.constant 0.000000e+00 : f32
    %347 = vector.broadcast %cst_161 : f32 to vector<9x48x128xf32>
    %c25 = arith.constant 25 : index
    %c0_162 = arith.constant 0 : index
    %c0_163 = arith.constant 0 : index
    %348 = vector.load %arg14[%c25, %c0_162, %c0_163] : memref<34x48x128xf32, #tpu.memory_space<vmem>>, vector<9x48x128xf32>
    tpu.vector_store %arg14[%c25, %c0_162, %c0_163], %347 {strides = array<i32>} : memref<34x48x128xf32, #tpu.memory_space<vmem>>, vector<9x48x128xf32>,
    %cst_164 = arith.constant 0.000000e+00 : f32
    %349 = vector.broadcast %cst_164 : f32 to vector<16x16x128xf32>
    %c9_165 = arith.constant 9 : index
    %c0_166 = arith.constant 0 : index
    %c0_167 = arith.constant 0 : index
    %350 = vector.load %arg14[%c9_165, %c0_166, %c0_167] : memref<34x48x128xf32, #tpu.memory_space<vmem>>, vector<16x16x128xf32>
    tpu.vector_store %arg14[%c9_165, %c0_166, %c0_167], %349 {strides = array<i32>} : memref<34x48x128xf32, #tpu.memory_space<vmem>>, vector<16x16x128xf32>,
    %cst_168 = arith.constant 0.000000e+00 : f32
    %351 = vector.broadcast %cst_168 : f32 to vector<16x16x128xf32>
    %c9_169 = arith.constant 9 : index
    %c32 = arith.constant 32 : index
    %c0_170 = arith.constant 0 : index
    %352 = vector.load %arg14[%c9_169, %c32, %c0_170] : memref<34x48x128xf32, #tpu.memory_space<vmem>>, vector<16x16x128xf32>
    tpu.vector_store %arg14[%c9_169, %c32, %c0_170], %351 {strides = array<i32>} : memref<34x48x128xf32, #tpu.memory_space<vmem>>, vector<16x16x128xf32>,
    %c9_171 = arith.constant 9 : index
    %c16_172 = arith.constant 16 : index
    %c0_173 = arith.constant 0 : index
    %353 = vector.load %arg14[%c9_171, %c16_172, %c0_173] : memref<34x48x128xf32, #tpu.memory_space<vmem>>, vector<16x16x128xf32>
    tpu.vector_store %arg14[%c9_171, %c16_172, %c0_173], %279 {strides = array<i32>} : memref<34x48x128xf32, #tpu.memory_space<vmem>>, vector<16x16x128xf32>,
    %cst_174 = arith.constant 0.000000e+00 : f32
    %354 = vector.broadcast %cst_174 : f32 to vector<16x16x128xf32>
    %c0_175 = arith.constant 0 : index
    %c7_176 = arith.constant 7 : index
    %c0_177 = arith.constant 0 : index
    %355 = vector.load %arg14[%c0_175, %c7_176, %c0_177] : memref<34x48x128xf32, #tpu.memory_space<vmem>>, vector<34x16x128xf32>
    %c0_178 = arith.constant 0 : index
    %c0_179 = arith.constant 0 : index
    %356 = vector.load %arg17[%c0_178, %c0_179] : memref<49x128xf32, #tpu.memory_space<vmem>>, vector<1x128xf32>
    %357 = vector.extract_strided_slice %355 {offsets = [0, 0, 0], sizes = [16, 16, 128], strides = [1, 1, 1]} : vector<34x16x128xf32> to vector<16x16x128xf32>
    %358 = vector.shape_cast %356 : vector<1x128xf32> to vector<1x1x128xf32>
    %359 = vector.broadcast %358 : vector<1x1x128xf32> to vector<16x16x128xf32>
    %360 = arith.mulf %357, %359 : vector<16x16x128xf32>
    %361 = arith.addf %354, %360 : vector<16x16x128xf32>
    %c7_180 = arith.constant 7 : index
    %c0_181 = arith.constant 0 : index
    %362 = vector.load %arg17[%c7_180, %c0_181] : memref<49x128xf32, #tpu.memory_space<vmem>>, vector<1x128xf32>
    %363 = vector.extract_strided_slice %355 {offsets = [3, 0, 0], sizes = [16, 16, 128], strides = [1, 1, 1]} : vector<34x16x128xf32> to vector<16x16x128xf32>
    %364 = vector.shape_cast %362 : vector<1x128xf32> to vector<1x1x128xf32>
    %365 = vector.broadcast %364 : vector<1x1x128xf32> to vector<16x16x128xf32>
    %366 = arith.mulf %363, %365 : vector<16x16x128xf32>
    %367 = arith.addf %361, %366 : vector<16x16x128xf32>
    %c14_182 = arith.constant 14 : index
    %c0_183 = arith.constant 0 : index
    %368 = vector.load %arg17[%c14_182, %c0_183] : memref<49x128xf32, #tpu.memory_space<vmem>>, vector<1x128xf32>
    %369 = vector.extract_strided_slice %355 {offsets = [6, 0, 0], sizes = [16, 16, 128], strides = [1, 1, 1]} : vector<34x16x128xf32> to vector<16x16x128xf32>
    %370 = vector.shape_cast %368 : vector<1x128xf32> to vector<1x1x128xf32>
    %371 = vector.broadcast %370 : vector<1x1x128xf32> to vector<16x16x128xf32>
    %372 = arith.mulf %369, %371 : vector<16x16x128xf32>
    %373 = arith.addf %367, %372 : vector<16x16x128xf32>
    %c21_184 = arith.constant 21 : index
    %c0_185 = arith.constant 0 : index
    %374 = vector.load %arg17[%c21_184, %c0_185] : memref<49x128xf32, #tpu.memory_space<vmem>>, vector<1x128xf32>
    %375 = vector.extract_strided_slice %355 {offsets = [9, 0, 0], sizes = [16, 16, 128], strides = [1, 1, 1]} : vector<34x16x128xf32> to vector<16x16x128xf32>
    %376 = vector.shape_cast %374 : vector<1x128xf32> to vector<1x1x128xf32>
    %377 = vector.broadcast %376 : vector<1x1x128xf32> to vector<16x16x128xf32>
    %378 = arith.mulf %375, %377 : vector<16x16x128xf32>
    %379 = arith.addf %373, %378 : vector<16x16x128xf32>
    %c28 = arith.constant 28 : index
    %c0_186 = arith.constant 0 : index
    %380 = vector.load %arg17[%c28, %c0_186] : memref<49x128xf32, #tpu.memory_space<vmem>>, vector<1x128xf32>
    %381 = vector.extract_strided_slice %355 {offsets = [12, 0, 0], sizes = [16, 16, 128], strides = [1, 1, 1]} : vector<34x16x128xf32> to vector<16x16x128xf32>
    %382 = vector.shape_cast %380 : vector<1x128xf32> to vector<1x1x128xf32>
    %383 = vector.broadcast %382 : vector<1x1x128xf32> to vector<16x16x128xf32>
    %384 = arith.mulf %381, %383 : vector<16x16x128xf32>
    %385 = arith.addf %379, %384 : vector<16x16x128xf32>
    %c35 = arith.constant 35 : index
    %c0_187 = arith.constant 0 : index
    %386 = vector.load %arg17[%c35, %c0_187] : memref<49x128xf32, #tpu.memory_space<vmem>>, vector<1x128xf32>
    %387 = vector.extract_strided_slice %355 {offsets = [15, 0, 0], sizes = [16, 16, 128], strides = [1, 1, 1]} : vector<34x16x128xf32> to vector<16x16x128xf32>
    %388 = vector.shape_cast %386 : vector<1x128xf32> to vector<1x1x128xf32>
    %389 = vector.broadcast %388 : vector<1x1x128xf32> to vector<16x16x128xf32>
    %390 = arith.mulf %387, %389 : vector<16x16x128xf32>
    %391 = arith.addf %385, %390 : vector<16x16x128xf32>
    %c42 = arith.constant 42 : index
    %c0_188 = arith.constant 0 : index
    %392 = vector.load %arg17[%c42, %c0_188] : memref<49x128xf32, #tpu.memory_space<vmem>>, vector<1x128xf32>
    %393 = vector.extract_strided_slice %355 {offsets = [18, 0, 0], sizes = [16, 16, 128], strides = [1, 1, 1]} : vector<34x16x128xf32> to vector<16x16x128xf32>
    %394 = vector.shape_cast %392 : vector<1x128xf32> to vector<1x1x128xf32>
    %395 = vector.broadcast %394 : vector<1x1x128xf32> to vector<16x16x128xf32>
    %396 = arith.mulf %393, %395 : vector<16x16x128xf32>
    %397 = arith.addf %391, %396 : vector<16x16x128xf32>
    %c0_189 = arith.constant 0 : index
    %c10_190 = arith.constant 10 : index
    %c0_191 = arith.constant 0 : index
    %398 = vector.load %arg14[%c0_189, %c10_190, %c0_191] : memref<34x48x128xf32, #tpu.memory_space<vmem>>, vector<34x16x128xf32>
    %c1_192 = arith.constant 1 : index
    %c0_193 = arith.constant 0 : index
    %399 = vector.load %arg17[%c1_192, %c0_193] : memref<49x128xf32, #tpu.memory_space<vmem>>, vector<1x128xf32>
    %400 = vector.extract_strided_slice %398 {offsets = [0, 0, 0], sizes = [16, 16, 128], strides = [1, 1, 1]} : vector<34x16x128xf32> to vector<16x16x128xf32>
    %401 = vector.shape_cast %399 : vector<1x128xf32> to vector<1x1x128xf32>
    %402 = vector.broadcast %401 : vector<1x1x128xf32> to vector<16x16x128xf32>
    %403 = arith.mulf %400, %402 : vector<16x16x128xf32>
    %404 = arith.addf %397, %403 : vector<16x16x128xf32>
    %c8_194 = arith.constant 8 : index
    %c0_195 = arith.constant 0 : index
    %405 = vector.load %arg17[%c8_194, %c0_195] : memref<49x128xf32, #tpu.memory_space<vmem>>, vector<1x128xf32>
    %406 = vector.extract_strided_slice %398 {offsets = [3, 0, 0], sizes = [16, 16, 128], strides = [1, 1, 1]} : vector<34x16x128xf32> to vector<16x16x128xf32>
    %407 = vector.shape_cast %405 : vector<1x128xf32> to vector<1x1x128xf32>
    %408 = vector.broadcast %407 : vector<1x1x128xf32> to vector<16x16x128xf32>
    %409 = arith.mulf %406, %408 : vector<16x16x128xf32>
    %410 = arith.addf %404, %409 : vector<16x16x128xf32>
    %c15_196 = arith.constant 15 : index
    %c0_197 = arith.constant 0 : index
    %411 = vector.load %arg17[%c15_196, %c0_197] : memref<49x128xf32, #tpu.memory_space<vmem>>, vector<1x128xf32>
    %412 = vector.extract_strided_slice %398 {offsets = [6, 0, 0], sizes = [16, 16, 128], strides = [1, 1, 1]} : vector<34x16x128xf32> to vector<16x16x128xf32>
    %413 = vector.shape_cast %411 : vector<1x128xf32> to vector<1x1x128xf32>
    %414 = vector.broadcast %413 : vector<1x1x128xf32> to vector<16x16x128xf32>
    %415 = arith.mulf %412, %414 : vector<16x16x128xf32>
    %416 = arith.addf %410, %415 : vector<16x16x128xf32>
    %c22_198 = arith.constant 22 : index
    %c0_199 = arith.constant 0 : index
    %417 = vector.load %arg17[%c22_198, %c0_199] : memref<49x128xf32, #tpu.memory_space<vmem>>, vector<1x128xf32>
    %418 = vector.extract_strided_slice %398 {offsets = [9, 0, 0], sizes = [16, 16, 128], strides = [1, 1, 1]} : vector<34x16x128xf32> to vector<16x16x128xf32>
    %419 = vector.shape_cast %417 : vector<1x128xf32> to vector<1x1x128xf32>
    %420 = vector.broadcast %419 : vector<1x1x128xf32> to vector<16x16x128xf32>
    %421 = arith.mulf %418, %420 : vector<16x16x128xf32>
    %422 = arith.addf %416, %421 : vector<16x16x128xf32>
    %c29 = arith.constant 29 : index
    %c0_200 = arith.constant 0 : index
    %423 = vector.load %arg17[%c29, %c0_200] : memref<49x128xf32, #tpu.memory_space<vmem>>, vector<1x128xf32>
    %424 = vector.extract_strided_slice %398 {offsets = [12, 0, 0], sizes = [16, 16, 128], strides = [1, 1, 1]} : vector<34x16x128xf32> to vector<16x16x128xf32>
    %425 = vector.shape_cast %423 : vector<1x128xf32> to vector<1x1x128xf32>
    %426 = vector.broadcast %425 : vector<1x1x128xf32> to vector<16x16x128xf32>
    %427 = arith.mulf %424, %426 : vector<16x16x128xf32>
    %428 = arith.addf %422, %427 : vector<16x16x128xf32>
    %c36 = arith.constant 36 : index
    %c0_201 = arith.constant 0 : index
    %429 = vector.load %arg17[%c36, %c0_201] : memref<49x128xf32, #tpu.memory_space<vmem>>, vector<1x128xf32>
    %430 = vector.extract_strided_slice %398 {offsets = [15, 0, 0], sizes = [16, 16, 128], strides = [1, 1, 1]} : vector<34x16x128xf32> to vector<16x16x128xf32>
    %431 = vector.shape_cast %429 : vector<1x128xf32> to vector<1x1x128xf32>
    %432 = vector.broadcast %431 : vector<1x1x128xf32> to vector<16x16x128xf32>
    %433 = arith.mulf %430, %432 : vector<16x16x128xf32>
    %434 = arith.addf %428, %433 : vector<16x16x128xf32>
    %c43 = arith.constant 43 : index
    %c0_202 = arith.constant 0 : index
    %435 = vector.load %arg17[%c43, %c0_202] : memref<49x128xf32, #tpu.memory_space<vmem>>, vector<1x128xf32>
    %436 = vector.extract_strided_slice %398 {offsets = [18, 0, 0], sizes = [16, 16, 128], strides = [1, 1, 1]} : vector<34x16x128xf32> to vector<16x16x128xf32>
    %437 = vector.shape_cast %435 : vector<1x128xf32> to vector<1x1x128xf32>
    %438 = vector.broadcast %437 : vector<1x1x128xf32> to vector<16x16x128xf32>
    %439 = arith.mulf %436, %438 : vector<16x16x128xf32>
    %440 = arith.addf %434, %439 : vector<16x16x128xf32>
    %c0_203 = arith.constant 0 : index
    %c13_204 = arith.constant 13 : index
    %c0_205 = arith.constant 0 : index
    %441 = vector.load %arg14[%c0_203, %c13_204, %c0_205] : memref<34x48x128xf32, #tpu.memory_space<vmem>>, vector<34x16x128xf32>
    %c2_206 = arith.constant 2 : index
    %c0_207 = arith.constant 0 : index
    %442 = vector.load %arg17[%c2_206, %c0_207] : memref<49x128xf32, #tpu.memory_space<vmem>>, vector<1x128xf32>
    %443 = vector.extract_strided_slice %441 {offsets = [0, 0, 0], sizes = [16, 16, 128], strides = [1, 1, 1]} : vector<34x16x128xf32> to vector<16x16x128xf32>
    %444 = vector.shape_cast %442 : vector<1x128xf32> to vector<1x1x128xf32>
    %445 = vector.broadcast %444 : vector<1x1x128xf32> to vector<16x16x128xf32>
    %446 = arith.mulf %443, %445 : vector<16x16x128xf32>
    %447 = arith.addf %440, %446 : vector<16x16x128xf32>
    %c9_208 = arith.constant 9 : index
    %c0_209 = arith.constant 0 : index
    %448 = vector.load %arg17[%c9_208, %c0_209] : memref<49x128xf32, #tpu.memory_space<vmem>>, vector<1x128xf32>
    %449 = vector.extract_strided_slice %441 {offsets = [3, 0, 0], sizes = [16, 16, 128], strides = [1, 1, 1]} : vector<34x16x128xf32> to vector<16x16x128xf32>
    %450 = vector.shape_cast %448 : vector<1x128xf32> to vector<1x1x128xf32>
    %451 = vector.broadcast %450 : vector<1x1x128xf32> to vector<16x16x128xf32>
    %452 = arith.mulf %449, %451 : vector<16x16x128xf32>
    %453 = arith.addf %447, %452 : vector<16x16x128xf32>
    %c16_210 = arith.constant 16 : index
    %c0_211 = arith.constant 0 : index
    %454 = vector.load %arg17[%c16_210, %c0_211] : memref<49x128xf32, #tpu.memory_space<vmem>>, vector<1x128xf32>
    %455 = vector.extract_strided_slice %441 {offsets = [6, 0, 0], sizes = [16, 16, 128], strides = [1, 1, 1]} : vector<34x16x128xf32> to vector<16x16x128xf32>
    %456 = vector.shape_cast %454 : vector<1x128xf32> to vector<1x1x128xf32>
    %457 = vector.broadcast %456 : vector<1x1x128xf32> to vector<16x16x128xf32>
    %458 = arith.mulf %455, %457 : vector<16x16x128xf32>
    %459 = arith.addf %453, %458 : vector<16x16x128xf32>
    %c23_212 = arith.constant 23 : index
    %c0_213 = arith.constant 0 : index
    %460 = vector.load %arg17[%c23_212, %c0_213] : memref<49x128xf32, #tpu.memory_space<vmem>>, vector<1x128xf32>
    %461 = vector.extract_strided_slice %441 {offsets = [9, 0, 0], sizes = [16, 16, 128], strides = [1, 1, 1]} : vector<34x16x128xf32> to vector<16x16x128xf32>
    %462 = vector.shape_cast %460 : vector<1x128xf32> to vector<1x1x128xf32>
    %463 = vector.broadcast %462 : vector<1x1x128xf32> to vector<16x16x128xf32>
    %464 = arith.mulf %461, %463 : vector<16x16x128xf32>
    %465 = arith.addf %459, %464 : vector<16x16x128xf32>
    %c30 = arith.constant 30 : index
    %c0_214 = arith.constant 0 : index
    %466 = vector.load %arg17[%c30, %c0_214] : memref<49x128xf32, #tpu.memory_space<vmem>>, vector<1x128xf32>
    %467 = vector.extract_strided_slice %441 {offsets = [12, 0, 0], sizes = [16, 16, 128], strides = [1, 1, 1]} : vector<34x16x128xf32> to vector<16x16x128xf32>
    %468 = vector.shape_cast %466 : vector<1x128xf32> to vector<1x1x128xf32>
    %469 = vector.broadcast %468 : vector<1x1x128xf32> to vector<16x16x128xf32>
    %470 = arith.mulf %467, %469 : vector<16x16x128xf32>
    %471 = arith.addf %465, %470 : vector<16x16x128xf32>
    %c37 = arith.constant 37 : index
    %c0_215 = arith.constant 0 : index
    %472 = vector.load %arg17[%c37, %c0_215] : memref<49x128xf32, #tpu.memory_space<vmem>>, vector<1x128xf32>
    %473 = vector.extract_strided_slice %441 {offsets = [15, 0, 0], sizes = [16, 16, 128], strides = [1, 1, 1]} : vector<34x16x128xf32> to vector<16x16x128xf32>
    %474 = vector.shape_cast %472 : vector<1x128xf32> to vector<1x1x128xf32>
    %475 = vector.broadcast %474 : vector<1x1x128xf32> to vector<16x16x128xf32>
    %476 = arith.mulf %473, %475 : vector<16x16x128xf32>
    %477 = arith.addf %471, %476 : vector<16x16x128xf32>
    %c44 = arith.constant 44 : index
    %c0_216 = arith.constant 0 : index
    %478 = vector.load %arg17[%c44, %c0_216] : memref<49x128xf32, #tpu.memory_space<vmem>>, vector<1x128xf32>
    %479 = vector.extract_strided_slice %441 {offsets = [18, 0, 0], sizes = [16, 16, 128], strides = [1, 1, 1]} : vector<34x16x128xf32> to vector<16x16x128xf32>
    %480 = vector.shape_cast %478 : vector<1x128xf32> to vector<1x1x128xf32>
    %481 = vector.broadcast %480 : vector<1x1x128xf32> to vector<16x16x128xf32>
    %482 = arith.mulf %479, %481 : vector<16x16x128xf32>
    %483 = arith.addf %477, %482 : vector<16x16x128xf32>
    %c0_217 = arith.constant 0 : index
    %c16_218 = arith.constant 16 : index
    %c0_219 = arith.constant 0 : index
    %484 = vector.load %arg14[%c0_217, %c16_218, %c0_219] : memref<34x48x128xf32, #tpu.memory_space<vmem>>, vector<34x16x128xf32>
    %c3_220 = arith.constant 3 : index
    %c0_221 = arith.constant 0 : index
    %485 = vector.load %arg17[%c3_220, %c0_221] : memref<49x128xf32, #tpu.memory_space<vmem>>, vector<1x128xf32>
    %486 = vector.extract_strided_slice %484 {offsets = [0, 0, 0], sizes = [16, 16, 128], strides = [1, 1, 1]} : vector<34x16x128xf32> to vector<16x16x128xf32>
    %487 = vector.shape_cast %485 : vector<1x128xf32> to vector<1x1x128xf32>
    %488 = vector.broadcast %487 : vector<1x1x128xf32> to vector<16x16x128xf32>
    %489 = arith.mulf %486, %488 : vector<16x16x128xf32>
    %490 = arith.addf %483, %489 : vector<16x16x128xf32>
    %c10_222 = arith.constant 10 : index
    %c0_223 = arith.constant 0 : index
    %491 = vector.load %arg17[%c10_222, %c0_223] : memref<49x128xf32, #tpu.memory_space<vmem>>, vector<1x128xf32>
    %492 = vector.extract_strided_slice %484 {offsets = [3, 0, 0], sizes = [16, 16, 128], strides = [1, 1, 1]} : vector<34x16x128xf32> to vector<16x16x128xf32>
    %493 = vector.shape_cast %491 : vector<1x128xf32> to vector<1x1x128xf32>
    %494 = vector.broadcast %493 : vector<1x1x128xf32> to vector<16x16x128xf32>
    %495 = arith.mulf %492, %494 : vector<16x16x128xf32>
    %496 = arith.addf %490, %495 : vector<16x16x128xf32>
    %c17_224 = arith.constant 17 : index
    %c0_225 = arith.constant 0 : index
    %497 = vector.load %arg17[%c17_224, %c0_225] : memref<49x128xf32, #tpu.memory_space<vmem>>, vector<1x128xf32>
    %498 = vector.extract_strided_slice %484 {offsets = [6, 0, 0], sizes = [16, 16, 128], strides = [1, 1, 1]} : vector<34x16x128xf32> to vector<16x16x128xf32>
    %499 = vector.shape_cast %497 : vector<1x128xf32> to vector<1x1x128xf32>
    %500 = vector.broadcast %499 : vector<1x1x128xf32> to vector<16x16x128xf32>
    %501 = arith.mulf %498, %500 : vector<16x16x128xf32>
    %502 = arith.addf %496, %501 : vector<16x16x128xf32>
    %c24_226 = arith.constant 24 : index
    %c0_227 = arith.constant 0 : index
    %503 = vector.load %arg17[%c24_226, %c0_227] : memref<49x128xf32, #tpu.memory_space<vmem>>, vector<1x128xf32>
    %504 = vector.extract_strided_slice %484 {offsets = [9, 0, 0], sizes = [16, 16, 128], strides = [1, 1, 1]} : vector<34x16x128xf32> to vector<16x16x128xf32>
    %505 = vector.shape_cast %503 : vector<1x128xf32> to vector<1x1x128xf32>
    %506 = vector.broadcast %505 : vector<1x1x128xf32> to vector<16x16x128xf32>
    %507 = arith.mulf %504, %506 : vector<16x16x128xf32>
    %508 = arith.addf %502, %507 : vector<16x16x128xf32>
    %c31 = arith.constant 31 : index
    %c0_228 = arith.constant 0 : index
    %509 = vector.load %arg17[%c31, %c0_228] : memref<49x128xf32, #tpu.memory_space<vmem>>, vector<1x128xf32>
    %510 = vector.extract_strided_slice %484 {offsets = [12, 0, 0], sizes = [16, 16, 128], strides = [1, 1, 1]} : vector<34x16x128xf32> to vector<16x16x128xf32>
    %511 = vector.shape_cast %509 : vector<1x128xf32> to vector<1x1x128xf32>
    %512 = vector.broadcast %511 : vector<1x1x128xf32> to vector<16x16x128xf32>
    %513 = arith.mulf %510, %512 : vector<16x16x128xf32>
    %514 = arith.addf %508, %513 : vector<16x16x128xf32>
    %c38 = arith.constant 38 : index
    %c0_229 = arith.constant 0 : index
    %515 = vector.load %arg17[%c38, %c0_229] : memref<49x128xf32, #tpu.memory_space<vmem>>, vector<1x128xf32>
    %516 = vector.extract_strided_slice %484 {offsets = [15, 0, 0], sizes = [16, 16, 128], strides = [1, 1, 1]} : vector<34x16x128xf32> to vector<16x16x128xf32>
    %517 = vector.shape_cast %515 : vector<1x128xf32> to vector<1x1x128xf32>
    %518 = vector.broadcast %517 : vector<1x1x128xf32> to vector<16x16x128xf32>
    %519 = arith.mulf %516, %518 : vector<16x16x128xf32>
    %520 = arith.addf %514, %519 : vector<16x16x128xf32>
    %c45 = arith.constant 45 : index
    %c0_230 = arith.constant 0 : index
    %521 = vector.load %arg17[%c45, %c0_230] : memref<49x128xf32, #tpu.memory_space<vmem>>, vector<1x128xf32>
    %522 = vector.extract_strided_slice %484 {offsets = [18, 0, 0], sizes = [16, 16, 128], strides = [1, 1, 1]} : vector<34x16x128xf32> to vector<16x16x128xf32>
    %523 = vector.shape_cast %521 : vector<1x128xf32> to vector<1x1x128xf32>
    %524 = vector.broadcast %523 : vector<1x1x128xf32> to vector<16x16x128xf32>
    %525 = arith.mulf %522, %524 : vector<16x16x128xf32>
    %526 = arith.addf %520, %525 : vector<16x16x128xf32>
    %c0_231 = arith.constant 0 : index
    %c19_232 = arith.constant 19 : index
    %c0_233 = arith.constant 0 : index
    %527 = vector.load %arg14[%c0_231, %c19_232, %c0_233] : memref<34x48x128xf32, #tpu.memory_space<vmem>>, vector<34x16x128xf32>
    %c4_234 = arith.constant 4 : index
    %c0_235 = arith.constant 0 : index
    %528 = vector.load %arg17[%c4_234, %c0_235] : memref<49x128xf32, #tpu.memory_space<vmem>>, vector<1x128xf32>
    %529 = vector.extract_strided_slice %527 {offsets = [0, 0, 0], sizes = [16, 16, 128], strides = [1, 1, 1]} : vector<34x16x128xf32> to vector<16x16x128xf32>
    %530 = vector.shape_cast %528 : vector<1x128xf32> to vector<1x1x128xf32>
    %531 = vector.broadcast %530 : vector<1x1x128xf32> to vector<16x16x128xf32>
    %532 = arith.mulf %529, %531 : vector<16x16x128xf32>
    %533 = arith.addf %526, %532 : vector<16x16x128xf32>
    %c11_236 = arith.constant 11 : index
    %c0_237 = arith.constant 0 : index
    %534 = vector.load %arg17[%c11_236, %c0_237] : memref<49x128xf32, #tpu.memory_space<vmem>>, vector<1x128xf32>
    %535 = vector.extract_strided_slice %527 {offsets = [3, 0, 0], sizes = [16, 16, 128], strides = [1, 1, 1]} : vector<34x16x128xf32> to vector<16x16x128xf32>
    %536 = vector.shape_cast %534 : vector<1x128xf32> to vector<1x1x128xf32>
    %537 = vector.broadcast %536 : vector<1x1x128xf32> to vector<16x16x128xf32>
    %538 = arith.mulf %535, %537 : vector<16x16x128xf32>
    %539 = arith.addf %533, %538 : vector<16x16x128xf32>
    %c18_238 = arith.constant 18 : index
    %c0_239 = arith.constant 0 : index
    %540 = vector.load %arg17[%c18_238, %c0_239] : memref<49x128xf32, #tpu.memory_space<vmem>>, vector<1x128xf32>
    %541 = vector.extract_strided_slice %527 {offsets = [6, 0, 0], sizes = [16, 16, 128], strides = [1, 1, 1]} : vector<34x16x128xf32> to vector<16x16x128xf32>
    %542 = vector.shape_cast %540 : vector<1x128xf32> to vector<1x1x128xf32>
    %543 = vector.broadcast %542 : vector<1x1x128xf32> to vector<16x16x128xf32>
    %544 = arith.mulf %541, %543 : vector<16x16x128xf32>
    %545 = arith.addf %539, %544 : vector<16x16x128xf32>
    %c25_240 = arith.constant 25 : index
    %c0_241 = arith.constant 0 : index
    %546 = vector.load %arg17[%c25_240, %c0_241] : memref<49x128xf32, #tpu.memory_space<vmem>>, vector<1x128xf32>
    %547 = vector.extract_strided_slice %527 {offsets = [9, 0, 0], sizes = [16, 16, 128], strides = [1, 1, 1]} : vector<34x16x128xf32> to vector<16x16x128xf32>
    %548 = vector.shape_cast %546 : vector<1x128xf32> to vector<1x1x128xf32>
    %549 = vector.broadcast %548 : vector<1x1x128xf32> to vector<16x16x128xf32>
    %550 = arith.mulf %547, %549 : vector<16x16x128xf32>
    %551 = arith.addf %545, %550 : vector<16x16x128xf32>
    %c32_242 = arith.constant 32 : index
    %c0_243 = arith.constant 0 : index
    %552 = vector.load %arg17[%c32_242, %c0_243] : memref<49x128xf32, #tpu.memory_space<vmem>>, vector<1x128xf32>
    %553 = vector.extract_strided_slice %527 {offsets = [12, 0, 0], sizes = [16, 16, 128], strides = [1, 1, 1]} : vector<34x16x128xf32> to vector<16x16x128xf32>
    %554 = vector.shape_cast %552 : vector<1x128xf32> to vector<1x1x128xf32>
    %555 = vector.broadcast %554 : vector<1x1x128xf32> to vector<16x16x128xf32>
    %556 = arith.mulf %553, %555 : vector<16x16x128xf32>
    %557 = arith.addf %551, %556 : vector<16x16x128xf32>
    %c39 = arith.constant 39 : index
    %c0_244 = arith.constant 0 : index
    %558 = vector.load %arg17[%c39, %c0_244] : memref<49x128xf32, #tpu.memory_space<vmem>>, vector<1x128xf32>
    %559 = vector.extract_strided_slice %527 {offsets = [15, 0, 0], sizes = [16, 16, 128], strides = [1, 1, 1]} : vector<34x16x128xf32> to vector<16x16x128xf32>
    %560 = vector.shape_cast %558 : vector<1x128xf32> to vector<1x1x128xf32>
    %561 = vector.broadcast %560 : vector<1x1x128xf32> to vector<16x16x128xf32>
    %562 = arith.mulf %559, %561 : vector<16x16x128xf32>
    %563 = arith.addf %557, %562 : vector<16x16x128xf32>
    %c46 = arith.constant 46 : index
    %c0_245 = arith.constant 0 : index
    %564 = vector.load %arg17[%c46, %c0_245] : memref<49x128xf32, #tpu.memory_space<vmem>>, vector<1x128xf32>
    %565 = vector.extract_strided_slice %527 {offsets = [18, 0, 0], sizes = [16, 16, 128], strides = [1, 1, 1]} : vector<34x16x128xf32> to vector<16x16x128xf32>
    %566 = vector.shape_cast %564 : vector<1x128xf32> to vector<1x1x128xf32>
    %567 = vector.broadcast %566 : vector<1x1x128xf32> to vector<16x16x128xf32>
    %568 = arith.mulf %565, %567 : vector<16x16x128xf32>
    %569 = arith.addf %563, %568 : vector<16x16x128xf32>
    %c0_246 = arith.constant 0 : index
    %c22_247 = arith.constant 22 : index
    %c0_248 = arith.constant 0 : index
    %570 = vector.load %arg14[%c0_246, %c22_247, %c0_248] : memref<34x48x128xf32, #tpu.memory_space<vmem>>, vector<34x16x128xf32>
    %c5_249 = arith.constant 5 : index
    %c0_250 = arith.constant 0 : index
    %571 = vector.load %arg17[%c5_249, %c0_250] : memref<49x128xf32, #tpu.memory_space<vmem>>, vector<1x128xf32>
    %572 = vector.extract_strided_slice %570 {offsets = [0, 0, 0], sizes = [16, 16, 128], strides = [1, 1, 1]} : vector<34x16x128xf32> to vector<16x16x128xf32>
    %573 = vector.shape_cast %571 : vector<1x128xf32> to vector<1x1x128xf32>
    %574 = vector.broadcast %573 : vector<1x1x128xf32> to vector<16x16x128xf32>
    %575 = arith.mulf %572, %574 : vector<16x16x128xf32>
    %576 = arith.addf %569, %575 : vector<16x16x128xf32>
    %c12_251 = arith.constant 12 : index
    %c0_252 = arith.constant 0 : index
    %577 = vector.load %arg17[%c12_251, %c0_252] : memref<49x128xf32, #tpu.memory_space<vmem>>, vector<1x128xf32>
    %578 = vector.extract_strided_slice %570 {offsets = [3, 0, 0], sizes = [16, 16, 128], strides = [1, 1, 1]} : vector<34x16x128xf32> to vector<16x16x128xf32>
    %579 = vector.shape_cast %577 : vector<1x128xf32> to vector<1x1x128xf32>
    %580 = vector.broadcast %579 : vector<1x1x128xf32> to vector<16x16x128xf32>
    %581 = arith.mulf %578, %580 : vector<16x16x128xf32>
    %582 = arith.addf %576, %581 : vector<16x16x128xf32>
    %c19_253 = arith.constant 19 : index
    %c0_254 = arith.constant 0 : index
    %583 = vector.load %arg17[%c19_253, %c0_254] : memref<49x128xf32, #tpu.memory_space<vmem>>, vector<1x128xf32>
    %584 = vector.extract_strided_slice %570 {offsets = [6, 0, 0], sizes = [16, 16, 128], strides = [1, 1, 1]} : vector<34x16x128xf32> to vector<16x16x128xf32>
    %585 = vector.shape_cast %583 : vector<1x128xf32> to vector<1x1x128xf32>
    %586 = vector.broadcast %585 : vector<1x1x128xf32> to vector<16x16x128xf32>
    %587 = arith.mulf %584, %586 : vector<16x16x128xf32>
    %588 = arith.addf %582, %587 : vector<16x16x128xf32>
    %c26 = arith.constant 26 : index
    %c0_255 = arith.constant 0 : index
    %589 = vector.load %arg17[%c26, %c0_255] : memref<49x128xf32, #tpu.memory_space<vmem>>, vector<1x128xf32>
    %590 = vector.extract_strided_slice %570 {offsets = [9, 0, 0], sizes = [16, 16, 128], strides = [1, 1, 1]} : vector<34x16x128xf32> to vector<16x16x128xf32>
    %591 = vector.shape_cast %589 : vector<1x128xf32> to vector<1x1x128xf32>
    %592 = vector.broadcast %591 : vector<1x1x128xf32> to vector<16x16x128xf32>
    %593 = arith.mulf %590, %592 : vector<16x16x128xf32>
    %594 = arith.addf %588, %593 : vector<16x16x128xf32>
    %c33 = arith.constant 33 : index
    %c0_256 = arith.constant 0 : index
    %595 = vector.load %arg17[%c33, %c0_256] : memref<49x128xf32, #tpu.memory_space<vmem>>, vector<1x128xf32>
    %596 = vector.extract_strided_slice %570 {offsets = [12, 0, 0], sizes = [16, 16, 128], strides = [1, 1, 1]} : vector<34x16x128xf32> to vector<16x16x128xf32>
    %597 = vector.shape_cast %595 : vector<1x128xf32> to vector<1x1x128xf32>
    %598 = vector.broadcast %597 : vector<1x1x128xf32> to vector<16x16x128xf32>
    %599 = arith.mulf %596, %598 : vector<16x16x128xf32>
    %600 = arith.addf %594, %599 : vector<16x16x128xf32>
    %c40 = arith.constant 40 : index
    %c0_257 = arith.constant 0 : index
    %601 = vector.load %arg17[%c40, %c0_257] : memref<49x128xf32, #tpu.memory_space<vmem>>, vector<1x128xf32>
    %602 = vector.extract_strided_slice %570 {offsets = [15, 0, 0], sizes = [16, 16, 128], strides = [1, 1, 1]} : vector<34x16x128xf32> to vector<16x16x128xf32>
    %603 = vector.shape_cast %601 : vector<1x128xf32> to vector<1x1x128xf32>
    %604 = vector.broadcast %603 : vector<1x1x128xf32> to vector<16x16x128xf32>
    %605 = arith.mulf %602, %604 : vector<16x16x128xf32>
    %606 = arith.addf %600, %605 : vector<16x16x128xf32>
    %c47 = arith.constant 47 : index
    %c0_258 = arith.constant 0 : index
    %607 = vector.load %arg17[%c47, %c0_258] : memref<49x128xf32, #tpu.memory_space<vmem>>, vector<1x128xf32>
    %608 = vector.extract_strided_slice %570 {offsets = [18, 0, 0], sizes = [16, 16, 128], strides = [1, 1, 1]} : vector<34x16x128xf32> to vector<16x16x128xf32>
    %609 = vector.shape_cast %607 : vector<1x128xf32> to vector<1x1x128xf32>
    %610 = vector.broadcast %609 : vector<1x1x128xf32> to vector<16x16x128xf32>
    %611 = arith.mulf %608, %610 : vector<16x16x128xf32>
    %612 = arith.addf %606, %611 : vector<16x16x128xf32>
    %c0_259 = arith.constant 0 : index
    %c25_260 = arith.constant 25 : index
    %c0_261 = arith.constant 0 : index
    %613 = vector.load %arg14[%c0_259, %c25_260, %c0_261] : memref<34x48x128xf32, #tpu.memory_space<vmem>>, vector<34x16x128xf32>
    %c6_262 = arith.constant 6 : index
    %c0_263 = arith.constant 0 : index
    %614 = vector.load %arg17[%c6_262, %c0_263] : memref<49x128xf32, #tpu.memory_space<vmem>>, vector<1x128xf32>
    %615 = vector.extract_strided_slice %613 {offsets = [0, 0, 0], sizes = [16, 16, 128], strides = [1, 1, 1]} : vector<34x16x128xf32> to vector<16x16x128xf32>
    %616 = vector.shape_cast %614 : vector<1x128xf32> to vector<1x1x128xf32>
    %617 = vector.broadcast %616 : vector<1x1x128xf32> to vector<16x16x128xf32>
    %618 = arith.mulf %615, %617 : vector<16x16x128xf32>
    %619 = arith.addf %612, %618 : vector<16x16x128xf32>
    %c13_264 = arith.constant 13 : index
    %c0_265 = arith.constant 0 : index
    %620 = vector.load %arg17[%c13_264, %c0_265] : memref<49x128xf32, #tpu.memory_space<vmem>>, vector<1x128xf32>
    %621 = vector.extract_strided_slice %613 {offsets = [3, 0, 0], sizes = [16, 16, 128], strides = [1, 1, 1]} : vector<34x16x128xf32> to vector<16x16x128xf32>
    %622 = vector.shape_cast %620 : vector<1x128xf32> to vector<1x1x128xf32>
    %623 = vector.broadcast %622 : vector<1x1x128xf32> to vector<16x16x128xf32>
    %624 = arith.mulf %621, %623 : vector<16x16x128xf32>
    %625 = arith.addf %619, %624 : vector<16x16x128xf32>
    %c20_266 = arith.constant 20 : index
    %c0_267 = arith.constant 0 : index
    %626 = vector.load %arg17[%c20_266, %c0_267] : memref<49x128xf32, #tpu.memory_space<vmem>>, vector<1x128xf32>
    %627 = vector.extract_strided_slice %613 {offsets = [6, 0, 0], sizes = [16, 16, 128], strides = [1, 1, 1]} : vector<34x16x128xf32> to vector<16x16x128xf32>
    %628 = vector.shape_cast %626 : vector<1x128xf32> to vector<1x1x128xf32>
    %629 = vector.broadcast %628 : vector<1x1x128xf32> to vector<16x16x128xf32>
    %630 = arith.mulf %627, %629 : vector<16x16x128xf32>
    %631 = arith.addf %625, %630 : vector<16x16x128xf32>
    %c27 = arith.constant 27 : index
    %c0_268 = arith.constant 0 : index
    %632 = vector.load %arg17[%c27, %c0_268] : memref<49x128xf32, #tpu.memory_space<vmem>>, vector<1x128xf32>
    %633 = vector.extract_strided_slice %613 {offsets = [9, 0, 0], sizes = [16, 16, 128], strides = [1, 1, 1]} : vector<34x16x128xf32> to vector<16x16x128xf32>
    %634 = vector.shape_cast %632 : vector<1x128xf32> to vector<1x1x128xf32>
    %635 = vector.broadcast %634 : vector<1x1x128xf32> to vector<16x16x128xf32>
    %636 = arith.mulf %633, %635 : vector<16x16x128xf32>
    %637 = arith.addf %631, %636 : vector<16x16x128xf32>
    %c34 = arith.constant 34 : index
    %c0_269 = arith.constant 0 : index
    %638 = vector.load %arg17[%c34, %c0_269] : memref<49x128xf32, #tpu.memory_space<vmem>>, vector<1x128xf32>
    %639 = vector.extract_strided_slice %613 {offsets = [12, 0, 0], sizes = [16, 16, 128], strides = [1, 1, 1]} : vector<34x16x128xf32> to vector<16x16x128xf32>
    %640 = vector.shape_cast %638 : vector<1x128xf32> to vector<1x1x128xf32>
    %641 = vector.broadcast %640 : vector<1x1x128xf32> to vector<16x16x128xf32>
    %642 = arith.mulf %639, %641 : vector<16x16x128xf32>
    %643 = arith.addf %637, %642 : vector<16x16x128xf32>
    %c41 = arith.constant 41 : index
    %c0_270 = arith.constant 0 : index
    %644 = vector.load %arg17[%c41, %c0_270] : memref<49x128xf32, #tpu.memory_space<vmem>>, vector<1x128xf32>
    %645 = vector.extract_strided_slice %613 {offsets = [15, 0, 0], sizes = [16, 16, 128], strides = [1, 1, 1]} : vector<34x16x128xf32> to vector<16x16x128xf32>
    %646 = vector.shape_cast %644 : vector<1x128xf32> to vector<1x1x128xf32>
    %647 = vector.broadcast %646 : vector<1x1x128xf32> to vector<16x16x128xf32>
    %648 = arith.mulf %645, %647 : vector<16x16x128xf32>
    %649 = arith.addf %643, %648 : vector<16x16x128xf32>
    %c48 = arith.constant 48 : index
    %c0_271 = arith.constant 0 : index
    %650 = vector.load %arg17[%c48, %c0_271] : memref<49x128xf32, #tpu.memory_space<vmem>>, vector<1x128xf32>
    %651 = vector.extract_strided_slice %613 {offsets = [18, 0, 0], sizes = [16, 16, 128], strides = [1, 1, 1]} : vector<34x16x128xf32> to vector<16x16x128xf32>
    %652 = vector.shape_cast %650 : vector<1x128xf32> to vector<1x1x128xf32>
    %653 = vector.broadcast %652 : vector<1x1x128xf32> to vector<16x16x128xf32>
    %654 = arith.mulf %651, %653 : vector<16x16x128xf32>
    %655 = arith.addf %649, %654 : vector<16x16x128xf32>
    %c0_272 = arith.constant 0 : index
    %c0_273 = arith.constant 0 : index
    %656 = vector.load %arg18[%c0_272, %c0_273] : memref<1x128xf32, #tpu.memory_space<vmem>>, vector<1x128xf32>
    %657 = vector.shape_cast %656 : vector<1x128xf32> to vector<1x1x128xf32>
    %658 = vector.broadcast %657 : vector<1x1x128xf32> to vector<16x16x128xf32>
    %659 = arith.addf %655, %658 : vector<16x16x128xf32>
    %cst_274 = arith.constant 5.000000e-01 : f32
    %660 = vector.broadcast %cst_274 : f32 to vector<16x16x128xf32>
    %661 = arith.mulf %660, %659 : vector<16x16x128xf32>
    %cst_275 = arith.constant 0.707106769 : f32
    %662 = vector.broadcast %cst_275 : f32 to vector<16x16x128xf32>
    %663 = arith.mulf %659, %662 : vector<16x16x128xf32>
    %cst_276 = arith.constant 0.000000e+00 : f32
    %664 = vector.broadcast %cst_276 : f32 to vector<16x16x128xf32>
    %665 = arith.cmpf oge, %663, %664 : vector<16x16x128xf32>
    %cst_277 = arith.constant 1.000000e+00 : f32
    %cst_278 = arith.constant -1.000000e+00 : f32
    %666 = vector.broadcast %cst_277 : f32 to vector<16x16x128xf32>
    %667 = vector.broadcast %cst_278 : f32 to vector<16x16x128xf32>
    %668 = arith.select %665, %666, %667 : vector<16x16x128xi1>, vector<16x16x128xf32>
    %669 = math.absf %663 : vector<16x16x128xf32>
    %cst_279 = arith.constant 0.327591091 : f32
    %670 = vector.broadcast %cst_279 : f32 to vector<16x16x128xf32>
    %671 = arith.mulf %670, %669 : vector<16x16x128xf32>
    %cst_280 = arith.constant 1.000000e+00 : f32
    %672 = vector.broadcast %cst_280 : f32 to vector<16x16x128xf32>
    %673 = arith.addf %672, %671 : vector<16x16x128xf32>
    %674 = tpu.reciprocal %673 {approx = true} : vector<16x16x128xf32> -> vector<16x16x128xf32>
    %675 = arith.mulf %673, %674 : vector<16x16x128xf32>
    %cst_281 = arith.constant 2.000000e+00 : f32
    %676 = vector.broadcast %cst_281 : f32 to vector<16x16x128xf32>
    %677 = arith.subf %676, %675 : vector<16x16x128xf32>
    %678 = arith.mulf %674, %677 : vector<16x16x128xf32>
    %cst_282 = arith.constant 1.06140542 : f32
    %679 = vector.broadcast %cst_282 : f32 to vector<16x16x128xf32>
    %680 = arith.mulf %679, %678 : vector<16x16x128xf32>
    %cst_283 = arith.constant -1.45315206 : f32
    %681 = vector.broadcast %cst_283 : f32 to vector<16x16x128xf32>
    %682 = arith.addf %680, %681 : vector<16x16x128xf32>
    %683 = arith.mulf %682, %678 : vector<16x16x128xf32>
    %cst_284 = arith.constant 1.42141378 : f32
    %684 = vector.broadcast %cst_284 : f32 to vector<16x16x128xf32>
    %685 = arith.addf %683, %684 : vector<16x16x128xf32>
    %686 = arith.mulf %685, %678 : vector<16x16x128xf32>
    %cst_285 = arith.constant -0.284496725 : f32
    %687 = vector.broadcast %cst_285 : f32 to vector<16x16x128xf32>
    %688 = arith.addf %686, %687 : vector<16x16x128xf32>
    %689 = arith.mulf %688, %678 : vector<16x16x128xf32>
    %cst_286 = arith.constant 0.254829586 : f32
    %690 = vector.broadcast %cst_286 : f32 to vector<16x16x128xf32>
    %691 = arith.addf %689, %690 : vector<16x16x128xf32>
    %692 = arith.mulf %691, %678 : vector<16x16x128xf32>
    %cst_287 = arith.constant 0.000000e+00 : f32
    %693 = vector.broadcast %cst_287 : f32 to vector<16x16x128xf32>
    %694 = arith.subf %693, %669 : vector<16x16x128xf32>
    %695 = arith.mulf %694, %669 : vector<16x16x128xf32>
    %696 = math.exp %695 : vector<16x16x128xf32>
    %697 = arith.mulf %692, %696 : vector<16x16x128xf32>
    %cst_288 = arith.constant 1.000000e+00 : f32
    %698 = vector.broadcast %cst_288 : f32 to vector<16x16x128xf32>
    %699 = arith.subf %698, %697 : vector<16x16x128xf32>
    %700 = arith.mulf %668, %699 : vector<16x16x128xf32>
    %cst_289 = arith.constant 1.000000e+00 : f32
    %701 = vector.broadcast %cst_289 : f32 to vector<16x16x128xf32>
    %702 = arith.addf %701, %700 : vector<16x16x128xf32>
    %703 = arith.mulf %661, %702 : vector<16x16x128xf32>
    %704 = vector.shape_cast %703 : vector<16x16x128xf32> to vector<256x128xf32>
    %c0_290 = arith.constant 0 : index
    %c0_291 = arith.constant 0 : index
    %705 = vector.load %arg10[%c0_290, %c0_291] : memref<128x128xf32, #tpu.memory_space<vmem>>, vector<128x128xf32>
    %cst_292 = arith.constant dense<0.000000e+00> : vector<256x128xf32>
    %706 = tpu.matmul %704, %705, %cst_292 {dimension_numbers = #tpu.dot_dimension_numbers<[1], [0], [0], [1], [0, 0, 1, 1], [], []>} : vector<256x128xf32>, vector<128x128xf32>, vector<256x128xf32> -> vector<256x128xf32>
    %c0_293 = arith.constant 0 : index
    %c0_294 = arith.constant 0 : index
    %707 = vector.load %arg11[%c0_293, %c0_294] : memref<1x128xf32, #tpu.memory_space<vmem>>, vector<1x128xf32>
    %708 = vector.broadcast %707 : vector<1x128xf32> to vector<256x128xf32>
    %709 = arith.addf %706, %708 : vector<256x128xf32>
    %710 = vector.shape_cast %709 : vector<256x128xf32> to vector<16x16x128xf32>
    %711 = arith.mulf %1, %710 : vector<16x16x128xf32>
    %c0_295 = arith.constant 0 : index
    %c0_296 = arith.constant 0 : index
    %c0_297 = arith.constant 0 : index
    %c0_298 = arith.constant 0 : index
    %712 = vector.load %arg12[%c0_295, %c0_296, %c0_297, %c0_298] : memref<1x16x16x128xf32, #tpu.memory_space<vmem>>, vector<1x16x16x128xf32>
    %713 = vector.shape_cast %712 : vector<1x16x16x128xf32> to vector<16x16x128xf32>
    %714 = vector.shape_cast %711 : vector<16x16x128xf32> to vector<1x16x16x128xf32>
    tpu.vector_store %arg12[%c0_295, %c0_296, %c0_297, %c0_298], %714 {strides = array<i32>} : memref<1x16x16x128xf32, #tpu.memory_space<vmem>>, vector<1x16x16x128xf32>,
    return
  }
  func.func @transform_0(%arg0: i32) -> (i32, i32, i32, i32) {
    %c0_i32 = arith.constant 0 : i32
    %c0_i32_0 = arith.constant 0 : i32
    %c0_i32_1 = arith.constant 0 : i32
    %c0_i32_2 = arith.constant 0 : i32
    return %arg0, %c0_i32, %c0_i32_0, %c0_i32_1 : i32, i32, i32, i32
  }
  func.func @transform_1(%arg0: i32) -> (i32, i32) {
    %c0_i32 = arith.constant 0 : i32
    %c0_i32_0 = arith.constant 0 : i32
    %c0_i32_1 = arith.constant 0 : i32
    return %c0_i32, %c0_i32_0 : i32, i32
  }
  func.func @transform_2(%arg0: i32) -> (i32, i32) {
    %c0_i32 = arith.constant 0 : i32
    %c0_i32_0 = arith.constant 0 : i32
    %c0_i32_1 = arith.constant 0 : i32
    return %c0_i32, %c0_i32_0 : i32, i32
  }
  func.func @transform_3(%arg0: i32) -> (i32, i32, i32) {
    %c0_i32 = arith.constant 0 : i32
    %c0_i32_0 = arith.constant 0 : i32
    %c0_i32_1 = arith.constant 0 : i32
    %c0_i32_2 = arith.constant 0 : i32
    return %c0_i32, %c0_i32_0, %c0_i32_1 : i32, i32, i32
  }
  func.func @transform_4(%arg0: i32) -> (i32, i32) {
    %c0_i32 = arith.constant 0 : i32
    %c0_i32_0 = arith.constant 0 : i32
    %c0_i32_1 = arith.constant 0 : i32
    return %c0_i32, %c0_i32_0 : i32, i32
  }
  func.func @transform_5(%arg0: i32) -> (i32, i32) {
    %c0_i32 = arith.constant 0 : i32
    %c0_i32_0 = arith.constant 0 : i32
    %c0_i32_1 = arith.constant 0 : i32
    return %c0_i32, %c0_i32_0 : i32, i32
  }
  func.func @transform_6(%arg0: i32) -> (i32, i32) {
    %c0_i32 = arith.constant 0 : i32
    %c0_i32_0 = arith.constant 0 : i32
    %c0_i32_1 = arith.constant 0 : i32
    return %c0_i32, %c0_i32_0 : i32, i32
  }
  func.func @transform_7(%arg0: i32) -> (i32, i32, i32) {
    %c0_i32 = arith.constant 0 : i32
    %c0_i32_0 = arith.constant 0 : i32
    %c0_i32_1 = arith.constant 0 : i32
    %c0_i32_2 = arith.constant 0 : i32
    return %c0_i32, %c0_i32_0, %c0_i32_1 : i32, i32, i32
  }
  func.func @transform_8(%arg0: i32) -> (i32, i32) {
    %c0_i32 = arith.constant 0 : i32
    %c0_i32_0 = arith.constant 0 : i32
    %c0_i32_1 = arith.constant 0 : i32
    return %c0_i32, %c0_i32_0 : i32, i32
  }
  func.func @transform_9(%arg0: i32) -> (i32, i32) {
    %c0_i32 = arith.constant 0 : i32
    %c0_i32_0 = arith.constant 0 : i32
    %c0_i32_1 = arith.constant 0 : i32
    return %c0_i32, %c0_i32_0 : i32, i32
  }
  func.func @transform_10(%arg0: i32) -> (i32, i32) {
    %c0_i32 = arith.constant 0 : i32
    %c0_i32_0 = arith.constant 0 : i32
    %c0_i32_1 = arith.constant 0 : i32
    return %c0_i32, %c0_i32_0 : i32, i32
  }
  func.func @transform_11(%arg0: i32) -> (i32, i32, i32, i32) {
    %c0_i32 = arith.constant 0 : i32
    %c0_i32_0 = arith.constant 0 : i32
    %c0_i32_1 = arith.constant 0 : i32
    %c0_i32_2 = arith.constant 0 : i32
    return %arg0, %c0_i32, %c0_i32_0, %c0_i32_1 : i32, i32, i32, i32
  }
}

</mosaic_0001>

<llo_original>
// kernel: tpu_custom_call.1
$region0: #{tpu_custom_call.1}
  #allocation0 [shape = 'u32[]', space=smem, size = 0x4, offset = 0x4, fixed_abs, tag = 'smem constant byte address 0x4 - core index']
  #allocation1 [shape = 'u32[144,128]{1,0:T(1,128)}', space=vmem, size = 0x12000, scoped, tag = 'internal scratch']
  #allocation2 [shape = 'f32[20,32,128]{2,1,0:T(8,128)}', space=vmem, size = 0x50000, scoped, tag = 'scratch operand']
  #allocation3 [shape = 'f32[34,48,128]{2,1,0:T(8,128)}', space=vmem, size = 0xcc000, scoped, tag = 'scratch operand']
  #allocation4 [shape = 'f32[25,128]{1,0:T(8,128)}', space=vmem, size = 0x4000, scoped, tag = 'scratch operand']
  #allocation5 [shape = 'f32[1,128]{1,0:T(1,128)}', space=vmem, size = 0x200, scoped, tag = 'scratch operand']
  #allocation6 [shape = 'f32[49,128]{1,0:T(8,128)}', space=vmem, size = 0x7000, scoped, tag = 'scratch operand']
  #allocation7 [shape = 'f32[1,128]{1,0:T(1,128)}', space=vmem, size = 0x200, scoped, tag = 'scratch operand']
  %s0 = inlined_call_operand.vmem [shape: f32[2,16,16,128], index: 0, kind: input, shape index: {}]
  %s1 = inlined_call_operand.vmem [shape: f32[4,128], index: 1, kind: input, shape index: {}]
  %s2 = inlined_call_operand.vmem [shape: f32[4,1], index: 2, kind: input, shape index: {}]
  %s3 = inlined_call_operand.vmem [shape: f32[4,25,128], index: 3, kind: input, shape index: {}]
  %s4 = inlined_call_operand.vmem [shape: f32[4,128], index: 4, kind: input, shape index: {}]
  %s5 = inlined_call_operand.vmem [shape: f32[4,128], index: 5, kind: input, shape index: {}]
  %s6 = inlined_call_operand.vmem [shape: f32[4,1], index: 6, kind: input, shape index: {}]
  %s7 = inlined_call_operand.vmem [shape: f32[4,49,128], index: 7, kind: input, shape index: {}]
  %s8 = inlined_call_operand.vmem [shape: f32[4,128], index: 8, kind: input, shape index: {}]
  %s9 = inlined_call_operand.vmem [shape: f32[128,128], index: 9, kind: input, shape index: {}]
  %s10 = inlined_call_operand.vmem [shape: f32[1,128], index: 10, kind: input, shape index: {}]
  %s11 = inlined_call_operand.hbm [shape: f32[2,16,16,128], index: 11, kind: output, shape index: {}]
  %s12 = sld [smem:[#allocation0]]
  $region77: #{tpu_custom_call.1} parent=0
    _
  %s14 = ssub.s32 1, %s12
  %s15 = scalar_select 0, %s14, %s12
  $region1: #{tpu_custom_call.1} parent=0
    #allocation8 [shape = 'u8[262144]{0}', space=vmem, size = 0x40000, scoped, tag = 'output window, operand 0']
    #allocation9 [shape = 's32[2]{0}', space=sflag, size = 0x8, scoped, tag = 'scoped memory for tpu_custom_call.1']
    %16 = vsyncpa [#allocation9], 0
    %s17 = scalar_lea.sflag [#allocation9], 1
    %18 = vsyncpa %s17, 0
    loop: start=0, step=1, limit=4
    $region2: #{tpu_custom_call.1} parent=1 // loop_pre_header
      _
    $region3: #{tpu_custom_call.1} parent=1 // loop_header
      %s20 = sphi 0, %s24
      %p21 = scmp.ge.s32.totalorder %s20, 4
      %s30 = sphi 0, %s32
      %s33 = sphi 0, %s30
      %s34 = sphi 0, %s33
      %s50 = sphi 0, %s34
      %s54 = sphi 0, %s54
      %s56 = sphi 0, %s54
      %s57 = sphi 0, %s56
      %s71 = sphi 0, %s57
      %s75 = sphi 0, %s75
      %s77 = sphi 0, %s75
      %s78 = sphi 0, %s77
      %s92 = sphi 0, %s78
      %s96 = sphi 0, %s96
      %s98 = sphi 0, %s96
      %s99 = sphi 0, %s98
      %s113 = sphi 0, %s99
      %s117 = sphi 0, %s117
      %s119 = sphi 0, %s117
      %s120 = sphi 0, %s119
      %s134 = sphi 0, %s120
      %s138 = sphi 0, %s138
      %s140 = sphi 0, %s138
      %s141 = sphi 0, %s140
      %s155 = sphi 0, %s141
      %s159 = sphi 0, %s159
      %s161 = sphi 0, %s159
      %s162 = sphi 0, %s161
      %s176 = sphi 0, %s162
      %s180 = sphi 0, %s180
      %s182 = sphi 0, %s180
      %s183 = sphi 0, %s182
      %s197 = sphi 0, %s183
      %s201 = sphi 0, %s201
      %s203 = sphi 0, %s201
      %s204 = sphi 0, %s203
      %s218 = sphi 0, %s204
      %s222 = sphi 0, %s222
      %s224 = sphi 0, %s222
      %s225 = sphi 0, %s224
      %s239 = sphi 0, %s225
      %s243 = sphi 0, %s243
      %s245 = sphi 0, %s243
      %s246 = sphi 0, %s245
      %s260 = sphi 0, %s246
      %s266 = sphi 0, %s268
      %s269 = sphi 0, %s266
      %s270 = sphi 0, %s269
      %s286 = sphi 0, %s270
    $region4: #{tpu_custom_call.1} parent=1 // loop_header_branch
      %23 = sbr.rel (%p21) target = $region8
    $region5: #{tpu_custom_call.1} parent=1 // loop_body
      %s25 = ssub.s32 %s20, 1
      %s26 = ssub.s32 %s20, 2
      %s27 = sadd.s32 %s20, 1
      %s28 = ssub.s32 %s20, %s27
      %p29 = scmp.eq.s32.totalorder %s28, 0
      %s31 = sadd.s32 %s30, 1
      %s32 = scalar_select %p29, %s30, %s31
      %p35 = pneg %p29
      %p36 = scmp.eq.s32.totalorder %s20, 1
      %p37 = por %p35, %p36
      %p38 = scmp.ne.s32.totalorder %s30, %s33
      %p39 = scmp.eq.s32.totalorder %s20, 0
      %p40 = por %p38, %p39
      %p41 = scmp.ne.s32.totalorder %s30, %s33
      %p42 = scmp.eq.s32.totalorder %s25, 1
      %p43 = por %p41, %p42
      %p44 = scmp.ne.s32.totalorder %s33, %s34
      %p45 = scmp.eq.s32.totalorder %s25, 0
      %p46 = por %p44, %p45
      %p47 = scmp.ne.s32.totalorder %s33, %s34
      %p48 = scmp.eq.s32.totalorder %s26, 1
      %p49 = por %p47, %p48
      %p51 = scmp.ne.s32.totalorder %s34, %s50
      %p52 = scmp.eq.s32.totalorder %s26, 0
      %p53 = por %p51, %p52
      %s55 = sadd.s32 %s54, 1
      %p58 = scmp.eq.s32.totalorder %s20, 1
      %p59 = scmp.ne.s32.totalorder %s54, %s56
      %p60 = scmp.eq.s32.totalorder %s20, 0
      %p61 = por %p59, %p60
      %p62 = scmp.ne.s32.totalorder %s54, %s56
      %p63 = scmp.eq.s32.totalorder %s25, 1
      %p64 = por %p62, %p63
      %p65 = scmp.ne.s32.totalorder %s56, %s57
      %p66 = scmp.eq.s32.totalorder %s25, 0
      %p67 = por %p65, %p66
      %p68 = scmp.ne.s32.totalorder %s56, %s57
      %p69 = scmp.eq.s32.totalorder %s26, 1
      %p70 = por %p68, %p69
      %p72 = scmp.ne.s32.totalorder %s57, %s71
      %p73 = scmp.eq.s32.totalorder %s26, 0
      %p74 = por %p72, %p73
      %s76 = sadd.s32 %s75, 1
      %p79 = scmp.eq.s32.totalorder %s20, 1
      %p80 = scmp.ne.s32.totalorder %s75, %s77
      %p81 = scmp.eq.s32.totalorder %s20, 0
      %p82 = por %p80, %p81
      %p83 = scmp.ne.s32.totalorder %s75, %s77
      %p84 = scmp.eq.s32.totalorder %s25, 1
      %p85 = por %p83, %p84
      %p86 = scmp.ne.s32.totalorder %s77, %s78
      %p87 = scmp.eq.s32.totalorder %s25, 0
      %p88 = por %p86, %p87
      %p89 = scmp.ne.s32.totalorder %s77, %s78
      %p90 = scmp.eq.s32.totalorder %s26, 1
      %p91 = por %p89, %p90
      %p93 = scmp.ne.s32.totalorder %s78, %s92
      %p94 = scmp.eq.s32.totalorder %s26, 0
      %p95 = por %p93, %p94
      %s97 = sadd.s32 %s96, 1
      %p100 = scmp.eq.s32.totalorder %s20, 1
      %p101 = scmp.ne.s32.totalorder %s96, %s98
      %p102 = scmp.eq.s32.totalorder %s20, 0
      %p103 = por %p101, %p102
      %p104 = scmp.ne.s32.totalorder %s96, %s98
      %p105 = scmp.eq.s32.totalorder %s25, 1
      %p106 = por %p104, %p105
      %p107 = scmp.ne.s32.totalorder %s98, %s99
      %p108 = scmp.eq.s32.totalorder %s25, 0
      %p109 = por %p107, %p108
      %p110 = scmp.ne.s32.totalorder %s98, %s99
      %p111 = scmp.eq.s32.totalorder %s26, 1
      %p112 = por %p110, %p111
      %p114 = scmp.ne.s32.totalorder %s99, %s113
      %p115 = scmp.eq.s32.totalorder %s26, 0
      %p116 = por %p114, %p115
      %s118 = sadd.s32 %s117, 1
      %p121 = scmp.eq.s32.totalorder %s20, 1
      %p122 = scmp.ne.s32.totalorder %s117, %s119
      %p123 = scmp.eq.s32.totalorder %s20, 0
      %p124 = por %p122, %p123
      %p125 = scmp.ne.s32.totalorder %s117, %s119
      %p126 = scmp.eq.s32.totalorder %s25, 1
      %p127 = por %p125, %p126
      %p128 = scmp.ne.s32.totalorder %s119, %s120
      %p129 = scmp.eq.s32.totalorder %s25, 0
      %p130 = por %p128, %p129
      %p131 = scmp.ne.s32.totalorder %s119, %s120
      %p132 = scmp.eq.s32.totalorder %s26, 1
      %p133 = por %p131, %p132
      %p135 = scmp.ne.s32.totalorder %s120, %s134
      %p136 = scmp.eq.s32.totalorder %s26, 0
      %p137 = por %p135, %p136
      %s139 = sadd.s32 %s138, 1
      %p142 = scmp.eq.s32.totalorder %s20, 1
      %p143 = scmp.ne.s32.totalorder %s138, %s140
      %p144 = scmp.eq.s32.totalorder %s20, 0
      %p145 = por %p143, %p144
      %p146 = scmp.ne.s32.totalorder %s138, %s140
      %p147 = scmp.eq.s32.totalorder %s25, 1
      %p148 = por %p146, %p147
      %p149 = scmp.ne.s32.totalorder %s140, %s141
      %p150 = scmp.eq.s32.totalorder %s25, 0
      %p151 = por %p149, %p150
      %p152 = scmp.ne.s32.totalorder %s140, %s141
      %p153 = scmp.eq.s32.totalorder %s26, 1
      %p154 = por %p152, %p153
      %p156 = scmp.ne.s32.totalorder %s141, %s155
      %p157 = scmp.eq.s32.totalorder %s26, 0
      %p158 = por %p156, %p157
      %s160 = sadd.s32 %s159, 1
      %p163 = scmp.eq.s32.totalorder %s20, 1
      %p164 = scmp.ne.s32.totalorder %s159, %s161
      %p165 = scmp.eq.s32.totalorder %s20, 0
      %p166 = por %p164, %p165
      %p167 = scmp.ne.s32.totalorder %s159, %s161
      %p168 = scmp.eq.s32.totalorder %s25, 1
      %p169 = por %p167, %p168
      %p170 = scmp.ne.s32.totalorder %s161, %s162
      %p171 = scmp.eq.s32.totalorder %s25, 0
      %p172 = por %p170, %p171
      %p173 = scmp.ne.s32.totalorder %s161, %s162
      %p174 = scmp.eq.s32.totalorder %s26, 1
      %p175 = por %p173, %p174
      %p177 = scmp.ne.s32.totalorder %s162, %s176
      %p178 = scmp.eq.s32.totalorder %s26, 0
      %p179 = por %p177, %p178
      %s181 = sadd.s32 %s180, 1
      %p184 = scmp.eq.s32.totalorder %s20, 1
      %p185 = scmp.ne.s32.totalorder %s180, %s182
      %p186 = scmp.eq.s32.totalorder %s20, 0
      %p187 = por %p185, %p186
      %p188 = scmp.ne.s32.totalorder %s180, %s182
      %p189 = scmp.eq.s32.totalorder %s25, 1
      %p190 = por %p188, %p189
      %p191 = scmp.ne.s32.totalorder %s182, %s183
      %p192 = scmp.eq.s32.totalorder %s25, 0
      %p193 = por %p191, %p192
      %p194 = scmp.ne.s32.totalorder %s182, %s183
      %p195 = scmp.eq.s32.totalorder %s26, 1
      %p196 = por %p194, %p195
      %p198 = scmp.ne.s32.totalorder %s183, %s197
      %p199 = scmp.eq.s32.totalorder %s26, 0
      %p200 = por %p198, %p199
      %s202 = sadd.s32 %s201, 1
      %p205 = scmp.eq.s32.totalorder %s20, 1
      %p206 = scmp.ne.s32.totalorder %s201, %s203
      %p207 = scmp.eq.s32.totalorder %s20, 0
      %p208 = por %p206, %p207
      %p209 = scmp.ne.s32.totalorder %s201, %s203
      %p210 = scmp.eq.s32.totalorder %s25, 1
      %p211 = por %p209, %p210
      %p212 = scmp.ne.s32.totalorder %s203, %s204
      %p213 = scmp.eq.s32.totalorder %s25, 0
      %p214 = por %p212, %p213
      %p215 = scmp.ne.s32.totalorder %s203, %s204
      %p216 = scmp.eq.s32.totalorder %s26, 1
      %p217 = por %p215, %p216
      %p219 = scmp.ne.s32.totalorder %s204, %s218
      %p220 = scmp.eq.s32.totalorder %s26, 0
      %p221 = por %p219, %p220
      %s223 = sadd.s32 %s222, 1
      %p226 = scmp.eq.s32.totalorder %s20, 1
      %p227 = scmp.ne.s32.totalorder %s222, %s224
      %p228 = scmp.eq.s32.totalorder %s20, 0
      %p229 = por %p227, %p228
      %p230 = scmp.ne.s32.totalorder %s222, %s224
      %p231 = scmp.eq.s32.totalorder %s25, 1
      %p232 = por %p230, %p231
      %p233 = scmp.ne.s32.totalorder %s224, %s225
      %p234 = scmp.eq.s32.totalorder %s25, 0
      %p235 = por %p233, %p234
      %p236 = scmp.ne.s32.totalorder %s224, %s225
      %p237 = scmp.eq.s32.totalorder %s26, 1
      %p238 = por %p236, %p237
      %p240 = scmp.ne.s32.totalorder %s225, %s239
      %p241 = scmp.eq.s32.totalorder %s26, 0
      %p242 = por %p240, %p241
      %s244 = sadd.s32 %s243, 1
      %p247 = scmp.eq.s32.totalorder %s20, 1
      %p248 = scmp.ne.s32.totalorder %s243, %s245
      %p249 = scmp.eq.s32.totalorder %s20, 0
      %p250 = por %p248, %p249
      %p251 = scmp.ne.s32.totalorder %s243, %s245
      %p252 = scmp.eq.s32.totalorder %s25, 1
      %p253 = por %p251, %p252
      %p254 = scmp.ne.s32.totalorder %s245, %s246
      %p255 = scmp.eq.s32.totalorder %s25, 0
      %p256 = por %p254, %p255
      %p257 = scmp.ne.s32.totalorder %s245, %s246
      %p258 = scmp.eq.s32.totalorder %s26, 1
      %p259 = por %p257, %p258
      %p261 = scmp.ne.s32.totalorder %s246, %s260
      %p262 = scmp.eq.s32.totalorder %s26, 0
      %p263 = por %p261, %p262
      %s264 = ssub.s32 %s20, %s27
      %p265 = scmp.eq.s32.totalorder %s264, 0
      %s267 = sadd.s32 %s266, 1
      %s268 = scalar_select %p265, %s266, %s267
      %p271 = pneg %p265
      %p272 = scmp.eq.s32.totalorder %s20, 1
      %p273 = por %p271, %p272
      %p274 = scmp.ne.s32.totalorder %s266, %s269
      %p275 = scmp.eq.s32.totalorder %s20, 0
      %p276 = por %p274, %p275
      %p277 = scmp.ne.s32.totalorder %s266, %s269
      %p278 = scmp.eq.s32.totalorder %s25, 1
      %p279 = por %p277, %p278
      %p280 = scmp.ne.s32.totalorder %s269, %s270
      %p281 = scmp.eq.s32.totalorder %s25, 0
      %p282 = por %p280, %p281
      %p283 = scmp.ne.s32.totalorder %s269, %s270
      %p284 = scmp.eq.s32.totalorder %s26, 1
      %p285 = por %p283, %p284
      %p287 = scmp.ne.s32.totalorder %s270, %s286
      %p288 = scmp.eq.s32.totalorder %s26, 0
      %p289 = por %p287, %p288
      %p290 = scmp.le.s32.totalorder 1, %s20
      %p291 = scmp.lt.s32.totalorder %s20, 3
      %p292 = pnand %p290, %p291
      %p293 = pneg %p292
      // Predicated region
      $region9: #{tpu_custom_call.1} parent=5 // pred_check
        _
      $region10: #{tpu_custom_call.1} parent=5 // pred_check_branch
        %295 = sbr.rel (%p292) target = $region12
      $region11: #{tpu_custom_call.1} parent=5 // pred_region
        %s296 = ssub.s32 %s20, 1
        // Predicated region
        $region13: #{tpu_custom_call.1} parent=11 // pred_check
          %p297 = pneg %p67
        $region14: #{tpu_custom_call.1} parent=11 // pred_check_branch
          %299 = sbr.rel (%p297) target = $region16
        $region15: #{tpu_custom_call.1} parent=11 // pred_region
          _
        $region16: #{tpu_custom_call.1} parent=11 // pred_fallthru
          _
        // Predicated region
        $region17: #{tpu_custom_call.1} parent=11 // pred_check
          %p300 = pneg %p88
        $region18: #{tpu_custom_call.1} parent=11 // pred_check_branch
          %302 = sbr.rel (%p300) target = $region20
        $region19: #{tpu_custom_call.1} parent=11 // pred_region
          _
        $region20: #{tpu_custom_call.1} parent=11 // pred_fallthru
          _
        // Predicated region
        $region21: #{tpu_custom_call.1} parent=11 // pred_check
          %p303 = pneg %p109
        $region22: #{tpu_custom_call.1} parent=11 // pred_check_branch
          %305 = sbr.rel (%p303) target = $region24
        $region23: #{tpu_custom_call.1} parent=11 // pred_region
          _
        $region24: #{tpu_custom_call.1} parent=11 // pred_fallthru
          _
        // Predicated region
        $region25: #{tpu_custom_call.1} parent=11 // pred_check
          %p306 = pneg %p130
        $region26: #{tpu_custom_call.1} parent=11 // pred_check_branch
          %308 = sbr.rel (%p306) target = $region28
        $region27: #{tpu_custom_call.1} parent=11 // pred_region
          _
        $region28: #{tpu_custom_call.1} parent=11 // pred_fallthru
          _
        // Predicated region
        $region29: #{tpu_custom_call.1} parent=11 // pred_check
          %p309 = pneg %p151
        $region30: #{tpu_custom_call.1} parent=11 // pred_check_branch
          %311 = sbr.rel (%p309) target = $region32
        $region31: #{tpu_custom_call.1} parent=11 // pred_region
          _
        $region32: #{tpu_custom_call.1} parent=11 // pred_fallthru
          _
        // Predicated region
        $region33: #{tpu_custom_call.1} parent=11 // pred_check
          %p312 = pneg %p172
        $region34: #{tpu_custom_call.1} parent=11 // pred_check_branch
          %314 = sbr.rel (%p312) target = $region36
        $region35: #{tpu_custom_call.1} parent=11 // pred_region
          _
        $region36: #{tpu_custom_call.1} parent=11 // pred_fallthru
          _
        // Predicated region
        $region37: #{tpu_custom_call.1} parent=11 // pred_check
          %p315 = pneg %p193
        $region38: #{tpu_custom_call.1} parent=11 // pred_check_branch
          %317 = sbr.rel (%p315) target = $region40
        $region39: #{tpu_custom_call.1} parent=11 // pred_region
          _
        $region40: #{tpu_custom_call.1} parent=11 // pred_fallthru
          _
        // Predicated region
        $region41: #{tpu_custom_call.1} parent=11 // pred_check
          %p318 = pneg %p214
        $region42: #{tpu_custom_call.1} parent=11 // pred_check_branch
          %320 = sbr.rel (%p318) target = $region44
        $region43: #{tpu_custom_call.1} parent=11 // pred_region
          _
        $region44: #{tpu_custom_call.1} parent=11 // pred_fallthru
          _
        // Predicated region
        $region45: #{tpu_custom_call.1} parent=11 // pred_check
          %p321 = pneg %p235
        $region46: #{tpu_custom_call.1} parent=11 // pred_check_branch
          %323 = sbr.rel (%p321) target = $region48
        $region47: #{tpu_custom_call.1} parent=11 // pred_region
          _
        $region48: #{tpu_custom_call.1} parent=11 // pred_fallthru
          _
        // Predicated region
        $region49: #{tpu_custom_call.1} parent=11 // pred_check
          %p324 = pneg %p256
        $region50: #{tpu_custom_call.1} parent=11 // pred_check_branch
          %326 = sbr.rel (%p324) target = $region52
        $region51: #{tpu_custom_call.1} parent=11 // pred_region
          _
        $region52: #{tpu_custom_call.1} parent=11 // pred_fallthru
          _
      $region12: #{tpu_custom_call.1} parent=5 // pred_fallthru
        _
      %p327 = scmp.lt.s32.totalorder %s20, 2
      // Predicated region
      $region53: #{tpu_custom_call.1} parent=5 // pred_check
        %p328 = pneg %p327
      $region54: #{tpu_custom_call.1} parent=5 // pred_check_branch
        %330 = sbr.rel (%p328) target = $region56
      $region55: #{tpu_custom_call.1} parent=5 // pred_region
        // Predicated region
        $region57: #{tpu_custom_call.1} parent=55 // pred_check
          %p331 = pneg %p40
        $region58: #{tpu_custom_call.1} parent=55 // pred_check_branch
          %333 = sbr.rel (%p331) target = $region60
        $region59: #{tpu_custom_call.1} parent=55 // pred_region
          %p334 = scmp.lt.s32.totalorder %s20, 1
          %s335 = scalar_select %p334, %s20, 1
          %s336 = smul.addr %s335, 32
          %s337 = smul.addr %s336, 8
          %s338 = scalar_lea.vmem %s0, %s337
        $region60: #{tpu_custom_call.1} parent=55 // pred_fallthru
          _
      $region56: #{tpu_custom_call.1} parent=5 // pred_fallthru
        _
      %p339 = scmp.le.s32.totalorder 1, %s20
      %p340 = scmp.lt.s32.totalorder %s20, 3
      %p341 = pnand %p339, %p340
      %p342 = pneg %p341
      // Predicated region
      $region61: #{tpu_custom_call.1} parent=5 // pred_check
        _
      $region62: #{tpu_custom_call.1} parent=5 // pred_check_branch
        %344 = sbr.rel (%p341) target = $region64
      $region63: #{tpu_custom_call.1} parent=5 // pred_region
        %s345 = ssub.s32 %s20, 1
        %p346 = scmp.lt.s32.totalorder %s25, 1
        %s347 = scalar_select %p346, %s25, 1
        %s348 = smul.addr %s347, 32
        %s349 = smul.addr %s348, 8
        %s350 = scalar_lea.vmem %s0, %s349
        %p351 = pneg %p46
        %p352 = pneg %p43
        %p353 = pneg %p67
        %p354 = pneg %p64
        %p355 = pneg %p88
        %p356 = pneg %p85
        %p357 = pneg %p109
        %p358 = pneg %p106
        %p359 = pneg %p130
        %p360 = pneg %p127
        %p361 = pneg %p151
        %p362 = pneg %p148
        %p363 = pneg %p172
        %p364 = pneg %p169
        %p365 = pneg %p193
        %p366 = pneg %p190
        %p367 = pneg %p214
        %p368 = pneg %p211
        %p369 = pneg %p235
        %p370 = pneg %p232
        %p371 = pneg %p256
        %p372 = pneg %p253
        %p373 = pneg %p282
        %p374 = pneg %p279
        %s375 = sand.u32 %s269, 1
        %s376 = scalar_lea.sflag [#allocation9], %s375
        %s377 = sand.u32 %s269, 1
        %s378 = smul.addr %s377, 256
        %s379 = scalar_lea.vmem [#allocation8], %s378
        %p380 = scmp.lt.s32.totalorder %s25, 1
        %s381 = scalar_select %p380, %s25, 1
        %s382 = smul.addr %s381, 32
        %s383 = smul.addr %s382, 8
        %s384 = scalar_lea.vmem %s0, %s383
        %v385 = vld [vmem:[%s384] sm:$0xff]
        %v386 = vld [vmem:[%s384 + $0x8] sm:$0xff]
        %v387 = vld [vmem:[%s384 + $0x10] sm:$0xff]
        %v388 = vld [vmem:[%s384 + $0x18] sm:$0xff]
        %v389 = vld [vmem:[%s384 + $0x20] sm:$0xff]
        %v390 = vld [vmem:[%s384 + $0x28] sm:$0xff]
        %v391 = vld [vmem:[%s384 + $0x30] sm:$0xff]
        %v392 = vld [vmem:[%s384 + $0x38] sm:$0xff]
        %v393 = vld [vmem:[%s384 + $0x40] sm:$0xff]
        %v394 = vld [vmem:[%s384 + $0x48] sm:$0xff]
        %v395 = vld [vmem:[%s384 + $0x50] sm:$0xff]
        %v396 = vld [vmem:[%s384 + $0x58] sm:$0xff]
        %v397 = vld [vmem:[%s384 + $0x60] sm:$0xff]
        %v398 = vld [vmem:[%s384 + $0x68] sm:$0xff]
        %v399 = vld [vmem:[%s384 + $0x70] sm:$0xff]
        %v400 = vld [vmem:[%s384 + $0x78] sm:$0xff]
        %v401 = vld [vmem:[%s384 + $0x80] sm:$0xff]
        %v402 = vld [vmem:[%s384 + $0x88] sm:$0xff]
        %v403 = vld [vmem:[%s384 + $0x90] sm:$0xff]
        %v404 = vld [vmem:[%s384 + $0x98] sm:$0xff]
        %v405 = vld [vmem:[%s384 + $0xa0] sm:$0xff]
        %v406 = vld [vmem:[%s384 + $0xa8] sm:$0xff]
        %v407 = vld [vmem:[%s384 + $0xb0] sm:$0xff]
        %v408 = vld [vmem:[%s384 + $0xb8] sm:$0xff]
        %v409 = vld [vmem:[%s384 + $0xc0] sm:$0xff]
        %v410 = vld [vmem:[%s384 + $0xc8] sm:$0xff]
        %v411 = vld [vmem:[%s384 + $0xd0] sm:$0xff]
        %v412 = vld [vmem:[%s384 + $0xd8] sm:$0xff]
        %v413 = vld [vmem:[%s384 + $0xe0] sm:$0xff]
        %v414 = vld [vmem:[%s384 + $0xe8] sm:$0xff]
        %v415 = vld [vmem:[%s384 + $0xf0] sm:$0xff]
        %v416 = vld [vmem:[%s384 + $0xf8] sm:$0xff]
        %v417 = vadd.f32 %v385, %v387
        %v418 = vadd.f32 %v417, %v389
        %v419 = vadd.f32 %v418, %v391
        %v420 = vadd.f32 %v419, %v393
        %v421 = vadd.f32 %v420, %v395
        %v422 = vadd.f32 %v421, %v397
        %v423 = vadd.f32 %v422, %v399
        %v424 = vadd.f32 %v423, %v401
        %v425 = vadd.f32 %v424, %v403
        %v426 = vadd.f32 %v425, %v405
        %v427 = vadd.f32 %v426, %v407
        %v428 = vadd.f32 %v427, %v409
        %v429 = vadd.f32 %v428, %v411
        %v430 = vadd.f32 %v429, %v413
        %v431 = vadd.f32 %v430, %v415
        %v432 = vadd.f32 %v386, %v388
        %v433 = vadd.f32 %v432, %v390
        %v434 = vadd.f32 %v433, %v392
        %v435 = vadd.f32 %v434, %v394
        %v436 = vadd.f32 %v435, %v396
        %v437 = vadd.f32 %v436, %v398
        %v438 = vadd.f32 %v437, %v400
        %v439 = vadd.f32 %v438, %v402
        %v440 = vadd.f32 %v439, %v404
        %v441 = vadd.f32 %v440, %v406
        %v442 = vadd.f32 %v441, %v408
        %v443 = vadd.f32 %v442, %v410
        %v444 = vadd.f32 %v443, %v412
        %v445 = vadd.f32 %v444, %v414
        %v446 = vadd.f32 %v445, %v416
        %v447 = vrcp.pop 16.0
        %v448 = vmul.f32 %v431, %v447
        %v449 = vmul.f32 %v446, %v447
        %v450 = vadd.f32 %v448, %v449
        %v451 = vrot.slane %v450, 4
        %v452 = vadd.f32 %v450, %v451
        %v453 = vrot.slane %v452, 2
        %v454 = vadd.f32 %v452, %v453
        %v455 = vrot.slane %v454, 1
        %v456 = vadd.f32 %v454, %v455
        %v457 = vmul.f32 %v456, %v447
        %v458 = vld [vmem:[%s1] sm:$0xf]
        %v459 = vmul.f32 %v458, %v457
        %vm460 = vcmask 1043456
        %v461 = vsel %vm460, %v459, 0.0
        %462 = vadd.xlane.f32.xlu0 %v461
        %v463 = vpop.xlane.xlu0 %462
        %v464 = vld [vmem:[%s2] sm:$0xf]
        %v465 = vadd.f32 %v463, %v464
        %v466 = vsub.f32 0.0, %v465
        %v467 = vmul.f32 %v466, 1.442695
        %v468 = vpow.pop %v467
        %v469 = vadd.f32 %v468, 1.0
        %v470 = vrcp.pop %v469
        %v471 = vmul.f32 1.0, %v470
        %v472 = vld [vmem:[%s3] sm:$0xff]
        %v473 = vld [vmem:[%s3 + $0x8] sm:$0xff]
        %v474 = vld [vmem:[%s3 + $0x10] sm:$0xff]
        %v475 = vld [vmem:[%s3 + $0x18] sm:$0x1]
        %s477 = vtos %v471
        %v478 = vstv %s477
        %v480 = vmul.f32 %v478, %v472
        %v481 = vmul.f32 %v478, %v473
        %v482 = vmul.f32 %v478, %v474
        %v483 = vmul.f32 %v478, %v475
        %v484 = vadd.f32 %v480, 0.0
        %v485 = vadd.f32 %v481, 0.0
        %v486 = vadd.f32 %v482, 0.0
        %v487 = vadd.f32 %v483, 0.0
        %v488 = vld [vmem:[%s4] sm:$0x1]
        %489 = vset.pattern.permute.xlu0 0
        %490 = vperm.xlu0 %489, %v471
        %v491 = vpop.permute.xlu0 %490
        %v493 = vmul.f32 %v491, %v488
        %v494 = vadd.f32 %v493, 0.0
        %s495 = scalar_lea.vmem %s3, 32
        %v496 = vld [vmem:[%s495] sm:$0xff]
        %v497 = vld [vmem:[%s495 + $0x8] sm:$0xff]
        %v498 = vld [vmem:[%s495 + $0x10] sm:$0xff]
        %v499 = vld [vmem:[%s495 + $0x18] sm:$0x1]
        %v500 = vrot.slane %v471, 1
        %s501 = vtos %v500
        %v502 = vstv %s501
        %v504 = vmul.f32 %v502, %v496
        %v505 = vmul.f32 %v502, %v497
        %v506 = vmul.f32 %v502, %v498
        %v507 = vmul.f32 %v502, %v499
        %v508 = vadd.f32 %v484, %v504
        %v509 = vadd.f32 %v485, %v505
        %v510 = vadd.f32 %v486, %v506
        %v511 = vadd.f32 %v487, %v507
        %v512 = vld [vmem:[%s4 + $0x1] sm:$0x1]
        %v514 = vrot.slane %v512, 7
        %v516 = vmul.f32 %v491, %v514
        %v518 = vrot.slane %v516, 1
        %v520 = vadd.f32 %v494, %v518
        %s521 = scalar_lea.vmem %s3, 64
        %v522 = vld [vmem:[%s521] sm:$0xff]
        %v523 = vld [vmem:[%s521 + $0x8] sm:$0xff]
        %v524 = vld [vmem:[%s521 + $0x10] sm:$0xff]
        %v525 = vld [vmem:[%s521 + $0x18] sm:$0x1]
        %v526 = vrot.slane %v471, 2
        %s527 = vtos %v526
        %v528 = vstv %s527
        %v530 = vmul.f32 %v528, %v522
        %v531 = vmul.f32 %v528, %v523
        %v532 = vmul.f32 %v528, %v524
        %v533 = vmul.f32 %v528, %v525
        %v534 = vadd.f32 %v508, %v530
        %v535 = vadd.f32 %v509, %v531
        %v536 = vadd.f32 %v510, %v532
        %v537 = vadd.f32 %v511, %v533
        %v538 = vld [vmem:[%s4 + $0x2] sm:$0x1]
        %v540 = vrot.slane %v538, 6
        %v542 = vmul.f32 %v491, %v540
        %v544 = vrot.slane %v542, 2
        %v546 = vadd.f32 %v520, %v544
        %s547 = scalar_lea.vmem %s3, 96
        %v548 = vld [vmem:[%s547] sm:$0xff]
        %v549 = vld [vmem:[%s547 + $0x8] sm:$0xff]
        %v550 = vld [vmem:[%s547 + $0x10] sm:$0xff]
        %v551 = vld [vmem:[%s547 + $0x18] sm:$0x1]
        %v552 = vrot.slane %v471, 3
        %s553 = vtos %v552
        %v554 = vstv %s553
        %v556 = vmul.f32 %v554, %v548
        %v557 = vmul.f32 %v554, %v549
        %v558 = vmul.f32 %v554, %v550
        %v559 = vmul.f32 %v554, %v551
        %v560 = vadd.f32 %v534, %v556
        %v561 = vadd.f32 %v535, %v557
        %v562 = vadd.f32 %v536, %v558
        %v563 = vadd.f32 %v537, %v559
        %v564 = vld [vmem:[%s4 + $0x3] sm:$0x1]
        %v566 = vrot.slane %v564, 5
        %v568 = vmul.f32 %v491, %v566
        %v570 = vrot.slane %v568, 3
        %v572 = vadd.f32 %v546, %v570
        %573 = vst [vmem:[#allocation4] sm:$0xff] %v560
        %574 = vst [vmem:[#allocation4 + $0x8] sm:$0xff] %v561
        %575 = vst [vmem:[#allocation4 + $0x10] sm:$0xff] %v562
        %576 = vst [vmem:[#allocation4 + $0x18] sm:$0x1] %v563
        %577 = vst [vmem:[#allocation5] sm:$0x1] %v572
        %578 = vst [vmem:[#allocation2] sm:$0xff] 0.0
        %579 = vst [vmem:[#allocation2 + $0x8] sm:$0xff] 0.0
        %580 = vst [vmem:[#allocation2 + $0x10] sm:$0xff] 0.0
        %581 = vst [vmem:[#allocation2 + $0x18] sm:$0xff] 0.0
        %582 = vst [vmem:[#allocation2 + $0x20] sm:$0xff] 0.0
        %583 = vst [vmem:[#allocation2 + $0x28] sm:$0xff] 0.0
        %584 = vst [vmem:[#allocation2 + $0x30] sm:$0xff] 0.0
        %585 = vst [vmem:[#allocation2 + $0x38] sm:$0xff] 0.0
        %s586 = scalar_lea.vmem [#allocation2], 576
        %587 = vst [vmem:[%s586] sm:$0xff] 0.0
        %588 = vst [vmem:[%s586 + $0x8] sm:$0xff] 0.0
        %589 = vst [vmem:[%s586 + $0x10] sm:$0xff] 0.0
        %590 = vst [vmem:[%s586 + $0x18] sm:$0xff] 0.0
        %591 = vst [vmem:[%s586 + $0x20] sm:$0xff] 0.0
        %592 = vst [vmem:[%s586 + $0x28] sm:$0xff] 0.0
        %593 = vst [vmem:[%s586 + $0x30] sm:$0xff] 0.0
        %594 = vst [vmem:[%s586 + $0x38] sm:$0xff] 0.0
        %s595 = scalar_lea.vmem [#allocation2], 64
        %596 = vst [vmem:[%s595] sm:$0xff] 0.0
        %597 = vst [vmem:[%s595 + $0x20] sm:$0xff] 0.0
        %598 = vst [vmem:[%s595 + $0x40] sm:$0xff] 0.0
        %599 = vst [vmem:[%s595 + $0x60] sm:$0xff] 0.0
        %600 = vst [vmem:[%s595 + $0x80] sm:$0xff] 0.0
        %601 = vst [vmem:[%s595 + $0xa0] sm:$0xff] 0.0
        %602 = vst [vmem:[%s595 + $0xc0] sm:$0xff] 0.0
        %603 = vst [vmem:[%s595 + $0xe0] sm:$0xff] 0.0
        %604 = vst [vmem:[%s595 + $0x100] sm:$0xff] 0.0
        %605 = vst [vmem:[%s595 + $0x120] sm:$0xff] 0.0
        %606 = vst [vmem:[%s595 + $0x140] sm:$0xff] 0.0
        %607 = vst [vmem:[%s595 + $0x160] sm:$0xff] 0.0
        %608 = vst [vmem:[%s595 + $0x180] sm:$0xff] 0.0
        %609 = vst [vmem:[%s595 + $0x1a0] sm:$0xff] 0.0
        %610 = vst [vmem:[%s595 + $0x1c0] sm:$0xff] 0.0
        %611 = vst [vmem:[%s595 + $0x1e0] sm:$0xff] 0.0
        %612 = vst [vmem:[%s595 + $0x18] sm:$0xff] 0.0
        %613 = vst [vmem:[%s595 + $0x38] sm:$0xff] 0.0
        %614 = vst [vmem:[%s595 + $0x58] sm:$0xff] 0.0
        %615 = vst [vmem:[%s595 + $0x78] sm:$0xff] 0.0
        %616 = vst [vmem:[%s595 + $0x98] sm:$0xff] 0.0
        %617 = vst [vmem:[%s595 + $0xb8] sm:$0xff] 0.0
        %618 = vst [vmem:[%s595 + $0xd8] sm:$0xff] 0.0
        %619 = vst [vmem:[%s595 + $0xf8] sm:$0xff] 0.0
        %620 = vst [vmem:[%s595 + $0x118] sm:$0xff] 0.0
        %621 = vst [vmem:[%s595 + $0x138] sm:$0xff] 0.0
        %622 = vst [vmem:[%s595 + $0x158] sm:$0xff] 0.0
        %623 = vst [vmem:[%s595 + $0x178] sm:$0xff] 0.0
        %624 = vst [vmem:[%s595 + $0x198] sm:$0xff] 0.0
        %625 = vst [vmem:[%s595 + $0x1b8] sm:$0xff] 0.0
        %626 = vst [vmem:[%s595 + $0x1d8] sm:$0xff] 0.0
        %627 = vst [vmem:[%s595 + $0x1f8] sm:$0xff] 0.0
        %628 = vst [vmem:[%s595 + $0x8] sm:$0xff] %v385
        %629 = vst [vmem:[%s595 + $0x10] sm:$0xff] %v386
        %630 = vst [vmem:[%s595 + $0x28] sm:$0xff] %v387
        %631 = vst [vmem:[%s595 + $0x30] sm:$0xff] %v388
        %632 = vst [vmem:[%s595 + $0x48] sm:$0xff] %v389
        %633 = vst [vmem:[%s595 + $0x50] sm:$0xff] %v390
        %634 = vst [vmem:[%s595 + $0x68] sm:$0xff] %v391
        %635 = vst [vmem:[%s595 + $0x70] sm:$0xff] %v392
        %636 = vst [vmem:[%s595 + $0x88] sm:$0xff] %v393
        %637 = vst [vmem:[%s595 + $0x90] sm:$0xff] %v394
        %638 = vst [vmem:[%s595 + $0xa8] sm:$0xff] %v395
        %639 = vst [vmem:[%s595 + $0xb0] sm:$0xff] %v396
        %640 = vst [vmem:[%s595 + $0xc8] sm:$0xff] %v397
        %641 = vst [vmem:[%s595 + $0xd0] sm:$0xff] %v398
        %642 = vst [vmem:[%s595 + $0xe8] sm:$0xff] %v399
        %643 = vst [vmem:[%s595 + $0xf0] sm:$0xff] %v400
        %644 = vst [vmem:[%s595 + $0x108] sm:$0xff] %v401
        %645 = vst [vmem:[%s595 + $0x110] sm:$0xff] %v402
        %646 = vst [vmem:[%s595 + $0x128] sm:$0xff] %v403
        %647 = vst [vmem:[%s595 + $0x130] sm:$0xff] %v404
        %648 = vst [vmem:[%s595 + $0x148] sm:$0xff] %v405
        %649 = vst [vmem:[%s595 + $0x150] sm:$0xff] %v406
        %650 = vst [vmem:[%s595 + $0x168] sm:$0xff] %v407
        %651 = vst [vmem:[%s595 + $0x170] sm:$0xff] %v408
        %652 = vst [vmem:[%s595 + $0x188] sm:$0xff] %v409
        %653 = vst [vmem:[%s595 + $0x190] sm:$0xff] %v410
        %654 = vst [vmem:[%s595 + $0x1a8] sm:$0xff] %v411
        %655 = vst [vmem:[%s595 + $0x1b0] sm:$0xff] %v412
        %656 = vst [vmem:[%s595 + $0x1c8] sm:$0xff] %v413
        %657 = vst [vmem:[%s595 + $0x1d0] sm:$0xff] %v414
        %658 = vst [vmem:[%s595 + $0x1e8] sm:$0xff] %v415
        %659 = vst [vmem:[%s595 + $0x1f0] sm:$0xff] %v416
        %v660 = vld [vmem:[#allocation2 + $0x6] sm:$0xff]
        %v661 = vld [vmem:[#allocation2 + $0xe] sm:$0xff]
        %v662 = vld [vmem:[#allocation2 + $0x26] sm:$0xff]
        %v663 = vld [vmem:[#allocation2 + $0x2e] sm:$0xff]
        %v664 = vld [vmem:[#allocation2 + $0x46] sm:$0xff]
        %v665 = vld [vmem:[#allocation2 + $0x4e] sm:$0xff]
        %v666 = vld [vmem:[#allocation2 + $0x66] sm:$0xff]
        %v667 = vld [vmem:[#allocation2 + $0x6e] sm:$0xff]
        %v668 = vld [vmem:[#allocation2 + $0x86] sm:$0xff]
        %v669 = vld [vmem:[#allocation2 + $0x8e] sm:$0xff]
        %v670 = vld [vmem:[#allocation2 + $0xa6] sm:$0xff]
        %v671 = vld [vmem:[#allocation2 + $0xae] sm:$0xff]
        %v672 = vld [vmem:[#allocation2 + $0xc6] sm:$0xff]
        %v673 = vld [vmem:[#allocation2 + $0xce] sm:$0xff]
        %v674 = vld [vmem:[#allocation2 + $0xe6] sm:$0xff]
        %v675 = vld [vmem:[#allocation2 + $0xee] sm:$0xff]
        %v676 = vld [vmem:[#allocation2 + $0x106] sm:$0xff]
        %v677 = vld [vmem:[#allocation2 + $0x10e] sm:$0xff]
        %v678 = vld [vmem:[#allocation2 + $0x126] sm:$0xff]
        %v679 = vld [vmem:[#allocation2 + $0x12e] sm:$0xff]
        %v680 = vld [vmem:[#allocation2 + $0x146] sm:$0xff]
        %v681 = vld [vmem:[#allocation2 + $0x14e] sm:$0xff]
        %v682 = vld [vmem:[#allocation2 + $0x166] sm:$0xff]
        %v683 = vld [vmem:[#allocation2 + $0x16e] sm:$0xff]
        %v684 = vld [vmem:[#allocation2 + $0x186] sm:$0xff]
        %v685 = vld [vmem:[#allocation2 + $0x18e] sm:$0xff]
        %v686 = vld [vmem:[#allocation2 + $0x1a6] sm:$0xff]
        %v687 = vld [vmem:[#allocation2 + $0x1ae] sm:$0xff]
        %v688 = vld [vmem:[#allocation2 + $0x1c6] sm:$0xff]
        %v689 = vld [vmem:[#allocation2 + $0x1ce] sm:$0xff]
        %v690 = vld [vmem:[#allocation2 + $0x1e6] sm:$0xff]
        %v691 = vld [vmem:[#allocation2 + $0x1ee] sm:$0xff]
        %v692 = vld [vmem:[#allocation2 + $0x206] sm:$0xff]
        %v693 = vld [vmem:[#allocation2 + $0x20e] sm:$0xff]
        %v694 = vld [vmem:[#allocation2 + $0x226] sm:$0xff]
        %v695 = vld [vmem:[#allocation2 + $0x22e] sm:$0xff]
        %v696 = vld [vmem:[#allocation2 + $0x246] sm:$0xff]
        %v697 = vld [vmem:[#allocation2 + $0x24e] sm:$0xff]
        %v698 = vld [vmem:[#allocation2 + $0x266] sm:$0xff]
        %v699 = vld [vmem:[#allocation2 + $0x26e] sm:$0xff]
        %v700 = vld [vmem:[#allocation4] sm:$0x1]
        %v701 = vlaneseq
        %v702 = vshrl.u32 %v701, 7
        %v703 = vsub.s32 0, %v702
        %v704 = vrot.slane %v700, %v703
        %v705 = vmul.f32 %v660, %v704
        %v706 = vmul.f32 %v661, %v704
        %v707 = vmul.f32 %v662, %v704
        %v708 = vmul.f32 %v663, %v704
        %v709 = vmul.f32 %v664, %v704
        %v710 = vmul.f32 %v665, %v704
        %v711 = vmul.f32 %v666, %v704
        %v712 = vmul.f32 %v667, %v704
        %v713 = vmul.f32 %v668, %v704
        %v714 = vmul.f32 %v669, %v704
        %v715 = vmul.f32 %v670, %v704
        %v716 = vmul.f32 %v671, %v704
        %v717 = vmul.f32 %v672, %v704
        %v718 = vmul.f32 %v673, %v704
        %v719 = vmul.f32 %v674, %v704
        %v720 = vmul.f32 %v675, %v704
        %v721 = vmul.f32 %v676, %v704
        %v722 = vmul.f32 %v677, %v704
        %v723 = vmul.f32 %v678, %v704
        %v724 = vmul.f32 %v679, %v704
        %v725 = vmul.f32 %v680, %v704
        %v726 = vmul.f32 %v681, %v704
        %v727 = vmul.f32 %v682, %v704
        %v728 = vmul.f32 %v683, %v704
        %v729 = vmul.f32 %v684, %v704
        %v730 = vmul.f32 %v685, %v704
        %v731 = vmul.f32 %v686, %v704
        %v732 = vmul.f32 %v687, %v704
        %v733 = vmul.f32 %v688, %v704
        %v734 = vmul.f32 %v689, %v704
        %v735 = vmul.f32 %v690, %v704
        %v736 = vmul.f32 %v691, %v704
        %v737 = vadd.f32 %v705, 0.0
        %v738 = vadd.f32 %v706, 0.0
        %v739 = vadd.f32 %v707, 0.0
        %v740 = vadd.f32 %v708, 0.0
        %v741 = vadd.f32 %v709, 0.0
        %v742 = vadd.f32 %v710, 0.0
        %v743 = vadd.f32 %v711, 0.0
        %v744 = vadd.f32 %v712, 0.0
        %v745 = vadd.f32 %v713, 0.0
        %v746 = vadd.f32 %v714, 0.0
        %v747 = vadd.f32 %v715, 0.0
        %v748 = vadd.f32 %v716, 0.0
        %v749 = vadd.f32 %v717, 0.0
        %v750 = vadd.f32 %v718, 0.0
        %v751 = vadd.f32 %v719, 0.0
        %v752 = vadd.f32 %v720, 0.0
        %v753 = vadd.f32 %v721, 0.0
        %v754 = vadd.f32 %v722, 0.0
        %v755 = vadd.f32 %v723, 0.0
        %v756 = vadd.f32 %v724, 0.0
        %v757 = vadd.f32 %v725, 0.0
        %v758 = vadd.f32 %v726, 0.0
        %v759 = vadd.f32 %v727, 0.0
        %v760 = vadd.f32 %v728, 0.0
        %v761 = vadd.f32 %v729, 0.0
        %v762 = vadd.f32 %v730, 0.0
        %v763 = vadd.f32 %v731, 0.0
        %v764 = vadd.f32 %v732, 0.0
        %v765 = vadd.f32 %v733, 0.0
        %v766 = vadd.f32 %v734, 0.0
        %v767 = vadd.f32 %v735, 0.0
        %v768 = vadd.f32 %v736, 0.0
        %v769 = vld [vmem:[#allocation4 + $0x5] sm:$0x1]
        %v770 = vlaneseq
        %v771 = vshrl.u32 %v770, 7
        %v772 = vsub.s32 0, %v771
        %v773 = vrot.slane %v769, %v772
        %v774 = vmul.f32 %v662, %v773
        %v775 = vmul.f32 %v663, %v773
        %v776 = vmul.f32 %v664, %v773
        %v777 = vmul.f32 %v665, %v773
        %v778 = vmul.f32 %v666, %v773
        %v779 = vmul.f32 %v667, %v773
        %v780 = vmul.f32 %v668, %v773
        %v781 = vmul.f32 %v669, %v773
        %v782 = vmul.f32 %v670, %v773
        %v783 = vmul.f32 %v671, %v773
        %v784 = vmul.f32 %v672, %v773
        %v785 = vmul.f32 %v673, %v773
        %v786 = vmul.f32 %v674, %v773
        %v787 = vmul.f32 %v675, %v773
        %v788 = vmul.f32 %v676, %v773
        %v789 = vmul.f32 %v677, %v773
        %v790 = vmul.f32 %v678, %v773
        %v791 = vmul.f32 %v679, %v773
        %v792 = vmul.f32 %v680, %v773
        %v793 = vmul.f32 %v681, %v773
        %v794 = vmul.f32 %v682, %v773
        %v795 = vmul.f32 %v683, %v773
        %v796 = vmul.f32 %v684, %v773
        %v797 = vmul.f32 %v685, %v773
        %v798 = vmul.f32 %v686, %v773
        %v799 = vmul.f32 %v687, %v773
        %v800 = vmul.f32 %v688, %v773
        %v801 = vmul.f32 %v689, %v773
        %v802 = vmul.f32 %v690, %v773
        %v803 = vmul.f32 %v691, %v773
        %v804 = vmul.f32 %v692, %v773
        %v805 = vmul.f32 %v693, %v773
        %v806 = vadd.f32 %v737, %v774
        %v807 = vadd.f32 %v738, %v775
        %v808 = vadd.f32 %v739, %v776
        %v809 = vadd.f32 %v740, %v777
        %v810 = vadd.f32 %v741, %v778
        %v811 = vadd.f32 %v742, %v779
        %v812 = vadd.f32 %v743, %v780
        %v813 = vadd.f32 %v744, %v781
        %v814 = vadd.f32 %v745, %v782
        %v815 = vadd.f32 %v746, %v783
        %v816 = vadd.f32 %v747, %v784
        %v817 = vadd.f32 %v748, %v785
        %v818 = vadd.f32 %v749, %v786
        %v819 = vadd.f32 %v750, %v787
        %v820 = vadd.f32 %v751, %v788
        %v821 = vadd.f32 %v752, %v789
        %v822 = vadd.f32 %v753, %v790
        %v823 = vadd.f32 %v754, %v791
        %v824 = vadd.f32 %v755, %v792
        %v825 = vadd.f32 %v756, %v793
        %v826 = vadd.f32 %v757, %v794
        %v827 = vadd.f32 %v758, %v795
        %v828 = vadd.f32 %v759, %v796
        %v829 = vadd.f32 %v760, %v797
        %v830 = vadd.f32 %v761, %v798
        %v831 = vadd.f32 %v762, %v799
        %v832 = vadd.f32 %v763, %v800
        %v833 = vadd.f32 %v764, %v801
        %v834 = vadd.f32 %v765, %v802
        %v835 = vadd.f32 %v766, %v803
        %v836 = vadd.f32 %v767, %v804
        %v837 = vadd.f32 %v768, %v805
        %v838 = vld [vmem:[#allocation4 + $0xa] sm:$0x1]
        %v839 = vlaneseq
        %v840 = vshrl.u32 %v839, 7
        %v841 = vsub.s32 0, %v840
        %v842 = vrot.slane %v838, %v841
        %v843 = vmul.f32 %v664, %v842
        %v844 = vmul.f32 %v665, %v842
        %v845 = vmul.f32 %v666, %v842
        %v846 = vmul.f32 %v667, %v842
        %v847 = vmul.f32 %v668, %v842
        %v848 = vmul.f32 %v669, %v842
        %v849 = vmul.f32 %v670, %v842
        %v850 = vmul.f32 %v671, %v842
        %v851 = vmul.f32 %v672, %v842
        %v852 = vmul.f32 %v673, %v842
        %v853 = vmul.f32 %v674, %v842
        %v854 = vmul.f32 %v675, %v842
        %v855 = vmul.f32 %v676, %v842
        %v856 = vmul.f32 %v677, %v842
        %v857 = vmul.f32 %v678, %v842
        %v858 = vmul.f32 %v679, %v842
        %v859 = vmul.f32 %v680, %v842
        %v860 = vmul.f32 %v681, %v842
        %v861 = vmul.f32 %v682, %v842
        %v862 = vmul.f32 %v683, %v842
        %v863 = vmul.f32 %v684, %v842
        %v864 = vmul.f32 %v685, %v842
        %v865 = vmul.f32 %v686, %v842
        %v866 = vmul.f32 %v687, %v842
        %v867 = vmul.f32 %v688, %v842
        %v868 = vmul.f32 %v689, %v842
        %v869 = vmul.f32 %v690, %v842
        %v870 = vmul.f32 %v691, %v842
        %v871 = vmul.f32 %v692, %v842
        %v872 = vmul.f32 %v693, %v842
        %v873 = vmul.f32 %v694, %v842
        %v874 = vmul.f32 %v695, %v842
        %v875 = vadd.f32 %v806, %v843
        %v876 = vadd.f32 %v807, %v844
        %v877 = vadd.f32 %v808, %v845
        %v878 = vadd.f32 %v809, %v846
        %v879 = vadd.f32 %v810, %v847
        %v880 = vadd.f32 %v811, %v848
        %v881 = vadd.f32 %v812, %v849
        %v882 = vadd.f32 %v813, %v850
        %v883 = vadd.f32 %v814, %v851
        %v884 = vadd.f32 %v815, %v852
        %v885 = vadd.f32 %v816, %v853
        %v886 = vadd.f32 %v817, %v854
        %v887 = vadd.f32 %v818, %v855
        %v888 = vadd.f32 %v819, %v856
        %v889 = vadd.f32 %v820, %v857
        %v890 = vadd.f32 %v821, %v858
        %v891 = vadd.f32 %v822, %v859
        %v892 = vadd.f32 %v823, %v860
        %v893 = vadd.f32 %v824, %v861
        %v894 = vadd.f32 %v825, %v862
        %v895 = vadd.f32 %v826, %v863
        %v896 = vadd.f32 %v827, %v864
        %v897 = vadd.f32 %v828, %v865
        %v898 = vadd.f32 %v829, %v866
        %v899 = vadd.f32 %v830, %v867
        %v900 = vadd.f32 %v831, %v868
        %v901 = vadd.f32 %v832, %v869
        %v902 = vadd.f32 %v833, %v870
        %v903 = vadd.f32 %v834, %v871
        %v904 = vadd.f32 %v835, %v872
        %v905 = vadd.f32 %v836, %v873
        %v906 = vadd.f32 %v837, %v874
        %v907 = vld [vmem:[#allocation4 + $0xf] sm:$0x1]
        %v908 = vlaneseq
        %v909 = vshrl.u32 %v908, 7
        %v910 = vsub.s32 0, %v909
        %v911 = vrot.slane %v907, %v910
        %v912 = vmul.f32 %v666, %v911
        %v913 = vmul.f32 %v667, %v911
        %v914 = vmul.f32 %v668, %v911
        %v915 = vmul.f32 %v669, %v911
        %v916 = vmul.f32 %v670, %v911
        %v917 = vmul.f32 %v671, %v911
        %v918 = vmul.f32 %v672, %v911
        %v919 = vmul.f32 %v673, %v911
        %v920 = vmul.f32 %v674, %v911
        %v921 = vmul.f32 %v675, %v911
        %v922 = vmul.f32 %v676, %v911
        %v923 = vmul.f32 %v677, %v911
        %v924 = vmul.f32 %v678, %v911
        %v925 = vmul.f32 %v679, %v911
        %v926 = vmul.f32 %v680, %v911
        %v927 = vmul.f32 %v681, %v911
        %v928 = vmul.f32 %v682, %v911
        %v929 = vmul.f32 %v683, %v911
        %v930 = vmul.f32 %v684, %v911
        %v931 = vmul.f32 %v685, %v911
        %v932 = vmul.f32 %v686, %v911
        %v933 = vmul.f32 %v687, %v911
        %v934 = vmul.f32 %v688, %v911
        %v935 = vmul.f32 %v689, %v911
        %v936 = vmul.f32 %v690, %v911
        %v937 = vmul.f32 %v691, %v911
        %v938 = vmul.f32 %v692, %v911
        %v939 = vmul.f32 %v693, %v911
        %v940 = vmul.f32 %v694, %v911
        %v941 = vmul.f32 %v695, %v911
        %v942 = vmul.f32 %v696, %v911
        %v943 = vmul.f32 %v697, %v911
        %v944 = vadd.f32 %v875, %v912
        %v945 = vadd.f32 %v876, %v913
        %v946 = vadd.f32 %v877, %v914
        %v947 = vadd.f32 %v878, %v915
        %v948 = vadd.f32 %v879, %v916
        %v949 = vadd.f32 %v880, %v917
        %v950 = vadd.f32 %v881, %v918
        %v951 = vadd.f32 %v882, %v919
        %v952 = vadd.f32 %v883, %v920
        %v953 = vadd.f32 %v884, %v921
        %v954 = vadd.f32 %v885, %v922
        %v955 = vadd.f32 %v886, %v923
        %v956 = vadd.f32 %v887, %v924
        %v957 = vadd.f32 %v888, %v925
        %v958 = vadd.f32 %v889, %v926
        %v959 = vadd.f32 %v890, %v927
        %v960 = vadd.f32 %v891, %v928
        %v961 = vadd.f32 %v892, %v929
        %v962 = vadd.f32 %v893, %v930
        %v963 = vadd.f32 %v894, %v931
        %v964 = vadd.f32 %v895, %v932
        %v965 = vadd.f32 %v896, %v933
        %v966 = vadd.f32 %v897, %v934
        %v967 = vadd.f32 %v898, %v935
        %v968 = vadd.f32 %v899, %v936
        %v969 = vadd.f32 %v900, %v937
        %v970 = vadd.f32 %v901, %v938
        %v971 = vadd.f32 %v902, %v939
        %v972 = vadd.f32 %v903, %v940
        %v973 = vadd.f32 %v904, %v941
        %v974 = vadd.f32 %v905, %v942
        %v975 = vadd.f32 %v906, %v943
        %v976 = vld [vmem:[#allocation4 + $0x14] sm:$0x1]
        %v977 = vlaneseq
        %v978 = vshrl.u32 %v977, 7
        %v979 = vsub.s32 0, %v978
        %v980 = vrot.slane %v976, %v979
        %v981 = vmul.f32 %v668, %v980
        %v982 = vmul.f32 %v669, %v980
        %v983 = vmul.f32 %v670, %v980
        %v984 = vmul.f32 %v671, %v980
        %v985 = vmul.f32 %v672, %v980
        %v986 = vmul.f32 %v673, %v980
        %v987 = vmul.f32 %v674, %v980
        %v988 = vmul.f32 %v675, %v980
        %v989 = vmul.f32 %v676, %v980
        %v990 = vmul.f32 %v677, %v980
        %v991 = vmul.f32 %v678, %v980
        %v992 = vmul.f32 %v679, %v980
        %v993 = vmul.f32 %v680, %v980
        %v994 = vmul.f32 %v681, %v980
        %v995 = vmul.f32 %v682, %v980
        %v996 = vmul.f32 %v683, %v980
        %v997 = vmul.f32 %v684, %v980
        %v998 = vmul.f32 %v685, %v980
        %v999 = vmul.f32 %v686, %v980
        %v1000 = vmul.f32 %v687, %v980
        %v1001 = vmul.f32 %v688, %v980
        %v1002 = vmul.f32 %v689, %v980
        %v1003 = vmul.f32 %v690, %v980
        %v1004 = vmul.f32 %v691, %v980
        %v1005 = vmul.f32 %v692, %v980
        %v1006 = vmul.f32 %v693, %v980
        %v1007 = vmul.f32 %v694, %v980
        %v1008 = vmul.f32 %v695, %v980
        %v1009 = vmul.f32 %v696, %v980
        %v1010 = vmul.f32 %v697, %v980
        %v1011 = vmul.f32 %v698, %v980
        %v1012 = vmul.f32 %v699, %v980
        %v1013 = vadd.f32 %v944, %v981
        %v1014 = vadd.f32 %v945, %v982
        %v1015 = vadd.f32 %v946, %v983
        %v1016 = vadd.f32 %v947, %v984
        %v1017 = vadd.f32 %v948, %v985
        %v1018 = vadd.f32 %v949, %v986
        %v1019 = vadd.f32 %v950, %v987
        %v1020 = vadd.f32 %v951, %v988
        %v1021 = vadd.f32 %v952, %v989
        %v1022 = vadd.f32 %v953, %v990
        %v1023 = vadd.f32 %v954, %v991
        %v1024 = vadd.f32 %v955, %v992
        %v1025 = vadd.f32 %v956, %v993
        %v1026 = vadd.f32 %v957, %v994
        %v1027 = vadd.f32 %v958, %v995
        %v1028 = vadd.f32 %v959, %v996
        %v1029 = vadd.f32 %v960, %v997
        %v1030 = vadd.f32 %v961, %v998
        %v1031 = vadd.f32 %v962, %v999
        %v1032 = vadd.f32 %v963, %v1000
        %v1033 = vadd.f32 %v964, %v1001
        %v1034 = vadd.f32 %v965, %v1002
        %v1035 = vadd.f32 %v966, %v1003
        %v1036 = vadd.f32 %v967, %v1004
        %v1037 = vadd.f32 %v968, %v1005
        %v1038 = vadd.f32 %v969, %v1006
        %v1039 = vadd.f32 %v970, %v1007
        %v1040 = vadd.f32 %v971, %v1008
        %v1041 = vadd.f32 %v972, %v1009
        %v1042 = vadd.f32 %v973, %v1010
        %v1043 = vadd.f32 %v974, %v1011
        %v1044 = vadd.f32 %v975, %v1012
        %v1045 = vld [vmem:[#allocation2 + $0x7] sm:$0xff]
        %v1046 = vld [vmem:[#allocation2 + $0xf] sm:$0xff]
        %v1047 = vld [vmem:[#allocation2 + $0x27] sm:$0xff]
        %v1048 = vld [vmem:[#allocation2 + $0x2f] sm:$0xff]
        %v1049 = vld [vmem:[#allocation2 + $0x47] sm:$0xff]
        %v1050 = vld [vmem:[#allocation2 + $0x4f] sm:$0xff]
        %v1051 = vld [vmem:[#allocation2 + $0x67] sm:$0xff]
        %v1052 = vld [vmem:[#allocation2 + $0x6f] sm:$0xff]
        %v1053 = vld [vmem:[#allocation2 + $0x87] sm:$0xff]
        %v1054 = vld [vmem:[#allocation2 + $0x8f] sm:$0xff]
        %v1055 = vld [vmem:[#allocation2 + $0xa7] sm:$0xff]
        %v1056 = vld [vmem:[#allocation2 + $0xaf] sm:$0xff]
        %v1057 = vld [vmem:[#allocation2 + $0xc7] sm:$0xff]
        %v1058 = vld [vmem:[#allocation2 + $0xcf] sm:$0xff]
        %v1059 = vld [vmem:[#allocation2 + $0xe7] sm:$0xff]
        %v1060 = vld [vmem:[#allocation2 + $0xef] sm:$0xff]
        %v1061 = vld [vmem:[#allocation2 + $0x107] sm:$0xff]
        %v1062 = vld [vmem:[#allocation2 + $0x10f] sm:$0xff]
        %v1063 = vld [vmem:[#allocation2 + $0x127] sm:$0xff]
        %v1064 = vld [vmem:[#allocation2 + $0x12f] sm:$0xff]
        %v1065 = vld [vmem:[#allocation2 + $0x147] sm:$0xff]
        %v1066 = vld [vmem:[#allocation2 + $0x14f] sm:$0xff]
        %v1067 = vld [vmem:[#allocation2 + $0x167] sm:$0xff]
        %v1068 = vld [vmem:[#allocation2 + $0x16f] sm:$0xff]
        %v1069 = vld [vmem:[#allocation2 + $0x187] sm:$0xff]
        %v1070 = vld [vmem:[#allocation2 + $0x18f] sm:$0xff]
        %v1071 = vld [vmem:[#allocation2 + $0x1a7] sm:$0xff]
        %v1072 = vld [vmem:[#allocation2 + $0x1af] sm:$0xff]
        %v1073 = vld [vmem:[#allocation2 + $0x1c7] sm:$0xff]
        %v1074 = vld [vmem:[#allocation2 + $0x1cf] sm:$0xff]
        %v1075 = vld [vmem:[#allocation2 + $0x1e7] sm:$0xff]
        %v1076 = vld [vmem:[#allocation2 + $0x1ef] sm:$0xff]
        %v1077 = vld [vmem:[#allocation2 + $0x207] sm:$0xff]
        %v1078 = vld [vmem:[#allocation2 + $0x20f] sm:$0xff]
        %v1079 = vld [vmem:[#allocation2 + $0x227] sm:$0xff]
        %v1080 = vld [vmem:[#allocation2 + $0x22f] sm:$0xff]
        %v1081 = vld [vmem:[#allocation2 + $0x247] sm:$0xff]
        %v1082 = vld [vmem:[#allocation2 + $0x24f] sm:$0xff]
        %v1083 = vld [vmem:[#allocation2 + $0x267] sm:$0xff]
        %v1084 = vld [vmem:[#allocation2 + $0x26f] sm:$0xff]
        %v1085 = vld [vmem:[#allocation4 + $0x1] sm:$0x1]
        %v1086 = vlaneseq
        %v1087 = vshrl.u32 %v1086, 7
        %v1088 = vsub.s32 0, %v1087
        %v1089 = vrot.slane %v1085, %v1088
        %v1090 = vmul.f32 %v1045, %v1089
        %v1091 = vmul.f32 %v1046, %v1089
        %v1092 = vmul.f32 %v1047, %v1089
        %v1093 = vmul.f32 %v1048, %v1089
        %v1094 = vmul.f32 %v1049, %v1089
        %v1095 = vmul.f32 %v1050, %v1089
        %v1096 = vmul.f32 %v1051, %v1089
        %v1097 = vmul.f32 %v1052, %v1089
        %v1098 = vmul.f32 %v1053, %v1089
        %v1099 = vmul.f32 %v1054, %v1089
        %v1100 = vmul.f32 %v1055, %v1089
        %v1101 = vmul.f32 %v1056, %v1089
        %v1102 = vmul.f32 %v1057, %v1089
        %v1103 = vmul.f32 %v1058, %v1089
        %v1104 = vmul.f32 %v1059, %v1089
        %v1105 = vmul.f32 %v1060, %v1089
        %v1106 = vmul.f32 %v1061, %v1089
        %v1107 = vmul.f32 %v1062, %v1089
        %v1108 = vmul.f32 %v1063, %v1089
        %v1109 = vmul.f32 %v1064, %v1089
        %v1110 = vmul.f32 %v1065, %v1089
        %v1111 = vmul.f32 %v1066, %v1089
        %v1112 = vmul.f32 %v1067, %v1089
        %v1113 = vmul.f32 %v1068, %v1089
        %v1114 = vmul.f32 %v1069, %v1089
        %v1115 = vmul.f32 %v1070, %v1089
        %v1116 = vmul.f32 %v1071, %v1089
        %v1117 = vmul.f32 %v1072, %v1089
        %v1118 = vmul.f32 %v1073, %v1089
        %v1119 = vmul.f32 %v1074, %v1089
        %v1120 = vmul.f32 %v1075, %v1089
        %v1121 = vmul.f32 %v1076, %v1089
        %v1122 = vadd.f32 %v1013, %v1090
        %v1123 = vadd.f32 %v1014, %v1091
        %v1124 = vadd.f32 %v1015, %v1092
        %v1125 = vadd.f32 %v1016, %v1093
        %v1126 = vadd.f32 %v1017, %v1094
        %v1127 = vadd.f32 %v1018, %v1095
        %v1128 = vadd.f32 %v1019, %v1096
        %v1129 = vadd.f32 %v1020, %v1097
        %v1130 = vadd.f32 %v1021, %v1098
        %v1131 = vadd.f32 %v1022, %v1099
        %v1132 = vadd.f32 %v1023, %v1100
        %v1133 = vadd.f32 %v1024, %v1101
        %v1134 = vadd.f32 %v1025, %v1102
        %v1135 = vadd.f32 %v1026, %v1103
        %v1136 = vadd.f32 %v1027, %v1104
        %v1137 = vadd.f32 %v1028, %v1105
        %v1138 = vadd.f32 %v1029, %v1106
        %v1139 = vadd.f32 %v1030, %v1107
        %v1140 = vadd.f32 %v1031, %v1108
        %v1141 = vadd.f32 %v1032, %v1109
        %v1142 = vadd.f32 %v1033, %v1110
        %v1143 = vadd.f32 %v1034, %v1111
        %v1144 = vadd.f32 %v1035, %v1112
        %v1145 = vadd.f32 %v1036, %v1113
        %v1146 = vadd.f32 %v1037, %v1114
        %v1147 = vadd.f32 %v1038, %v1115
        %v1148 = vadd.f32 %v1039, %v1116
        %v1149 = vadd.f32 %v1040, %v1117
        %v1150 = vadd.f32 %v1041, %v1118
        %v1151 = vadd.f32 %v1042, %v1119
        %v1152 = vadd.f32 %v1043, %v1120
        %v1153 = vadd.f32 %v1044, %v1121
        %v1154 = vld [vmem:[#allocation4 + $0x6] sm:$0x1]
        %v1155 = vlaneseq
        %v1156 = vshrl.u32 %v1155, 7
        %v1157 = vsub.s32 0, %v1156
        %v1158 = vrot.slane %v1154, %v1157
        %v1159 = vmul.f32 %v1047, %v1158
        %v1160 = vmul.f32 %v1048, %v1158
        %v1161 = vmul.f32 %v1049, %v1158
        %v1162 = vmul.f32 %v1050, %v1158
        %v1163 = vmul.f32 %v1051, %v1158
        %v1164 = vmul.f32 %v1052, %v1158
        %v1165 = vmul.f32 %v1053, %v1158
        %v1166 = vmul.f32 %v1054, %v1158
        %v1167 = vmul.f32 %v1055, %v1158
        %v1168 = vmul.f32 %v1056, %v1158
        %v1169 = vmul.f32 %v1057, %v1158
        %v1170 = vmul.f32 %v1058, %v1158
        %v1171 = vmul.f32 %v1059, %v1158
        %v1172 = vmul.f32 %v1060, %v1158
        %v1173 = vmul.f32 %v1061, %v1158
        %v1174 = vmul.f32 %v1062, %v1158
        %v1175 = vmul.f32 %v1063, %v1158
        %v1176 = vmul.f32 %v1064, %v1158
        %v1177 = vmul.f32 %v1065, %v1158
        %v1178 = vmul.f32 %v1066, %v1158
        %v1179 = vmul.f32 %v1067, %v1158
        %v1180 = vmul.f32 %v1068, %v1158
        %v1181 = vmul.f32 %v1069, %v1158
        %v1182 = vmul.f32 %v1070, %v1158
        %v1183 = vmul.f32 %v1071, %v1158
        %v1184 = vmul.f32 %v1072, %v1158
        %v1185 = vmul.f32 %v1073, %v1158
        %v1186 = vmul.f32 %v1074, %v1158
        %v1187 = vmul.f32 %v1075, %v1158
        %v1188 = vmul.f32 %v1076, %v1158
        %v1189 = vmul.f32 %v1077, %v1158
        %v1190 = vmul.f32 %v1078, %v1158
        %v1191 = vadd.f32 %v1122, %v1159
        %v1192 = vadd.f32 %v1123, %v1160
        %v1193 = vadd.f32 %v1124, %v1161
        %v1194 = vadd.f32 %v1125, %v1162
        %v1195 = vadd.f32 %v1126, %v1163
        %v1196 = vadd.f32 %v1127, %v1164
        %v1197 = vadd.f32 %v1128, %v1165
        %v1198 = vadd.f32 %v1129, %v1166
        %v1199 = vadd.f32 %v1130, %v1167
        %v1200 = vadd.f32 %v1131, %v1168
        %v1201 = vadd.f32 %v1132, %v1169
        %v1202 = vadd.f32 %v1133, %v1170
        %v1203 = vadd.f32 %v1134, %v1171
        %v1204 = vadd.f32 %v1135, %v1172
        %v1205 = vadd.f32 %v1136, %v1173
        %v1206 = vadd.f32 %v1137, %v1174
        %v1207 = vadd.f32 %v1138, %v1175
        %v1208 = vadd.f32 %v1139, %v1176
        %v1209 = vadd.f32 %v1140, %v1177
        %v1210 = vadd.f32 %v1141, %v1178
        %v1211 = vadd.f32 %v1142, %v1179
        %v1212 = vadd.f32 %v1143, %v1180
        %v1213 = vadd.f32 %v1144, %v1181
        %v1214 = vadd.f32 %v1145, %v1182
        %v1215 = vadd.f32 %v1146, %v1183
        %v1216 = vadd.f32 %v1147, %v1184
        %v1217 = vadd.f32 %v1148, %v1185
        %v1218 = vadd.f32 %v1149, %v1186
        %v1219 = vadd.f32 %v1150, %v1187
        %v1220 = vadd.f32 %v1151, %v1188
        %v1221 = vadd.f32 %v1152, %v1189
        %v1222 = vadd.f32 %v1153, %v1190
        %v1223 = vld [vmem:[#allocation4 + $0xb] sm:$0x1]
        %v1224 = vlaneseq
        %v1225 = vshrl.u32 %v1224, 7
        %v1226 = vsub.s32 0, %v1225
        %v1227 = vrot.slane %v1223, %v1226
        %v1228 = vmul.f32 %v1049, %v1227
        %v1229 = vmul.f32 %v1050, %v1227
        %v1230 = vmul.f32 %v1051, %v1227
        %v1231 = vmul.f32 %v1052, %v1227
        %v1232 = vmul.f32 %v1053, %v1227
        %v1233 = vmul.f32 %v1054, %v1227
        %v1234 = vmul.f32 %v1055, %v1227
        %v1235 = vmul.f32 %v1056, %v1227
        %v1236 = vmul.f32 %v1057, %v1227
        %v1237 = vmul.f32 %v1058, %v1227
        %v1238 = vmul.f32 %v1059, %v1227
        %v1239 = vmul.f32 %v1060, %v1227
        %v1240 = vmul.f32 %v1061, %v1227
        %v1241 = vmul.f32 %v1062, %v1227
        %v1242 = vmul.f32 %v1063, %v1227
        %v1243 = vmul.f32 %v1064, %v1227
        %v1244 = vmul.f32 %v1065, %v1227
        %v1245 = vmul.f32 %v1066, %v1227
        %v1246 = vmul.f32 %v1067, %v1227
        %v1247 = vmul.f32 %v1068, %v1227
        %v1248 = vmul.f32 %v1069, %v1227
        %v1249 = vmul.f32 %v1070, %v1227
        %v1250 = vmul.f32 %v1071, %v1227
        %v1251 = vmul.f32 %v1072, %v1227
        %v1252 = vmul.f32 %v1073, %v1227
        %v1253 = vmul.f32 %v1074, %v1227
        %v1254 = vmul.f32 %v1075, %v1227
        %v1255 = vmul.f32 %v1076, %v1227
        %v1256 = vmul.f32 %v1077, %v1227
        %v1257 = vmul.f32 %v1078, %v1227
        %v1258 = vmul.f32 %v1079, %v1227
        %v1259 = vmul.f32 %v1080, %v1227
        %v1260 = vadd.f32 %v1191, %v1228
        %v1261 = vadd.f32 %v1192, %v1229
        %v1262 = vadd.f32 %v1193, %v1230
        %v1263 = vadd.f32 %v1194, %v1231
        %v1264 = vadd.f32 %v1195, %v1232
        %v1265 = vadd.f32 %v1196, %v1233
        %v1266 = vadd.f32 %v1197, %v1234
        %v1267 = vadd.f32 %v1198, %v1235
        %v1268 = vadd.f32 %v1199, %v1236
        %v1269 = vadd.f32 %v1200, %v1237
        %v1270 = vadd.f32 %v1201, %v1238
        %v1271 = vadd.f32 %v1202, %v1239
        %v1272 = vadd.f32 %v1203, %v1240
        %v1273 = vadd.f32 %v1204, %v1241
        %v1274 = vadd.f32 %v1205, %v1242
        %v1275 = vadd.f32 %v1206, %v1243
        %v1276 = vadd.f32 %v1207, %v1244
        %v1277 = vadd.f32 %v1208, %v1245
        %v1278 = vadd.f32 %v1209, %v1246
        %v1279 = vadd.f32 %v1210, %v1247
        %v1280 = vadd.f32 %v1211, %v1248
        %v1281 = vadd.f32 %v1212, %v1249
        %v1282 = vadd.f32 %v1213, %v1250
        %v1283 = vadd.f32 %v1214, %v1251
        %v1284 = vadd.f32 %v1215, %v1252
        %v1285 = vadd.f32 %v1216, %v1253
        %v1286 = vadd.f32 %v1217, %v1254
        %v1287 = vadd.f32 %v1218, %v1255
        %v1288 = vadd.f32 %v1219, %v1256
        %v1289 = vadd.f32 %v1220, %v1257
        %v1290 = vadd.f32 %v1221, %v1258
        %v1291 = vadd.f32 %v1222, %v1259
        %v1292 = vld [vmem:[#allocation4 + $0x10] sm:$0x1]
        %v1293 = vlaneseq
        %v1294 = vshrl.u32 %v1293, 7
        %v1295 = vsub.s32 0, %v1294
        %v1296 = vrot.slane %v1292, %v1295
        %v1297 = vmul.f32 %v1051, %v1296
        %v1298 = vmul.f32 %v1052, %v1296
        %v1299 = vmul.f32 %v1053, %v1296
        %v1300 = vmul.f32 %v1054, %v1296
        %v1301 = vmul.f32 %v1055, %v1296
        %v1302 = vmul.f32 %v1056, %v1296
        %v1303 = vmul.f32 %v1057, %v1296
        %v1304 = vmul.f32 %v1058, %v1296
        %v1305 = vmul.f32 %v1059, %v1296
        %v1306 = vmul.f32 %v1060, %v1296
        %v1307 = vmul.f32 %v1061, %v1296
        %v1308 = vmul.f32 %v1062, %v1296
        %v1309 = vmul.f32 %v1063, %v1296
        %v1310 = vmul.f32 %v1064, %v1296
        %v1311 = vmul.f32 %v1065, %v1296
        %v1312 = vmul.f32 %v1066, %v1296
        %v1313 = vmul.f32 %v1067, %v1296
        %v1314 = vmul.f32 %v1068, %v1296
        %v1315 = vmul.f32 %v1069, %v1296
        %v1316 = vmul.f32 %v1070, %v1296
        %v1317 = vmul.f32 %v1071, %v1296
        %v1318 = vmul.f32 %v1072, %v1296
        %v1319 = vmul.f32 %v1073, %v1296
        %v1320 = vmul.f32 %v1074, %v1296
        %v1321 = vmul.f32 %v1075, %v1296
        %v1322 = vmul.f32 %v1076, %v1296
        %v1323 = vmul.f32 %v1077, %v1296
        %v1324 = vmul.f32 %v1078, %v1296
        %v1325 = vmul.f32 %v1079, %v1296
        %v1326 = vmul.f32 %v1080, %v1296
        %v1327 = vmul.f32 %v1081, %v1296
        %v1328 = vmul.f32 %v1082, %v1296
        %v1329 = vadd.f32 %v1260, %v1297
        %v1330 = vadd.f32 %v1261, %v1298
        %v1331 = vadd.f32 %v1262, %v1299
        %v1332 = vadd.f32 %v1263, %v1300
        %v1333 = vadd.f32 %v1264, %v1301
        %v1334 = vadd.f32 %v1265, %v1302
        %v1335 = vadd.f32 %v1266, %v1303
        %v1336 = vadd.f32 %v1267, %v1304
        %v1337 = vadd.f32 %v1268, %v1305
        %v1338 = vadd.f32 %v1269, %v1306
        %v1339 = vadd.f32 %v1270, %v1307
        %v1340 = vadd.f32 %v1271, %v1308
        %v1341 = vadd.f32 %v1272, %v1309
        %v1342 = vadd.f32 %v1273, %v1310
        %v1343 = vadd.f32 %v1274, %v1311
        %v1344 = vadd.f32 %v1275, %v1312
        %v1345 = vadd.f32 %v1276, %v1313
        %v1346 = vadd.f32 %v1277, %v1314
        %v1347 = vadd.f32 %v1278, %v1315
        %v1348 = vadd.f32 %v1279, %v1316
        %v1349 = vadd.f32 %v1280, %v1317
        %v1350 = vadd.f32 %v1281, %v1318
        %v1351 = vadd.f32 %v1282, %v1319
        %v1352 = vadd.f32 %v1283, %v1320
        %v1353 = vadd.f32 %v1284, %v1321
        %v1354 = vadd.f32 %v1285, %v1322
        %v1355 = vadd.f32 %v1286, %v1323
        %v1356 = vadd.f32 %v1287, %v1324
        %v1357 = vadd.f32 %v1288, %v1325
        %v1358 = vadd.f32 %v1289, %v1326
        %v1359 = vadd.f32 %v1290, %v1327
        %v1360 = vadd.f32 %v1291, %v1328
        %v1361 = vld [vmem:[#allocation4 + $0x15] sm:$0x1]
        %v1362 = vlaneseq
        %v1363 = vshrl.u32 %v1362, 7
        %v1364 = vsub.s32 0, %v1363
        %v1365 = vrot.slane %v1361, %v1364
        %v1366 = vmul.f32 %v1053, %v1365
        %v1367 = vmul.f32 %v1054, %v1365
        %v1368 = vmul.f32 %v1055, %v1365
        %v1369 = vmul.f32 %v1056, %v1365
        %v1370 = vmul.f32 %v1057, %v1365
        %v1371 = vmul.f32 %v1058, %v1365
        %v1372 = vmul.f32 %v1059, %v1365
        %v1373 = vmul.f32 %v1060, %v1365
        %v1374 = vmul.f32 %v1061, %v1365
        %v1375 = vmul.f32 %v1062, %v1365
        %v1376 = vmul.f32 %v1063, %v1365
        %v1377 = vmul.f32 %v1064, %v1365
        %v1378 = vmul.f32 %v1065, %v1365
        %v1379 = vmul.f32 %v1066, %v1365
        %v1380 = vmul.f32 %v1067, %v1365
        %v1381 = vmul.f32 %v1068, %v1365
        %v1382 = vmul.f32 %v1069, %v1365
        %v1383 = vmul.f32 %v1070, %v1365
        %v1384 = vmul.f32 %v1071, %v1365
        %v1385 = vmul.f32 %v1072, %v1365
        %v1386 = vmul.f32 %v1073, %v1365
        %v1387 = vmul.f32 %v1074, %v1365
        %v1388 = vmul.f32 %v1075, %v1365
        %v1389 = vmul.f32 %v1076, %v1365
        %v1390 = vmul.f32 %v1077, %v1365
        %v1391 = vmul.f32 %v1078, %v1365
        %v1392 = vmul.f32 %v1079, %v1365
        %v1393 = vmul.f32 %v1080, %v1365
        %v1394 = vmul.f32 %v1081, %v1365
        %v1395 = vmul.f32 %v1082, %v1365
        %v1396 = vmul.f32 %v1083, %v1365
        %v1397 = vmul.f32 %v1084, %v1365
        %v1398 = vadd.f32 %v1329, %v1366
        %v1399 = vadd.f32 %v1330, %v1367
        %v1400 = vadd.f32 %v1331, %v1368
        %v1401 = vadd.f32 %v1332, %v1369
        %v1402 = vadd.f32 %v1333, %v1370
        %v1403 = vadd.f32 %v1334, %v1371
        %v1404 = vadd.f32 %v1335, %v1372
        %v1405 = vadd.f32 %v1336, %v1373
        %v1406 = vadd.f32 %v1337, %v1374
        %v1407 = vadd.f32 %v1338, %v1375
        %v1408 = vadd.f32 %v1339, %v1376
        %v1409 = vadd.f32 %v1340, %v1377
        %v1410 = vadd.f32 %v1341, %v1378
        %v1411 = vadd.f32 %v1342, %v1379
        %v1412 = vadd.f32 %v1343, %v1380
        %v1413 = vadd.f32 %v1344, %v1381
        %v1414 = vadd.f32 %v1345, %v1382
        %v1415 = vadd.f32 %v1346, %v1383
        %v1416 = vadd.f32 %v1347, %v1384
        %v1417 = vadd.f32 %v1348, %v1385
        %v1418 = vadd.f32 %v1349, %v1386
        %v1419 = vadd.f32 %v1350, %v1387
        %v1420 = vadd.f32 %v1351, %v1388
        %v1421 = vadd.f32 %v1352, %v1389
        %v1422 = vadd.f32 %v1353, %v1390
        %v1423 = vadd.f32 %v1354, %v1391
        %v1424 = vadd.f32 %v1355, %v1392
        %v1425 = vadd.f32 %v1356, %v1393
        %v1426 = vadd.f32 %v1357, %v1394
        %v1427 = vadd.f32 %v1358, %v1395
        %v1428 = vadd.f32 %v1359, %v1396
        %v1429 = vadd.f32 %v1360, %v1397
        %v1430 = vld [vmem:[#allocation2 + $0x8] sm:$0xff]
        %v1431 = vld [vmem:[#allocation2 + $0x10] sm:$0xff]
        %v1432 = vld [vmem:[#allocation2 + $0x28] sm:$0xff]
        %v1433 = vld [vmem:[#allocation2 + $0x30] sm:$0xff]
        %v1434 = vld [vmem:[#allocation2 + $0x48] sm:$0xff]
        %v1435 = vld [vmem:[#allocation2 + $0x50] sm:$0xff]
        %v1436 = vld [vmem:[#allocation2 + $0x68] sm:$0xff]
        %v1437 = vld [vmem:[#allocation2 + $0x70] sm:$0xff]
        %v1438 = vld [vmem:[#allocation2 + $0x88] sm:$0xff]
        %v1439 = vld [vmem:[#allocation2 + $0x90] sm:$0xff]
        %v1440 = vld [vmem:[#allocation2 + $0xa8] sm:$0xff]
        %v1441 = vld [vmem:[#allocation2 + $0xb0] sm:$0xff]
        %v1442 = vld [vmem:[#allocation2 + $0xc8] sm:$0xff]
        %v1443 = vld [vmem:[#allocation2 + $0xd0] sm:$0xff]
        %v1444 = vld [vmem:[#allocation2 + $0xe8] sm:$0xff]
        %v1445 = vld [vmem:[#allocation2 + $0xf0] sm:$0xff]
        %v1446 = vld [vmem:[#allocation2 + $0x108] sm:$0xff]
        %v1447 = vld [vmem:[#allocation2 + $0x110] sm:$0xff]
        %v1448 = vld [vmem:[#allocation2 + $0x128] sm:$0xff]
        %v1449 = vld [vmem:[#allocation2 + $0x130] sm:$0xff]
        %v1450 = vld [vmem:[#allocation2 + $0x148] sm:$0xff]
        %v1451 = vld [vmem:[#allocation2 + $0x150] sm:$0xff]
        %v1452 = vld [vmem:[#allocation2 + $0x168] sm:$0xff]
        %v1453 = vld [vmem:[#allocation2 + $0x170] sm:$0xff]
        %v1454 = vld [vmem:[#allocation2 + $0x188] sm:$0xff]
        %v1455 = vld [vmem:[#allocation2 + $0x190] sm:$0xff]
        %v1456 = vld [vmem:[#allocation2 + $0x1a8] sm:$0xff]
        %v1457 = vld [vmem:[#allocation2 + $0x1b0] sm:$0xff]
        %v1458 = vld [vmem:[#allocation2 + $0x1c8] sm:$0xff]
        %v1459 = vld [vmem:[#allocation2 + $0x1d0] sm:$0xff]
        %v1460 = vld [vmem:[#allocation2 + $0x1e8] sm:$0xff]
        %v1461 = vld [vmem:[#allocation2 + $0x1f0] sm:$0xff]
        %v1462 = vld [vmem:[#allocation2 + $0x208] sm:$0xff]
        %v1463 = vld [vmem:[#allocation2 + $0x210] sm:$0xff]
        %v1464 = vld [vmem:[#allocation2 + $0x228] sm:$0xff]
        %v1465 = vld [vmem:[#allocation2 + $0x230] sm:$0xff]
        %v1466 = vld [vmem:[#allocation2 + $0x248] sm:$0xff]
        %v1467 = vld [vmem:[#allocation2 + $0x250] sm:$0xff]
        %v1468 = vld [vmem:[#allocation2 + $0x268] sm:$0xff]
        %v1469 = vld [vmem:[#allocation2 + $0x270] sm:$0xff]
        %v1470 = vld [vmem:[#allocation4 + $0x2] sm:$0x1]
        %v1471 = vlaneseq
        %v1472 = vshrl.u32 %v1471, 7
        %v1473 = vsub.s32 0, %v1472
        %v1474 = vrot.slane %v1470, %v1473
        %v1475 = vmul.f32 %v1430, %v1474
        %v1476 = vmul.f32 %v1431, %v1474
        %v1477 = vmul.f32 %v1432, %v1474
        %v1478 = vmul.f32 %v1433, %v1474
        %v1479 = vmul.f32 %v1434, %v1474
        %v1480 = vmul.f32 %v1435, %v1474
        %v1481 = vmul.f32 %v1436, %v1474
        %v1482 = vmul.f32 %v1437, %v1474
        %v1483 = vmul.f32 %v1438, %v1474
        %v1484 = vmul.f32 %v1439, %v1474
        %v1485 = vmul.f32 %v1440, %v1474
        %v1486 = vmul.f32 %v1441, %v1474
        %v1487 = vmul.f32 %v1442, %v1474
        %v1488 = vmul.f32 %v1443, %v1474
        %v1489 = vmul.f32 %v1444, %v1474
        %v1490 = vmul.f32 %v1445, %v1474
        %v1491 = vmul.f32 %v1446, %v1474
        %v1492 = vmul.f32 %v1447, %v1474
        %v1493 = vmul.f32 %v1448, %v1474
        %v1494 = vmul.f32 %v1449, %v1474
        %v1495 = vmul.f32 %v1450, %v1474
        %v1496 = vmul.f32 %v1451, %v1474
        %v1497 = vmul.f32 %v1452, %v1474
        %v1498 = vmul.f32 %v1453, %v1474
        %v1499 = vmul.f32 %v1454, %v1474
        %v1500 = vmul.f32 %v1455, %v1474
        %v1501 = vmul.f32 %v1456, %v1474
        %v1502 = vmul.f32 %v1457, %v1474
        %v1503 = vmul.f32 %v1458, %v1474
        %v1504 = vmul.f32 %v1459, %v1474
        %v1505 = vmul.f32 %v1460, %v1474
        %v1506 = vmul.f32 %v1461, %v1474
        %v1507 = vadd.f32 %v1398, %v1475
        %v1508 = vadd.f32 %v1399, %v1476
        %v1509 = vadd.f32 %v1400, %v1477
        %v1510 = vadd.f32 %v1401, %v1478
        %v1511 = vadd.f32 %v1402, %v1479
        %v1512 = vadd.f32 %v1403, %v1480
        %v1513 = vadd.f32 %v1404, %v1481
        %v1514 = vadd.f32 %v1405, %v1482
        %v1515 = vadd.f32 %v1406, %v1483
        %v1516 = vadd.f32 %v1407, %v1484
        %v1517 = vadd.f32 %v1408, %v1485
        %v1518 = vadd.f32 %v1409, %v1486
        %v1519 = vadd.f32 %v1410, %v1487
        %v1520 = vadd.f32 %v1411, %v1488
        %v1521 = vadd.f32 %v1412, %v1489
        %v1522 = vadd.f32 %v1413, %v1490
        %v1523 = vadd.f32 %v1414, %v1491
        %v1524 = vadd.f32 %v1415, %v1492
        %v1525 = vadd.f32 %v1416, %v1493
        %v1526 = vadd.f32 %v1417, %v1494
        %v1527 = vadd.f32 %v1418, %v1495
        %v1528 = vadd.f32 %v1419, %v1496
        %v1529 = vadd.f32 %v1420, %v1497
        %v1530 = vadd.f32 %v1421, %v1498
        %v1531 = vadd.f32 %v1422, %v1499
        %v1532 = vadd.f32 %v1423, %v1500
        %v1533 = vadd.f32 %v1424, %v1501
        %v1534 = vadd.f32 %v1425, %v1502
        %v1535 = vadd.f32 %v1426, %v1503
        %v1536 = vadd.f32 %v1427, %v1504
        %v1537 = vadd.f32 %v1428, %v1505
        %v1538 = vadd.f32 %v1429, %v1506
        %v1539 = vld [vmem:[#allocation4 + $0x7] sm:$0x1]
        %v1540 = vlaneseq
        %v1541 = vshrl.u32 %v1540, 7
        %v1542 = vsub.s32 0, %v1541
        %v1543 = vrot.slane %v1539, %v1542
        %v1544 = vmul.f32 %v1432, %v1543
        %v1545 = vmul.f32 %v1433, %v1543
        %v1546 = vmul.f32 %v1434, %v1543
        %v1547 = vmul.f32 %v1435, %v1543
        %v1548 = vmul.f32 %v1436, %v1543
        %v1549 = vmul.f32 %v1437, %v1543
        %v1550 = vmul.f32 %v1438, %v1543
        %v1551 = vmul.f32 %v1439, %v1543
        %v1552 = vmul.f32 %v1440, %v1543
        %v1553 = vmul.f32 %v1441, %v1543
        %v1554 = vmul.f32 %v1442, %v1543
        %v1555 = vmul.f32 %v1443, %v1543
        %v1556 = vmul.f32 %v1444, %v1543
        %v1557 = vmul.f32 %v1445, %v1543
        %v1558 = vmul.f32 %v1446, %v1543
        %v1559 = vmul.f32 %v1447, %v1543
        %v1560 = vmul.f32 %v1448, %v1543
        %v1561 = vmul.f32 %v1449, %v1543
        %v1562 = vmul.f32 %v1450, %v1543
        %v1563 = vmul.f32 %v1451, %v1543
        %v1564 = vmul.f32 %v1452, %v1543
        %v1565 = vmul.f32 %v1453, %v1543
        %v1566 = vmul.f32 %v1454, %v1543
        %v1567 = vmul.f32 %v1455, %v1543
        %v1568 = vmul.f32 %v1456, %v1543
        %v1569 = vmul.f32 %v1457, %v1543
        %v1570 = vmul.f32 %v1458, %v1543
        %v1571 = vmul.f32 %v1459, %v1543
        %v1572 = vmul.f32 %v1460, %v1543
        %v1573 = vmul.f32 %v1461, %v1543
        %v1574 = vmul.f32 %v1462, %v1543
        %v1575 = vmul.f32 %v1463, %v1543
        %v1576 = vadd.f32 %v1507, %v1544
        %v1577 = vadd.f32 %v1508, %v1545
        %v1578 = vadd.f32 %v1509, %v1546
        %v1579 = vadd.f32 %v1510, %v1547
        %v1580 = vadd.f32 %v1511, %v1548
        %v1581 = vadd.f32 %v1512, %v1549
        %v1582 = vadd.f32 %v1513, %v1550
        %v1583 = vadd.f32 %v1514, %v1551
        %v1584 = vadd.f32 %v1515, %v1552
        %v1585 = vadd.f32 %v1516, %v1553
        %v1586 = vadd.f32 %v1517, %v1554
        %v1587 = vadd.f32 %v1518, %v1555
        %v1588 = vadd.f32 %v1519, %v1556
        %v1589 = vadd.f32 %v1520, %v1557
        %v1590 = vadd.f32 %v1521, %v1558
        %v1591 = vadd.f32 %v1522, %v1559
        %v1592 = vadd.f32 %v1523, %v1560
        %v1593 = vadd.f32 %v1524, %v1561
        %v1594 = vadd.f32 %v1525, %v1562
        %v1595 = vadd.f32 %v1526, %v1563
        %v1596 = vadd.f32 %v1527, %v1564
        %v1597 = vadd.f32 %v1528, %v1565
        %v1598 = vadd.f32 %v1529, %v1566
        %v1599 = vadd.f32 %v1530, %v1567
        %v1600 = vadd.f32 %v1531, %v1568
        %v1601 = vadd.f32 %v1532, %v1569
        %v1602 = vadd.f32 %v1533, %v1570
        %v1603 = vadd.f32 %v1534, %v1571
        %v1604 = vadd.f32 %v1535, %v1572
        %v1605 = vadd.f32 %v1536, %v1573
        %v1606 = vadd.f32 %v1537, %v1574
        %v1607 = vadd.f32 %v1538, %v1575
        %v1608 = vld [vmem:[#allocation4 + $0xc] sm:$0x1]
        %v1609 = vlaneseq
        %v1610 = vshrl.u32 %v1609, 7
        %v1611 = vsub.s32 0, %v1610
        %v1612 = vrot.slane %v1608, %v1611
        %v1613 = vmul.f32 %v1434, %v1612
        %v1614 = vmul.f32 %v1435, %v1612
        %v1615 = vmul.f32 %v1436, %v1612
        %v1616 = vmul.f32 %v1437, %v1612
        %v1617 = vmul.f32 %v1438, %v1612
        %v1618 = vmul.f32 %v1439, %v1612
        %v1619 = vmul.f32 %v1440, %v1612
        %v1620 = vmul.f32 %v1441, %v1612
        %v1621 = vmul.f32 %v1442, %v1612
        %v1622 = vmul.f32 %v1443, %v1612
        %v1623 = vmul.f32 %v1444, %v1612
        %v1624 = vmul.f32 %v1445, %v1612
        %v1625 = vmul.f32 %v1446, %v1612
        %v1626 = vmul.f32 %v1447, %v1612
        %v1627 = vmul.f32 %v1448, %v1612
        %v1628 = vmul.f32 %v1449, %v1612
        %v1629 = vmul.f32 %v1450, %v1612
        %v1630 = vmul.f32 %v1451, %v1612
        %v1631 = vmul.f32 %v1452, %v1612
        %v1632 = vmul.f32 %v1453, %v1612
        %v1633 = vmul.f32 %v1454, %v1612
        %v1634 = vmul.f32 %v1455, %v1612
        %v1635 = vmul.f32 %v1456, %v1612
        %v1636 = vmul.f32 %v1457, %v1612
        %v1637 = vmul.f32 %v1458, %v1612
        %v1638 = vmul.f32 %v1459, %v1612
        %v1639 = vmul.f32 %v1460, %v1612
        %v1640 = vmul.f32 %v1461, %v1612
        %v1641 = vmul.f32 %v1462, %v1612
        %v1642 = vmul.f32 %v1463, %v1612
        %v1643 = vmul.f32 %v1464, %v1612
        %v1644 = vmul.f32 %v1465, %v1612
        %v1645 = vadd.f32 %v1576, %v1613
        %v1646 = vadd.f32 %v1577, %v1614
        %v1647 = vadd.f32 %v1578, %v1615
        %v1648 = vadd.f32 %v1579, %v1616
        %v1649 = vadd.f32 %v1580, %v1617
        %v1650 = vadd.f32 %v1581, %v1618
        %v1651 = vadd.f32 %v1582, %v1619
        %v1652 = vadd.f32 %v1583, %v1620
        %v1653 = vadd.f32 %v1584, %v1621
        %v1654 = vadd.f32 %v1585, %v1622
        %v1655 = vadd.f32 %v1586, %v1623
        %v1656 = vadd.f32 %v1587, %v1624
        %v1657 = vadd.f32 %v1588, %v1625
        %v1658 = vadd.f32 %v1589, %v1626
        %v1659 = vadd.f32 %v1590, %v1627
        %v1660 = vadd.f32 %v1591, %v1628
        %v1661 = vadd.f32 %v1592, %v1629
        %v1662 = vadd.f32 %v1593, %v1630
        %v1663 = vadd.f32 %v1594, %v1631
        %v1664 = vadd.f32 %v1595, %v1632
        %v1665 = vadd.f32 %v1596, %v1633
        %v1666 = vadd.f32 %v1597, %v1634
        %v1667 = vadd.f32 %v1598, %v1635
        %v1668 = vadd.f32 %v1599, %v1636
        %v1669 = vadd.f32 %v1600, %v1637
        %v1670 = vadd.f32 %v1601, %v1638
        %v1671 = vadd.f32 %v1602, %v1639
        %v1672 = vadd.f32 %v1603, %v1640
        %v1673 = vadd.f32 %v1604, %v1641
        %v1674 = vadd.f32 %v1605, %v1642
        %v1675 = vadd.f32 %v1606, %v1643
        %v1676 = vadd.f32 %v1607, %v1644
        %v1677 = vld [vmem:[#allocation4 + $0x11] sm:$0x1]
        %v1678 = vlaneseq
        %v1679 = vshrl.u32 %v1678, 7
        %v1680 = vsub.s32 0, %v1679
        %v1681 = vrot.slane %v1677, %v1680
        %v1682 = vmul.f32 %v1436, %v1681
        %v1683 = vmul.f32 %v1437, %v1681
        %v1684 = vmul.f32 %v1438, %v1681
        %v1685 = vmul.f32 %v1439, %v1681
        %v1686 = vmul.f32 %v1440, %v1681
        %v1687 = vmul.f32 %v1441, %v1681
        %v1688 = vmul.f32 %v1442, %v1681
        %v1689 = vmul.f32 %v1443, %v1681
        %v1690 = vmul.f32 %v1444, %v1681
        %v1691 = vmul.f32 %v1445, %v1681
        %v1692 = vmul.f32 %v1446, %v1681
        %v1693 = vmul.f32 %v1447, %v1681
        %v1694 = vmul.f32 %v1448, %v1681
        %v1695 = vmul.f32 %v1449, %v1681
        %v1696 = vmul.f32 %v1450, %v1681
        %v1697 = vmul.f32 %v1451, %v1681
        %v1698 = vmul.f32 %v1452, %v1681
        %v1699 = vmul.f32 %v1453, %v1681
        %v1700 = vmul.f32 %v1454, %v1681
        %v1701 = vmul.f32 %v1455, %v1681
        %v1702 = vmul.f32 %v1456, %v1681
        %v1703 = vmul.f32 %v1457, %v1681
        %v1704 = vmul.f32 %v1458, %v1681
        %v1705 = vmul.f32 %v1459, %v1681
        %v1706 = vmul.f32 %v1460, %v1681
        %v1707 = vmul.f32 %v1461, %v1681
        %v1708 = vmul.f32 %v1462, %v1681
        %v1709 = vmul.f32 %v1463, %v1681
        %v1710 = vmul.f32 %v1464, %v1681
        %v1711 = vmul.f32 %v1465, %v1681
        %v1712 = vmul.f32 %v1466, %v1681
        %v1713 = vmul.f32 %v1467, %v1681
        %v1714 = vadd.f32 %v1645, %v1682
        %v1715 = vadd.f32 %v1646, %v1683
        %v1716 = vadd.f32 %v1647, %v1684
        %v1717 = vadd.f32 %v1648, %v1685
        %v1718 = vadd.f32 %v1649, %v1686
        %v1719 = vadd.f32 %v1650, %v1687
        %v1720 = vadd.f32 %v1651, %v1688
        %v1721 = vadd.f32 %v1652, %v1689
        %v1722 = vadd.f32 %v1653, %v1690
        %v1723 = vadd.f32 %v1654, %v1691
        %v1724 = vadd.f32 %v1655, %v1692
        %v1725 = vadd.f32 %v1656, %v1693
        %v1726 = vadd.f32 %v1657, %v1694
        %v1727 = vadd.f32 %v1658, %v1695
        %v1728 = vadd.f32 %v1659, %v1696
        %v1729 = vadd.f32 %v1660, %v1697
        %v1730 = vadd.f32 %v1661, %v1698
        %v1731 = vadd.f32 %v1662, %v1699
        %v1732 = vadd.f32 %v1663, %v1700
        %v1733 = vadd.f32 %v1664, %v1701
        %v1734 = vadd.f32 %v1665, %v1702
        %v1735 = vadd.f32 %v1666, %v1703
        %v1736 = vadd.f32 %v1667, %v1704
        %v1737 = vadd.f32 %v1668, %v1705
        %v1738 = vadd.f32 %v1669, %v1706
        %v1739 = vadd.f32 %v1670, %v1707
        %v1740 = vadd.f32 %v1671, %v1708
        %v1741 = vadd.f32 %v1672, %v1709
        %v1742 = vadd.f32 %v1673, %v1710
        %v1743 = vadd.f32 %v1674, %v1711
        %v1744 = vadd.f32 %v1675, %v1712
        %v1745 = vadd.f32 %v1676, %v1713
        %v1746 = vld [vmem:[#allocation4 + $0x16] sm:$0x1]
        %v1747 = vlaneseq
        %v1748 = vshrl.u32 %v1747, 7
        %v1749 = vsub.s32 0, %v1748
        %v1750 = vrot.slane %v1746, %v1749
        %v1751 = vmul.f32 %v1438, %v1750
        %v1752 = vmul.f32 %v1439, %v1750
        %v1753 = vmul.f32 %v1440, %v1750
        %v1754 = vmul.f32 %v1441, %v1750
        %v1755 = vmul.f32 %v1442, %v1750
        %v1756 = vmul.f32 %v1443, %v1750
        %v1757 = vmul.f32 %v1444, %v1750
        %v1758 = vmul.f32 %v1445, %v1750
        %v1759 = vmul.f32 %v1446, %v1750
        %v1760 = vmul.f32 %v1447, %v1750
        %v1761 = vmul.f32 %v1448, %v1750
        %v1762 = vmul.f32 %v1449, %v1750
        %v1763 = vmul.f32 %v1450, %v1750
        %v1764 = vmul.f32 %v1451, %v1750
        %v1765 = vmul.f32 %v1452, %v1750
        %v1766 = vmul.f32 %v1453, %v1750
        %v1767 = vmul.f32 %v1454, %v1750
        %v1768 = vmul.f32 %v1455, %v1750
        %v1769 = vmul.f32 %v1456, %v1750
        %v1770 = vmul.f32 %v1457, %v1750
        %v1771 = vmul.f32 %v1458, %v1750
        %v1772 = vmul.f32 %v1459, %v1750
        %v1773 = vmul.f32 %v1460, %v1750
        %v1774 = vmul.f32 %v1461, %v1750
        %v1775 = vmul.f32 %v1462, %v1750
        %v1776 = vmul.f32 %v1463, %v1750
        %v1777 = vmul.f32 %v1464, %v1750
        %v1778 = vmul.f32 %v1465, %v1750
        %v1779 = vmul.f32 %v1466, %v1750
        %v1780 = vmul.f32 %v1467, %v1750
        %v1781 = vmul.f32 %v1468, %v1750
        %v1782 = vmul.f32 %v1469, %v1750
        %v1783 = vadd.f32 %v1714, %v1751
        %v1784 = vadd.f32 %v1715, %v1752
        %v1785 = vadd.f32 %v1716, %v1753
        %v1786 = vadd.f32 %v1717, %v1754
        %v1787 = vadd.f32 %v1718, %v1755
        %v1788 = vadd.f32 %v1719, %v1756
        %v1789 = vadd.f32 %v1720, %v1757
        %v1790 = vadd.f32 %v1721, %v1758
        %v1791 = vadd.f32 %v1722, %v1759
        %v1792 = vadd.f32 %v1723, %v1760
        %v1793 = vadd.f32 %v1724, %v1761
        %v1794 = vadd.f32 %v1725, %v1762
        %v1795 = vadd.f32 %v1726, %v1763
        %v1796 = vadd.f32 %v1727, %v1764
        %v1797 = vadd.f32 %v1728, %v1765
        %v1798 = vadd.f32 %v1729, %v1766
        %v1799 = vadd.f32 %v1730, %v1767
        %v1800 = vadd.f32 %v1731, %v1768
        %v1801 = vadd.f32 %v1732, %v1769
        %v1802 = vadd.f32 %v1733, %v1770
        %v1803 = vadd.f32 %v1734, %v1771
        %v1804 = vadd.f32 %v1735, %v1772
        %v1805 = vadd.f32 %v1736, %v1773
        %v1806 = vadd.f32 %v1737, %v1774
        %v1807 = vadd.f32 %v1738, %v1775
        %v1808 = vadd.f32 %v1739, %v1776
        %v1809 = vadd.f32 %v1740, %v1777
        %v1810 = vadd.f32 %v1741, %v1778
        %v1811 = vadd.f32 %v1742, %v1779
        %v1812 = vadd.f32 %v1743, %v1780
        %v1813 = vadd.f32 %v1744, %v1781
        %v1814 = vadd.f32 %v1745, %v1782
        %v1815 = vld [vmem:[#allocation2 + $0x9] sm:$0xff]
        %v1816 = vld [vmem:[#allocation2 + $0x11] sm:$0xff]
        %v1817 = vld [vmem:[#allocation2 + $0x29] sm:$0xff]
        %v1818 = vld [vmem:[#allocation2 + $0x31] sm:$0xff]
        %v1819 = vld [vmem:[#allocation2 + $0x49] sm:$0xff]
        %v1820 = vld [vmem:[#allocation2 + $0x51] sm:$0xff]
        %v1821 = vld [vmem:[#allocation2 + $0x69] sm:$0xff]
        %v1822 = vld [vmem:[#allocation2 + $0x71] sm:$0xff]
        %v1823 = vld [vmem:[#allocation2 + $0x89] sm:$0xff]
        %v1824 = vld [vmem:[#allocation2 + $0x91] sm:$0xff]
        %v1825 = vld [vmem:[#allocation2 + $0xa9] sm:$0xff]
        %v1826 = vld [vmem:[#allocation2 + $0xb1] sm:$0xff]
        %v1827 = vld [vmem:[#allocation2 + $0xc9] sm:$0xff]
        %v1828 = vld [vmem:[#allocation2 + $0xd1] sm:$0xff]
        %v1829 = vld [vmem:[#allocation2 + $0xe9] sm:$0xff]
        %v1830 = vld [vmem:[#allocation2 + $0xf1] sm:$0xff]
        %v1831 = vld [vmem:[#allocation2 + $0x109] sm:$0xff]
        %v1832 = vld [vmem:[#allocation2 + $0x111] sm:$0xff]
        %v1833 = vld [vmem:[#allocation2 + $0x129] sm:$0xff]
        %v1834 = vld [vmem:[#allocation2 + $0x131] sm:$0xff]
        %v1835 = vld [vmem:[#allocation2 + $0x149] sm:$0xff]
        %v1836 = vld [vmem:[#allocation2 + $0x151] sm:$0xff]
        %v1837 = vld [vmem:[#allocation2 + $0x169] sm:$0xff]
        %v1838 = vld [vmem:[#allocation2 + $0x171] sm:$0xff]
        %v1839 = vld [vmem:[#allocation2 + $0x189] sm:$0xff]
        %v1840 = vld [vmem:[#allocation2 + $0x191] sm:$0xff]
        %v1841 = vld [vmem:[#allocation2 + $0x1a9] sm:$0xff]
        %v1842 = vld [vmem:[#allocation2 + $0x1b1] sm:$0xff]
        %v1843 = vld [vmem:[#allocation2 + $0x1c9] sm:$0xff]
        %v1844 = vld [vmem:[#allocation2 + $0x1d1] sm:$0xff]
        %v1845 = vld [vmem:[#allocation2 + $0x1e9] sm:$0xff]
        %v1846 = vld [vmem:[#allocation2 + $0x1f1] sm:$0xff]
        %v1847 = vld [vmem:[#allocation2 + $0x209] sm:$0xff]
        %v1848 = vld [vmem:[#allocation2 + $0x211] sm:$0xff]
        %v1849 = vld [vmem:[#allocation2 + $0x229] sm:$0xff]
        %v1850 = vld [vmem:[#allocation2 + $0x231] sm:$0xff]
        %v1851 = vld [vmem:[#allocation2 + $0x249] sm:$0xff]
        %v1852 = vld [vmem:[#allocation2 + $0x251] sm:$0xff]
        %v1853 = vld [vmem:[#allocation2 + $0x269] sm:$0xff]
        %v1854 = vld [vmem:[#allocation2 + $0x271] sm:$0xff]
        %v1855 = vld [vmem:[#allocation4 + $0x3] sm:$0x1]
        %v1856 = vlaneseq
        %v1857 = vshrl.u32 %v1856, 7
        %v1858 = vsub.s32 0, %v1857
        %v1859 = vrot.slane %v1855, %v1858
        %v1860 = vmul.f32 %v1815, %v1859
        %v1861 = vmul.f32 %v1816, %v1859
        %v1862 = vmul.f32 %v1817, %v1859
        %v1863 = vmul.f32 %v1818, %v1859
        %v1864 = vmul.f32 %v1819, %v1859
        %v1865 = vmul.f32 %v1820, %v1859
        %v1866 = vmul.f32 %v1821, %v1859
        %v1867 = vmul.f32 %v1822, %v1859
        %v1868 = vmul.f32 %v1823, %v1859
        %v1869 = vmul.f32 %v1824, %v1859
        %v1870 = vmul.f32 %v1825, %v1859
        %v1871 = vmul.f32 %v1826, %v1859
        %v1872 = vmul.f32 %v1827, %v1859
        %v1873 = vmul.f32 %v1828, %v1859
        %v1874 = vmul.f32 %v1829, %v1859
        %v1875 = vmul.f32 %v1830, %v1859
        %v1876 = vmul.f32 %v1831, %v1859
        %v1877 = vmul.f32 %v1832, %v1859
        %v1878 = vmul.f32 %v1833, %v1859
        %v1879 = vmul.f32 %v1834, %v1859
        %v1880 = vmul.f32 %v1835, %v1859
        %v1881 = vmul.f32 %v1836, %v1859
        %v1882 = vmul.f32 %v1837, %v1859
        %v1883 = vmul.f32 %v1838, %v1859
        %v1884 = vmul.f32 %v1839, %v1859
        %v1885 = vmul.f32 %v1840, %v1859
        %v1886 = vmul.f32 %v1841, %v1859
        %v1887 = vmul.f32 %v1842, %v1859
        %v1888 = vmul.f32 %v1843, %v1859
        %v1889 = vmul.f32 %v1844, %v1859
        %v1890 = vmul.f32 %v1845, %v1859
        %v1891 = vmul.f32 %v1846, %v1859
        %v1892 = vadd.f32 %v1783, %v1860
        %v1893 = vadd.f32 %v1784, %v1861
        %v1894 = vadd.f32 %v1785, %v1862
        %v1895 = vadd.f32 %v1786, %v1863
        %v1896 = vadd.f32 %v1787, %v1864
        %v1897 = vadd.f32 %v1788, %v1865
        %v1898 = vadd.f32 %v1789, %v1866
        %v1899 = vadd.f32 %v1790, %v1867
        %v1900 = vadd.f32 %v1791, %v1868
        %v1901 = vadd.f32 %v1792, %v1869
        %v1902 = vadd.f32 %v1793, %v1870
        %v1903 = vadd.f32 %v1794, %v1871
        %v1904 = vadd.f32 %v1795, %v1872
        %v1905 = vadd.f32 %v1796, %v1873
        %v1906 = vadd.f32 %v1797, %v1874
        %v1907 = vadd.f32 %v1798, %v1875
        %v1908 = vadd.f32 %v1799, %v1876
        %v1909 = vadd.f32 %v1800, %v1877
        %v1910 = vadd.f32 %v1801, %v1878
        %v1911 = vadd.f32 %v1802, %v1879
        %v1912 = vadd.f32 %v1803, %v1880
        %v1913 = vadd.f32 %v1804, %v1881
        %v1914 = vadd.f32 %v1805, %v1882
        %v1915 = vadd.f32 %v1806, %v1883
        %v1916 = vadd.f32 %v1807, %v1884
        %v1917 = vadd.f32 %v1808, %v1885
        %v1918 = vadd.f32 %v1809, %v1886
        %v1919 = vadd.f32 %v1810, %v1887
        %v1920 = vadd.f32 %v1811, %v1888
        %v1921 = vadd.f32 %v1812, %v1889
        %v1922 = vadd.f32 %v1813, %v1890
        %v1923 = vadd.f32 %v1814, %v1891
        %v1924 = vld [vmem:[#allocation4 + $0x8] sm:$0x1]
        %v1925 = vlaneseq
        %v1926 = vshrl.u32 %v1925, 7
        %v1927 = vsub.s32 0, %v1926
        %v1928 = vrot.slane %v1924, %v1927
        %v1929 = vmul.f32 %v1817, %v1928
        %v1930 = vmul.f32 %v1818, %v1928
        %v1931 = vmul.f32 %v1819, %v1928
        %v1932 = vmul.f32 %v1820, %v1928
        %v1933 = vmul.f32 %v1821, %v1928
        %v1934 = vmul.f32 %v1822, %v1928
        %v1935 = vmul.f32 %v1823, %v1928
        %v1936 = vmul.f32 %v1824, %v1928
        %v1937 = vmul.f32 %v1825, %v1928
        %v1938 = vmul.f32 %v1826, %v1928
        %v1939 = vmul.f32 %v1827, %v1928
        %v1940 = vmul.f32 %v1828, %v1928
        %v1941 = vmul.f32 %v1829, %v1928
        %v1942 = vmul.f32 %v1830, %v1928
        %v1943 = vmul.f32 %v1831, %v1928
        %v1944 = vmul.f32 %v1832, %v1928
        %v1945 = vmul.f32 %v1833, %v1928
        %v1946 = vmul.f32 %v1834, %v1928
        %v1947 = vmul.f32 %v1835, %v1928
        %v1948 = vmul.f32 %v1836, %v1928
        %v1949 = vmul.f32 %v1837, %v1928
        %v1950 = vmul.f32 %v1838, %v1928
        %v1951 = vmul.f32 %v1839, %v1928
        %v1952 = vmul.f32 %v1840, %v1928
        %v1953 = vmul.f32 %v1841, %v1928
        %v1954 = vmul.f32 %v1842, %v1928
        %v1955 = vmul.f32 %v1843, %v1928
        %v1956 = vmul.f32 %v1844, %v1928
        %v1957 = vmul.f32 %v1845, %v1928
        %v1958 = vmul.f32 %v1846, %v1928
        %v1959 = vmul.f32 %v1847, %v1928
        %v1960 = vmul.f32 %v1848, %v1928
        %v1961 = vadd.f32 %v1892, %v1929
        %v1962 = vadd.f32 %v1893, %v1930
        %v1963 = vadd.f32 %v1894, %v1931
        %v1964 = vadd.f32 %v1895, %v1932
        %v1965 = vadd.f32 %v1896, %v1933
        %v1966 = vadd.f32 %v1897, %v1934
        %v1967 = vadd.f32 %v1898, %v1935
        %v1968 = vadd.f32 %v1899, %v1936
        %v1969 = vadd.f32 %v1900, %v1937
        %v1970 = vadd.f32 %v1901, %v1938
        %v1971 = vadd.f32 %v1902, %v1939
        %v1972 = vadd.f32 %v1903, %v1940
        %v1973 = vadd.f32 %v1904, %v1941
        %v1974 = vadd.f32 %v1905, %v1942
        %v1975 = vadd.f32 %v1906, %v1943
        %v1976 = vadd.f32 %v1907, %v1944
        %v1977 = vadd.f32 %v1908, %v1945
        %v1978 = vadd.f32 %v1909, %v1946
        %v1979 = vadd.f32 %v1910, %v1947
        %v1980 = vadd.f32 %v1911, %v1948
        %v1981 = vadd.f32 %v1912, %v1949
        %v1982 = vadd.f32 %v1913, %v1950
        %v1983 = vadd.f32 %v1914, %v1951
        %v1984 = vadd.f32 %v1915, %v1952
        %v1985 = vadd.f32 %v1916, %v1953
        %v1986 = vadd.f32 %v1917, %v1954
        %v1987 = vadd.f32 %v1918, %v1955
        %v1988 = vadd.f32 %v1919, %v1956
        %v1989 = vadd.f32 %v1920, %v1957
        %v1990 = vadd.f32 %v1921, %v1958
        %v1991 = vadd.f32 %v1922, %v1959
        %v1992 = vadd.f32 %v1923, %v1960
        %v1993 = vld [vmem:[#allocation4 + $0xd] sm:$0x1]
        %v1994 = vlaneseq
        %v1995 = vshrl.u32 %v1994, 7
        %v1996 = vsub.s32 0, %v1995
        %v1997 = vrot.slane %v1993, %v1996
        %v1998 = vmul.f32 %v1819, %v1997
        %v1999 = vmul.f32 %v1820, %v1997
        %v2000 = vmul.f32 %v1821, %v1997
        %v2001 = vmul.f32 %v1822, %v1997
        %v2002 = vmul.f32 %v1823, %v1997
        %v2003 = vmul.f32 %v1824, %v1997
        %v2004 = vmul.f32 %v1825, %v1997
        %v2005 = vmul.f32 %v1826, %v1997
        %v2006 = vmul.f32 %v1827, %v1997
        %v2007 = vmul.f32 %v1828, %v1997
        %v2008 = vmul.f32 %v1829, %v1997
        %v2009 = vmul.f32 %v1830, %v1997
        %v2010 = vmul.f32 %v1831, %v1997
        %v2011 = vmul.f32 %v1832, %v1997
        %v2012 = vmul.f32 %v1833, %v1997
        %v2013 = vmul.f32 %v1834, %v1997
        %v2014 = vmul.f32 %v1835, %v1997
        %v2015 = vmul.f32 %v1836, %v1997
        %v2016 = vmul.f32 %v1837, %v1997
        %v2017 = vmul.f32 %v1838, %v1997
        %v2018 = vmul.f32 %v1839, %v1997
        %v2019 = vmul.f32 %v1840, %v1997
        %v2020 = vmul.f32 %v1841, %v1997
        %v2021 = vmul.f32 %v1842, %v1997
        %v2022 = vmul.f32 %v1843, %v1997
        %v2023 = vmul.f32 %v1844, %v1997
        %v2024 = vmul.f32 %v1845, %v1997
        %v2025 = vmul.f32 %v1846, %v1997
        %v2026 = vmul.f32 %v1847, %v1997
        %v2027 = vmul.f32 %v1848, %v1997
        %v2028 = vmul.f32 %v1849, %v1997
        %v2029 = vmul.f32 %v1850, %v1997
        %v2030 = vadd.f32 %v1961, %v1998
        %v2031 = vadd.f32 %v1962, %v1999
        %v2032 = vadd.f32 %v1963, %v2000
        %v2033 = vadd.f32 %v1964, %v2001
        %v2034 = vadd.f32 %v1965, %v2002
        %v2035 = vadd.f32 %v1966, %v2003
        %v2036 = vadd.f32 %v1967, %v2004
        %v2037 = vadd.f32 %v1968, %v2005
        %v2038 = vadd.f32 %v1969, %v2006
        %v2039 = vadd.f32 %v1970, %v2007
        %v2040 = vadd.f32 %v1971, %v2008
        %v2041 = vadd.f32 %v1972, %v2009
        %v2042 = vadd.f32 %v1973, %v2010
        %v2043 = vadd.f32 %v1974, %v2011
        %v2044 = vadd.f32 %v1975, %v2012
        %v2045 = vadd.f32 %v1976, %v2013
        %v2046 = vadd.f32 %v1977, %v2014
        %v2047 = vadd.f32 %v1978, %v2015
        %v2048 = vadd.f32 %v1979, %v2016
        %v2049 = vadd.f32 %v1980, %v2017
        %v2050 = vadd.f32 %v1981, %v2018
        %v2051 = vadd.f32 %v1982, %v2019
        %v2052 = vadd.f32 %v1983, %v2020
        %v2053 = vadd.f32 %v1984, %v2021
        %v2054 = vadd.f32 %v1985, %v2022
        %v2055 = vadd.f32 %v1986, %v2023
        %v2056 = vadd.f32 %v1987, %v2024
        %v2057 = vadd.f32 %v1988, %v2025
        %v2058 = vadd.f32 %v1989, %v2026
        %v2059 = vadd.f32 %v1990, %v2027
        %v2060 = vadd.f32 %v1991, %v2028
        %v2061 = vadd.f32 %v1992, %v2029
        %v2062 = vld [vmem:[#allocation4 + $0x12] sm:$0x1]
        %v2063 = vlaneseq
        %v2064 = vshrl.u32 %v2063, 7
        %v2065 = vsub.s32 0, %v2064
        %v2066 = vrot.slane %v2062, %v2065
        %v2067 = vmul.f32 %v1821, %v2066
        %v2068 = vmul.f32 %v1822, %v2066
        %v2069 = vmul.f32 %v1823, %v2066
        %v2070 = vmul.f32 %v1824, %v2066
        %v2071 = vmul.f32 %v1825, %v2066
        %v2072 = vmul.f32 %v1826, %v2066
        %v2073 = vmul.f32 %v1827, %v2066
        %v2074 = vmul.f32 %v1828, %v2066
        %v2075 = vmul.f32 %v1829, %v2066
        %v2076 = vmul.f32 %v1830, %v2066
        %v2077 = vmul.f32 %v1831, %v2066
        %v2078 = vmul.f32 %v1832, %v2066
        %v2079 = vmul.f32 %v1833, %v2066
        %v2080 = vmul.f32 %v1834, %v2066
        %v2081 = vmul.f32 %v1835, %v2066
        %v2082 = vmul.f32 %v1836, %v2066
        %v2083 = vmul.f32 %v1837, %v2066
        %v2084 = vmul.f32 %v1838, %v2066
        %v2085 = vmul.f32 %v1839, %v2066
        %v2086 = vmul.f32 %v1840, %v2066
        %v2087 = vmul.f32 %v1841, %v2066
        %v2088 = vmul.f32 %v1842, %v2066
        %v2089 = vmul.f32 %v1843, %v2066
        %v2090 = vmul.f32 %v1844, %v2066
        %v2091 = vmul.f32 %v1845, %v2066
        %v2092 = vmul.f32 %v1846, %v2066
        %v2093 = vmul.f32 %v1847, %v2066
        %v2094 = vmul.f32 %v1848, %v2066
        %v2095 = vmul.f32 %v1849, %v2066
        %v2096 = vmul.f32 %v1850, %v2066
        %v2097 = vmul.f32 %v1851, %v2066
        %v2098 = vmul.f32 %v1852, %v2066
        %v2099 = vadd.f32 %v2030, %v2067
        %v2100 = vadd.f32 %v2031, %v2068
        %v2101 = vadd.f32 %v2032, %v2069
        %v2102 = vadd.f32 %v2033, %v2070
        %v2103 = vadd.f32 %v2034, %v2071
        %v2104 = vadd.f32 %v2035, %v2072
        %v2105 = vadd.f32 %v2036, %v2073
        %v2106 = vadd.f32 %v2037, %v2074
        %v2107 = vadd.f32 %v2038, %v2075
        %v2108 = vadd.f32 %v2039, %v2076
        %v2109 = vadd.f32 %v2040, %v2077
        %v2110 = vadd.f32 %v2041, %v2078
        %v2111 = vadd.f32 %v2042, %v2079
        %v2112 = vadd.f32 %v2043, %v2080
        %v2113 = vadd.f32 %v2044, %v2081
        %v2114 = vadd.f32 %v2045, %v2082
        %v2115 = vadd.f32 %v2046, %v2083
        %v2116 = vadd.f32 %v2047, %v2084
        %v2117 = vadd.f32 %v2048, %v2085
        %v2118 = vadd.f32 %v2049, %v2086
        %v2119 = vadd.f32 %v2050, %v2087
        %v2120 = vadd.f32 %v2051, %v2088
        %v2121 = vadd.f32 %v2052, %v2089
        %v2122 = vadd.f32 %v2053, %v2090
        %v2123 = vadd.f32 %v2054, %v2091
        %v2124 = vadd.f32 %v2055, %v2092
        %v2125 = vadd.f32 %v2056, %v2093
        %v2126 = vadd.f32 %v2057, %v2094
        %v2127 = vadd.f32 %v2058, %v2095
        %v2128 = vadd.f32 %v2059, %v2096
        %v2129 = vadd.f32 %v2060, %v2097
        %v2130 = vadd.f32 %v2061, %v2098
        %v2131 = vld [vmem:[#allocation4 + $0x17] sm:$0x1]
        %v2132 = vlaneseq
        %v2133 = vshrl.u32 %v2132, 7
        %v2134 = vsub.s32 0, %v2133
        %v2135 = vrot.slane %v2131, %v2134
        %v2136 = vmul.f32 %v1823, %v2135
        %v2137 = vmul.f32 %v1824, %v2135
        %v2138 = vmul.f32 %v1825, %v2135
        %v2139 = vmul.f32 %v1826, %v2135
        %v2140 = vmul.f32 %v1827, %v2135
        %v2141 = vmul.f32 %v1828, %v2135
        %v2142 = vmul.f32 %v1829, %v2135
        %v2143 = vmul.f32 %v1830, %v2135
        %v2144 = vmul.f32 %v1831, %v2135
        %v2145 = vmul.f32 %v1832, %v2135
        %v2146 = vmul.f32 %v1833, %v2135
        %v2147 = vmul.f32 %v1834, %v2135
        %v2148 = vmul.f32 %v1835, %v2135
        %v2149 = vmul.f32 %v1836, %v2135
        %v2150 = vmul.f32 %v1837, %v2135
        %v2151 = vmul.f32 %v1838, %v2135
        %v2152 = vmul.f32 %v1839, %v2135
        %v2153 = vmul.f32 %v1840, %v2135
        %v2154 = vmul.f32 %v1841, %v2135
        %v2155 = vmul.f32 %v1842, %v2135
        %v2156 = vmul.f32 %v1843, %v2135
        %v2157 = vmul.f32 %v1844, %v2135
        %v2158 = vmul.f32 %v1845, %v2135
        %v2159 = vmul.f32 %v1846, %v2135
        %v2160 = vmul.f32 %v1847, %v2135
        %v2161 = vmul.f32 %v1848, %v2135
        %v2162 = vmul.f32 %v1849, %v2135
        %v2163 = vmul.f32 %v1850, %v2135
        %v2164 = vmul.f32 %v1851, %v2135
        %v2165 = vmul.f32 %v1852, %v2135
        %v2166 = vmul.f32 %v1853, %v2135
        %v2167 = vmul.f32 %v1854, %v2135
        %v2168 = vadd.f32 %v2099, %v2136
        %v2169 = vadd.f32 %v2100, %v2137
        %v2170 = vadd.f32 %v2101, %v2138
        %v2171 = vadd.f32 %v2102, %v2139
        %v2172 = vadd.f32 %v2103, %v2140
        %v2173 = vadd.f32 %v2104, %v2141
        %v2174 = vadd.f32 %v2105, %v2142
        %v2175 = vadd.f32 %v2106, %v2143
        %v2176 = vadd.f32 %v2107, %v2144
        %v2177 = vadd.f32 %v2108, %v2145
        %v2178 = vadd.f32 %v2109, %v2146
        %v2179 = vadd.f32 %v2110, %v2147
        %v2180 = vadd.f32 %v2111, %v2148
        %v2181 = vadd.f32 %v2112, %v2149
        %v2182 = vadd.f32 %v2113, %v2150
        %v2183 = vadd.f32 %v2114, %v2151
        %v2184 = vadd.f32 %v2115, %v2152
        %v2185 = vadd.f32 %v2116, %v2153
        %v2186 = vadd.f32 %v2117, %v2154
        %v2187 = vadd.f32 %v2118, %v2155
        %v2188 = vadd.f32 %v2119, %v2156
        %v2189 = vadd.f32 %v2120, %v2157
        %v2190 = vadd.f32 %v2121, %v2158
        %v2191 = vadd.f32 %v2122, %v2159
        %v2192 = vadd.f32 %v2123, %v2160
        %v2193 = vadd.f32 %v2124, %v2161
        %v2194 = vadd.f32 %v2125, %v2162
        %v2195 = vadd.f32 %v2126, %v2163
        %v2196 = vadd.f32 %v2127, %v2164
        %v2197 = vadd.f32 %v2128, %v2165
        %v2198 = vadd.f32 %v2129, %v2166
        %v2199 = vadd.f32 %v2130, %v2167
        %v2200 = vld [vmem:[#allocation2 + $0xa] sm:$0xff]
        %v2201 = vld [vmem:[#allocation2 + $0x12] sm:$0xff]
        %v2202 = vld [vmem:[#allocation2 + $0x2a] sm:$0xff]
        %v2203 = vld [vmem:[#allocation2 + $0x32] sm:$0xff]
        %v2204 = vld [vmem:[#allocation2 + $0x4a] sm:$0xff]
        %v2205 = vld [vmem:[#allocation2 + $0x52] sm:$0xff]
        %v2206 = vld [vmem:[#allocation2 + $0x6a] sm:$0xff]
        %v2207 = vld [vmem:[#allocation2 + $0x72] sm:$0xff]
        %v2208 = vld [vmem:[#allocation2 + $0x8a] sm:$0xff]
        %v2209 = vld [vmem:[#allocation2 + $0x92] sm:$0xff]
        %v2210 = vld [vmem:[#allocation2 + $0xaa] sm:$0xff]
        %v2211 = vld [vmem:[#allocation2 + $0xb2] sm:$0xff]
        %v2212 = vld [vmem:[#allocation2 + $0xca] sm:$0xff]
        %v2213 = vld [vmem:[#allocation2 + $0xd2] sm:$0xff]
        %v2214 = vld [vmem:[#allocation2 + $0xea] sm:$0xff]
        %v2215 = vld [vmem:[#allocation2 + $0xf2] sm:$0xff]
        %v2216 = vld [vmem:[#allocation2 + $0x10a] sm:$0xff]
        %v2217 = vld [vmem:[#allocation2 + $0x112] sm:$0xff]
        %v2218 = vld [vmem:[#allocation2 + $0x12a] sm:$0xff]
        %v2219 = vld [vmem:[#allocation2 + $0x132] sm:$0xff]
        %v2220 = vld [vmem:[#allocation2 + $0x14a] sm:$0xff]
        %v2221 = vld [vmem:[#allocation2 + $0x152] sm:$0xff]
        %v2222 = vld [vmem:[#allocation2 + $0x16a] sm:$0xff]
        %v2223 = vld [vmem:[#allocation2 + $0x172] sm:$0xff]
        %v2224 = vld [vmem:[#allocation2 + $0x18a] sm:$0xff]
        %v2225 = vld [vmem:[#allocation2 + $0x192] sm:$0xff]
        %v2226 = vld [vmem:[#allocation2 + $0x1aa] sm:$0xff]
        %v2227 = vld [vmem:[#allocation2 + $0x1b2] sm:$0xff]
        %v2228 = vld [vmem:[#allocation2 + $0x1ca] sm:$0xff]
        %v2229 = vld [vmem:[#allocation2 + $0x1d2] sm:$0xff]
        %v2230 = vld [vmem:[#allocation2 + $0x1ea] sm:$0xff]
        %v2231 = vld [vmem:[#allocation2 + $0x1f2] sm:$0xff]
        %v2232 = vld [vmem:[#allocation2 + $0x20a] sm:$0xff]
        %v2233 = vld [vmem:[#allocation2 + $0x212] sm:$0xff]
        %v2234 = vld [vmem:[#allocation2 + $0x22a] sm:$0xff]
        %v2235 = vld [vmem:[#allocation2 + $0x232] sm:$0xff]
        %v2236 = vld [vmem:[#allocation2 + $0x24a] sm:$0xff]
        %v2237 = vld [vmem:[#allocation2 + $0x252] sm:$0xff]
        %v2238 = vld [vmem:[#allocation2 + $0x26a] sm:$0xff]
        %v2239 = vld [vmem:[#allocation2 + $0x272] sm:$0xff]
        %v2240 = vld [vmem:[#allocation4 + $0x4] sm:$0x1]
        %v2241 = vlaneseq
        %v2242 = vshrl.u32 %v2241, 7
        %v2243 = vsub.s32 0, %v2242
        %v2244 = vrot.slane %v2240, %v2243
        %v2245 = vmul.f32 %v2200, %v2244
        %v2246 = vmul.f32 %v2201, %v2244
        %v2247 = vmul.f32 %v2202, %v2244
        %v2248 = vmul.f32 %v2203, %v2244
        %v2249 = vmul.f32 %v2204, %v2244
        %v2250 = vmul.f32 %v2205, %v2244
        %v2251 = vmul.f32 %v2206, %v2244
        %v2252 = vmul.f32 %v2207, %v2244
        %v2253 = vmul.f32 %v2208, %v2244
        %v2254 = vmul.f32 %v2209, %v2244
        %v2255 = vmul.f32 %v2210, %v2244
        %v2256 = vmul.f32 %v2211, %v2244
        %v2257 = vmul.f32 %v2212, %v2244
        %v2258 = vmul.f32 %v2213, %v2244
        %v2259 = vmul.f32 %v2214, %v2244
        %v2260 = vmul.f32 %v2215, %v2244
        %v2261 = vmul.f32 %v2216, %v2244
        %v2262 = vmul.f32 %v2217, %v2244
        %v2263 = vmul.f32 %v2218, %v2244
        %v2264 = vmul.f32 %v2219, %v2244
        %v2265 = vmul.f32 %v2220, %v2244
        %v2266 = vmul.f32 %v2221, %v2244
        %v2267 = vmul.f32 %v2222, %v2244
        %v2268 = vmul.f32 %v2223, %v2244
        %v2269 = vmul.f32 %v2224, %v2244
        %v2270 = vmul.f32 %v2225, %v2244
        %v2271 = vmul.f32 %v2226, %v2244
        %v2272 = vmul.f32 %v2227, %v2244
        %v2273 = vmul.f32 %v2228, %v2244
        %v2274 = vmul.f32 %v2229, %v2244
        %v2275 = vmul.f32 %v2230, %v2244
        %v2276 = vmul.f32 %v2231, %v2244
        %v2277 = vadd.f32 %v2168, %v2245
        %v2278 = vadd.f32 %v2169, %v2246
        %v2279 = vadd.f32 %v2170, %v2247
        %v2280 = vadd.f32 %v2171, %v2248
        %v2281 = vadd.f32 %v2172, %v2249
        %v2282 = vadd.f32 %v2173, %v2250
        %v2283 = vadd.f32 %v2174, %v2251
        %v2284 = vadd.f32 %v2175, %v2252
        %v2285 = vadd.f32 %v2176, %v2253
        %v2286 = vadd.f32 %v2177, %v2254
        %v2287 = vadd.f32 %v2178, %v2255
        %v2288 = vadd.f32 %v2179, %v2256
        %v2289 = vadd.f32 %v2180, %v2257
        %v2290 = vadd.f32 %v2181, %v2258
        %v2291 = vadd.f32 %v2182, %v2259
        %v2292 = vadd.f32 %v2183, %v2260
        %v2293 = vadd.f32 %v2184, %v2261
        %v2294 = vadd.f32 %v2185, %v2262
        %v2295 = vadd.f32 %v2186, %v2263
        %v2296 = vadd.f32 %v2187, %v2264
        %v2297 = vadd.f32 %v2188, %v2265
        %v2298 = vadd.f32 %v2189, %v2266
        %v2299 = vadd.f32 %v2190, %v2267
        %v2300 = vadd.f32 %v2191, %v2268
        %v2301 = vadd.f32 %v2192, %v2269
        %v2302 = vadd.f32 %v2193, %v2270
        %v2303 = vadd.f32 %v2194, %v2271
        %v2304 = vadd.f32 %v2195, %v2272
        %v2305 = vadd.f32 %v2196, %v2273
        %v2306 = vadd.f32 %v2197, %v2274
        %v2307 = vadd.f32 %v2198, %v2275
        %v2308 = vadd.f32 %v2199, %v2276
        %v2309 = vld [vmem:[#allocation4 + $0x9] sm:$0x1]
        %v2310 = vlaneseq
        %v2311 = vshrl.u32 %v2310, 7
        %v2312 = vsub.s32 0, %v2311
        %v2313 = vrot.slane %v2309, %v2312
        %v2314 = vmul.f32 %v2202, %v2313
        %v2315 = vmul.f32 %v2203, %v2313
        %v2316 = vmul.f32 %v2204, %v2313
        %v2317 = vmul.f32 %v2205, %v2313
        %v2318 = vmul.f32 %v2206, %v2313
        %v2319 = vmul.f32 %v2207, %v2313
        %v2320 = vmul.f32 %v2208, %v2313
        %v2321 = vmul.f32 %v2209, %v2313
        %v2322 = vmul.f32 %v2210, %v2313
        %v2323 = vmul.f32 %v2211, %v2313
        %v2324 = vmul.f32 %v2212, %v2313
        %v2325 = vmul.f32 %v2213, %v2313
        %v2326 = vmul.f32 %v2214, %v2313
        %v2327 = vmul.f32 %v2215, %v2313
        %v2328 = vmul.f32 %v2216, %v2313
        %v2329 = vmul.f32 %v2217, %v2313
        %v2330 = vmul.f32 %v2218, %v2313
        %v2331 = vmul.f32 %v2219, %v2313
        %v2332 = vmul.f32 %v2220, %v2313
        %v2333 = vmul.f32 %v2221, %v2313
        %v2334 = vmul.f32 %v2222, %v2313
        %v2335 = vmul.f32 %v2223, %v2313
        %v2336 = vmul.f32 %v2224, %v2313
        %v2337 = vmul.f32 %v2225, %v2313
        %v2338 = vmul.f32 %v2226, %v2313
        %v2339 = vmul.f32 %v2227, %v2313
        %v2340 = vmul.f32 %v2228, %v2313
        %v2341 = vmul.f32 %v2229, %v2313
        %v2342 = vmul.f32 %v2230, %v2313
        %v2343 = vmul.f32 %v2231, %v2313
        %v2344 = vmul.f32 %v2232, %v2313
        %v2345 = vmul.f32 %v2233, %v2313
        %v2346 = vadd.f32 %v2277, %v2314
        %v2347 = vadd.f32 %v2278, %v2315
        %v2348 = vadd.f32 %v2279, %v2316
        %v2349 = vadd.f32 %v2280, %v2317
        %v2350 = vadd.f32 %v2281, %v2318
        %v2351 = vadd.f32 %v2282, %v2319
        %v2352 = vadd.f32 %v2283, %v2320
        %v2353 = vadd.f32 %v2284, %v2321
        %v2354 = vadd.f32 %v2285, %v2322
        %v2355 = vadd.f32 %v2286, %v2323
        %v2356 = vadd.f32 %v2287, %v2324
        %v2357 = vadd.f32 %v2288, %v2325
        %v2358 = vadd.f32 %v2289, %v2326
        %v2359 = vadd.f32 %v2290, %v2327
        %v2360 = vadd.f32 %v2291, %v2328
        %v2361 = vadd.f32 %v2292, %v2329
        %v2362 = vadd.f32 %v2293, %v2330
        %v2363 = vadd.f32 %v2294, %v2331
        %v2364 = vadd.f32 %v2295, %v2332
        %v2365 = vadd.f32 %v2296, %v2333
        %v2366 = vadd.f32 %v2297, %v2334
        %v2367 = vadd.f32 %v2298, %v2335
        %v2368 = vadd.f32 %v2299, %v2336
        %v2369 = vadd.f32 %v2300, %v2337
        %v2370 = vadd.f32 %v2301, %v2338
        %v2371 = vadd.f32 %v2302, %v2339
        %v2372 = vadd.f32 %v2303, %v2340
        %v2373 = vadd.f32 %v2304, %v2341
        %v2374 = vadd.f32 %v2305, %v2342
        %v2375 = vadd.f32 %v2306, %v2343
        %v2376 = vadd.f32 %v2307, %v2344
        %v2377 = vadd.f32 %v2308, %v2345
        %v2378 = vld [vmem:[#allocation4 + $0xe] sm:$0x1]
        %v2379 = vlaneseq
        %v2380 = vshrl.u32 %v2379, 7
        %v2381 = vsub.s32 0, %v2380
        %v2382 = vrot.slane %v2378, %v2381
        %v2383 = vmul.f32 %v2204, %v2382
        %v2384 = vmul.f32 %v2205, %v2382
        %v2385 = vmul.f32 %v2206, %v2382
        %v2386 = vmul.f32 %v2207, %v2382
        %v2387 = vmul.f32 %v2208, %v2382
        %v2388 = vmul.f32 %v2209, %v2382
        %v2389 = vmul.f32 %v2210, %v2382
        %v2390 = vmul.f32 %v2211, %v2382
        %v2391 = vmul.f32 %v2212, %v2382
        %v2392 = vmul.f32 %v2213, %v2382
        %v2393 = vmul.f32 %v2214, %v2382
        %v2394 = vmul.f32 %v2215, %v2382
        %v2395 = vmul.f32 %v2216, %v2382
        %v2396 = vmul.f32 %v2217, %v2382
        %v2397 = vmul.f32 %v2218, %v2382
        %v2398 = vmul.f32 %v2219, %v2382
        %v2399 = vmul.f32 %v2220, %v2382
        %v2400 = vmul.f32 %v2221, %v2382
        %v2401 = vmul.f32 %v2222, %v2382
        %v2402 = vmul.f32 %v2223, %v2382
        %v2403 = vmul.f32 %v2224, %v2382
        %v2404 = vmul.f32 %v2225, %v2382
        %v2405 = vmul.f32 %v2226, %v2382
        %v2406 = vmul.f32 %v2227, %v2382
        %v2407 = vmul.f32 %v2228, %v2382
        %v2408 = vmul.f32 %v2229, %v2382
        %v2409 = vmul.f32 %v2230, %v2382
        %v2410 = vmul.f32 %v2231, %v2382
        %v2411 = vmul.f32 %v2232, %v2382
        %v2412 = vmul.f32 %v2233, %v2382
        %v2413 = vmul.f32 %v2234, %v2382
        %v2414 = vmul.f32 %v2235, %v2382
        %v2415 = vadd.f32 %v2346, %v2383
        %v2416 = vadd.f32 %v2347, %v2384
        %v2417 = vadd.f32 %v2348, %v2385
        %v2418 = vadd.f32 %v2349, %v2386
        %v2419 = vadd.f32 %v2350, %v2387
        %v2420 = vadd.f32 %v2351, %v2388
        %v2421 = vadd.f32 %v2352, %v2389
        %v2422 = vadd.f32 %v2353, %v2390
        %v2423 = vadd.f32 %v2354, %v2391
        %v2424 = vadd.f32 %v2355, %v2392
        %v2425 = vadd.f32 %v2356, %v2393
        %v2426 = vadd.f32 %v2357, %v2394
        %v2427 = vadd.f32 %v2358, %v2395
        %v2428 = vadd.f32 %v2359, %v2396
        %v2429 = vadd.f32 %v2360, %v2397
        %v2430 = vadd.f32 %v2361, %v2398
        %v2431 = vadd.f32 %v2362, %v2399
        %v2432 = vadd.f32 %v2363, %v2400
        %v2433 = vadd.f32 %v2364, %v2401
        %v2434 = vadd.f32 %v2365, %v2402
        %v2435 = vadd.f32 %v2366, %v2403
        %v2436 = vadd.f32 %v2367, %v2404
        %v2437 = vadd.f32 %v2368, %v2405
        %v2438 = vadd.f32 %v2369, %v2406
        %v2439 = vadd.f32 %v2370, %v2407
        %v2440 = vadd.f32 %v2371, %v2408
        %v2441 = vadd.f32 %v2372, %v2409
        %v2442 = vadd.f32 %v2373, %v2410
        %v2443 = vadd.f32 %v2374, %v2411
        %v2444 = vadd.f32 %v2375, %v2412
        %v2445 = vadd.f32 %v2376, %v2413
        %v2446 = vadd.f32 %v2377, %v2414
        %v2447 = vld [vmem:[#allocation4 + $0x13] sm:$0x1]
        %v2448 = vlaneseq
        %v2449 = vshrl.u32 %v2448, 7
        %v2450 = vsub.s32 0, %v2449
        %v2451 = vrot.slane %v2447, %v2450
        %v2452 = vmul.f32 %v2206, %v2451
        %v2453 = vmul.f32 %v2207, %v2451
        %v2454 = vmul.f32 %v2208, %v2451
        %v2455 = vmul.f32 %v2209, %v2451
        %v2456 = vmul.f32 %v2210, %v2451
        %v2457 = vmul.f32 %v2211, %v2451
        %v2458 = vmul.f32 %v2212, %v2451
        %v2459 = vmul.f32 %v2213, %v2451
        %v2460 = vmul.f32 %v2214, %v2451
        %v2461 = vmul.f32 %v2215, %v2451
        %v2462 = vmul.f32 %v2216, %v2451
        %v2463 = vmul.f32 %v2217, %v2451
        %v2464 = vmul.f32 %v2218, %v2451
        %v2465 = vmul.f32 %v2219, %v2451
        %v2466 = vmul.f32 %v2220, %v2451
        %v2467 = vmul.f32 %v2221, %v2451
        %v2468 = vmul.f32 %v2222, %v2451
        %v2469 = vmul.f32 %v2223, %v2451
        %v2470 = vmul.f32 %v2224, %v2451
        %v2471 = vmul.f32 %v2225, %v2451
        %v2472 = vmul.f32 %v2226, %v2451
        %v2473 = vmul.f32 %v2227, %v2451
        %v2474 = vmul.f32 %v2228, %v2451
        %v2475 = vmul.f32 %v2229, %v2451
        %v2476 = vmul.f32 %v2230, %v2451
        %v2477 = vmul.f32 %v2231, %v2451
        %v2478 = vmul.f32 %v2232, %v2451
        %v2479 = vmul.f32 %v2233, %v2451
        %v2480 = vmul.f32 %v2234, %v2451
        %v2481 = vmul.f32 %v2235, %v2451
        %v2482 = vmul.f32 %v2236, %v2451
        %v2483 = vmul.f32 %v2237, %v2451
        %v2484 = vadd.f32 %v2415, %v2452
        %v2485 = vadd.f32 %v2416, %v2453
        %v2486 = vadd.f32 %v2417, %v2454
        %v2487 = vadd.f32 %v2418, %v2455
        %v2488 = vadd.f32 %v2419, %v2456
        %v2489 = vadd.f32 %v2420, %v2457
        %v2490 = vadd.f32 %v2421, %v2458
        %v2491 = vadd.f32 %v2422, %v2459
        %v2492 = vadd.f32 %v2423, %v2460
        %v2493 = vadd.f32 %v2424, %v2461
        %v2494 = vadd.f32 %v2425, %v2462
        %v2495 = vadd.f32 %v2426, %v2463
        %v2496 = vadd.f32 %v2427, %v2464
        %v2497 = vadd.f32 %v2428, %v2465
        %v2498 = vadd.f32 %v2429, %v2466
        %v2499 = vadd.f32 %v2430, %v2467
        %v2500 = vadd.f32 %v2431, %v2468
        %v2501 = vadd.f32 %v2432, %v2469
        %v2502 = vadd.f32 %v2433, %v2470
        %v2503 = vadd.f32 %v2434, %v2471
        %v2504 = vadd.f32 %v2435, %v2472
        %v2505 = vadd.f32 %v2436, %v2473
        %v2506 = vadd.f32 %v2437, %v2474
        %v2507 = vadd.f32 %v2438, %v2475
        %v2508 = vadd.f32 %v2439, %v2476
        %v2509 = vadd.f32 %v2440, %v2477
        %v2510 = vadd.f32 %v2441, %v2478
        %v2511 = vadd.f32 %v2442, %v2479
        %v2512 = vadd.f32 %v2443, %v2480
        %v2513 = vadd.f32 %v2444, %v2481
        %v2514 = vadd.f32 %v2445, %v2482
        %v2515 = vadd.f32 %v2446, %v2483
        %v2516 = vld [vmem:[#allocation4 + $0x18] sm:$0x1]
        %v2517 = vlaneseq
        %v2518 = vshrl.u32 %v2517, 7
        %v2519 = vsub.s32 0, %v2518
        %v2520 = vrot.slane %v2516, %v2519
        %v2521 = vmul.f32 %v2208, %v2520
        %v2522 = vmul.f32 %v2209, %v2520
        %v2523 = vmul.f32 %v2210, %v2520
        %v2524 = vmul.f32 %v2211, %v2520
        %v2525 = vmul.f32 %v2212, %v2520
        %v2526 = vmul.f32 %v2213, %v2520
        %v2527 = vmul.f32 %v2214, %v2520
        %v2528 = vmul.f32 %v2215, %v2520
        %v2529 = vmul.f32 %v2216, %v2520
        %v2530 = vmul.f32 %v2217, %v2520
        %v2531 = vmul.f32 %v2218, %v2520
        %v2532 = vmul.f32 %v2219, %v2520
        %v2533 = vmul.f32 %v2220, %v2520
        %v2534 = vmul.f32 %v2221, %v2520
        %v2535 = vmul.f32 %v2222, %v2520
        %v2536 = vmul.f32 %v2223, %v2520
        %v2537 = vmul.f32 %v2224, %v2520
        %v2538 = vmul.f32 %v2225, %v2520
        %v2539 = vmul.f32 %v2226, %v2520
        %v2540 = vmul.f32 %v2227, %v2520
        %v2541 = vmul.f32 %v2228, %v2520
        %v2542 = vmul.f32 %v2229, %v2520
        %v2543 = vmul.f32 %v2230, %v2520
        %v2544 = vmul.f32 %v2231, %v2520
        %v2545 = vmul.f32 %v2232, %v2520
        %v2546 = vmul.f32 %v2233, %v2520
        %v2547 = vmul.f32 %v2234, %v2520
        %v2548 = vmul.f32 %v2235, %v2520
        %v2549 = vmul.f32 %v2236, %v2520
        %v2550 = vmul.f32 %v2237, %v2520
        %v2551 = vmul.f32 %v2238, %v2520
        %v2552 = vmul.f32 %v2239, %v2520
        %v2553 = vadd.f32 %v2484, %v2521
        %v2554 = vadd.f32 %v2485, %v2522
        %v2555 = vadd.f32 %v2486, %v2523
        %v2556 = vadd.f32 %v2487, %v2524
        %v2557 = vadd.f32 %v2488, %v2525
        %v2558 = vadd.f32 %v2489, %v2526
        %v2559 = vadd.f32 %v2490, %v2527
        %v2560 = vadd.f32 %v2491, %v2528
        %v2561 = vadd.f32 %v2492, %v2529
        %v2562 = vadd.f32 %v2493, %v2530
        %v2563 = vadd.f32 %v2494, %v2531
        %v2564 = vadd.f32 %v2495, %v2532
        %v2565 = vadd.f32 %v2496, %v2533
        %v2566 = vadd.f32 %v2497, %v2534
        %v2567 = vadd.f32 %v2498, %v2535
        %v2568 = vadd.f32 %v2499, %v2536
        %v2569 = vadd.f32 %v2500, %v2537
        %v2570 = vadd.f32 %v2501, %v2538
        %v2571 = vadd.f32 %v2502, %v2539
        %v2572 = vadd.f32 %v2503, %v2540
        %v2573 = vadd.f32 %v2504, %v2541
        %v2574 = vadd.f32 %v2505, %v2542
        %v2575 = vadd.f32 %v2506, %v2543
        %v2576 = vadd.f32 %v2507, %v2544
        %v2577 = vadd.f32 %v2508, %v2545
        %v2578 = vadd.f32 %v2509, %v2546
        %v2579 = vadd.f32 %v2510, %v2547
        %v2580 = vadd.f32 %v2511, %v2548
        %v2581 = vadd.f32 %v2512, %v2549
        %v2582 = vadd.f32 %v2513, %v2550
        %v2583 = vadd.f32 %v2514, %v2551
        %v2584 = vadd.f32 %v2515, %v2552
        %v2585 = vld [vmem:[#allocation5] sm:$0x1]
        %v2587 = vlaneseq
        %v2588 = vshrl.u32 %v2587, 7
        %v2589 = vsub.s32 0, %v2588
        %v2590 = vrot.slane %v2585, %v2589
        %v2592 = vadd.f32 %v2553, %v2590
        %v2593 = vadd.f32 %v2554, %v2590
        %v2594 = vadd.f32 %v2555, %v2590
        %v2595 = vadd.f32 %v2556, %v2590
        %v2596 = vadd.f32 %v2557, %v2590
        %v2597 = vadd.f32 %v2558, %v2590
        %v2598 = vadd.f32 %v2559, %v2590
        %v2599 = vadd.f32 %v2560, %v2590
        %v2600 = vadd.f32 %v2561, %v2590
        %v2601 = vadd.f32 %v2562, %v2590
        %v2602 = vadd.f32 %v2563, %v2590
        %v2603 = vadd.f32 %v2564, %v2590
        %v2604 = vadd.f32 %v2565, %v2590
        %v2605 = vadd.f32 %v2566, %v2590
        %v2606 = vadd.f32 %v2567, %v2590
        %v2607 = vadd.f32 %v2568, %v2590
        %v2608 = vadd.f32 %v2569, %v2590
        %v2609 = vadd.f32 %v2570, %v2590
        %v2610 = vadd.f32 %v2571, %v2590
        %v2611 = vadd.f32 %v2572, %v2590
        %v2612 = vadd.f32 %v2573, %v2590
        %v2613 = vadd.f32 %v2574, %v2590
        %v2614 = vadd.f32 %v2575, %v2590
        %v2615 = vadd.f32 %v2576, %v2590
        %v2616 = vadd.f32 %v2577, %v2590
        %v2617 = vadd.f32 %v2578, %v2590
        %v2618 = vadd.f32 %v2579, %v2590
        %v2619 = vadd.f32 %v2580, %v2590
        %v2620 = vadd.f32 %v2581, %v2590
        %v2621 = vadd.f32 %v2582, %v2590
        %v2622 = vadd.f32 %v2583, %v2590
        %v2623 = vadd.f32 %v2584, %v2590
        %v2624 = vmul.f32 %v2592, 0.5
        %v2625 = vmul.f32 %v2593, 0.5
        %v2626 = vmul.f32 %v2594, 0.5
        %v2627 = vmul.f32 %v2595, 0.5
        %v2628 = vmul.f32 %v2596, 0.5
        %v2629 = vmul.f32 %v2597, 0.5
        %v2630 = vmul.f32 %v2598, 0.5
        %v2631 = vmul.f32 %v2599, 0.5
        %v2632 = vmul.f32 %v2600, 0.5
        %v2633 = vmul.f32 %v2601, 0.5
        %v2634 = vmul.f32 %v2602, 0.5
        %v2635 = vmul.f32 %v2603, 0.5
        %v2636 = vmul.f32 %v2604, 0.5
        %v2637 = vmul.f32 %v2605, 0.5
        %v2638 = vmul.f32 %v2606, 0.5
        %v2639 = vmul.f32 %v2607, 0.5
        %v2640 = vmul.f32 %v2608, 0.5
        %v2641 = vmul.f32 %v2609, 0.5
        %v2642 = vmul.f32 %v2610, 0.5
        %v2643 = vmul.f32 %v2611, 0.5
        %v2644 = vmul.f32 %v2612, 0.5
        %v2645 = vmul.f32 %v2613, 0.5
        %v2646 = vmul.f32 %v2614, 0.5
        %v2647 = vmul.f32 %v2615, 0.5
        %v2648 = vmul.f32 %v2616, 0.5
        %v2649 = vmul.f32 %v2617, 0.5
        %v2650 = vmul.f32 %v2618, 0.5
        %v2651 = vmul.f32 %v2619, 0.5
        %v2652 = vmul.f32 %v2620, 0.5
        %v2653 = vmul.f32 %v2621, 0.5
        %v2654 = vmul.f32 %v2622, 0.5
        %v2655 = vmul.f32 %v2623, 0.5
        %v2656 = vmul.f32 %v2592, 0.70710677
        %v2657 = vmul.f32 %v2593, 0.70710677
        %v2658 = vmul.f32 %v2594, 0.70710677
        %v2659 = vmul.f32 %v2595, 0.70710677
        %v2660 = vmul.f32 %v2596, 0.70710677
        %v2661 = vmul.f32 %v2597, 0.70710677
        %v2662 = vmul.f32 %v2598, 0.70710677
        %v2663 = vmul.f32 %v2599, 0.70710677
        %v2664 = vmul.f32 %v2600, 0.70710677
        %v2665 = vmul.f32 %v2601, 0.70710677
        %v2666 = vmul.f32 %v2602, 0.70710677
        %v2667 = vmul.f32 %v2603, 0.70710677
        %v2668 = vmul.f32 %v2604, 0.70710677
        %v2669 = vmul.f32 %v2605, 0.70710677
        %v2670 = vmul.f32 %v2606, 0.70710677
        %v2671 = vmul.f32 %v2607, 0.70710677
        %v2672 = vmul.f32 %v2608, 0.70710677
        %v2673 = vmul.f32 %v2609, 0.70710677
        %v2674 = vmul.f32 %v2610, 0.70710677
        %v2675 = vmul.f32 %v2611, 0.70710677
        %v2676 = vmul.f32 %v2612, 0.70710677
        %v2677 = vmul.f32 %v2613, 0.70710677
        %v2678 = vmul.f32 %v2614, 0.70710677
        %v2679 = vmul.f32 %v2615, 0.70710677
        %v2680 = vmul.f32 %v2616, 0.70710677
        %v2681 = vmul.f32 %v2617, 0.70710677
        %v2682 = vmul.f32 %v2618, 0.70710677
        %v2683 = vmul.f32 %v2619, 0.70710677
        %v2684 = vmul.f32 %v2620, 0.70710677
        %v2685 = vmul.f32 %v2621, 0.70710677
        %v2686 = vmul.f32 %v2622, 0.70710677
        %v2687 = vmul.f32 %v2623, 0.70710677
        %vm2688 = vcmp.ge.f32.partialorder %v2656, 0.0
        %vm2689 = vcmp.ge.f32.partialorder %v2657, 0.0
        %vm2690 = vcmp.ge.f32.partialorder %v2658, 0.0
        %vm2691 = vcmp.ge.f32.partialorder %v2659, 0.0
        %vm2692 = vcmp.ge.f32.partialorder %v2660, 0.0
        %vm2693 = vcmp.ge.f32.partialorder %v2661, 0.0
        %vm2694 = vcmp.ge.f32.partialorder %v2662, 0.0
        %vm2695 = vcmp.ge.f32.partialorder %v2663, 0.0
        %vm2696 = vcmp.ge.f32.partialorder %v2664, 0.0
        %vm2697 = vcmp.ge.f32.partialorder %v2665, 0.0
        %vm2698 = vcmp.ge.f32.partialorder %v2666, 0.0
        %vm2699 = vcmp.ge.f32.partialorder %v2667, 0.0
        %vm2700 = vcmp.ge.f32.partialorder %v2668, 0.0
        %vm2701 = vcmp.ge.f32.partialorder %v2669, 0.0
        %vm2702 = vcmp.ge.f32.partialorder %v2670, 0.0
        %vm2703 = vcmp.ge.f32.partialorder %v2671, 0.0
        %vm2704 = vcmp.ge.f32.partialorder %v2672, 0.0
        %vm2705 = vcmp.ge.f32.partialorder %v2673, 0.0
        %vm2706 = vcmp.ge.f32.partialorder %v2674, 0.0
        %vm2707 = vcmp.ge.f32.partialorder %v2675, 0.0
        %vm2708 = vcmp.ge.f32.partialorder %v2676, 0.0
        %vm2709 = vcmp.ge.f32.partialorder %v2677, 0.0
        %vm2710 = vcmp.ge.f32.partialorder %v2678, 0.0
        %vm2711 = vcmp.ge.f32.partialorder %v2679, 0.0
        %vm2712 = vcmp.ge.f32.partialorder %v2680, 0.0
        %vm2713 = vcmp.ge.f32.partialorder %v2681, 0.0
        %vm2714 = vcmp.ge.f32.partialorder %v2682, 0.0
        %vm2715 = vcmp.ge.f32.partialorder %v2683, 0.0
        %vm2716 = vcmp.ge.f32.partialorder %v2684, 0.0
        %vm2717 = vcmp.ge.f32.partialorder %v2685, 0.0
        %vm2718 = vcmp.ge.f32.partialorder %v2686, 0.0
        %vm2719 = vcmp.ge.f32.partialorder %v2687, 0.0
        %v2720 = vsel %vm2688, 1.0, -1.0
        %v2721 = vsel %vm2689, 1.0, -1.0
        %v2722 = vsel %vm2690, 1.0, -1.0
        %v2723 = vsel %vm2691, 1.0, -1.0
        %v2724 = vsel %vm2692, 1.0, -1.0
        %v2725 = vsel %vm2693, 1.0, -1.0
        %v2726 = vsel %vm2694, 1.0, -1.0
        %v2727 = vsel %vm2695, 1.0, -1.0
        %v2728 = vsel %vm2696, 1.0, -1.0
        %v2729 = vsel %vm2697, 1.0, -1.0
        %v2730 = vsel %vm2698, 1.0, -1.0
        %v2731 = vsel %vm2699, 1.0, -1.0
        %v2732 = vsel %vm2700, 1.0, -1.0
        %v2733 = vsel %vm2701, 1.0, -1.0
        %v2734 = vsel %vm2702, 1.0, -1.0
        %v2735 = vsel %vm2703, 1.0, -1.0
        %v2736 = vsel %vm2704, 1.0, -1.0
        %v2737 = vsel %vm2705, 1.0, -1.0
        %v2738 = vsel %vm2706, 1.0, -1.0
        %v2739 = vsel %vm2707, 1.0, -1.0
        %v2740 = vsel %vm2708, 1.0, -1.0
        %v2741 = vsel %vm2709, 1.0, -1.0
        %v2742 = vsel %vm2710, 1.0, -1.0
        %v2743 = vsel %vm2711, 1.0, -1.0
        %v2744 = vsel %vm2712, 1.0, -1.0
        %v2745 = vsel %vm2713, 1.0, -1.0
        %v2746 = vsel %vm2714, 1.0, -1.0
        %v2747 = vsel %vm2715, 1.0, -1.0
        %v2748 = vsel %vm2716, 1.0, -1.0
        %v2749 = vsel %vm2717, 1.0, -1.0
        %v2750 = vsel %vm2718, 1.0, -1.0
        %v2751 = vsel %vm2719, 1.0, -1.0
        %v2752 = vand.u32 2147483647, %v2656
        %v2753 = vand.u32 2147483647, %v2657
        %v2754 = vand.u32 2147483647, %v2658
        %v2755 = vand.u32 2147483647, %v2659
        %v2756 = vand.u32 2147483647, %v2660
        %v2757 = vand.u32 2147483647, %v2661
        %v2758 = vand.u32 2147483647, %v2662
        %v2759 = vand.u32 2147483647, %v2663
        %v2760 = vand.u32 2147483647, %v2664
        %v2761 = vand.u32 2147483647, %v2665
        %v2762 = vand.u32 2147483647, %v2666
        %v2763 = vand.u32 2147483647, %v2667
        %v2764 = vand.u32 2147483647, %v2668
        %v2765 = vand.u32 2147483647, %v2669
        %v2766 = vand.u32 2147483647, %v2670
        %v2767 = vand.u32 2147483647, %v2671
        %v2768 = vand.u32 2147483647, %v2672
        %v2769 = vand.u32 2147483647, %v2673
        %v2770 = vand.u32 2147483647, %v2674
        %v2771 = vand.u32 2147483647, %v2675
        %v2772 = vand.u32 2147483647, %v2676
        %v2773 = vand.u32 2147483647, %v2677
        %v2774 = vand.u32 2147483647, %v2678
        %v2775 = vand.u32 2147483647, %v2679
        %v2776 = vand.u32 2147483647, %v2680
        %v2777 = vand.u32 2147483647, %v2681
        %v2778 = vand.u32 2147483647, %v2682
        %v2779 = vand.u32 2147483647, %v2683
        %v2780 = vand.u32 2147483647, %v2684
        %v2781 = vand.u32 2147483647, %v2685
        %v2782 = vand.u32 2147483647, %v2686
        %v2783 = vand.u32 2147483647, %v2687
        %v2784 = vmul.f32 %v2752, 0.3275911
        %v2785 = vmul.f32 %v2753, 0.3275911
        %v2786 = vmul.f32 %v2754, 0.3275911
        %v2787 = vmul.f32 %v2755, 0.3275911
        %v2788 = vmul.f32 %v2756, 0.3275911
        %v2789 = vmul.f32 %v2757, 0.3275911
        %v2790 = vmul.f32 %v2758, 0.3275911
        %v2791 = vmul.f32 %v2759, 0.3275911
        %v2792 = vmul.f32 %v2760, 0.3275911
        %v2793 = vmul.f32 %v2761, 0.3275911
        %v2794 = vmul.f32 %v2762, 0.3275911
        %v2795 = vmul.f32 %v2763, 0.3275911
        %v2796 = vmul.f32 %v2764, 0.3275911
        %v2797 = vmul.f32 %v2765, 0.3275911
        %v2798 = vmul.f32 %v2766, 0.3275911
        %v2799 = vmul.f32 %v2767, 0.3275911
        %v2800 = vmul.f32 %v2768, 0.3275911
        %v2801 = vmul.f32 %v2769, 0.3275911
        %v2802 = vmul.f32 %v2770, 0.3275911
        %v2803 = vmul.f32 %v2771, 0.3275911
        %v2804 = vmul.f32 %v2772, 0.3275911
        %v2805 = vmul.f32 %v2773, 0.3275911
        %v2806 = vmul.f32 %v2774, 0.3275911
        %v2807 = vmul.f32 %v2775, 0.3275911
        %v2808 = vmul.f32 %v2776, 0.3275911
        %v2809 = vmul.f32 %v2777, 0.3275911
        %v2810 = vmul.f32 %v2778, 0.3275911
        %v2811 = vmul.f32 %v2779, 0.3275911
        %v2812 = vmul.f32 %v2780, 0.3275911
        %v2813 = vmul.f32 %v2781, 0.3275911
        %v2814 = vmul.f32 %v2782, 0.3275911
        %v2815 = vmul.f32 %v2783, 0.3275911
        %v2816 = vadd.f32 %v2784, 1.0
        %v2817 = vadd.f32 %v2785, 1.0
        %v2818 = vadd.f32 %v2786, 1.0
        %v2819 = vadd.f32 %v2787, 1.0
        %v2820 = vadd.f32 %v2788, 1.0
        %v2821 = vadd.f32 %v2789, 1.0
        %v2822 = vadd.f32 %v2790, 1.0
        %v2823 = vadd.f32 %v2791, 1.0
        %v2824 = vadd.f32 %v2792, 1.0
        %v2825 = vadd.f32 %v2793, 1.0
        %v2826 = vadd.f32 %v2794, 1.0
        %v2827 = vadd.f32 %v2795, 1.0
        %v2828 = vadd.f32 %v2796, 1.0
        %v2829 = vadd.f32 %v2797, 1.0
        %v2830 = vadd.f32 %v2798, 1.0
        %v2831 = vadd.f32 %v2799, 1.0
        %v2832 = vadd.f32 %v2800, 1.0
        %v2833 = vadd.f32 %v2801, 1.0
        %v2834 = vadd.f32 %v2802, 1.0
        %v2835 = vadd.f32 %v2803, 1.0
        %v2836 = vadd.f32 %v2804, 1.0
        %v2837 = vadd.f32 %v2805, 1.0
        %v2838 = vadd.f32 %v2806, 1.0
        %v2839 = vadd.f32 %v2807, 1.0
        %v2840 = vadd.f32 %v2808, 1.0
        %v2841 = vadd.f32 %v2809, 1.0
        %v2842 = vadd.f32 %v2810, 1.0
        %v2843 = vadd.f32 %v2811, 1.0
        %v2844 = vadd.f32 %v2812, 1.0
        %v2845 = vadd.f32 %v2813, 1.0
        %v2846 = vadd.f32 %v2814, 1.0
        %v2847 = vadd.f32 %v2815, 1.0
        %v2848 = vrcp.pop %v2816
        %v2849 = vrcp.pop %v2817
        %v2850 = vrcp.pop %v2818
        %v2851 = vrcp.pop %v2819
        %v2852 = vrcp.pop %v2820
        %v2853 = vrcp.pop %v2821
        %v2854 = vrcp.pop %v2822
        %v2855 = vrcp.pop %v2823
        %v2856 = vrcp.pop %v2824
        %v2857 = vrcp.pop %v2825
        %v2858 = vrcp.pop %v2826
        %v2859 = vrcp.pop %v2827
        %v2860 = vrcp.pop %v2828
        %v2861 = vrcp.pop %v2829
        %v2862 = vrcp.pop %v2830
        %v2863 = vrcp.pop %v2831
        %v2864 = vrcp.pop %v2832
        %v2865 = vrcp.pop %v2833
        %v2866 = vrcp.pop %v2834
        %v2867 = vrcp.pop %v2835
        %v2868 = vrcp.pop %v2836
        %v2869 = vrcp.pop %v2837
        %v2870 = vrcp.pop %v2838
        %v2871 = vrcp.pop %v2839
        %v2872 = vrcp.pop %v2840
        %v2873 = vrcp.pop %v2841
        %v2874 = vrcp.pop %v2842
        %v2875 = vrcp.pop %v2843
        %v2876 = vrcp.pop %v2844
        %v2877 = vrcp.pop %v2845
        %v2878 = vrcp.pop %v2846
        %v2879 = vrcp.pop %v2847
        %v2880 = vmul.f32 %v2816, %v2848
        %v2881 = vmul.f32 %v2817, %v2849
        %v2882 = vmul.f32 %v2818, %v2850
        %v2883 = vmul.f32 %v2819, %v2851
        %v2884 = vmul.f32 %v2820, %v2852
        %v2885 = vmul.f32 %v2821, %v2853
        %v2886 = vmul.f32 %v2822, %v2854
        %v2887 = vmul.f32 %v2823, %v2855
        %v2888 = vmul.f32 %v2824, %v2856
        %v2889 = vmul.f32 %v2825, %v2857
        %v2890 = vmul.f32 %v2826, %v2858
        %v2891 = vmul.f32 %v2827, %v2859
        %v2892 = vmul.f32 %v2828, %v2860
        %v2893 = vmul.f32 %v2829, %v2861
        %v2894 = vmul.f32 %v2830, %v2862
        %v2895 = vmul.f32 %v2831, %v2863
        %v2896 = vmul.f32 %v2832, %v2864
        %v2897 = vmul.f32 %v2833, %v2865
        %v2898 = vmul.f32 %v2834, %v2866
        %v2899 = vmul.f32 %v2835, %v2867
        %v2900 = vmul.f32 %v2836, %v2868
        %v2901 = vmul.f32 %v2837, %v2869
        %v2902 = vmul.f32 %v2838, %v2870
        %v2903 = vmul.f32 %v2839, %v2871
        %v2904 = vmul.f32 %v2840, %v2872
        %v2905 = vmul.f32 %v2841, %v2873
        %v2906 = vmul.f32 %v2842, %v2874
        %v2907 = vmul.f32 %v2843, %v2875
        %v2908 = vmul.f32 %v2844, %v2876
        %v2909 = vmul.f32 %v2845, %v2877
        %v2910 = vmul.f32 %v2846, %v2878
        %v2911 = vmul.f32 %v2847, %v2879
        %v2912 = vsub.f32 2.0, %v2880
        %v2913 = vsub.f32 2.0, %v2881
        %v2914 = vsub.f32 2.0, %v2882
        %v2915 = vsub.f32 2.0, %v2883
        %v2916 = vsub.f32 2.0, %v2884
        %v2917 = vsub.f32 2.0, %v2885
        %v2918 = vsub.f32 2.0, %v2886
        %v2919 = vsub.f32 2.0, %v2887
        %v2920 = vsub.f32 2.0, %v2888
        %v2921 = vsub.f32 2.0, %v2889
        %v2922 = vsub.f32 2.0, %v2890
        %v2923 = vsub.f32 2.0, %v2891
        %v2924 = vsub.f32 2.0, %v2892
        %v2925 = vsub.f32 2.0, %v2893
        %v2926 = vsub.f32 2.0, %v2894
        %v2927 = vsub.f32 2.0, %v2895
        %v2928 = vsub.f32 2.0, %v2896
        %v2929 = vsub.f32 2.0, %v2897
        %v2930 = vsub.f32 2.0, %v2898
        %v2931 = vsub.f32 2.0, %v2899
        %v2932 = vsub.f32 2.0, %v2900
        %v2933 = vsub.f32 2.0, %v2901
        %v2934 = vsub.f32 2.0, %v2902
        %v2935 = vsub.f32 2.0, %v2903
        %v2936 = vsub.f32 2.0, %v2904
        %v2937 = vsub.f32 2.0, %v2905
        %v2938 = vsub.f32 2.0, %v2906
        %v2939 = vsub.f32 2.0, %v2907
        %v2940 = vsub.f32 2.0, %v2908
        %v2941 = vsub.f32 2.0, %v2909
        %v2942 = vsub.f32 2.0, %v2910
        %v2943 = vsub.f32 2.0, %v2911
        %v2944 = vmul.f32 %v2848, %v2912
        %v2945 = vmul.f32 %v2849, %v2913
        %v2946 = vmul.f32 %v2850, %v2914
        %v2947 = vmul.f32 %v2851, %v2915
        %v2948 = vmul.f32 %v2852, %v2916
        %v2949 = vmul.f32 %v2853, %v2917
        %v2950 = vmul.f32 %v2854, %v2918
        %v2951 = vmul.f32 %v2855, %v2919
        %v2952 = vmul.f32 %v2856, %v2920
        %v2953 = vmul.f32 %v2857, %v2921
        %v2954 = vmul.f32 %v2858, %v2922
        %v2955 = vmul.f32 %v2859, %v2923
        %v2956 = vmul.f32 %v2860, %v2924
        %v2957 = vmul.f32 %v2861, %v2925
        %v2958 = vmul.f32 %v2862, %v2926
        %v2959 = vmul.f32 %v2863, %v2927
        %v2960 = vmul.f32 %v2864, %v2928
        %v2961 = vmul.f32 %v2865, %v2929
        %v2962 = vmul.f32 %v2866, %v2930
        %v2963 = vmul.f32 %v2867, %v2931
        %v2964 = vmul.f32 %v2868, %v2932
        %v2965 = vmul.f32 %v2869, %v2933
        %v2966 = vmul.f32 %v2870, %v2934
        %v2967 = vmul.f32 %v2871, %v2935
        %v2968 = vmul.f32 %v2872, %v2936
        %v2969 = vmul.f32 %v2873, %v2937
        %v2970 = vmul.f32 %v2874, %v2938
        %v2971 = vmul.f32 %v2875, %v2939
        %v2972 = vmul.f32 %v2876, %v2940
        %v2973 = vmul.f32 %v2877, %v2941
        %v2974 = vmul.f32 %v2878, %v2942
        %v2975 = vmul.f32 %v2879, %v2943
        %v2976 = vmul.f32 %v2944, 1.0614054
        %v2977 = vmul.f32 %v2945, 1.0614054
        %v2978 = vmul.f32 %v2946, 1.0614054
        %v2979 = vmul.f32 %v2947, 1.0614054
        %v2980 = vmul.f32 %v2948, 1.0614054
        %v2981 = vmul.f32 %v2949, 1.0614054
        %v2982 = vmul.f32 %v2950, 1.0614054
        %v2983 = vmul.f32 %v2951, 1.0614054
        %v2984 = vmul.f32 %v2952, 1.0614054
        %v2985 = vmul.f32 %v2953, 1.0614054
        %v2986 = vmul.f32 %v2954, 1.0614054
        %v2987 = vmul.f32 %v2955, 1.0614054
        %v2988 = vmul.f32 %v2956, 1.0614054
        %v2989 = vmul.f32 %v2957, 1.0614054
        %v2990 = vmul.f32 %v2958, 1.0614054
        %v2991 = vmul.f32 %v2959, 1.0614054
        %v2992 = vmul.f32 %v2960, 1.0614054
        %v2993 = vmul.f32 %v2961, 1.0614054
        %v2994 = vmul.f32 %v2962, 1.0614054
        %v2995 = vmul.f32 %v2963, 1.0614054
        %v2996 = vmul.f32 %v2964, 1.0614054
        %v2997 = vmul.f32 %v2965, 1.0614054
        %v2998 = vmul.f32 %v2966, 1.0614054
        %v2999 = vmul.f32 %v2967, 1.0614054
        %v3000 = vmul.f32 %v2968, 1.0614054
        %v3001 = vmul.f32 %v2969, 1.0614054
        %v3002 = vmul.f32 %v2970, 1.0614054
        %v3003 = vmul.f32 %v2971, 1.0614054
        %v3004 = vmul.f32 %v2972, 1.0614054
        %v3005 = vmul.f32 %v2973, 1.0614054
        %v3006 = vmul.f32 %v2974, 1.0614054
        %v3007 = vmul.f32 %v2975, 1.0614054
        %v3008 = vadd.f32 %v2976, -1.4531521
        %v3009 = vadd.f32 %v2977, -1.4531521
        %v3010 = vadd.f32 %v2978, -1.4531521
        %v3011 = vadd.f32 %v2979, -1.4531521
        %v3012 = vadd.f32 %v2980, -1.4531521
        %v3013 = vadd.f32 %v2981, -1.4531521
        %v3014 = vadd.f32 %v2982, -1.4531521
        %v3015 = vadd.f32 %v2983, -1.4531521
        %v3016 = vadd.f32 %v2984, -1.4531521
        %v3017 = vadd.f32 %v2985, -1.4531521
        %v3018 = vadd.f32 %v2986, -1.4531521
        %v3019 = vadd.f32 %v2987, -1.4531521
        %v3020 = vadd.f32 %v2988, -1.4531521
        %v3021 = vadd.f32 %v2989, -1.4531521
        %v3022 = vadd.f32 %v2990, -1.4531521
        %v3023 = vadd.f32 %v2991, -1.4531521
        %v3024 = vadd.f32 %v2992, -1.4531521
        %v3025 = vadd.f32 %v2993, -1.4531521
        %v3026 = vadd.f32 %v2994, -1.4531521
        %v3027 = vadd.f32 %v2995, -1.4531521
        %v3028 = vadd.f32 %v2996, -1.4531521
        %v3029 = vadd.f32 %v2997, -1.4531521
        %v3030 = vadd.f32 %v2998, -1.4531521
        %v3031 = vadd.f32 %v2999, -1.4531521
        %v3032 = vadd.f32 %v3000, -1.4531521
        %v3033 = vadd.f32 %v3001, -1.4531521
        %v3034 = vadd.f32 %v3002, -1.4531521
        %v3035 = vadd.f32 %v3003, -1.4531521
        %v3036 = vadd.f32 %v3004, -1.4531521
        %v3037 = vadd.f32 %v3005, -1.4531521
        %v3038 = vadd.f32 %v3006, -1.4531521
        %v3039 = vadd.f32 %v3007, -1.4531521
        %v3040 = vmul.f32 %v3008, %v2944
        %v3041 = vmul.f32 %v3009, %v2945
        %v3042 = vmul.f32 %v3010, %v2946
        %v3043 = vmul.f32 %v3011, %v2947
        %v3044 = vmul.f32 %v3012, %v2948
        %v3045 = vmul.f32 %v3013, %v2949
        %v3046 = vmul.f32 %v3014, %v2950
        %v3047 = vmul.f32 %v3015, %v2951
        %v3048 = vmul.f32 %v3016, %v2952
        %v3049 = vmul.f32 %v3017, %v2953
        %v3050 = vmul.f32 %v3018, %v2954
        %v3051 = vmul.f32 %v3019, %v2955
        %v3052 = vmul.f32 %v3020, %v2956
        %v3053 = vmul.f32 %v3021, %v2957
        %v3054 = vmul.f32 %v3022, %v2958
        %v3055 = vmul.f32 %v3023, %v2959
        %v3056 = vmul.f32 %v3024, %v2960
        %v3057 = vmul.f32 %v3025, %v2961
        %v3058 = vmul.f32 %v3026, %v2962
        %v3059 = vmul.f32 %v3027, %v2963
        %v3060 = vmul.f32 %v3028, %v2964
        %v3061 = vmul.f32 %v3029, %v2965
        %v3062 = vmul.f32 %v3030, %v2966
        %v3063 = vmul.f32 %v3031, %v2967
        %v3064 = vmul.f32 %v3032, %v2968
        %v3065 = vmul.f32 %v3033, %v2969
        %v3066 = vmul.f32 %v3034, %v2970
        %v3067 = vmul.f32 %v3035, %v2971
        %v3068 = vmul.f32 %v3036, %v2972
        %v3069 = vmul.f32 %v3037, %v2973
        %v3070 = vmul.f32 %v3038, %v2974
        %v3071 = vmul.f32 %v3039, %v2975
        %v3072 = vadd.f32 %v3040, 1.4214138
        %v3073 = vadd.f32 %v3041, 1.4214138
        %v3074 = vadd.f32 %v3042, 1.4214138
        %v3075 = vadd.f32 %v3043, 1.4214138
        %v3076 = vadd.f32 %v3044, 1.4214138
        %v3077 = vadd.f32 %v3045, 1.4214138
        %v3078 = vadd.f32 %v3046, 1.4214138
        %v3079 = vadd.f32 %v3047, 1.4214138
        %v3080 = vadd.f32 %v3048, 1.4214138
        %v3081 = vadd.f32 %v3049, 1.4214138
        %v3082 = vadd.f32 %v3050, 1.4214138
        %v3083 = vadd.f32 %v3051, 1.4214138
        %v3084 = vadd.f32 %v3052, 1.4214138
        %v3085 = vadd.f32 %v3053, 1.4214138
        %v3086 = vadd.f32 %v3054, 1.4214138
        %v3087 = vadd.f32 %v3055, 1.4214138
        %v3088 = vadd.f32 %v3056, 1.4214138
        %v3089 = vadd.f32 %v3057, 1.4214138
        %v3090 = vadd.f32 %v3058, 1.4214138
        %v3091 = vadd.f32 %v3059, 1.4214138
        %v3092 = vadd.f32 %v3060, 1.4214138
        %v3093 = vadd.f32 %v3061, 1.4214138
        %v3094 = vadd.f32 %v3062, 1.4214138
        %v3095 = vadd.f32 %v3063, 1.4214138
        %v3096 = vadd.f32 %v3064, 1.4214138
        %v3097 = vadd.f32 %v3065, 1.4214138
        %v3098 = vadd.f32 %v3066, 1.4214138
        %v3099 = vadd.f32 %v3067, 1.4214138
        %v3100 = vadd.f32 %v3068, 1.4214138
        %v3101 = vadd.f32 %v3069, 1.4214138
        %v3102 = vadd.f32 %v3070, 1.4214138
        %v3103 = vadd.f32 %v3071, 1.4214138
        %v3104 = vmul.f32 %v3072, %v2944
        %v3105 = vmul.f32 %v3073, %v2945
        %v3106 = vmul.f32 %v3074, %v2946
        %v3107 = vmul.f32 %v3075, %v2947
        %v3108 = vmul.f32 %v3076, %v2948
        %v3109 = vmul.f32 %v3077, %v2949
        %v3110 = vmul.f32 %v3078, %v2950
        %v3111 = vmul.f32 %v3079, %v2951
        %v3112 = vmul.f32 %v3080, %v2952
        %v3113 = vmul.f32 %v3081, %v2953
        %v3114 = vmul.f32 %v3082, %v2954
        %v3115 = vmul.f32 %v3083, %v2955
        %v3116 = vmul.f32 %v3084, %v2956
        %v3117 = vmul.f32 %v3085, %v2957
        %v3118 = vmul.f32 %v3086, %v2958
        %v3119 = vmul.f32 %v3087, %v2959
        %v3120 = vmul.f32 %v3088, %v2960
        %v3121 = vmul.f32 %v3089, %v2961
        %v3122 = vmul.f32 %v3090, %v2962
        %v3123 = vmul.f32 %v3091, %v2963
        %v3124 = vmul.f32 %v3092, %v2964
        %v3125 = vmul.f32 %v3093, %v2965
        %v3126 = vmul.f32 %v3094, %v2966
        %v3127 = vmul.f32 %v3095, %v2967
        %v3128 = vmul.f32 %v3096, %v2968
        %v3129 = vmul.f32 %v3097, %v2969
        %v3130 = vmul.f32 %v3098, %v2970
        %v3131 = vmul.f32 %v3099, %v2971
        %v3132 = vmul.f32 %v3100, %v2972
        %v3133 = vmul.f32 %v3101, %v2973
        %v3134 = vmul.f32 %v3102, %v2974
        %v3135 = vmul.f32 %v3103, %v2975
        %v3136 = vadd.f32 %v3104, -0.28449672
        %v3137 = vadd.f32 %v3105, -0.28449672
        %v3138 = vadd.f32 %v3106, -0.28449672
        %v3139 = vadd.f32 %v3107, -0.28449672
        %v3140 = vadd.f32 %v3108, -0.28449672
        %v3141 = vadd.f32 %v3109, -0.28449672
        %v3142 = vadd.f32 %v3110, -0.28449672
        %v3143 = vadd.f32 %v3111, -0.28449672
        %v3144 = vadd.f32 %v3112, -0.28449672
        %v3145 = vadd.f32 %v3113, -0.28449672
        %v3146 = vadd.f32 %v3114, -0.28449672
        %v3147 = vadd.f32 %v3115, -0.28449672
        %v3148 = vadd.f32 %v3116, -0.28449672
        %v3149 = vadd.f32 %v3117, -0.28449672
        %v3150 = vadd.f32 %v3118, -0.28449672
        %v3151 = vadd.f32 %v3119, -0.28449672
        %v3152 = vadd.f32 %v3120, -0.28449672
        %v3153 = vadd.f32 %v3121, -0.28449672
        %v3154 = vadd.f32 %v3122, -0.28449672
        %v3155 = vadd.f32 %v3123, -0.28449672
        %v3156 = vadd.f32 %v3124, -0.28449672
        %v3157 = vadd.f32 %v3125, -0.28449672
        %v3158 = vadd.f32 %v3126, -0.28449672
        %v3159 = vadd.f32 %v3127, -0.28449672
        %v3160 = vadd.f32 %v3128, -0.28449672
        %v3161 = vadd.f32 %v3129, -0.28449672
        %v3162 = vadd.f32 %v3130, -0.28449672
        %v3163 = vadd.f32 %v3131, -0.28449672
        %v3164 = vadd.f32 %v3132, -0.28449672
        %v3165 = vadd.f32 %v3133, -0.28449672
        %v3166 = vadd.f32 %v3134, -0.28449672
        %v3167 = vadd.f32 %v3135, -0.28449672
        %v3168 = vmul.f32 %v3136, %v2944
        %v3169 = vmul.f32 %v3137, %v2945
        %v3170 = vmul.f32 %v3138, %v2946
        %v3171 = vmul.f32 %v3139, %v2947
        %v3172 = vmul.f32 %v3140, %v2948
        %v3173 = vmul.f32 %v3141, %v2949
        %v3174 = vmul.f32 %v3142, %v2950
        %v3175 = vmul.f32 %v3143, %v2951
        %v3176 = vmul.f32 %v3144, %v2952
        %v3177 = vmul.f32 %v3145, %v2953
        %v3178 = vmul.f32 %v3146, %v2954
        %v3179 = vmul.f32 %v3147, %v2955
        %v3180 = vmul.f32 %v3148, %v2956
        %v3181 = vmul.f32 %v3149, %v2957
        %v3182 = vmul.f32 %v3150, %v2958
        %v3183 = vmul.f32 %v3151, %v2959
        %v3184 = vmul.f32 %v3152, %v2960
        %v3185 = vmul.f32 %v3153, %v2961
        %v3186 = vmul.f32 %v3154, %v2962
        %v3187 = vmul.f32 %v3155, %v2963
        %v3188 = vmul.f32 %v3156, %v2964
        %v3189 = vmul.f32 %v3157, %v2965
        %v3190 = vmul.f32 %v3158, %v2966
        %v3191 = vmul.f32 %v3159, %v2967
        %v3192 = vmul.f32 %v3160, %v2968
        %v3193 = vmul.f32 %v3161, %v2969
        %v3194 = vmul.f32 %v3162, %v2970
        %v3195 = vmul.f32 %v3163, %v2971
        %v3196 = vmul.f32 %v3164, %v2972
        %v3197 = vmul.f32 %v3165, %v2973
        %v3198 = vmul.f32 %v3166, %v2974
        %v3199 = vmul.f32 %v3167, %v2975
        %v3200 = vadd.f32 %v3168, 0.2548296
        %v3201 = vadd.f32 %v3169, 0.2548296
        %v3202 = vadd.f32 %v3170, 0.2548296
        %v3203 = vadd.f32 %v3171, 0.2548296
        %v3204 = vadd.f32 %v3172, 0.2548296
        %v3205 = vadd.f32 %v3173, 0.2548296
        %v3206 = vadd.f32 %v3174, 0.2548296
        %v3207 = vadd.f32 %v3175, 0.2548296
        %v3208 = vadd.f32 %v3176, 0.2548296
        %v3209 = vadd.f32 %v3177, 0.2548296
        %v3210 = vadd.f32 %v3178, 0.2548296
        %v3211 = vadd.f32 %v3179, 0.2548296
        %v3212 = vadd.f32 %v3180, 0.2548296
        %v3213 = vadd.f32 %v3181, 0.2548296
        %v3214 = vadd.f32 %v3182, 0.2548296
        %v3215 = vadd.f32 %v3183, 0.2548296
        %v3216 = vadd.f32 %v3184, 0.2548296
        %v3217 = vadd.f32 %v3185, 0.2548296
        %v3218 = vadd.f32 %v3186, 0.2548296
        %v3219 = vadd.f32 %v3187, 0.2548296
        %v3220 = vadd.f32 %v3188, 0.2548296
        %v3221 = vadd.f32 %v3189, 0.2548296
        %v3222 = vadd.f32 %v3190, 0.2548296
        %v3223 = vadd.f32 %v3191, 0.2548296
        %v3224 = vadd.f32 %v3192, 0.2548296
        %v3225 = vadd.f32 %v3193, 0.2548296
        %v3226 = vadd.f32 %v3194, 0.2548296
        %v3227 = vadd.f32 %v3195, 0.2548296
        %v3228 = vadd.f32 %v3196, 0.2548296
        %v3229 = vadd.f32 %v3197, 0.2548296
        %v3230 = vadd.f32 %v3198, 0.2548296
        %v3231 = vadd.f32 %v3199, 0.2548296
        %v3232 = vmul.f32 %v3200, %v2944
        %v3233 = vmul.f32 %v3201, %v2945
        %v3234 = vmul.f32 %v3202, %v2946
        %v3235 = vmul.f32 %v3203, %v2947
        %v3236 = vmul.f32 %v3204, %v2948
        %v3237 = vmul.f32 %v3205, %v2949
        %v3238 = vmul.f32 %v3206, %v2950
        %v3239 = vmul.f32 %v3207, %v2951
        %v3240 = vmul.f32 %v3208, %v2952
        %v3241 = vmul.f32 %v3209, %v2953
        %v3242 = vmul.f32 %v3210, %v2954
        %v3243 = vmul.f32 %v3211, %v2955
        %v3244 = vmul.f32 %v3212, %v2956
        %v3245 = vmul.f32 %v3213, %v2957
        %v3246 = vmul.f32 %v3214, %v2958
        %v3247 = vmul.f32 %v3215, %v2959
        %v3248 = vmul.f32 %v3216, %v2960
        %v3249 = vmul.f32 %v3217, %v2961
        %v3250 = vmul.f32 %v3218, %v2962
        %v3251 = vmul.f32 %v3219, %v2963
        %v3252 = vmul.f32 %v3220, %v2964
        %v3253 = vmul.f32 %v3221, %v2965
        %v3254 = vmul.f32 %v3222, %v2966
        %v3255 = vmul.f32 %v3223, %v2967
        %v3256 = vmul.f32 %v3224, %v2968
        %v3257 = vmul.f32 %v3225, %v2969
        %v3258 = vmul.f32 %v3226, %v2970
        %v3259 = vmul.f32 %v3227, %v2971
        %v3260 = vmul.f32 %v3228, %v2972
        %v3261 = vmul.f32 %v3229, %v2973
        %v3262 = vmul.f32 %v3230, %v2974
        %v3263 = vmul.f32 %v3231, %v2975
        %v3264 = vsub.f32 0.0, %v2752
        %v3265 = vsub.f32 0.0, %v2753
        %v3266 = vsub.f32 0.0, %v2754
        %v3267 = vsub.f32 0.0, %v2755
        %v3268 = vsub.f32 0.0, %v2756
        %v3269 = vsub.f32 0.0, %v2757
        %v3270 = vsub.f32 0.0, %v2758
        %v3271 = vsub.f32 0.0, %v2759
        %v3272 = vsub.f32 0.0, %v2760
        %v3273 = vsub.f32 0.0, %v2761
        %v3274 = vsub.f32 0.0, %v2762
        %v3275 = vsub.f32 0.0, %v2763
        %v3276 = vsub.f32 0.0, %v2764
        %v3277 = vsub.f32 0.0, %v2765
        %v3278 = vsub.f32 0.0, %v2766
        %v3279 = vsub.f32 0.0, %v2767
        %v3280 = vsub.f32 0.0, %v2768
        %v3281 = vsub.f32 0.0, %v2769
        %v3282 = vsub.f32 0.0, %v2770
        %v3283 = vsub.f32 0.0, %v2771
        %v3284 = vsub.f32 0.0, %v2772
        %v3285 = vsub.f32 0.0, %v2773
        %v3286 = vsub.f32 0.0, %v2774
        %v3287 = vsub.f32 0.0, %v2775
        %v3288 = vsub.f32 0.0, %v2776
        %v3289 = vsub.f32 0.0, %v2777
        %v3290 = vsub.f32 0.0, %v2778
        %v3291 = vsub.f32 0.0, %v2779
        %v3292 = vsub.f32 0.0, %v2780
        %v3293 = vsub.f32 0.0, %v2781
        %v3294 = vsub.f32 0.0, %v2782
        %v3295 = vsub.f32 0.0, %v2783
        %v3296 = vmul.f32 %v3264, %v2752
        %v3297 = vmul.f32 %v3265, %v2753
        %v3298 = vmul.f32 %v3266, %v2754
        %v3299 = vmul.f32 %v3267, %v2755
        %v3300 = vmul.f32 %v3268, %v2756
        %v3301 = vmul.f32 %v3269, %v2757
        %v3302 = vmul.f32 %v3270, %v2758
        %v3303 = vmul.f32 %v3271, %v2759
        %v3304 = vmul.f32 %v3272, %v2760
        %v3305 = vmul.f32 %v3273, %v2761
        %v3306 = vmul.f32 %v3274, %v2762
        %v3307 = vmul.f32 %v3275, %v2763
        %v3308 = vmul.f32 %v3276, %v2764
        %v3309 = vmul.f32 %v3277, %v2765
        %v3310 = vmul.f32 %v3278, %v2766
        %v3311 = vmul.f32 %v3279, %v2767
        %v3312 = vmul.f32 %v3280, %v2768
        %v3313 = vmul.f32 %v3281, %v2769
        %v3314 = vmul.f32 %v3282, %v2770
        %v3315 = vmul.f32 %v3283, %v2771
        %v3316 = vmul.f32 %v3284, %v2772
        %v3317 = vmul.f32 %v3285, %v2773
        %v3318 = vmul.f32 %v3286, %v2774
        %v3319 = vmul.f32 %v3287, %v2775
        %v3320 = vmul.f32 %v3288, %v2776
        %v3321 = vmul.f32 %v3289, %v2777
        %v3322 = vmul.f32 %v3290, %v2778
        %v3323 = vmul.f32 %v3291, %v2779
        %v3324 = vmul.f32 %v3292, %v2780
        %v3325 = vmul.f32 %v3293, %v2781
        %v3326 = vmul.f32 %v3294, %v2782
        %v3327 = vmul.f32 %v3295, %v2783
        %v3328 = vmul.f32 %v3296, 1.442695
        %v3329 = vpow.pop %v3328
        %v3330 = vmul.f32 %v3297, 1.442695
        %v3331 = vpow.pop %v3330
        %v3332 = vmul.f32 %v3298, 1.442695
        %v3333 = vpow.pop %v3332
        %v3334 = vmul.f32 %v3299, 1.442695
        %v3335 = vpow.pop %v3334
        %v3336 = vmul.f32 %v3300, 1.442695
        %v3337 = vpow.pop %v3336
        %v3338 = vmul.f32 %v3301, 1.442695
        %v3339 = vpow.pop %v3338
        %v3340 = vmul.f32 %v3302, 1.442695
        %v3341 = vpow.pop %v3340
        %v3342 = vmul.f32 %v3303, 1.442695
        %v3343 = vpow.pop %v3342
        %v3344 = vmul.f32 %v3304, 1.442695
        %v3345 = vpow.pop %v3344
        %v3346 = vmul.f32 %v3305, 1.442695
        %v3347 = vpow.pop %v3346
        %v3348 = vmul.f32 %v3306, 1.442695
        %v3349 = vpow.pop %v3348
        %v3350 = vmul.f32 %v3307, 1.442695
        %v3351 = vpow.pop %v3350
        %v3352 = vmul.f32 %v3308, 1.442695
        %v3353 = vpow.pop %v3352
        %v3354 = vmul.f32 %v3309, 1.442695
        %v3355 = vpow.pop %v3354
        %v3356 = vmul.f32 %v3310, 1.442695
        %v3357 = vpow.pop %v3356
        %v3358 = vmul.f32 %v3311, 1.442695
        %v3359 = vpow.pop %v3358
        %v3360 = vmul.f32 %v3312, 1.442695
        %v3361 = vpow.pop %v3360
        %v3362 = vmul.f32 %v3313, 1.442695
        %v3363 = vpow.pop %v3362
        %v3364 = vmul.f32 %v3314, 1.442695
        %v3365 = vpow.pop %v3364
        %v3366 = vmul.f32 %v3315, 1.442695
        %v3367 = vpow.pop %v3366
        %v3368 = vmul.f32 %v3316, 1.442695
        %v3369 = vpow.pop %v3368
        %v3370 = vmul.f32 %v3317, 1.442695
        %v3371 = vpow.pop %v3370
        %v3372 = vmul.f32 %v3318, 1.442695
        %v3373 = vpow.pop %v3372
        %v3374 = vmul.f32 %v3319, 1.442695
        %v3375 = vpow.pop %v3374
        %v3376 = vmul.f32 %v3320, 1.442695
        %v3377 = vpow.pop %v3376
        %v3378 = vmul.f32 %v3321, 1.442695
        %v3379 = vpow.pop %v3378
        %v3380 = vmul.f32 %v3322, 1.442695
        %v3381 = vpow.pop %v3380
        %v3382 = vmul.f32 %v3323, 1.442695
        %v3383 = vpow.pop %v3382
        %v3384 = vmul.f32 %v3324, 1.442695
        %v3385 = vpow.pop %v3384
        %v3386 = vmul.f32 %v3325, 1.442695
        %v3387 = vpow.pop %v3386
        %v3388 = vmul.f32 %v3326, 1.442695
        %v3389 = vpow.pop %v3388
        %v3390 = vmul.f32 %v3327, 1.442695
        %v3391 = vpow.pop %v3390
        %v3392 = vmul.f32 %v3232, %v3329
        %v3393 = vmul.f32 %v3233, %v3331
        %v3394 = vmul.f32 %v3234, %v3333
        %v3395 = vmul.f32 %v3235, %v3335
        %v3396 = vmul.f32 %v3236, %v3337
        %v3397 = vmul.f32 %v3237, %v3339
        %v3398 = vmul.f32 %v3238, %v3341
        %v3399 = vmul.f32 %v3239, %v3343
        %v3400 = vmul.f32 %v3240, %v3345
        %v3401 = vmul.f32 %v3241, %v3347
        %v3402 = vmul.f32 %v3242, %v3349
        %v3403 = vmul.f32 %v3243, %v3351
        %v3404 = vmul.f32 %v3244, %v3353
        %v3405 = vmul.f32 %v3245, %v3355
        %v3406 = vmul.f32 %v3246, %v3357
        %v3407 = vmul.f32 %v3247, %v3359
        %v3408 = vmul.f32 %v3248, %v3361
        %v3409 = vmul.f32 %v3249, %v3363
        %v3410 = vmul.f32 %v3250, %v3365
        %v3411 = vmul.f32 %v3251, %v3367
        %v3412 = vmul.f32 %v3252, %v3369
        %v3413 = vmul.f32 %v3253, %v3371
        %v3414 = vmul.f32 %v3254, %v3373
        %v3415 = vmul.f32 %v3255, %v3375
        %v3416 = vmul.f32 %v3256, %v3377
        %v3417 = vmul.f32 %v3257, %v3379
        %v3418 = vmul.f32 %v3258, %v3381
        %v3419 = vmul.f32 %v3259, %v3383
        %v3420 = vmul.f32 %v3260, %v3385
        %v3421 = vmul.f32 %v3261, %v3387
        %v3422 = vmul.f32 %v3262, %v3389
        %v3423 = vmul.f32 %v3263, %v3391
        %v3424 = vsub.f32 1.0, %v3392
        %v3425 = vsub.f32 1.0, %v3393
        %v3426 = vsub.f32 1.0, %v3394
        %v3427 = vsub.f32 1.0, %v3395
        %v3428 = vsub.f32 1.0, %v3396
        %v3429 = vsub.f32 1.0, %v3397
        %v3430 = vsub.f32 1.0, %v3398
        %v3431 = vsub.f32 1.0, %v3399
        %v3432 = vsub.f32 1.0, %v3400
        %v3433 = vsub.f32 1.0, %v3401
        %v3434 = vsub.f32 1.0, %v3402
        %v3435 = vsub.f32 1.0, %v3403
        %v3436 = vsub.f32 1.0, %v3404
        %v3437 = vsub.f32 1.0, %v3405
        %v3438 = vsub.f32 1.0, %v3406
        %v3439 = vsub.f32 1.0, %v3407
        %v3440 = vsub.f32 1.0, %v3408
        %v3441 = vsub.f32 1.0, %v3409
        %v3442 = vsub.f32 1.0, %v3410
        %v3443 = vsub.f32 1.0, %v3411
        %v3444 = vsub.f32 1.0, %v3412
        %v3445 = vsub.f32 1.0, %v3413
        %v3446 = vsub.f32 1.0, %v3414
        %v3447 = vsub.f32 1.0, %v3415
        %v3448 = vsub.f32 1.0, %v3416
        %v3449 = vsub.f32 1.0, %v3417
        %v3450 = vsub.f32 1.0, %v3418
        %v3451 = vsub.f32 1.0, %v3419
        %v3452 = vsub.f32 1.0, %v3420
        %v3453 = vsub.f32 1.0, %v3421
        %v3454 = vsub.f32 1.0, %v3422
        %v3455 = vsub.f32 1.0, %v3423
        %v3456 = vmul.f32 %v2720, %v3424
        %v3457 = vmul.f32 %v2721, %v3425
        %v3458 = vmul.f32 %v2722, %v3426
        %v3459 = vmul.f32 %v2723, %v3427
        %v3460 = vmul.f32 %v2724, %v3428
        %v3461 = vmul.f32 %v2725, %v3429
        %v3462 = vmul.f32 %v2726, %v3430
        %v3463 = vmul.f32 %v2727, %v3431
        %v3464 = vmul.f32 %v2728, %v3432
        %v3465 = vmul.f32 %v2729, %v3433
        %v3466 = vmul.f32 %v2730, %v3434
        %v3467 = vmul.f32 %v2731, %v3435
        %v3468 = vmul.f32 %v2732, %v3436
        %v3469 = vmul.f32 %v2733, %v3437
        %v3470 = vmul.f32 %v2734, %v3438
        %v3471 = vmul.f32 %v2735, %v3439
        %v3472 = vmul.f32 %v2736, %v3440
        %v3473 = vmul.f32 %v2737, %v3441
        %v3474 = vmul.f32 %v2738, %v3442
        %v3475 = vmul.f32 %v2739, %v3443
        %v3476 = vmul.f32 %v2740, %v3444
        %v3477 = vmul.f32 %v2741, %v3445
        %v3478 = vmul.f32 %v2742, %v3446
        %v3479 = vmul.f32 %v2743, %v3447
        %v3480 = vmul.f32 %v2744, %v3448
        %v3481 = vmul.f32 %v2745, %v3449
        %v3482 = vmul.f32 %v2746, %v3450
        %v3483 = vmul.f32 %v2747, %v3451
        %v3484 = vmul.f32 %v2748, %v3452
        %v3485 = vmul.f32 %v2749, %v3453
        %v3486 = vmul.f32 %v2750, %v3454
        %v3487 = vmul.f32 %v2751, %v3455
        %v3488 = vadd.f32 %v3456, 1.0
        %v3489 = vadd.f32 %v3457, 1.0
        %v3490 = vadd.f32 %v3458, 1.0
        %v3491 = vadd.f32 %v3459, 1.0
        %v3492 = vadd.f32 %v3460, 1.0
        %v3493 = vadd.f32 %v3461, 1.0
        %v3494 = vadd.f32 %v3462, 1.0
        %v3495 = vadd.f32 %v3463, 1.0
        %v3496 = vadd.f32 %v3464, 1.0
        %v3497 = vadd.f32 %v3465, 1.0
        %v3498 = vadd.f32 %v3466, 1.0
        %v3499 = vadd.f32 %v3467, 1.0
        %v3500 = vadd.f32 %v3468, 1.0
        %v3501 = vadd.f32 %v3469, 1.0
        %v3502 = vadd.f32 %v3470, 1.0
        %v3503 = vadd.f32 %v3471, 1.0
        %v3504 = vadd.f32 %v3472, 1.0
        %v3505 = vadd.f32 %v3473, 1.0
        %v3506 = vadd.f32 %v3474, 1.0
        %v3507 = vadd.f32 %v3475, 1.0
        %v3508 = vadd.f32 %v3476, 1.0
        %v3509 = vadd.f32 %v3477, 1.0
        %v3510 = vadd.f32 %v3478, 1.0
        %v3511 = vadd.f32 %v3479, 1.0
        %v3512 = vadd.f32 %v3480, 1.0
        %v3513 = vadd.f32 %v3481, 1.0
        %v3514 = vadd.f32 %v3482, 1.0
        %v3515 = vadd.f32 %v3483, 1.0
        %v3516 = vadd.f32 %v3484, 1.0
        %v3517 = vadd.f32 %v3485, 1.0
        %v3518 = vadd.f32 %v3486, 1.0
        %v3519 = vadd.f32 %v3487, 1.0
        %v3520 = vmul.f32 %v2624, %v3488
        %v3521 = vmul.f32 %v2625, %v3489
        %v3522 = vmul.f32 %v2626, %v3490
        %v3523 = vmul.f32 %v2627, %v3491
        %v3524 = vmul.f32 %v2628, %v3492
        %v3525 = vmul.f32 %v2629, %v3493
        %v3526 = vmul.f32 %v2630, %v3494
        %v3527 = vmul.f32 %v2631, %v3495
        %v3528 = vmul.f32 %v2632, %v3496
        %v3529 = vmul.f32 %v2633, %v3497
        %v3530 = vmul.f32 %v2634, %v3498
        %v3531 = vmul.f32 %v2635, %v3499
        %v3532 = vmul.f32 %v2636, %v3500
        %v3533 = vmul.f32 %v2637, %v3501
        %v3534 = vmul.f32 %v2638, %v3502
        %v3535 = vmul.f32 %v2639, %v3503
        %v3536 = vmul.f32 %v2640, %v3504
        %v3537 = vmul.f32 %v2641, %v3505
        %v3538 = vmul.f32 %v2642, %v3506
        %v3539 = vmul.f32 %v2643, %v3507
        %v3540 = vmul.f32 %v2644, %v3508
        %v3541 = vmul.f32 %v2645, %v3509
        %v3542 = vmul.f32 %v2646, %v3510
        %v3543 = vmul.f32 %v2647, %v3511
        %v3544 = vmul.f32 %v2648, %v3512
        %v3545 = vmul.f32 %v2649, %v3513
        %v3546 = vmul.f32 %v2650, %v3514
        %v3547 = vmul.f32 %v2651, %v3515
        %v3548 = vmul.f32 %v2652, %v3516
        %v3549 = vmul.f32 %v2653, %v3517
        %v3550 = vmul.f32 %v2654, %v3518
        %v3551 = vmul.f32 %v2655, %v3519
        %v3552 = vadd.f32 %v3520, %v3522
        %v3553 = vadd.f32 %v3552, %v3524
        %v3554 = vadd.f32 %v3553, %v3526
        %v3555 = vadd.f32 %v3554, %v3528
        %v3556 = vadd.f32 %v3555, %v3530
        %v3557 = vadd.f32 %v3556, %v3532
        %v3558 = vadd.f32 %v3557, %v3534
        %v3559 = vadd.f32 %v3558, %v3536
        %v3560 = vadd.f32 %v3559, %v3538
        %v3561 = vadd.f32 %v3560, %v3540
        %v3562 = vadd.f32 %v3561, %v3542
        %v3563 = vadd.f32 %v3562, %v3544
        %v3564 = vadd.f32 %v3563, %v3546
        %v3565 = vadd.f32 %v3564, %v3548
        %v3566 = vadd.f32 %v3565, %v3550
        %v3567 = vadd.f32 %v3521, %v3523
        %v3568 = vadd.f32 %v3567, %v3525
        %v3569 = vadd.f32 %v3568, %v3527
        %v3570 = vadd.f32 %v3569, %v3529
        %v3571 = vadd.f32 %v3570, %v3531
        %v3572 = vadd.f32 %v3571, %v3533
        %v3573 = vadd.f32 %v3572, %v3535
        %v3574 = vadd.f32 %v3573, %v3537
        %v3575 = vadd.f32 %v3574, %v3539
        %v3576 = vadd.f32 %v3575, %v3541
        %v3577 = vadd.f32 %v3576, %v3543
        %v3578 = vadd.f32 %v3577, %v3545
        %v3579 = vadd.f32 %v3578, %v3547
        %v3580 = vadd.f32 %v3579, %v3549
        %v3581 = vadd.f32 %v3580, %v3551
        %v3582 = vmul.f32 %v3566, %v447
        %v3583 = vmul.f32 %v3581, %v447
        %v3584 = vadd.f32 %v3582, %v3583
        %v3585 = vrot.slane %v3584, 4
        %v3586 = vadd.f32 %v3584, %v3585
        %v3587 = vrot.slane %v3586, 2
        %v3588 = vadd.f32 %v3586, %v3587
        %v3589 = vrot.slane %v3588, 1
        %v3590 = vadd.f32 %v3588, %v3589
        %v3591 = vmul.f32 %v3590, %v447
        %v3592 = vld [vmem:[%s5] sm:$0xf]
        %v3593 = vmul.f32 %v3592, %v3591
        %v3594 = vsel %vm460, %v3593, 0.0
        %3595 = vadd.xlane.f32.xlu0 %v3594
        %v3596 = vpop.xlane.xlu0 %3595
        %v3597 = vld [vmem:[%s6] sm:$0xf]
        %v3598 = vadd.f32 %v3596, %v3597
        %v3599 = vsub.f32 0.0, %v3598
        %v3600 = vmul.f32 %v3599, 1.442695
        %v3601 = vpow.pop %v3600
        %v3602 = vadd.f32 %v3601, 1.0
        %v3603 = vrcp.pop %v3602
        %v3604 = vmul.f32 1.0, %v3603
        %v3605 = vld [vmem:[%s7] sm:$0xff]
        %v3606 = vld [vmem:[%s7 + $0x8] sm:$0xff]
        %v3607 = vld [vmem:[%s7 + $0x10] sm:$0xff]
        %v3608 = vld [vmem:[%s7 + $0x18] sm:$0xff]
        %v3609 = vld [vmem:[%s7 + $0x20] sm:$0xff]
        %v3610 = vld [vmem:[%s7 + $0x28] sm:$0xff]
        %v3611 = vld [vmem:[%s7 + $0x30] sm:$0x1]
        %s3613 = vtos %v3604
        %v3614 = vstv %s3613
        %v3616 = vmul.f32 %v3614, %v3605
        %v3617 = vmul.f32 %v3614, %v3606
        %v3618 = vmul.f32 %v3614, %v3607
        %v3619 = vmul.f32 %v3614, %v3608
        %v3620 = vmul.f32 %v3614, %v3609
        %v3621 = vmul.f32 %v3614, %v3610
        %v3622 = vmul.f32 %v3614, %v3611
        %v3623 = vadd.f32 %v3616, 0.0
        %v3624 = vadd.f32 %v3617, 0.0
        %v3625 = vadd.f32 %v3618, 0.0
        %v3626 = vadd.f32 %v3619, 0.0
        %v3627 = vadd.f32 %v3620, 0.0
        %v3628 = vadd.f32 %v3621, 0.0
        %v3629 = vadd.f32 %v3622, 0.0
        %v3630 = vld [vmem:[%s8] sm:$0x1]
        %3631 = vset.pattern.permute.xlu0 0
        %3632 = vperm.xlu0 %3631, %v3604
        %v3633 = vpop.permute.xlu0 %3632
        %v3635 = vmul.f32 %v3633, %v3630
        %v3636 = vadd.f32 %v3635, 0.0
        %s3637 = scalar_lea.vmem %s7, 56
        %v3638 = vld [vmem:[%s3637] sm:$0xff]
        %v3639 = vld [vmem:[%s3637 + $0x8] sm:$0xff]
        %v3640 = vld [vmem:[%s3637 + $0x10] sm:$0xff]
        %v3641 = vld [vmem:[%s3637 + $0x18] sm:$0xff]
        %v3642 = vld [vmem:[%s3637 + $0x20] sm:$0xff]
        %v3643 = vld [vmem:[%s3637 + $0x28] sm:$0xff]
        %v3644 = vld [vmem:[%s3637 + $0x30] sm:$0x1]
        %v3645 = vrot.slane %v3604, 1
        %s3646 = vtos %v3645
        %v3647 = vstv %s3646
        %v3649 = vmul.f32 %v3647, %v3638
        %v3650 = vmul.f32 %v3647, %v3639
        %v3651 = vmul.f32 %v3647, %v3640
        %v3652 = vmul.f32 %v3647, %v3641
        %v3653 = vmul.f32 %v3647, %v3642
        %v3654 = vmul.f32 %v3647, %v3643
        %v3655 = vmul.f32 %v3647, %v3644
        %v3656 = vadd.f32 %v3623, %v3649
        %v3657 = vadd.f32 %v3624, %v3650
        %v3658 = vadd.f32 %v3625, %v3651
        %v3659 = vadd.f32 %v3626, %v3652
        %v3660 = vadd.f32 %v3627, %v3653
        %v3661 = vadd.f32 %v3628, %v3654
        %v3662 = vadd.f32 %v3629, %v3655
        %v3663 = vld [vmem:[%s8 + $0x1] sm:$0x1]
        %v3665 = vrot.slane %v3663, 7
        %v3667 = vmul.f32 %v3633, %v3665
        %v3669 = vrot.slane %v3667, 1
        %v3671 = vadd.f32 %v3636, %v3669
        %s3672 = scalar_lea.vmem %s7, 112
        %v3673 = vld [vmem:[%s3672] sm:$0xff]
        %v3674 = vld [vmem:[%s3672 + $0x8] sm:$0xff]
        %v3675 = vld [vmem:[%s3672 + $0x10] sm:$0xff]
        %v3676 = vld [vmem:[%s3672 + $0x18] sm:$0xff]
        %v3677 = vld [vmem:[%s3672 + $0x20] sm:$0xff]
        %v3678 = vld [vmem:[%s3672 + $0x28] sm:$0xff]
        %v3679 = vld [vmem:[%s3672 + $0x30] sm:$0x1]
        %v3680 = vrot.slane %v3604, 2
        %s3681 = vtos %v3680
        %v3682 = vstv %s3681
        %v3684 = vmul.f32 %v3682, %v3673
        %v3685 = vmul.f32 %v3682, %v3674
        %v3686 = vmul.f32 %v3682, %v3675
        %v3687 = vmul.f32 %v3682, %v3676
        %v3688 = vmul.f32 %v3682, %v3677
        %v3689 = vmul.f32 %v3682, %v3678
        %v3690 = vmul.f32 %v3682, %v3679
        %v3691 = vadd.f32 %v3656, %v3684
        %v3692 = vadd.f32 %v3657, %v3685
        %v3693 = vadd.f32 %v3658, %v3686
        %v3694 = vadd.f32 %v3659, %v3687
        %v3695 = vadd.f32 %v3660, %v3688
        %v3696 = vadd.f32 %v3661, %v3689
        %v3697 = vadd.f32 %v3662, %v3690
        %v3698 = vld [vmem:[%s8 + $0x2] sm:$0x1]
        %v3700 = vrot.slane %v3698, 6
        %v3702 = vmul.f32 %v3633, %v3700
        %v3704 = vrot.slane %v3702, 2
        %v3706 = vadd.f32 %v3671, %v3704
        %s3707 = scalar_lea.vmem %s7, 168
        %v3708 = vld [vmem:[%s3707] sm:$0xff]
        %v3709 = vld [vmem:[%s3707 + $0x8] sm:$0xff]
        %v3710 = vld [vmem:[%s3707 + $0x10] sm:$0xff]
        %v3711 = vld [vmem:[%s3707 + $0x18] sm:$0xff]
        %v3712 = vld [vmem:[%s3707 + $0x20] sm:$0xff]
        %v3713 = vld [vmem:[%s3707 + $0x28] sm:$0xff]
        %v3714 = vld [vmem:[%s3707 + $0x30] sm:$0x1]
        %v3715 = vrot.slane %v3604, 3
        %s3716 = vtos %v3715
        %v3717 = vstv %s3716
        %v3719 = vmul.f32 %v3717, %v3708
        %v3720 = vmul.f32 %v3717, %v3709
        %v3721 = vmul.f32 %v3717, %v3710
        %v3722 = vmul.f32 %v3717, %v3711
        %v3723 = vmul.f32 %v3717, %v3712
        %v3724 = vmul.f32 %v3717, %v3713
        %v3725 = vmul.f32 %v3717, %v3714
        %v3726 = vadd.f32 %v3691, %v3719
        %v3727 = vadd.f32 %v3692, %v3720
        %v3728 = vadd.f32 %v3693, %v3721
        %v3729 = vadd.f32 %v3694, %v3722
        %v3730 = vadd.f32 %v3695, %v3723
        %v3731 = vadd.f32 %v3696, %v3724
        %v3732 = vadd.f32 %v3697, %v3725
        %v3733 = vld [vmem:[%s8 + $0x3] sm:$0x1]
        %v3735 = vrot.slane %v3733, 5
        %v3737 = vmul.f32 %v3633, %v3735
        %v3739 = vrot.slane %v3737, 3
        %v3741 = vadd.f32 %v3706, %v3739
        %3742 = vst [vmem:[#allocation6] sm:$0xff] %v3726
        %3743 = vst [vmem:[#allocation6 + $0x8] sm:$0xff] %v3727
        %3744 = vst [vmem:[#allocation6 + $0x10] sm:$0xff] %v3728
        %3745 = vst [vmem:[#allocation6 + $0x18] sm:$0xff] %v3729
        %3746 = vst [vmem:[#allocation6 + $0x20] sm:$0xff] %v3730
        %3747 = vst [vmem:[#allocation6 + $0x28] sm:$0xff] %v3731
        %3748 = vst [vmem:[#allocation6 + $0x30] sm:$0x1] %v3732
        %3749 = vst [vmem:[#allocation7] sm:$0x1] %v3741
        %3750 = vst [vmem:[#allocation3] sm:$0xff] 0.0
        %3751 = vst [vmem:[#allocation3 + $0x8] sm:$0xff] 0.0
        %3752 = vst [vmem:[#allocation3 + $0x10] sm:$0xff] 0.0
        %3753 = vst [vmem:[#allocation3 + $0x18] sm:$0xff] 0.0
        %3754 = vst [vmem:[#allocation3 + $0x20] sm:$0xff] 0.0
        %3755 = vst [vmem:[#allocation3 + $0x28] sm:$0xff] 0.0
        %3756 = vst [vmem:[#allocation3 + $0x30] sm:$0xff] 0.0
        %3757 = vst [vmem:[#allocation3 + $0x38] sm:$0xff] 0.0
        %3758 = vst [vmem:[#allocation3 + $0x40] sm:$0xff] 0.0
        %3759 = vst [vmem:[#allocation3 + $0x48] sm:$0xff] 0.0
        %3760 = vst [vmem:[#allocation3 + $0x50] sm:$0xff] 0.0
        %3761 = vst [vmem:[#allocation3 + $0x58] sm:$0xff] 0.0
        %3762 = vst [vmem:[#allocation3 + $0x60] sm:$0xff] 0.0
        %3763 = vst [vmem:[#allocation3 + $0x68] sm:$0xff] 0.0
        %3764 = vst [vmem:[#allocation3 + $0x70] sm:$0xff] 0.0
        %3765 = vst [vmem:[#allocation3 + $0x78] sm:$0xff] 0.0
        %3766 = vst [vmem:[#allocation3 + $0x80] sm:$0xff] 0.0
        %3767 = vst [vmem:[#allocation3 + $0x88] sm:$0xff] 0.0
        %3768 = vst [vmem:[#allocation3 + $0x90] sm:$0xff] 0.0
        %3769 = vst [vmem:[#allocation3 + $0x98] sm:$0xff] 0.0
        %3770 = vst [vmem:[#allocation3 + $0xa0] sm:$0xff] 0.0
        %3771 = vst [vmem:[#allocation3 + $0xa8] sm:$0xff] 0.0
        %3772 = vst [vmem:[#allocation3 + $0xb0] sm:$0xff] 0.0
        %3773 = vst [vmem:[#allocation3 + $0xb8] sm:$0xff] 0.0
        %3774 = vst [vmem:[#allocation3 + $0xc0] sm:$0xff] 0.0
        %3775 = vst [vmem:[#allocation3 + $0xc8] sm:$0xff] 0.0
        %3776 = vst [vmem:[#allocation3 + $0xd0] sm:$0xff] 0.0
        %3777 = vst [vmem:[#allocation3 + $0xd8] sm:$0xff] 0.0
        %3778 = vst [vmem:[#allocation3 + $0xe0] sm:$0xff] 0.0
        %3779 = vst [vmem:[#allocation3 + $0xe8] sm:$0xff] 0.0
        %3780 = vst [vmem:[#allocation3 + $0xf0] sm:$0xff] 0.0
        %3781 = vst [vmem:[#allocation3 + $0xf8] sm:$0xff] 0.0
        %3782 = vst [vmem:[#allocation3 + $0x100] sm:$0xff] 0.0
        %3783 = vst [vmem:[#allocation3 + $0x108] sm:$0xff] 0.0
        %3784 = vst [vmem:[#allocation3 + $0x110] sm:$0xff] 0.0
        %3785 = vst [vmem:[#allocation3 + $0x118] sm:$0xff] 0.0
        %3786 = vst [vmem:[#allocation3 + $0x120] sm:$0xff] 0.0
        %3787 = vst [vmem:[#allocation3 + $0x128] sm:$0xff] 0.0
        %3788 = vst [vmem:[#allocation3 + $0x130] sm:$0xff] 0.0
        %3789 = vst [vmem:[#allocation3 + $0x138] sm:$0xff] 0.0
        %3790 = vst [vmem:[#allocation3 + $0x140] sm:$0xff] 0.0
        %3791 = vst [vmem:[#allocation3 + $0x148] sm:$0xff] 0.0
        %3792 = vst [vmem:[#allocation3 + $0x150] sm:$0xff] 0.0
        %3793 = vst [vmem:[#allocation3 + $0x158] sm:$0xff] 0.0
        %3794 = vst [vmem:[#allocation3 + $0x160] sm:$0xff] 0.0
        %3795 = vst [vmem:[#allocation3 + $0x168] sm:$0xff] 0.0
        %3796 = vst [vmem:[#allocation3 + $0x170] sm:$0xff] 0.0
        %3797 = vst [vmem:[#allocation3 + $0x178] sm:$0xff] 0.0
        %3798 = vst [vmem:[#allocation3 + $0x180] sm:$0xff] 0.0
        %3799 = vst [vmem:[#allocation3 + $0x188] sm:$0xff] 0.0
        %3800 = vst [vmem:[#allocation3 + $0x190] sm:$0xff] 0.0
        %3801 = vst [vmem:[#allocation3 + $0x198] sm:$0xff] 0.0
        %3802 = vst [vmem:[#allocation3 + $0x1a0] sm:$0xff] 0.0
        %3803 = vst [vmem:[#allocation3 + $0x1a8] sm:$0xff] 0.0
        %s3804 = scalar_lea.vmem [#allocation3], 1200
        %3805 = vst [vmem:[%s3804] sm:$0xff] 0.0
        %3806 = vst [vmem:[%s3804 + $0x8] sm:$0xff] 0.0
        %3807 = vst [vmem:[%s3804 + $0x10] sm:$0xff] 0.0
        %3808 = vst [vmem:[%s3804 + $0x18] sm:$0xff] 0.0
        %3809 = vst [vmem:[%s3804 + $0x20] sm:$0xff] 0.0
        %3810 = vst [vmem:[%s3804 + $0x28] sm:$0xff] 0.0
        %3811 = vst [vmem:[%s3804 + $0x30] sm:$0xff] 0.0
        %3812 = vst [vmem:[%s3804 + $0x38] sm:$0xff] 0.0
        %3813 = vst [vmem:[%s3804 + $0x40] sm:$0xff] 0.0
        %3814 = vst [vmem:[%s3804 + $0x48] sm:$0xff] 0.0
        %3815 = vst [vmem:[%s3804 + $0x50] sm:$0xff] 0.0
        %3816 = vst [vmem:[%s3804 + $0x58] sm:$0xff] 0.0
        %3817 = vst [vmem:[%s3804 + $0x60] sm:$0xff] 0.0
        %3818 = vst [vmem:[%s3804 + $0x68] sm:$0xff] 0.0
        %3819 = vst [vmem:[%s3804 + $0x70] sm:$0xff] 0.0
        %3820 = vst [vmem:[%s3804 + $0x78] sm:$0xff] 0.0
        %3821 = vst [vmem:[%s3804 + $0x80] sm:$0xff] 0.0
        %3822 = vst [vmem:[%s3804 + $0x88] sm:$0xff] 0.0
        %3823 = vst [vmem:[%s3804 + $0x90] sm:$0xff] 0.0
        %3824 = vst [vmem:[%s3804 + $0x98] sm:$0xff] 0.0
        %3825 = vst [vmem:[%s3804 + $0xa0] sm:$0xff] 0.0
        %3826 = vst [vmem:[%s3804 + $0xa8] sm:$0xff] 0.0
        %3827 = vst [vmem:[%s3804 + $0xb0] sm:$0xff] 0.0
        %3828 = vst [vmem:[%s3804 + $0xb8] sm:$0xff] 0.0
        %3829 = vst [vmem:[%s3804 + $0xc0] sm:$0xff] 0.0
        %3830 = vst [vmem:[%s3804 + $0xc8] sm:$0xff] 0.0
        %3831 = vst [vmem:[%s3804 + $0xd0] sm:$0xff] 0.0
        %3832 = vst [vmem:[%s3804 + $0xd8] sm:$0xff] 0.0
        %3833 = vst [vmem:[%s3804 + $0xe0] sm:$0xff] 0.0
        %3834 = vst [vmem:[%s3804 + $0xe8] sm:$0xff] 0.0
        %3835 = vst [vmem:[%s3804 + $0xf0] sm:$0xff] 0.0
        %3836 = vst [vmem:[%s3804 + $0xf8] sm:$0xff] 0.0
        %3837 = vst [vmem:[%s3804 + $0x100] sm:$0xff] 0.0
        %3838 = vst [vmem:[%s3804 + $0x108] sm:$0xff] 0.0
        %3839 = vst [vmem:[%s3804 + $0x110] sm:$0xff] 0.0
        %3840 = vst [vmem:[%s3804 + $0x118] sm:$0xff] 0.0
        %3841 = vst [vmem:[%s3804 + $0x120] sm:$0xff] 0.0
        %3842 = vst [vmem:[%s3804 + $0x128] sm:$0xff] 0.0
        %3843 = vst [vmem:[%s3804 + $0x130] sm:$0xff] 0.0
        %3844 = vst [vmem:[%s3804 + $0x138] sm:$0xff] 0.0
        %3845 = vst [vmem:[%s3804 + $0x140] sm:$0xff] 0.0
        %3846 = vst [vmem:[%s3804 + $0x148] sm:$0xff] 0.0
        %3847 = vst [vmem:[%s3804 + $0x150] sm:$0xff] 0.0
        %3848 = vst [vmem:[%s3804 + $0x158] sm:$0xff] 0.0
        %3849 = vst [vmem:[%s3804 + $0x160] sm:$0xff] 0.0
        %3850 = vst [vmem:[%s3804 + $0x168] sm:$0xff] 0.0
        %3851 = vst [vmem:[%s3804 + $0x170] sm:$0xff] 0.0
        %3852 = vst [vmem:[%s3804 + $0x178] sm:$0xff] 0.0
        %3853 = vst [vmem:[%s3804 + $0x180] sm:$0xff] 0.0
        %3854 = vst [vmem:[%s3804 + $0x188] sm:$0xff] 0.0
        %3855 = vst [vmem:[%s3804 + $0x190] sm:$0xff] 0.0
        %3856 = vst [vmem:[%s3804 + $0x198] sm:$0xff] 0.0
        %3857 = vst [vmem:[%s3804 + $0x1a0] sm:$0xff] 0.0
        %3858 = vst [vmem:[%s3804 + $0x1a8] sm:$0xff] 0.0
        %s3859 = scalar_lea.vmem [#allocation3], 432
        %3860 = vst [vmem:[%s3859] sm:$0xff] 0.0
        %3861 = vst [vmem:[%s3859 + $0x8] sm:$0xff] 0.0
        %3862 = vst [vmem:[%s3859 + $0x30] sm:$0xff] 0.0
        %3863 = vst [vmem:[%s3859 + $0x38] sm:$0xff] 0.0
        %3864 = vst [vmem:[%s3859 + $0x60] sm:$0xff] 0.0
        %3865 = vst [vmem:[%s3859 + $0x68] sm:$0xff] 0.0
        %3866 = vst [vmem:[%s3859 + $0x90] sm:$0xff] 0.0
        %3867 = vst [vmem:[%s3859 + $0x98] sm:$0xff] 0.0
        %3868 = vst [vmem:[%s3859 + $0xc0] sm:$0xff] 0.0
        %3869 = vst [vmem:[%s3859 + $0xc8] sm:$0xff] 0.0
        %3870 = vst [vmem:[%s3859 + $0xf0] sm:$0xff] 0.0
        %3871 = vst [vmem:[%s3859 + $0xf8] sm:$0xff] 0.0
        %3872 = vst [vmem:[%s3859 + $0x120] sm:$0xff] 0.0
        %3873 = vst [vmem:[%s3859 + $0x128] sm:$0xff] 0.0
        %3874 = vst [vmem:[%s3859 + $0x150] sm:$0xff] 0.0
        %3875 = vst [vmem:[%s3859 + $0x158] sm:$0xff] 0.0
        %3876 = vst [vmem:[%s3859 + $0x180] sm:$0xff] 0.0
        %3877 = vst [vmem:[%s3859 + $0x188] sm:$0xff] 0.0
        %3878 = vst [vmem:[%s3859 + $0x1b0] sm:$0xff] 0.0
        %3879 = vst [vmem:[%s3859 + $0x1b8] sm:$0xff] 0.0
        %3880 = vst [vmem:[%s3859 + $0x1e0] sm:$0xff] 0.0
        %3881 = vst [vmem:[%s3859 + $0x1e8] sm:$0xff] 0.0
        %3882 = vst [vmem:[%s3859 + $0x210] sm:$0xff] 0.0
        %3883 = vst [vmem:[%s3859 + $0x218] sm:$0xff] 0.0
        %3884 = vst [vmem:[%s3859 + $0x240] sm:$0xff] 0.0
        %3885 = vst [vmem:[%s3859 + $0x248] sm:$0xff] 0.0
        %3886 = vst [vmem:[%s3859 + $0x270] sm:$0xff] 0.0
        %3887 = vst [vmem:[%s3859 + $0x278] sm:$0xff] 0.0
        %3888 = vst [vmem:[%s3859 + $0x2a0] sm:$0xff] 0.0
        %3889 = vst [vmem:[%s3859 + $0x2a8] sm:$0xff] 0.0
        %3890 = vst [vmem:[%s3859 + $0x2d0] sm:$0xff] 0.0
        %3891 = vst [vmem:[%s3859 + $0x2d8] sm:$0xff] 0.0
        %3892 = vst [vmem:[%s3859 + $0x20] sm:$0xff] 0.0
        %3893 = vst [vmem:[%s3859 + $0x28] sm:$0xff] 0.0
        %3894 = vst [vmem:[%s3859 + $0x50] sm:$0xff] 0.0
        %3895 = vst [vmem:[%s3859 + $0x58] sm:$0xff] 0.0
        %3896 = vst [vmem:[%s3859 + $0x80] sm:$0xff] 0.0
        %3897 = vst [vmem:[%s3859 + $0x88] sm:$0xff] 0.0
        %3898 = vst [vmem:[%s3859 + $0xb0] sm:$0xff] 0.0
        %3899 = vst [vmem:[%s3859 + $0xb8] sm:$0xff] 0.0
        %3900 = vst [vmem:[%s3859 + $0xe0] sm:$0xff] 0.0
        %3901 = vst [vmem:[%s3859 + $0xe8] sm:$0xff] 0.0
        %3902 = vst [vmem:[%s3859 + $0x110] sm:$0xff] 0.0
        %3903 = vst [vmem:[%s3859 + $0x118] sm:$0xff] 0.0
        %3904 = vst [vmem:[%s3859 + $0x140] sm:$0xff] 0.0
        %3905 = vst [vmem:[%s3859 + $0x148] sm:$0xff] 0.0
        %3906 = vst [vmem:[%s3859 + $0x170] sm:$0xff] 0.0
        %3907 = vst [vmem:[%s3859 + $0x178] sm:$0xff] 0.0
        %3908 = vst [vmem:[%s3859 + $0x1a0] sm:$0xff] 0.0
        %3909 = vst [vmem:[%s3859 + $0x1a8] sm:$0xff] 0.0
        %3910 = vst [vmem:[%s3859 + $0x1d0] sm:$0xff] 0.0
        %3911 = vst [vmem:[%s3859 + $0x1d8] sm:$0xff] 0.0
        %3912 = vst [vmem:[%s3859 + $0x200] sm:$0xff] 0.0
        %3913 = vst [vmem:[%s3859 + $0x208] sm:$0xff] 0.0
        %3914 = vst [vmem:[%s3859 + $0x230] sm:$0xff] 0.0
        %3915 = vst [vmem:[%s3859 + $0x238] sm:$0xff] 0.0
        %3916 = vst [vmem:[%s3859 + $0x260] sm:$0xff] 0.0
        %3917 = vst [vmem:[%s3859 + $0x268] sm:$0xff] 0.0
        %3918 = vst [vmem:[%s3859 + $0x290] sm:$0xff] 0.0
        %3919 = vst [vmem:[%s3859 + $0x298] sm:$0xff] 0.0
        %3920 = vst [vmem:[%s3859 + $0x2c0] sm:$0xff] 0.0
        %3921 = vst [vmem:[%s3859 + $0x2c8] sm:$0xff] 0.0
        %3922 = vst [vmem:[%s3859 + $0x2f0] sm:$0xff] 0.0
        %3923 = vst [vmem:[%s3859 + $0x2f8] sm:$0xff] 0.0
        %3924 = vst [vmem:[%s3859 + $0x10] sm:$0xff] %v3520
        %3925 = vst [vmem:[%s3859 + $0x18] sm:$0xff] %v3521
        %3926 = vst [vmem:[%s3859 + $0x40] sm:$0xff] %v3522
        %3927 = vst [vmem:[%s3859 + $0x48] sm:$0xff] %v3523
        %3928 = vst [vmem:[%s3859 + $0x70] sm:$0xff] %v3524
        %3929 = vst [vmem:[%s3859 + $0x78] sm:$0xff] %v3525
        %3930 = vst [vmem:[%s3859 + $0xa0] sm:$0xff] %v3526
        %3931 = vst [vmem:[%s3859 + $0xa8] sm:$0xff] %v3527
        %3932 = vst [vmem:[%s3859 + $0xd0] sm:$0xff] %v3528
        %3933 = vst [vmem:[%s3859 + $0xd8] sm:$0xff] %v3529
        %3934 = vst [vmem:[%s3859 + $0x100] sm:$0xff] %v3530
        %3935 = vst [vmem:[%s3859 + $0x108] sm:$0xff] %v3531
        %3936 = vst [vmem:[%s3859 + $0x130] sm:$0xff] %v3532
        %3937 = vst [vmem:[%s3859 + $0x138] sm:$0xff] %v3533
        %3938 = vst [vmem:[%s3859 + $0x160] sm:$0xff] %v3534
        %3939 = vst [vmem:[%s3859 + $0x168] sm:$0xff] %v3535
        %3940 = vst [vmem:[%s3859 + $0x190] sm:$0xff] %v3536
        %3941 = vst [vmem:[%s3859 + $0x198] sm:$0xff] %v3537
        %3942 = vst [vmem:[%s3859 + $0x1c0] sm:$0xff] %v3538
        %3943 = vst [vmem:[%s3859 + $0x1c8] sm:$0xff] %v3539
        %3944 = vst [vmem:[%s3859 + $0x1f0] sm:$0xff] %v3540
        %3945 = vst [vmem:[%s3859 + $0x1f8] sm:$0xff] %v3541
        %3946 = vst [vmem:[%s3859 + $0x220] sm:$0xff] %v3542
        %3947 = vst [vmem:[%s3859 + $0x228] sm:$0xff] %v3543
        %3948 = vst [vmem:[%s3859 + $0x250] sm:$0xff] %v3544
        %3949 = vst [vmem:[%s3859 + $0x258] sm:$0xff] %v3545
        %3950 = vst [vmem:[%s3859 + $0x280] sm:$0xff] %v3546
        %3951 = vst [vmem:[%s3859 + $0x288] sm:$0xff] %v3547
        %3952 = vst [vmem:[%s3859 + $0x2b0] sm:$0xff] %v3548
        %3953 = vst [vmem:[%s3859 + $0x2b8] sm:$0xff] %v3549
        %3954 = vst [vmem:[%s3859 + $0x2e0] sm:$0xff] %v3550
        %3955 = vst [vmem:[%s3859 + $0x2e8] sm:$0xff] %v3551
        %v3956 = vld [vmem:[#allocation3 + $0x7] sm:$0xff]
        %v3957 = vld [vmem:[#allocation3 + $0xf] sm:$0xff]
        %v3958 = vld [vmem:[#allocation3 + $0x37] sm:$0xff]
        %v3959 = vld [vmem:[#allocation3 + $0x3f] sm:$0xff]
        %v3960 = vld [vmem:[#allocation3 + $0x67] sm:$0xff]
        %v3961 = vld [vmem:[#allocation3 + $0x6f] sm:$0xff]
        %v3962 = vld [vmem:[#allocation3 + $0x97] sm:$0xff]
        %v3963 = vld [vmem:[#allocation3 + $0x9f] sm:$0xff]
        %v3964 = vld [vmem:[#allocation3 + $0xc7] sm:$0xff]
        %v3965 = vld [vmem:[#allocation3 + $0xcf] sm:$0xff]
        %v3966 = vld [vmem:[#allocation3 + $0xf7] sm:$0xff]
        %v3967 = vld [vmem:[#allocation3 + $0xff] sm:$0xff]
        %v3968 = vld [vmem:[#allocation3 + $0x127] sm:$0xff]
        %v3969 = vld [vmem:[#allocation3 + $0x12f] sm:$0xff]
        %v3970 = vld [vmem:[#allocation3 + $0x157] sm:$0xff]
        %v3971 = vld [vmem:[#allocation3 + $0x15f] sm:$0xff]
        %v3972 = vld [vmem:[#allocation3 + $0x187] sm:$0xff]
        %v3973 = vld [vmem:[#allocation3 + $0x18f] sm:$0xff]
        %v3974 = vld [vmem:[#allocation3 + $0x1b7] sm:$0xff]
        %v3975 = vld [vmem:[#allocation3 + $0x1bf] sm:$0xff]
        %v3976 = vld [vmem:[#allocation3 + $0x1e7] sm:$0xff]
        %v3977 = vld [vmem:[#allocation3 + $0x1ef] sm:$0xff]
        %v3978 = vld [vmem:[#allocation3 + $0x217] sm:$0xff]
        %v3979 = vld [vmem:[#allocation3 + $0x21f] sm:$0xff]
        %v3980 = vld [vmem:[#allocation3 + $0x247] sm:$0xff]
        %v3981 = vld [vmem:[#allocation3 + $0x24f] sm:$0xff]
        %v3982 = vld [vmem:[#allocation3 + $0x277] sm:$0xff]
        %v3983 = vld [vmem:[#allocation3 + $0x27f] sm:$0xff]
        %v3984 = vld [vmem:[#allocation3 + $0x2a7] sm:$0xff]
        %v3985 = vld [vmem:[#allocation3 + $0x2af] sm:$0xff]
        %v3986 = vld [vmem:[#allocation3 + $0x2d7] sm:$0xff]
        %v3987 = vld [vmem:[#allocation3 + $0x2df] sm:$0xff]
        %v3988 = vld [vmem:[#allocation3 + $0x307] sm:$0xff]
        %v3989 = vld [vmem:[#allocation3 + $0x30f] sm:$0xff]
        %v3990 = vld [vmem:[#allocation3 + $0x337] sm:$0xff]
        %v3991 = vld [vmem:[#allocation3 + $0x33f] sm:$0xff]
        %v3992 = vld [vmem:[#allocation3 + $0x367] sm:$0xff]
        %v3993 = vld [vmem:[#allocation3 + $0x36f] sm:$0xff]
        %v3994 = vld [vmem:[#allocation3 + $0x397] sm:$0xff]
        %v3995 = vld [vmem:[#allocation3 + $0x39f] sm:$0xff]
        %v3996 = vld [vmem:[#allocation3 + $0x3c7] sm:$0xff]
        %v3997 = vld [vmem:[#allocation3 + $0x3cf] sm:$0xff]
        %v3998 = vld [vmem:[#allocation3 + $0x3f7] sm:$0xff]
        %v3999 = vld [vmem:[#allocation3 + $0x3ff] sm:$0xff]
        %v4000 = vld [vmem:[#allocation3 + $0x427] sm:$0xff]
        %v4001 = vld [vmem:[#allocation3 + $0x42f] sm:$0xff]
        %v4002 = vld [vmem:[#allocation3 + $0x457] sm:$0xff]
        %v4003 = vld [vmem:[#allocation3 + $0x45f] sm:$0xff]
        %v4004 = vld [vmem:[#allocation3 + $0x487] sm:$0xff]
        %v4005 = vld [vmem:[#allocation3 + $0x48f] sm:$0xff]
        %v4006 = vld [vmem:[#allocation3 + $0x4b7] sm:$0xff]
        %v4007 = vld [vmem:[#allocation3 + $0x4bf] sm:$0xff]
        %v4008 = vld [vmem:[#allocation3 + $0x4e7] sm:$0xff]
        %v4009 = vld [vmem:[#allocation3 + $0x4ef] sm:$0xff]
        %v4010 = vld [vmem:[#allocation3 + $0x517] sm:$0xff]
        %v4011 = vld [vmem:[#allocation3 + $0x51f] sm:$0xff]
        %v4012 = vld [vmem:[#allocation3 + $0x547] sm:$0xff]
        %v4013 = vld [vmem:[#allocation3 + $0x54f] sm:$0xff]
        %v4014 = vld [vmem:[#allocation3 + $0x577] sm:$0xff]
        %v4015 = vld [vmem:[#allocation3 + $0x57f] sm:$0xff]
        %v4016 = vld [vmem:[#allocation3 + $0x5a7] sm:$0xff]
        %v4017 = vld [vmem:[#allocation3 + $0x5af] sm:$0xff]
        %v4018 = vld [vmem:[#allocation3 + $0x5d7] sm:$0xff]
        %v4019 = vld [vmem:[#allocation3 + $0x5df] sm:$0xff]
        %v4020 = vld [vmem:[#allocation3 + $0x607] sm:$0xff]
        %v4021 = vld [vmem:[#allocation3 + $0x60f] sm:$0xff]
        %v4022 = vld [vmem:[#allocation3 + $0x637] sm:$0xff]
        %v4023 = vld [vmem:[#allocation3 + $0x63f] sm:$0xff]
        %v4024 = vld [vmem:[#allocation6] sm:$0x1]
        %v4025 = vlaneseq
        %v4026 = vshrl.u32 %v4025, 7
        %v4027 = vsub.s32 0, %v4026
        %v4028 = vrot.slane %v4024, %v4027
        %v4029 = vmul.f32 %v3956, %v4028
        %v4030 = vmul.f32 %v3957, %v4028
        %v4031 = vmul.f32 %v3958, %v4028
        %v4032 = vmul.f32 %v3959, %v4028
        %v4033 = vmul.f32 %v3960, %v4028
        %v4034 = vmul.f32 %v3961, %v4028
        %v4035 = vmul.f32 %v3962, %v4028
        %v4036 = vmul.f32 %v3963, %v4028
        %v4037 = vmul.f32 %v3964, %v4028
        %v4038 = vmul.f32 %v3965, %v4028
        %v4039 = vmul.f32 %v3966, %v4028
        %v4040 = vmul.f32 %v3967, %v4028
        %v4041 = vmul.f32 %v3968, %v4028
        %v4042 = vmul.f32 %v3969, %v4028
        %v4043 = vmul.f32 %v3970, %v4028
        %v4044 = vmul.f32 %v3971, %v4028
        %v4045 = vmul.f32 %v3972, %v4028
        %v4046 = vmul.f32 %v3973, %v4028
        %v4047 = vmul.f32 %v3974, %v4028
        %v4048 = vmul.f32 %v3975, %v4028
        %v4049 = vmul.f32 %v3976, %v4028
        %v4050 = vmul.f32 %v3977, %v4028
        %v4051 = vmul.f32 %v3978, %v4028
        %v4052 = vmul.f32 %v3979, %v4028
        %v4053 = vmul.f32 %v3980, %v4028
        %v4054 = vmul.f32 %v3981, %v4028
        %v4055 = vmul.f32 %v3982, %v4028
        %v4056 = vmul.f32 %v3983, %v4028
        %v4057 = vmul.f32 %v3984, %v4028
        %v4058 = vmul.f32 %v3985, %v4028
        %v4059 = vmul.f32 %v3986, %v4028
        %v4060 = vmul.f32 %v3987, %v4028
        %v4061 = vadd.f32 %v4029, 0.0
        %v4062 = vadd.f32 %v4030, 0.0
        %v4063 = vadd.f32 %v4031, 0.0
        %v4064 = vadd.f32 %v4032, 0.0
        %v4065 = vadd.f32 %v4033, 0.0
        %v4066 = vadd.f32 %v4034, 0.0
        %v4067 = vadd.f32 %v4035, 0.0
        %v4068 = vadd.f32 %v4036, 0.0
        %v4069 = vadd.f32 %v4037, 0.0
        %v4070 = vadd.f32 %v4038, 0.0
        %v4071 = vadd.f32 %v4039, 0.0
        %v4072 = vadd.f32 %v4040, 0.0
        %v4073 = vadd.f32 %v4041, 0.0
        %v4074 = vadd.f32 %v4042, 0.0
        %v4075 = vadd.f32 %v4043, 0.0
        %v4076 = vadd.f32 %v4044, 0.0
        %v4077 = vadd.f32 %v4045, 0.0
        %v4078 = vadd.f32 %v4046, 0.0
        %v4079 = vadd.f32 %v4047, 0.0
        %v4080 = vadd.f32 %v4048, 0.0
        %v4081 = vadd.f32 %v4049, 0.0
        %v4082 = vadd.f32 %v4050, 0.0
        %v4083 = vadd.f32 %v4051, 0.0
        %v4084 = vadd.f32 %v4052, 0.0
        %v4085 = vadd.f32 %v4053, 0.0
        %v4086 = vadd.f32 %v4054, 0.0
        %v4087 = vadd.f32 %v4055, 0.0
        %v4088 = vadd.f32 %v4056, 0.0
        %v4089 = vadd.f32 %v4057, 0.0
        %v4090 = vadd.f32 %v4058, 0.0
        %v4091 = vadd.f32 %v4059, 0.0
        %v4092 = vadd.f32 %v4060, 0.0
        %v4093 = vld [vmem:[#allocation6 + $0x7] sm:$0x1]
        %v4094 = vlaneseq
        %v4095 = vshrl.u32 %v4094, 7
        %v4096 = vsub.s32 0, %v4095
        %v4097 = vrot.slane %v4093, %v4096
        %v4098 = vmul.f32 %v3962, %v4097
        %v4099 = vmul.f32 %v3963, %v4097
        %v4100 = vmul.f32 %v3964, %v4097
        %v4101 = vmul.f32 %v3965, %v4097
        %v4102 = vmul.f32 %v3966, %v4097
        %v4103 = vmul.f32 %v3967, %v4097
        %v4104 = vmul.f32 %v3968, %v4097
        %v4105 = vmul.f32 %v3969, %v4097
        %v4106 = vmul.f32 %v3970, %v4097
        %v4107 = vmul.f32 %v3971, %v4097
        %v4108 = vmul.f32 %v3972, %v4097
        %v4109 = vmul.f32 %v3973, %v4097
        %v4110 = vmul.f32 %v3974, %v4097
        %v4111 = vmul.f32 %v3975, %v4097
        %v4112 = vmul.f32 %v3976, %v4097
        %v4113 = vmul.f32 %v3977, %v4097
        %v4114 = vmul.f32 %v3978, %v4097
        %v4115 = vmul.f32 %v3979, %v4097
        %v4116 = vmul.f32 %v3980, %v4097
        %v4117 = vmul.f32 %v3981, %v4097
        %v4118 = vmul.f32 %v3982, %v4097
        %v4119 = vmul.f32 %v3983, %v4097
        %v4120 = vmul.f32 %v3984, %v4097
        %v4121 = vmul.f32 %v3985, %v4097
        %v4122 = vmul.f32 %v3986, %v4097
        %v4123 = vmul.f32 %v3987, %v4097
        %v4124 = vmul.f32 %v3988, %v4097
        %v4125 = vmul.f32 %v3989, %v4097
        %v4126 = vmul.f32 %v3990, %v4097
        %v4127 = vmul.f32 %v3991, %v4097
        %v4128 = vmul.f32 %v3992, %v4097
        %v4129 = vmul.f32 %v3993, %v4097
        %v4130 = vadd.f32 %v4061, %v4098
        %v4131 = vadd.f32 %v4062, %v4099
        %v4132 = vadd.f32 %v4063, %v4100
        %v4133 = vadd.f32 %v4064, %v4101
        %v4134 = vadd.f32 %v4065, %v4102
        %v4135 = vadd.f32 %v4066, %v4103
        %v4136 = vadd.f32 %v4067, %v4104
        %v4137 = vadd.f32 %v4068, %v4105
        %v4138 = vadd.f32 %v4069, %v4106
        %v4139 = vadd.f32 %v4070, %v4107
        %v4140 = vadd.f32 %v4071, %v4108
        %v4141 = vadd.f32 %v4072, %v4109
        %v4142 = vadd.f32 %v4073, %v4110
        %v4143 = vadd.f32 %v4074, %v4111
        %v4144 = vadd.f32 %v4075, %v4112
        %v4145 = vadd.f32 %v4076, %v4113
        %v4146 = vadd.f32 %v4077, %v4114
        %v4147 = vadd.f32 %v4078, %v4115
        %v4148 = vadd.f32 %v4079, %v4116
        %v4149 = vadd.f32 %v4080, %v4117
        %v4150 = vadd.f32 %v4081, %v4118
        %v4151 = vadd.f32 %v4082, %v4119
        %v4152 = vadd.f32 %v4083, %v4120
        %v4153 = vadd.f32 %v4084, %v4121
        %v4154 = vadd.f32 %v4085, %v4122
        %v4155 = vadd.f32 %v4086, %v4123
        %v4156 = vadd.f32 %v4087, %v4124
        %v4157 = vadd.f32 %v4088, %v4125
        %v4158 = vadd.f32 %v4089, %v4126
        %v4159 = vadd.f32 %v4090, %v4127
        %v4160 = vadd.f32 %v4091, %v4128
        %v4161 = vadd.f32 %v4092, %v4129
        %v4162 = vld [vmem:[#allocation6 + $0xe] sm:$0x1]
        %v4163 = vlaneseq
        %v4164 = vshrl.u32 %v4163, 7
        %v4165 = vsub.s32 0, %v4164
        %v4166 = vrot.slane %v4162, %v4165
        %v4167 = vmul.f32 %v3968, %v4166
        %v4168 = vmul.f32 %v3969, %v4166
        %v4169 = vmul.f32 %v3970, %v4166
        %v4170 = vmul.f32 %v3971, %v4166
        %v4171 = vmul.f32 %v3972, %v4166
        %v4172 = vmul.f32 %v3973, %v4166
        %v4173 = vmul.f32 %v3974, %v4166
        %v4174 = vmul.f32 %v3975, %v4166
        %v4175 = vmul.f32 %v3976, %v4166
        %v4176 = vmul.f32 %v3977, %v4166
        %v4177 = vmul.f32 %v3978, %v4166
        %v4178 = vmul.f32 %v3979, %v4166
        %v4179 = vmul.f32 %v3980, %v4166
        %v4180 = vmul.f32 %v3981, %v4166
        %v4181 = vmul.f32 %v3982, %v4166
        %v4182 = vmul.f32 %v3983, %v4166
        %v4183 = vmul.f32 %v3984, %v4166
        %v4184 = vmul.f32 %v3985, %v4166
        %v4185 = vmul.f32 %v3986, %v4166
        %v4186 = vmul.f32 %v3987, %v4166
        %v4187 = vmul.f32 %v3988, %v4166
        %v4188 = vmul.f32 %v3989, %v4166
        %v4189 = vmul.f32 %v3990, %v4166
        %v4190 = vmul.f32 %v3991, %v4166
        %v4191 = vmul.f32 %v3992, %v4166
        %v4192 = vmul.f32 %v3993, %v4166
        %v4193 = vmul.f32 %v3994, %v4166
        %v4194 = vmul.f32 %v3995, %v4166
        %v4195 = vmul.f32 %v3996, %v4166
        %v4196 = vmul.f32 %v3997, %v4166
        %v4197 = vmul.f32 %v3998, %v4166
        %v4198 = vmul.f32 %v3999, %v4166
        %v4199 = vadd.f32 %v4130, %v4167
        %v4200 = vadd.f32 %v4131, %v4168
        %v4201 = vadd.f32 %v4132, %v4169
        %v4202 = vadd.f32 %v4133, %v4170
        %v4203 = vadd.f32 %v4134, %v4171
        %v4204 = vadd.f32 %v4135, %v4172
        %v4205 = vadd.f32 %v4136, %v4173
        %v4206 = vadd.f32 %v4137, %v4174
        %v4207 = vadd.f32 %v4138, %v4175
        %v4208 = vadd.f32 %v4139, %v4176
        %v4209 = vadd.f32 %v4140, %v4177
        %v4210 = vadd.f32 %v4141, %v4178
        %v4211 = vadd.f32 %v4142, %v4179
        %v4212 = vadd.f32 %v4143, %v4180
        %v4213 = vadd.f32 %v4144, %v4181
        %v4214 = vadd.f32 %v4145, %v4182
        %v4215 = vadd.f32 %v4146, %v4183
        %v4216 = vadd.f32 %v4147, %v4184
        %v4217 = vadd.f32 %v4148, %v4185
        %v4218 = vadd.f32 %v4149, %v4186
        %v4219 = vadd.f32 %v4150, %v4187
        %v4220 = vadd.f32 %v4151, %v4188
        %v4221 = vadd.f32 %v4152, %v4189
        %v4222 = vadd.f32 %v4153, %v4190
        %v4223 = vadd.f32 %v4154, %v4191
        %v4224 = vadd.f32 %v4155, %v4192
        %v4225 = vadd.f32 %v4156, %v4193
        %v4226 = vadd.f32 %v4157, %v4194
        %v4227 = vadd.f32 %v4158, %v4195
        %v4228 = vadd.f32 %v4159, %v4196
        %v4229 = vadd.f32 %v4160, %v4197
        %v4230 = vadd.f32 %v4161, %v4198
        %v4231 = vld [vmem:[#allocation6 + $0x15] sm:$0x1]
        %v4232 = vlaneseq
        %v4233 = vshrl.u32 %v4232, 7
        %v4234 = vsub.s32 0, %v4233
        %v4235 = vrot.slane %v4231, %v4234
        %v4236 = vmul.f32 %v3974, %v4235
        %v4237 = vmul.f32 %v3975, %v4235
        %v4238 = vmul.f32 %v3976, %v4235
        %v4239 = vmul.f32 %v3977, %v4235
        %v4240 = vmul.f32 %v3978, %v4235
        %v4241 = vmul.f32 %v3979, %v4235
        %v4242 = vmul.f32 %v3980, %v4235
        %v4243 = vmul.f32 %v3981, %v4235
        %v4244 = vmul.f32 %v3982, %v4235
        %v4245 = vmul.f32 %v3983, %v4235
        %v4246 = vmul.f32 %v3984, %v4235
        %v4247 = vmul.f32 %v3985, %v4235
        %v4248 = vmul.f32 %v3986, %v4235
        %v4249 = vmul.f32 %v3987, %v4235
        %v4250 = vmul.f32 %v3988, %v4235
        %v4251 = vmul.f32 %v3989, %v4235
        %v4252 = vmul.f32 %v3990, %v4235
        %v4253 = vmul.f32 %v3991, %v4235
        %v4254 = vmul.f32 %v3992, %v4235
        %v4255 = vmul.f32 %v3993, %v4235
        %v4256 = vmul.f32 %v3994, %v4235
        %v4257 = vmul.f32 %v3995, %v4235
        %v4258 = vmul.f32 %v3996, %v4235
        %v4259 = vmul.f32 %v3997, %v4235
        %v4260 = vmul.f32 %v3998, %v4235
        %v4261 = vmul.f32 %v3999, %v4235
        %v4262 = vmul.f32 %v4000, %v4235
        %v4263 = vmul.f32 %v4001, %v4235
        %v4264 = vmul.f32 %v4002, %v4235
        %v4265 = vmul.f32 %v4003, %v4235
        %v4266 = vmul.f32 %v4004, %v4235
        %v4267 = vmul.f32 %v4005, %v4235
        %v4268 = vadd.f32 %v4199, %v4236
        %v4269 = vadd.f32 %v4200, %v4237
        %v4270 = vadd.f32 %v4201, %v4238
        %v4271 = vadd.f32 %v4202, %v4239
        %v4272 = vadd.f32 %v4203, %v4240
        %v4273 = vadd.f32 %v4204, %v4241
        %v4274 = vadd.f32 %v4205, %v4242
        %v4275 = vadd.f32 %v4206, %v4243
        %v4276 = vadd.f32 %v4207, %v4244
        %v4277 = vadd.f32 %v4208, %v4245
        %v4278 = vadd.f32 %v4209, %v4246
        %v4279 = vadd.f32 %v4210, %v4247
        %v4280 = vadd.f32 %v4211, %v4248
        %v4281 = vadd.f32 %v4212, %v4249
        %v4282 = vadd.f32 %v4213, %v4250
        %v4283 = vadd.f32 %v4214, %v4251
        %v4284 = vadd.f32 %v4215, %v4252
        %v4285 = vadd.f32 %v4216, %v4253
        %v4286 = vadd.f32 %v4217, %v4254
        %v4287 = vadd.f32 %v4218, %v4255
        %v4288 = vadd.f32 %v4219, %v4256
        %v4289 = vadd.f32 %v4220, %v4257
        %v4290 = vadd.f32 %v4221, %v4258
        %v4291 = vadd.f32 %v4222, %v4259
        %v4292 = vadd.f32 %v4223, %v4260
        %v4293 = vadd.f32 %v4224, %v4261
        %v4294 = vadd.f32 %v4225, %v4262
        %v4295 = vadd.f32 %v4226, %v4263
        %v4296 = vadd.f32 %v4227, %v4264
        %v4297 = vadd.f32 %v4228, %v4265
        %v4298 = vadd.f32 %v4229, %v4266
        %v4299 = vadd.f32 %v4230, %v4267
        %v4300 = vld [vmem:[#allocation6 + $0x1c] sm:$0x1]
        %v4301 = vlaneseq
        %v4302 = vshrl.u32 %v4301, 7
        %v4303 = vsub.s32 0, %v4302
        %v4304 = vrot.slane %v4300, %v4303
        %v4305 = vmul.f32 %v3980, %v4304
        %v4306 = vmul.f32 %v3981, %v4304
        %v4307 = vmul.f32 %v3982, %v4304
        %v4308 = vmul.f32 %v3983, %v4304
        %v4309 = vmul.f32 %v3984, %v4304
        %v4310 = vmul.f32 %v3985, %v4304
        %v4311 = vmul.f32 %v3986, %v4304
        %v4312 = vmul.f32 %v3987, %v4304
        %v4313 = vmul.f32 %v3988, %v4304
        %v4314 = vmul.f32 %v3989, %v4304
        %v4315 = vmul.f32 %v3990, %v4304
        %v4316 = vmul.f32 %v3991, %v4304
        %v4317 = vmul.f32 %v3992, %v4304
        %v4318 = vmul.f32 %v3993, %v4304
        %v4319 = vmul.f32 %v3994, %v4304
        %v4320 = vmul.f32 %v3995, %v4304
        %v4321 = vmul.f32 %v3996, %v4304
        %v4322 = vmul.f32 %v3997, %v4304
        %v4323 = vmul.f32 %v3998, %v4304
        %v4324 = vmul.f32 %v3999, %v4304
        %v4325 = vmul.f32 %v4000, %v4304
        %v4326 = vmul.f32 %v4001, %v4304
        %v4327 = vmul.f32 %v4002, %v4304
        %v4328 = vmul.f32 %v4003, %v4304
        %v4329 = vmul.f32 %v4004, %v4304
        %v4330 = vmul.f32 %v4005, %v4304
        %v4331 = vmul.f32 %v4006, %v4304
        %v4332 = vmul.f32 %v4007, %v4304
        %v4333 = vmul.f32 %v4008, %v4304
        %v4334 = vmul.f32 %v4009, %v4304
        %v4335 = vmul.f32 %v4010, %v4304
        %v4336 = vmul.f32 %v4011, %v4304
        %v4337 = vadd.f32 %v4268, %v4305
        %v4338 = vadd.f32 %v4269, %v4306
        %v4339 = vadd.f32 %v4270, %v4307
        %v4340 = vadd.f32 %v4271, %v4308
        %v4341 = vadd.f32 %v4272, %v4309
        %v4342 = vadd.f32 %v4273, %v4310
        %v4343 = vadd.f32 %v4274, %v4311
        %v4344 = vadd.f32 %v4275, %v4312
        %v4345 = vadd.f32 %v4276, %v4313
        %v4346 = vadd.f32 %v4277, %v4314
        %v4347 = vadd.f32 %v4278, %v4315
        %v4348 = vadd.f32 %v4279, %v4316
        %v4349 = vadd.f32 %v4280, %v4317
        %v4350 = vadd.f32 %v4281, %v4318
        %v4351 = vadd.f32 %v4282, %v4319
        %v4352 = vadd.f32 %v4283, %v4320
        %v4353 = vadd.f32 %v4284, %v4321
        %v4354 = vadd.f32 %v4285, %v4322
        %v4355 = vadd.f32 %v4286, %v4323
        %v4356 = vadd.f32 %v4287, %v4324
        %v4357 = vadd.f32 %v4288, %v4325
        %v4358 = vadd.f32 %v4289, %v4326
        %v4359 = vadd.f32 %v4290, %v4327
        %v4360 = vadd.f32 %v4291, %v4328
        %v4361 = vadd.f32 %v4292, %v4329
        %v4362 = vadd.f32 %v4293, %v4330
        %v4363 = vadd.f32 %v4294, %v4331
        %v4364 = vadd.f32 %v4295, %v4332
        %v4365 = vadd.f32 %v4296, %v4333
        %v4366 = vadd.f32 %v4297, %v4334
        %v4367 = vadd.f32 %v4298, %v4335
        %v4368 = vadd.f32 %v4299, %v4336
        %v4369 = vld [vmem:[#allocation6 + $0x23] sm:$0x1]
        %v4370 = vlaneseq
        %v4371 = vshrl.u32 %v4370, 7
        %v4372 = vsub.s32 0, %v4371
        %v4373 = vrot.slane %v4369, %v4372
        %v4374 = vmul.f32 %v3986, %v4373
        %v4375 = vmul.f32 %v3987, %v4373
        %v4376 = vmul.f32 %v3988, %v4373
        %v4377 = vmul.f32 %v3989, %v4373
        %v4378 = vmul.f32 %v3990, %v4373
        %v4379 = vmul.f32 %v3991, %v4373
        %v4380 = vmul.f32 %v3992, %v4373
        %v4381 = vmul.f32 %v3993, %v4373
        %v4382 = vmul.f32 %v3994, %v4373
        %v4383 = vmul.f32 %v3995, %v4373
        %v4384 = vmul.f32 %v3996, %v4373
        %v4385 = vmul.f32 %v3997, %v4373
        %v4386 = vmul.f32 %v3998, %v4373
        %v4387 = vmul.f32 %v3999, %v4373
        %v4388 = vmul.f32 %v4000, %v4373
        %v4389 = vmul.f32 %v4001, %v4373
        %v4390 = vmul.f32 %v4002, %v4373
        %v4391 = vmul.f32 %v4003, %v4373
        %v4392 = vmul.f32 %v4004, %v4373
        %v4393 = vmul.f32 %v4005, %v4373
        %v4394 = vmul.f32 %v4006, %v4373
        %v4395 = vmul.f32 %v4007, %v4373
        %v4396 = vmul.f32 %v4008, %v4373
        %v4397 = vmul.f32 %v4009, %v4373
        %v4398 = vmul.f32 %v4010, %v4373
        %v4399 = vmul.f32 %v4011, %v4373
        %v4400 = vmul.f32 %v4012, %v4373
        %v4401 = vmul.f32 %v4013, %v4373
        %v4402 = vmul.f32 %v4014, %v4373
        %v4403 = vmul.f32 %v4015, %v4373
        %v4404 = vmul.f32 %v4016, %v4373
        %v4405 = vmul.f32 %v4017, %v4373
        %v4406 = vadd.f32 %v4337, %v4374
        %v4407 = vadd.f32 %v4338, %v4375
        %v4408 = vadd.f32 %v4339, %v4376
        %v4409 = vadd.f32 %v4340, %v4377
        %v4410 = vadd.f32 %v4341, %v4378
        %v4411 = vadd.f32 %v4342, %v4379
        %v4412 = vadd.f32 %v4343, %v4380
        %v4413 = vadd.f32 %v4344, %v4381
        %v4414 = vadd.f32 %v4345, %v4382
        %v4415 = vadd.f32 %v4346, %v4383
        %v4416 = vadd.f32 %v4347, %v4384
        %v4417 = vadd.f32 %v4348, %v4385
        %v4418 = vadd.f32 %v4349, %v4386
        %v4419 = vadd.f32 %v4350, %v4387
        %v4420 = vadd.f32 %v4351, %v4388
        %v4421 = vadd.f32 %v4352, %v4389
        %v4422 = vadd.f32 %v4353, %v4390
        %v4423 = vadd.f32 %v4354, %v4391
        %v4424 = vadd.f32 %v4355, %v4392
        %v4425 = vadd.f32 %v4356, %v4393
        %v4426 = vadd.f32 %v4357, %v4394
        %v4427 = vadd.f32 %v4358, %v4395
        %v4428 = vadd.f32 %v4359, %v4396
        %v4429 = vadd.f32 %v4360, %v4397
        %v4430 = vadd.f32 %v4361, %v4398
        %v4431 = vadd.f32 %v4362, %v4399
        %v4432 = vadd.f32 %v4363, %v4400
        %v4433 = vadd.f32 %v4364, %v4401
        %v4434 = vadd.f32 %v4365, %v4402
        %v4435 = vadd.f32 %v4366, %v4403
        %v4436 = vadd.f32 %v4367, %v4404
        %v4437 = vadd.f32 %v4368, %v4405
        %v4438 = vld [vmem:[#allocation6 + $0x2a] sm:$0x1]
        %v4439 = vlaneseq
        %v4440 = vshrl.u32 %v4439, 7
        %v4441 = vsub.s32 0, %v4440
        %v4442 = vrot.slane %v4438, %v4441
        %v4443 = vmul.f32 %v3992, %v4442
        %v4444 = vmul.f32 %v3993, %v4442
        %v4445 = vmul.f32 %v3994, %v4442
        %v4446 = vmul.f32 %v3995, %v4442
        %v4447 = vmul.f32 %v3996, %v4442
        %v4448 = vmul.f32 %v3997, %v4442
        %v4449 = vmul.f32 %v3998, %v4442
        %v4450 = vmul.f32 %v3999, %v4442
        %v4451 = vmul.f32 %v4000, %v4442
        %v4452 = vmul.f32 %v4001, %v4442
        %v4453 = vmul.f32 %v4002, %v4442
        %v4454 = vmul.f32 %v4003, %v4442
        %v4455 = vmul.f32 %v4004, %v4442
        %v4456 = vmul.f32 %v4005, %v4442
        %v4457 = vmul.f32 %v4006, %v4442
        %v4458 = vmul.f32 %v4007, %v4442
        %v4459 = vmul.f32 %v4008, %v4442
        %v4460 = vmul.f32 %v4009, %v4442
        %v4461 = vmul.f32 %v4010, %v4442
        %v4462 = vmul.f32 %v4011, %v4442
        %v4463 = vmul.f32 %v4012, %v4442
        %v4464 = vmul.f32 %v4013, %v4442
        %v4465 = vmul.f32 %v4014, %v4442
        %v4466 = vmul.f32 %v4015, %v4442
        %v4467 = vmul.f32 %v4016, %v4442
        %v4468 = vmul.f32 %v4017, %v4442
        %v4469 = vmul.f32 %v4018, %v4442
        %v4470 = vmul.f32 %v4019, %v4442
        %v4471 = vmul.f32 %v4020, %v4442
        %v4472 = vmul.f32 %v4021, %v4442
        %v4473 = vmul.f32 %v4022, %v4442
        %v4474 = vmul.f32 %v4023, %v4442
        %v4475 = vadd.f32 %v4406, %v4443
        %v4476 = vadd.f32 %v4407, %v4444
        %v4477 = vadd.f32 %v4408, %v4445
        %v4478 = vadd.f32 %v4409, %v4446
        %v4479 = vadd.f32 %v4410, %v4447
        %v4480 = vadd.f32 %v4411, %v4448
        %v4481 = vadd.f32 %v4412, %v4449
        %v4482 = vadd.f32 %v4413, %v4450
        %v4483 = vadd.f32 %v4414, %v4451
        %v4484 = vadd.f32 %v4415, %v4452
        %v4485 = vadd.f32 %v4416, %v4453
        %v4486 = vadd.f32 %v4417, %v4454
        %v4487 = vadd.f32 %v4418, %v4455
        %v4488 = vadd.f32 %v4419, %v4456
        %v4489 = vadd.f32 %v4420, %v4457
        %v4490 = vadd.f32 %v4421, %v4458
        %v4491 = vadd.f32 %v4422, %v4459
        %v4492 = vadd.f32 %v4423, %v4460
        %v4493 = vadd.f32 %v4424, %v4461
        %v4494 = vadd.f32 %v4425, %v4462
        %v4495 = vadd.f32 %v4426, %v4463
        %v4496 = vadd.f32 %v4427, %v4464
        %v4497 = vadd.f32 %v4428, %v4465
        %v4498 = vadd.f32 %v4429, %v4466
        %v4499 = vadd.f32 %v4430, %v4467
        %v4500 = vadd.f32 %v4431, %v4468
        %v4501 = vadd.f32 %v4432, %v4469
        %v4502 = vadd.f32 %v4433, %v4470
        %v4503 = vadd.f32 %v4434, %v4471
        %v4504 = vadd.f32 %v4435, %v4472
        %v4505 = vadd.f32 %v4436, %v4473
        %v4506 = vadd.f32 %v4437, %v4474
        %v4507 = vld [vmem:[#allocation3 + $0xa] sm:$0xff]
        %v4508 = vld [vmem:[#allocation3 + $0x12] sm:$0xff]
        %v4509 = vld [vmem:[#allocation3 + $0x3a] sm:$0xff]
        %v4510 = vld [vmem:[#allocation3 + $0x42] sm:$0xff]
        %v4511 = vld [vmem:[#allocation3 + $0x6a] sm:$0xff]
        %v4512 = vld [vmem:[#allocation3 + $0x72] sm:$0xff]
        %v4513 = vld [vmem:[#allocation3 + $0x9a] sm:$0xff]
        %v4514 = vld [vmem:[#allocation3 + $0xa2] sm:$0xff]
        %v4515 = vld [vmem:[#allocation3 + $0xca] sm:$0xff]
        %v4516 = vld [vmem:[#allocation3 + $0xd2] sm:$0xff]
        %v4517 = vld [vmem:[#allocation3 + $0xfa] sm:$0xff]
        %v4518 = vld [vmem:[#allocation3 + $0x102] sm:$0xff]
        %v4519 = vld [vmem:[#allocation3 + $0x12a] sm:$0xff]
        %v4520 = vld [vmem:[#allocation3 + $0x132] sm:$0xff]
        %v4521 = vld [vmem:[#allocation3 + $0x15a] sm:$0xff]
        %v4522 = vld [vmem:[#allocation3 + $0x162] sm:$0xff]
        %v4523 = vld [vmem:[#allocation3 + $0x18a] sm:$0xff]
        %v4524 = vld [vmem:[#allocation3 + $0x192] sm:$0xff]
        %v4525 = vld [vmem:[#allocation3 + $0x1ba] sm:$0xff]
        %v4526 = vld [vmem:[#allocation3 + $0x1c2] sm:$0xff]
        %v4527 = vld [vmem:[#allocation3 + $0x1ea] sm:$0xff]
        %v4528 = vld [vmem:[#allocation3 + $0x1f2] sm:$0xff]
        %v4529 = vld [vmem:[#allocation3 + $0x21a] sm:$0xff]
        %v4530 = vld [vmem:[#allocation3 + $0x222] sm:$0xff]
        %v4531 = vld [vmem:[#allocation3 + $0x24a] sm:$0xff]
        %v4532 = vld [vmem:[#allocation3 + $0x252] sm:$0xff]
        %v4533 = vld [vmem:[#allocation3 + $0x27a] sm:$0xff]
        %v4534 = vld [vmem:[#allocation3 + $0x282] sm:$0xff]
        %v4535 = vld [vmem:[#allocation3 + $0x2aa] sm:$0xff]
        %v4536 = vld [vmem:[#allocation3 + $0x2b2] sm:$0xff]
        %v4537 = vld [vmem:[#allocation3 + $0x2da] sm:$0xff]
        %v4538 = vld [vmem:[#allocation3 + $0x2e2] sm:$0xff]
        %v4539 = vld [vmem:[#allocation3 + $0x30a] sm:$0xff]
        %v4540 = vld [vmem:[#allocation3 + $0x312] sm:$0xff]
        %v4541 = vld [vmem:[#allocation3 + $0x33a] sm:$0xff]
        %v4542 = vld [vmem:[#allocation3 + $0x342] sm:$0xff]
        %v4543 = vld [vmem:[#allocation3 + $0x36a] sm:$0xff]
        %v4544 = vld [vmem:[#allocation3 + $0x372] sm:$0xff]
        %v4545 = vld [vmem:[#allocation3 + $0x39a] sm:$0xff]
        %v4546 = vld [vmem:[#allocation3 + $0x3a2] sm:$0xff]
        %v4547 = vld [vmem:[#allocation3 + $0x3ca] sm:$0xff]
        %v4548 = vld [vmem:[#allocation3 + $0x3d2] sm:$0xff]
        %v4549 = vld [vmem:[#allocation3 + $0x3fa] sm:$0xff]
        %v4550 = vld [vmem:[#allocation3 + $0x402] sm:$0xff]
        %v4551 = vld [vmem:[#allocation3 + $0x42a] sm:$0xff]
        %v4552 = vld [vmem:[#allocation3 + $0x432] sm:$0xff]
        %v4553 = vld [vmem:[#allocation3 + $0x45a] sm:$0xff]
        %v4554 = vld [vmem:[#allocation3 + $0x462] sm:$0xff]
        %v4555 = vld [vmem:[#allocation3 + $0x48a] sm:$0xff]
        %v4556 = vld [vmem:[#allocation3 + $0x492] sm:$0xff]
        %v4557 = vld [vmem:[#allocation3 + $0x4ba] sm:$0xff]
        %v4558 = vld [vmem:[#allocation3 + $0x4c2] sm:$0xff]
        %v4559 = vld [vmem:[#allocation3 + $0x4ea] sm:$0xff]
        %v4560 = vld [vmem:[#allocation3 + $0x4f2] sm:$0xff]
        %v4561 = vld [vmem:[#allocation3 + $0x51a] sm:$0xff]
        %v4562 = vld [vmem:[#allocation3 + $0x522] sm:$0xff]
        %v4563 = vld [vmem:[#allocation3 + $0x54a] sm:$0xff]
        %v4564 = vld [vmem:[#allocation3 + $0x552] sm:$0xff]
        %v4565 = vld [vmem:[#allocation3 + $0x57a] sm:$0xff]
        %v4566 = vld [vmem:[#allocation3 + $0x582] sm:$0xff]
        %v4567 = vld [vmem:[#allocation3 + $0x5aa] sm:$0xff]
        %v4568 = vld [vmem:[#allocation3 + $0x5b2] sm:$0xff]
        %v4569 = vld [vmem:[#allocation3 + $0x5da] sm:$0xff]
        %v4570 = vld [vmem:[#allocation3 + $0x5e2] sm:$0xff]
        %v4571 = vld [vmem:[#allocation3 + $0x60a] sm:$0xff]
        %v4572 = vld [vmem:[#allocation3 + $0x612] sm:$0xff]
        %v4573 = vld [vmem:[#allocation3 + $0x63a] sm:$0xff]
        %v4574 = vld [vmem:[#allocation3 + $0x642] sm:$0xff]
        %v4575 = vld [vmem:[#allocation6 + $0x1] sm:$0x1]
        %v4576 = vlaneseq
        %v4577 = vshrl.u32 %v4576, 7
        %v4578 = vsub.s32 0, %v4577
        %v4579 = vrot.slane %v4575, %v4578
        %v4580 = vmul.f32 %v4507, %v4579
        %v4581 = vmul.f32 %v4508, %v4579
        %v4582 = vmul.f32 %v4509, %v4579
        %v4583 = vmul.f32 %v4510, %v4579
        %v4584 = vmul.f32 %v4511, %v4579
        %v4585 = vmul.f32 %v4512, %v4579
        %v4586 = vmul.f32 %v4513, %v4579
        %v4587 = vmul.f32 %v4514, %v4579
        %v4588 = vmul.f32 %v4515, %v4579
        %v4589 = vmul.f32 %v4516, %v4579
        %v4590 = vmul.f32 %v4517, %v4579
        %v4591 = vmul.f32 %v4518, %v4579
        %v4592 = vmul.f32 %v4519, %v4579
        %v4593 = vmul.f32 %v4520, %v4579
        %v4594 = vmul.f32 %v4521, %v4579
        %v4595 = vmul.f32 %v4522, %v4579
        %v4596 = vmul.f32 %v4523, %v4579
        %v4597 = vmul.f32 %v4524, %v4579
        %v4598 = vmul.f32 %v4525, %v4579
        %v4599 = vmul.f32 %v4526, %v4579
        %v4600 = vmul.f32 %v4527, %v4579
        %v4601 = vmul.f32 %v4528, %v4579
        %v4602 = vmul.f32 %v4529, %v4579
        %v4603 = vmul.f32 %v4530, %v4579
        %v4604 = vmul.f32 %v4531, %v4579
        %v4605 = vmul.f32 %v4532, %v4579
        %v4606 = vmul.f32 %v4533, %v4579
        %v4607 = vmul.f32 %v4534, %v4579
        %v4608 = vmul.f32 %v4535, %v4579
        %v4609 = vmul.f32 %v4536, %v4579
        %v4610 = vmul.f32 %v4537, %v4579
        %v4611 = vmul.f32 %v4538, %v4579
        %v4612 = vadd.f32 %v4475, %v4580
        %v4613 = vadd.f32 %v4476, %v4581
        %v4614 = vadd.f32 %v4477, %v4582
        %v4615 = vadd.f32 %v4478, %v4583
        %v4616 = vadd.f32 %v4479, %v4584
        %v4617 = vadd.f32 %v4480, %v4585
        %v4618 = vadd.f32 %v4481, %v4586
        %v4619 = vadd.f32 %v4482, %v4587
        %v4620 = vadd.f32 %v4483, %v4588
        %v4621 = vadd.f32 %v4484, %v4589
        %v4622 = vadd.f32 %v4485, %v4590
        %v4623 = vadd.f32 %v4486, %v4591
        %v4624 = vadd.f32 %v4487, %v4592
        %v4625 = vadd.f32 %v4488, %v4593
        %v4626 = vadd.f32 %v4489, %v4594
        %v4627 = vadd.f32 %v4490, %v4595
        %v4628 = vadd.f32 %v4491, %v4596
        %v4629 = vadd.f32 %v4492, %v4597
        %v4630 = vadd.f32 %v4493, %v4598
        %v4631 = vadd.f32 %v4494, %v4599
        %v4632 = vadd.f32 %v4495, %v4600
        %v4633 = vadd.f32 %v4496, %v4601
        %v4634 = vadd.f32 %v4497, %v4602
        %v4635 = vadd.f32 %v4498, %v4603
        %v4636 = vadd.f32 %v4499, %v4604
        %v4637 = vadd.f32 %v4500, %v4605
        %v4638 = vadd.f32 %v4501, %v4606
        %v4639 = vadd.f32 %v4502, %v4607
        %v4640 = vadd.f32 %v4503, %v4608
        %v4641 = vadd.f32 %v4504, %v4609
        %v4642 = vadd.f32 %v4505, %v4610
        %v4643 = vadd.f32 %v4506, %v4611
        %v4644 = vld [vmem:[#allocation6 + $0x8] sm:$0x1]
        %v4645 = vlaneseq
        %v4646 = vshrl.u32 %v4645, 7
        %v4647 = vsub.s32 0, %v4646
        %v4648 = vrot.slane %v4644, %v4647
        %v4649 = vmul.f32 %v4513, %v4648
        %v4650 = vmul.f32 %v4514, %v4648
        %v4651 = vmul.f32 %v4515, %v4648
        %v4652 = vmul.f32 %v4516, %v4648
        %v4653 = vmul.f32 %v4517, %v4648
        %v4654 = vmul.f32 %v4518, %v4648
        %v4655 = vmul.f32 %v4519, %v4648
        %v4656 = vmul.f32 %v4520, %v4648
        %v4657 = vmul.f32 %v4521, %v4648
        %v4658 = vmul.f32 %v4522, %v4648
        %v4659 = vmul.f32 %v4523, %v4648
        %v4660 = vmul.f32 %v4524, %v4648
        %v4661 = vmul.f32 %v4525, %v4648
        %v4662 = vmul.f32 %v4526, %v4648
        %v4663 = vmul.f32 %v4527, %v4648
        %v4664 = vmul.f32 %v4528, %v4648
        %v4665 = vmul.f32 %v4529, %v4648
        %v4666 = vmul.f32 %v4530, %v4648
        %v4667 = vmul.f32 %v4531, %v4648
        %v4668 = vmul.f32 %v4532, %v4648
        %v4669 = vmul.f32 %v4533, %v4648
        %v4670 = vmul.f32 %v4534, %v4648
        %v4671 = vmul.f32 %v4535, %v4648
        %v4672 = vmul.f32 %v4536, %v4648
        %v4673 = vmul.f32 %v4537, %v4648
        %v4674 = vmul.f32 %v4538, %v4648
        %v4675 = vmul.f32 %v4539, %v4648
        %v4676 = vmul.f32 %v4540, %v4648
        %v4677 = vmul.f32 %v4541, %v4648
        %v4678 = vmul.f32 %v4542, %v4648
        %v4679 = vmul.f32 %v4543, %v4648
        %v4680 = vmul.f32 %v4544, %v4648
        %v4681 = vadd.f32 %v4612, %v4649
        %v4682 = vadd.f32 %v4613, %v4650
        %v4683 = vadd.f32 %v4614, %v4651
        %v4684 = vadd.f32 %v4615, %v4652
        %v4685 = vadd.f32 %v4616, %v4653
        %v4686 = vadd.f32 %v4617, %v4654
        %v4687 = vadd.f32 %v4618, %v4655
        %v4688 = vadd.f32 %v4619, %v4656
        %v4689 = vadd.f32 %v4620, %v4657
        %v4690 = vadd.f32 %v4621, %v4658
        %v4691 = vadd.f32 %v4622, %v4659
        %v4692 = vadd.f32 %v4623, %v4660
        %v4693 = vadd.f32 %v4624, %v4661
        %v4694 = vadd.f32 %v4625, %v4662
        %v4695 = vadd.f32 %v4626, %v4663
        %v4696 = vadd.f32 %v4627, %v4664
        %v4697 = vadd.f32 %v4628, %v4665
        %v4698 = vadd.f32 %v4629, %v4666
        %v4699 = vadd.f32 %v4630, %v4667
        %v4700 = vadd.f32 %v4631, %v4668
        %v4701 = vadd.f32 %v4632, %v4669
        %v4702 = vadd.f32 %v4633, %v4670
        %v4703 = vadd.f32 %v4634, %v4671
        %v4704 = vadd.f32 %v4635, %v4672
        %v4705 = vadd.f32 %v4636, %v4673
        %v4706 = vadd.f32 %v4637, %v4674
        %v4707 = vadd.f32 %v4638, %v4675
        %v4708 = vadd.f32 %v4639, %v4676
        %v4709 = vadd.f32 %v4640, %v4677
        %v4710 = vadd.f32 %v4641, %v4678
        %v4711 = vadd.f32 %v4642, %v4679
        %v4712 = vadd.f32 %v4643, %v4680
        %v4713 = vld [vmem:[#allocation6 + $0xf] sm:$0x1]
        %v4714 = vlaneseq
        %v4715 = vshrl.u32 %v4714, 7
        %v4716 = vsub.s32 0, %v4715
        %v4717 = vrot.slane %v4713, %v4716
        %v4718 = vmul.f32 %v4519, %v4717
        %v4719 = vmul.f32 %v4520, %v4717
        %v4720 = vmul.f32 %v4521, %v4717
        %v4721 = vmul.f32 %v4522, %v4717
        %v4722 = vmul.f32 %v4523, %v4717
        %v4723 = vmul.f32 %v4524, %v4717
        %v4724 = vmul.f32 %v4525, %v4717
        %v4725 = vmul.f32 %v4526, %v4717
        %v4726 = vmul.f32 %v4527, %v4717
        %v4727 = vmul.f32 %v4528, %v4717
        %v4728 = vmul.f32 %v4529, %v4717
        %v4729 = vmul.f32 %v4530, %v4717
        %v4730 = vmul.f32 %v4531, %v4717
        %v4731 = vmul.f32 %v4532, %v4717
        %v4732 = vmul.f32 %v4533, %v4717
        %v4733 = vmul.f32 %v4534, %v4717
        %v4734 = vmul.f32 %v4535, %v4717
        %v4735 = vmul.f32 %v4536, %v4717
        %v4736 = vmul.f32 %v4537, %v4717
        %v4737 = vmul.f32 %v4538, %v4717
        %v4738 = vmul.f32 %v4539, %v4717
        %v4739 = vmul.f32 %v4540, %v4717
        %v4740 = vmul.f32 %v4541, %v4717
        %v4741 = vmul.f32 %v4542, %v4717
        %v4742 = vmul.f32 %v4543, %v4717
        %v4743 = vmul.f32 %v4544, %v4717
        %v4744 = vmul.f32 %v4545, %v4717
        %v4745 = vmul.f32 %v4546, %v4717
        %v4746 = vmul.f32 %v4547, %v4717
        %v4747 = vmul.f32 %v4548, %v4717
        %v4748 = vmul.f32 %v4549, %v4717
        %v4749 = vmul.f32 %v4550, %v4717
        %v4750 = vadd.f32 %v4681, %v4718
        %v4751 = vadd.f32 %v4682, %v4719
        %v4752 = vadd.f32 %v4683, %v4720
        %v4753 = vadd.f32 %v4684, %v4721
        %v4754 = vadd.f32 %v4685, %v4722
        %v4755 = vadd.f32 %v4686, %v4723
        %v4756 = vadd.f32 %v4687, %v4724
        %v4757 = vadd.f32 %v4688, %v4725
        %v4758 = vadd.f32 %v4689, %v4726
        %v4759 = vadd.f32 %v4690, %v4727
        %v4760 = vadd.f32 %v4691, %v4728
        %v4761 = vadd.f32 %v4692, %v4729
        %v4762 = vadd.f32 %v4693, %v4730
        %v4763 = vadd.f32 %v4694, %v4731
        %v4764 = vadd.f32 %v4695, %v4732
        %v4765 = vadd.f32 %v4696, %v4733
        %v4766 = vadd.f32 %v4697, %v4734
        %v4767 = vadd.f32 %v4698, %v4735
        %v4768 = vadd.f32 %v4699, %v4736
        %v4769 = vadd.f32 %v4700, %v4737
        %v4770 = vadd.f32 %v4701, %v4738
        %v4771 = vadd.f32 %v4702, %v4739
        %v4772 = vadd.f32 %v4703, %v4740
        %v4773 = vadd.f32 %v4704, %v4741
        %v4774 = vadd.f32 %v4705, %v4742
        %v4775 = vadd.f32 %v4706, %v4743
        %v4776 = vadd.f32 %v4707, %v4744
        %v4777 = vadd.f32 %v4708, %v4745
        %v4778 = vadd.f32 %v4709, %v4746
        %v4779 = vadd.f32 %v4710, %v4747
        %v4780 = vadd.f32 %v4711, %v4748
        %v4781 = vadd.f32 %v4712, %v4749
        %v4782 = vld [vmem:[#allocation6 + $0x16] sm:$0x1]
        %v4783 = vlaneseq
        %v4784 = vshrl.u32 %v4783, 7
        %v4785 = vsub.s32 0, %v4784
        %v4786 = vrot.slane %v4782, %v4785
        %v4787 = vmul.f32 %v4525, %v4786
        %v4788 = vmul.f32 %v4526, %v4786
        %v4789 = vmul.f32 %v4527, %v4786
        %v4790 = vmul.f32 %v4528, %v4786
        %v4791 = vmul.f32 %v4529, %v4786
        %v4792 = vmul.f32 %v4530, %v4786
        %v4793 = vmul.f32 %v4531, %v4786
        %v4794 = vmul.f32 %v4532, %v4786
        %v4795 = vmul.f32 %v4533, %v4786
        %v4796 = vmul.f32 %v4534, %v4786
        %v4797 = vmul.f32 %v4535, %v4786
        %v4798 = vmul.f32 %v4536, %v4786
        %v4799 = vmul.f32 %v4537, %v4786
        %v4800 = vmul.f32 %v4538, %v4786
        %v4801 = vmul.f32 %v4539, %v4786
        %v4802 = vmul.f32 %v4540, %v4786
        %v4803 = vmul.f32 %v4541, %v4786
        %v4804 = vmul.f32 %v4542, %v4786
        %v4805 = vmul.f32 %v4543, %v4786
        %v4806 = vmul.f32 %v4544, %v4786
        %v4807 = vmul.f32 %v4545, %v4786
        %v4808 = vmul.f32 %v4546, %v4786
        %v4809 = vmul.f32 %v4547, %v4786
        %v4810 = vmul.f32 %v4548, %v4786
        %v4811 = vmul.f32 %v4549, %v4786
        %v4812 = vmul.f32 %v4550, %v4786
        %v4813 = vmul.f32 %v4551, %v4786
        %v4814 = vmul.f32 %v4552, %v4786
        %v4815 = vmul.f32 %v4553, %v4786
        %v4816 = vmul.f32 %v4554, %v4786
        %v4817 = vmul.f32 %v4555, %v4786
        %v4818 = vmul.f32 %v4556, %v4786
        %v4819 = vadd.f32 %v4750, %v4787
        %v4820 = vadd.f32 %v4751, %v4788
        %v4821 = vadd.f32 %v4752, %v4789
        %v4822 = vadd.f32 %v4753, %v4790
        %v4823 = vadd.f32 %v4754, %v4791
        %v4824 = vadd.f32 %v4755, %v4792
        %v4825 = vadd.f32 %v4756, %v4793
        %v4826 = vadd.f32 %v4757, %v4794
        %v4827 = vadd.f32 %v4758, %v4795
        %v4828 = vadd.f32 %v4759, %v4796
        %v4829 = vadd.f32 %v4760, %v4797
        %v4830 = vadd.f32 %v4761, %v4798
        %v4831 = vadd.f32 %v4762, %v4799
        %v4832 = vadd.f32 %v4763, %v4800
        %v4833 = vadd.f32 %v4764, %v4801
        %v4834 = vadd.f32 %v4765, %v4802
        %v4835 = vadd.f32 %v4766, %v4803
        %v4836 = vadd.f32 %v4767, %v4804
        %v4837 = vadd.f32 %v4768, %v4805
        %v4838 = vadd.f32 %v4769, %v4806
        %v4839 = vadd.f32 %v4770, %v4807
        %v4840 = vadd.f32 %v4771, %v4808
        %v4841 = vadd.f32 %v4772, %v4809
        %v4842 = vadd.f32 %v4773, %v4810
        %v4843 = vadd.f32 %v4774, %v4811
        %v4844 = vadd.f32 %v4775, %v4812
        %v4845 = vadd.f32 %v4776, %v4813
        %v4846 = vadd.f32 %v4777, %v4814
        %v4847 = vadd.f32 %v4778, %v4815
        %v4848 = vadd.f32 %v4779, %v4816
        %v4849 = vadd.f32 %v4780, %v4817
        %v4850 = vadd.f32 %v4781, %v4818
        %v4851 = vld [vmem:[#allocation6 + $0x1d] sm:$0x1]
        %v4852 = vlaneseq
        %v4853 = vshrl.u32 %v4852, 7
        %v4854 = vsub.s32 0, %v4853
        %v4855 = vrot.slane %v4851, %v4854
        %v4856 = vmul.f32 %v4531, %v4855
        %v4857 = vmul.f32 %v4532, %v4855
        %v4858 = vmul.f32 %v4533, %v4855
        %v4859 = vmul.f32 %v4534, %v4855
        %v4860 = vmul.f32 %v4535, %v4855
        %v4861 = vmul.f32 %v4536, %v4855
        %v4862 = vmul.f32 %v4537, %v4855
        %v4863 = vmul.f32 %v4538, %v4855
        %v4864 = vmul.f32 %v4539, %v4855
        %v4865 = vmul.f32 %v4540, %v4855
        %v4866 = vmul.f32 %v4541, %v4855
        %v4867 = vmul.f32 %v4542, %v4855
        %v4868 = vmul.f32 %v4543, %v4855
        %v4869 = vmul.f32 %v4544, %v4855
        %v4870 = vmul.f32 %v4545, %v4855
        %v4871 = vmul.f32 %v4546, %v4855
        %v4872 = vmul.f32 %v4547, %v4855
        %v4873 = vmul.f32 %v4548, %v4855
        %v4874 = vmul.f32 %v4549, %v4855
        %v4875 = vmul.f32 %v4550, %v4855
        %v4876 = vmul.f32 %v4551, %v4855
        %v4877 = vmul.f32 %v4552, %v4855
        %v4878 = vmul.f32 %v4553, %v4855
        %v4879 = vmul.f32 %v4554, %v4855
        %v4880 = vmul.f32 %v4555, %v4855
        %v4881 = vmul.f32 %v4556, %v4855
        %v4882 = vmul.f32 %v4557, %v4855
        %v4883 = vmul.f32 %v4558, %v4855
        %v4884 = vmul.f32 %v4559, %v4855
        %v4885 = vmul.f32 %v4560, %v4855
        %v4886 = vmul.f32 %v4561, %v4855
        %v4887 = vmul.f32 %v4562, %v4855
        %v4888 = vadd.f32 %v4819, %v4856
        %v4889 = vadd.f32 %v4820, %v4857
        %v4890 = vadd.f32 %v4821, %v4858
        %v4891 = vadd.f32 %v4822, %v4859
        %v4892 = vadd.f32 %v4823, %v4860
        %v4893 = vadd.f32 %v4824, %v4861
        %v4894 = vadd.f32 %v4825, %v4862
        %v4895 = vadd.f32 %v4826, %v4863
        %v4896 = vadd.f32 %v4827, %v4864
        %v4897 = vadd.f32 %v4828, %v4865
        %v4898 = vadd.f32 %v4829, %v4866
        %v4899 = vadd.f32 %v4830, %v4867
        %v4900 = vadd.f32 %v4831, %v4868
        %v4901 = vadd.f32 %v4832, %v4869
        %v4902 = vadd.f32 %v4833, %v4870
        %v4903 = vadd.f32 %v4834, %v4871
        %v4904 = vadd.f32 %v4835, %v4872
        %v4905 = vadd.f32 %v4836, %v4873
        %v4906 = vadd.f32 %v4837, %v4874
        %v4907 = vadd.f32 %v4838, %v4875
        %v4908 = vadd.f32 %v4839, %v4876
        %v4909 = vadd.f32 %v4840, %v4877
        %v4910 = vadd.f32 %v4841, %v4878
        %v4911 = vadd.f32 %v4842, %v4879
        %v4912 = vadd.f32 %v4843, %v4880
        %v4913 = vadd.f32 %v4844, %v4881
        %v4914 = vadd.f32 %v4845, %v4882
        %v4915 = vadd.f32 %v4846, %v4883
        %v4916 = vadd.f32 %v4847, %v4884
        %v4917 = vadd.f32 %v4848, %v4885
        %v4918 = vadd.f32 %v4849, %v4886
        %v4919 = vadd.f32 %v4850, %v4887
        %v4920 = vld [vmem:[#allocation6 + $0x24] sm:$0x1]
        %v4921 = vlaneseq
        %v4922 = vshrl.u32 %v4921, 7
        %v4923 = vsub.s32 0, %v4922
        %v4924 = vrot.slane %v4920, %v4923
        %v4925 = vmul.f32 %v4537, %v4924
        %v4926 = vmul.f32 %v4538, %v4924
        %v4927 = vmul.f32 %v4539, %v4924
        %v4928 = vmul.f32 %v4540, %v4924
        %v4929 = vmul.f32 %v4541, %v4924
        %v4930 = vmul.f32 %v4542, %v4924
        %v4931 = vmul.f32 %v4543, %v4924
        %v4932 = vmul.f32 %v4544, %v4924
        %v4933 = vmul.f32 %v4545, %v4924
        %v4934 = vmul.f32 %v4546, %v4924
        %v4935 = vmul.f32 %v4547, %v4924
        %v4936 = vmul.f32 %v4548, %v4924
        %v4937 = vmul.f32 %v4549, %v4924
        %v4938 = vmul.f32 %v4550, %v4924
        %v4939 = vmul.f32 %v4551, %v4924
        %v4940 = vmul.f32 %v4552, %v4924
        %v4941 = vmul.f32 %v4553, %v4924
        %v4942 = vmul.f32 %v4554, %v4924
        %v4943 = vmul.f32 %v4555, %v4924
        %v4944 = vmul.f32 %v4556, %v4924
        %v4945 = vmul.f32 %v4557, %v4924
        %v4946 = vmul.f32 %v4558, %v4924
        %v4947 = vmul.f32 %v4559, %v4924
        %v4948 = vmul.f32 %v4560, %v4924
        %v4949 = vmul.f32 %v4561, %v4924
        %v4950 = vmul.f32 %v4562, %v4924
        %v4951 = vmul.f32 %v4563, %v4924
        %v4952 = vmul.f32 %v4564, %v4924
        %v4953 = vmul.f32 %v4565, %v4924
        %v4954 = vmul.f32 %v4566, %v4924
        %v4955 = vmul.f32 %v4567, %v4924
        %v4956 = vmul.f32 %v4568, %v4924
        %v4957 = vadd.f32 %v4888, %v4925
        %v4958 = vadd.f32 %v4889, %v4926
        %v4959 = vadd.f32 %v4890, %v4927
        %v4960 = vadd.f32 %v4891, %v4928
        %v4961 = vadd.f32 %v4892, %v4929
        %v4962 = vadd.f32 %v4893, %v4930
        %v4963 = vadd.f32 %v4894, %v4931
        %v4964 = vadd.f32 %v4895, %v4932
        %v4965 = vadd.f32 %v4896, %v4933
        %v4966 = vadd.f32 %v4897, %v4934
        %v4967 = vadd.f32 %v4898, %v4935
        %v4968 = vadd.f32 %v4899, %v4936
        %v4969 = vadd.f32 %v4900, %v4937
        %v4970 = vadd.f32 %v4901, %v4938
        %v4971 = vadd.f32 %v4902, %v4939
        %v4972 = vadd.f32 %v4903, %v4940
        %v4973 = vadd.f32 %v4904, %v4941
        %v4974 = vadd.f32 %v4905, %v4942
        %v4975 = vadd.f32 %v4906, %v4943
        %v4976 = vadd.f32 %v4907, %v4944
        %v4977 = vadd.f32 %v4908, %v4945
        %v4978 = vadd.f32 %v4909, %v4946
        %v4979 = vadd.f32 %v4910, %v4947
        %v4980 = vadd.f32 %v4911, %v4948
        %v4981 = vadd.f32 %v4912, %v4949
        %v4982 = vadd.f32 %v4913, %v4950
        %v4983 = vadd.f32 %v4914, %v4951
        %v4984 = vadd.f32 %v4915, %v4952
        %v4985 = vadd.f32 %v4916, %v4953
        %v4986 = vadd.f32 %v4917, %v4954
        %v4987 = vadd.f32 %v4918, %v4955
        %v4988 = vadd.f32 %v4919, %v4956
        %v4989 = vld [vmem:[#allocation6 + $0x2b] sm:$0x1]
        %v4990 = vlaneseq
        %v4991 = vshrl.u32 %v4990, 7
        %v4992 = vsub.s32 0, %v4991
        %v4993 = vrot.slane %v4989, %v4992
        %v4994 = vmul.f32 %v4543, %v4993
        %v4995 = vmul.f32 %v4544, %v4993
        %v4996 = vmul.f32 %v4545, %v4993
        %v4997 = vmul.f32 %v4546, %v4993
        %v4998 = vmul.f32 %v4547, %v4993
        %v4999 = vmul.f32 %v4548, %v4993
        %v5000 = vmul.f32 %v4549, %v4993
        %v5001 = vmul.f32 %v4550, %v4993
        %v5002 = vmul.f32 %v4551, %v4993
        %v5003 = vmul.f32 %v4552, %v4993
        %v5004 = vmul.f32 %v4553, %v4993
        %v5005 = vmul.f32 %v4554, %v4993
        %v5006 = vmul.f32 %v4555, %v4993
        %v5007 = vmul.f32 %v4556, %v4993
        %v5008 = vmul.f32 %v4557, %v4993
        %v5009 = vmul.f32 %v4558, %v4993
        %v5010 = vmul.f32 %v4559, %v4993
        %v5011 = vmul.f32 %v4560, %v4993
        %v5012 = vmul.f32 %v4561, %v4993
        %v5013 = vmul.f32 %v4562, %v4993
        %v5014 = vmul.f32 %v4563, %v4993
        %v5015 = vmul.f32 %v4564, %v4993
        %v5016 = vmul.f32 %v4565, %v4993
        %v5017 = vmul.f32 %v4566, %v4993
        %v5018 = vmul.f32 %v4567, %v4993
        %v5019 = vmul.f32 %v4568, %v4993
        %v5020 = vmul.f32 %v4569, %v4993
        %v5021 = vmul.f32 %v4570, %v4993
        %v5022 = vmul.f32 %v4571, %v4993
        %v5023 = vmul.f32 %v4572, %v4993
        %v5024 = vmul.f32 %v4573, %v4993
        %v5025 = vmul.f32 %v4574, %v4993
        %v5026 = vadd.f32 %v4957, %v4994
        %v5027 = vadd.f32 %v4958, %v4995
        %v5028 = vadd.f32 %v4959, %v4996
        %v5029 = vadd.f32 %v4960, %v4997
        %v5030 = vadd.f32 %v4961, %v4998
        %v5031 = vadd.f32 %v4962, %v4999
        %v5032 = vadd.f32 %v4963, %v5000
        %v5033 = vadd.f32 %v4964, %v5001
        %v5034 = vadd.f32 %v4965, %v5002
        %v5035 = vadd.f32 %v4966, %v5003
        %v5036 = vadd.f32 %v4967, %v5004
        %v5037 = vadd.f32 %v4968, %v5005
        %v5038 = vadd.f32 %v4969, %v5006
        %v5039 = vadd.f32 %v4970, %v5007
        %v5040 = vadd.f32 %v4971, %v5008
        %v5041 = vadd.f32 %v4972, %v5009
        %v5042 = vadd.f32 %v4973, %v5010
        %v5043 = vadd.f32 %v4974, %v5011
        %v5044 = vadd.f32 %v4975, %v5012
        %v5045 = vadd.f32 %v4976, %v5013
        %v5046 = vadd.f32 %v4977, %v5014
        %v5047 = vadd.f32 %v4978, %v5015
        %v5048 = vadd.f32 %v4979, %v5016
        %v5049 = vadd.f32 %v4980, %v5017
        %v5050 = vadd.f32 %v4981, %v5018
        %v5051 = vadd.f32 %v4982, %v5019
        %v5052 = vadd.f32 %v4983, %v5020
        %v5053 = vadd.f32 %v4984, %v5021
        %v5054 = vadd.f32 %v4985, %v5022
        %v5055 = vadd.f32 %v4986, %v5023
        %v5056 = vadd.f32 %v4987, %v5024
        %v5057 = vadd.f32 %v4988, %v5025
        %v5058 = vld [vmem:[#allocation3 + $0xd] sm:$0xff]
        %v5059 = vld [vmem:[#allocation3 + $0x15] sm:$0xff]
        %v5060 = vld [vmem:[#allocation3 + $0x3d] sm:$0xff]
        %v5061 = vld [vmem:[#allocation3 + $0x45] sm:$0xff]
        %v5062 = vld [vmem:[#allocation3 + $0x6d] sm:$0xff]
        %v5063 = vld [vmem:[#allocation3 + $0x75] sm:$0xff]
        %v5064 = vld [vmem:[#allocation3 + $0x9d] sm:$0xff]
        %v5065 = vld [vmem:[#allocation3 + $0xa5] sm:$0xff]
        %v5066 = vld [vmem:[#allocation3 + $0xcd] sm:$0xff]
        %v5067 = vld [vmem:[#allocation3 + $0xd5] sm:$0xff]
        %v5068 = vld [vmem:[#allocation3 + $0xfd] sm:$0xff]
        %v5069 = vld [vmem:[#allocation3 + $0x105] sm:$0xff]
        %v5070 = vld [vmem:[#allocation3 + $0x12d] sm:$0xff]
        %v5071 = vld [vmem:[#allocation3 + $0x135] sm:$0xff]
        %v5072 = vld [vmem:[#allocation3 + $0x15d] sm:$0xff]
        %v5073 = vld [vmem:[#allocation3 + $0x165] sm:$0xff]
        %v5074 = vld [vmem:[#allocation3 + $0x18d] sm:$0xff]
        %v5075 = vld [vmem:[#allocation3 + $0x195] sm:$0xff]
        %v5076 = vld [vmem:[#allocation3 + $0x1bd] sm:$0xff]
        %v5077 = vld [vmem:[#allocation3 + $0x1c5] sm:$0xff]
        %v5078 = vld [vmem:[#allocation3 + $0x1ed] sm:$0xff]
        %v5079 = vld [vmem:[#allocation3 + $0x1f5] sm:$0xff]
        %v5080 = vld [vmem:[#allocation3 + $0x21d] sm:$0xff]
        %v5081 = vld [vmem:[#allocation3 + $0x225] sm:$0xff]
        %v5082 = vld [vmem:[#allocation3 + $0x24d] sm:$0xff]
        %v5083 = vld [vmem:[#allocation3 + $0x255] sm:$0xff]
        %v5084 = vld [vmem:[#allocation3 + $0x27d] sm:$0xff]
        %v5085 = vld [vmem:[#allocation3 + $0x285] sm:$0xff]
        %v5086 = vld [vmem:[#allocation3 + $0x2ad] sm:$0xff]
        %v5087 = vld [vmem:[#allocation3 + $0x2b5] sm:$0xff]
        %v5088 = vld [vmem:[#allocation3 + $0x2dd] sm:$0xff]
        %v5089 = vld [vmem:[#allocation3 + $0x2e5] sm:$0xff]
        %v5090 = vld [vmem:[#allocation3 + $0x30d] sm:$0xff]
        %v5091 = vld [vmem:[#allocation3 + $0x315] sm:$0xff]
        %v5092 = vld [vmem:[#allocation3 + $0x33d] sm:$0xff]
        %v5093 = vld [vmem:[#allocation3 + $0x345] sm:$0xff]
        %v5094 = vld [vmem:[#allocation3 + $0x36d] sm:$0xff]
        %v5095 = vld [vmem:[#allocation3 + $0x375] sm:$0xff]
        %v5096 = vld [vmem:[#allocation3 + $0x39d] sm:$0xff]
        %v5097 = vld [vmem:[#allocation3 + $0x3a5] sm:$0xff]
        %v5098 = vld [vmem:[#allocation3 + $0x3cd] sm:$0xff]
        %v5099 = vld [vmem:[#allocation3 + $0x3d5] sm:$0xff]
        %v5100 = vld [vmem:[#allocation3 + $0x3fd] sm:$0xff]
        %v5101 = vld [vmem:[#allocation3 + $0x405] sm:$0xff]
        %v5102 = vld [vmem:[#allocation3 + $0x42d] sm:$0xff]
        %v5103 = vld [vmem:[#allocation3 + $0x435] sm:$0xff]
        %v5104 = vld [vmem:[#allocation3 + $0x45d] sm:$0xff]
        %v5105 = vld [vmem:[#allocation3 + $0x465] sm:$0xff]
        %v5106 = vld [vmem:[#allocation3 + $0x48d] sm:$0xff]
        %v5107 = vld [vmem:[#allocation3 + $0x495] sm:$0xff]
        %v5108 = vld [vmem:[#allocation3 + $0x4bd] sm:$0xff]
        %v5109 = vld [vmem:[#allocation3 + $0x4c5] sm:$0xff]
        %v5110 = vld [vmem:[#allocation3 + $0x4ed] sm:$0xff]
        %v5111 = vld [vmem:[#allocation3 + $0x4f5] sm:$0xff]
        %v5112 = vld [vmem:[#allocation3 + $0x51d] sm:$0xff]
        %v5113 = vld [vmem:[#allocation3 + $0x525] sm:$0xff]
        %v5114 = vld [vmem:[#allocation3 + $0x54d] sm:$0xff]
        %v5115 = vld [vmem:[#allocation3 + $0x555] sm:$0xff]
        %v5116 = vld [vmem:[#allocation3 + $0x57d] sm:$0xff]
        %v5117 = vld [vmem:[#allocation3 + $0x585] sm:$0xff]
        %v5118 = vld [vmem:[#allocation3 + $0x5ad] sm:$0xff]
        %v5119 = vld [vmem:[#allocation3 + $0x5b5] sm:$0xff]
        %v5120 = vld [vmem:[#allocation3 + $0x5dd] sm:$0xff]
        %v5121 = vld [vmem:[#allocation3 + $0x5e5] sm:$0xff]
        %v5122 = vld [vmem:[#allocation3 + $0x60d] sm:$0xff]
        %v5123 = vld [vmem:[#allocation3 + $0x615] sm:$0xff]
        %v5124 = vld [vmem:[#allocation3 + $0x63d] sm:$0xff]
        %v5125 = vld [vmem:[#allocation3 + $0x645] sm:$0xff]
        %v5126 = vld [vmem:[#allocation6 + $0x2] sm:$0x1]
        %v5127 = vlaneseq
        %v5128 = vshrl.u32 %v5127, 7
        %v5129 = vsub.s32 0, %v5128
        %v5130 = vrot.slane %v5126, %v5129
        %v5131 = vmul.f32 %v5058, %v5130
        %v5132 = vmul.f32 %v5059, %v5130
        %v5133 = vmul.f32 %v5060, %v5130
        %v5134 = vmul.f32 %v5061, %v5130
        %v5135 = vmul.f32 %v5062, %v5130
        %v5136 = vmul.f32 %v5063, %v5130
        %v5137 = vmul.f32 %v5064, %v5130
        %v5138 = vmul.f32 %v5065, %v5130
        %v5139 = vmul.f32 %v5066, %v5130
        %v5140 = vmul.f32 %v5067, %v5130
        %v5141 = vmul.f32 %v5068, %v5130
        %v5142 = vmul.f32 %v5069, %v5130
        %v5143 = vmul.f32 %v5070, %v5130
        %v5144 = vmul.f32 %v5071, %v5130
        %v5145 = vmul.f32 %v5072, %v5130
        %v5146 = vmul.f32 %v5073, %v5130
        %v5147 = vmul.f32 %v5074, %v5130
        %v5148 = vmul.f32 %v5075, %v5130
        %v5149 = vmul.f32 %v5076, %v5130
        %v5150 = vmul.f32 %v5077, %v5130
        %v5151 = vmul.f32 %v5078, %v5130
        %v5152 = vmul.f32 %v5079, %v5130
        %v5153 = vmul.f32 %v5080, %v5130
        %v5154 = vmul.f32 %v5081, %v5130
        %v5155 = vmul.f32 %v5082, %v5130
        %v5156 = vmul.f32 %v5083, %v5130
        %v5157 = vmul.f32 %v5084, %v5130
        %v5158 = vmul.f32 %v5085, %v5130
        %v5159 = vmul.f32 %v5086, %v5130
        %v5160 = vmul.f32 %v5087, %v5130
        %v5161 = vmul.f32 %v5088, %v5130
        %v5162 = vmul.f32 %v5089, %v5130
        %v5163 = vadd.f32 %v5026, %v5131
        %v5164 = vadd.f32 %v5027, %v5132
        %v5165 = vadd.f32 %v5028, %v5133
        %v5166 = vadd.f32 %v5029, %v5134
        %v5167 = vadd.f32 %v5030, %v5135
        %v5168 = vadd.f32 %v5031, %v5136
        %v5169 = vadd.f32 %v5032, %v5137
        %v5170 = vadd.f32 %v5033, %v5138
        %v5171 = vadd.f32 %v5034, %v5139
        %v5172 = vadd.f32 %v5035, %v5140
        %v5173 = vadd.f32 %v5036, %v5141
        %v5174 = vadd.f32 %v5037, %v5142
        %v5175 = vadd.f32 %v5038, %v5143
        %v5176 = vadd.f32 %v5039, %v5144
        %v5177 = vadd.f32 %v5040, %v5145
        %v5178 = vadd.f32 %v5041, %v5146
        %v5179 = vadd.f32 %v5042, %v5147
        %v5180 = vadd.f32 %v5043, %v5148
        %v5181 = vadd.f32 %v5044, %v5149
        %v5182 = vadd.f32 %v5045, %v5150
        %v5183 = vadd.f32 %v5046, %v5151
        %v5184 = vadd.f32 %v5047, %v5152
        %v5185 = vadd.f32 %v5048, %v5153
        %v5186 = vadd.f32 %v5049, %v5154
        %v5187 = vadd.f32 %v5050, %v5155
        %v5188 = vadd.f32 %v5051, %v5156
        %v5189 = vadd.f32 %v5052, %v5157
        %v5190 = vadd.f32 %v5053, %v5158
        %v5191 = vadd.f32 %v5054, %v5159
        %v5192 = vadd.f32 %v5055, %v5160
        %v5193 = vadd.f32 %v5056, %v5161
        %v5194 = vadd.f32 %v5057, %v5162
        %v5195 = vld [vmem:[#allocation6 + $0x9] sm:$0x1]
        %v5196 = vlaneseq
        %v5197 = vshrl.u32 %v5196, 7
        %v5198 = vsub.s32 0, %v5197
        %v5199 = vrot.slane %v5195, %v5198
        %v5200 = vmul.f32 %v5064, %v5199
        %v5201 = vmul.f32 %v5065, %v5199
        %v5202 = vmul.f32 %v5066, %v5199
        %v5203 = vmul.f32 %v5067, %v5199
        %v5204 = vmul.f32 %v5068, %v5199
        %v5205 = vmul.f32 %v5069, %v5199
        %v5206 = vmul.f32 %v5070, %v5199
        %v5207 = vmul.f32 %v5071, %v5199
        %v5208 = vmul.f32 %v5072, %v5199
        %v5209 = vmul.f32 %v5073, %v5199
        %v5210 = vmul.f32 %v5074, %v5199
        %v5211 = vmul.f32 %v5075, %v5199
        %v5212 = vmul.f32 %v5076, %v5199
        %v5213 = vmul.f32 %v5077, %v5199
        %v5214 = vmul.f32 %v5078, %v5199
        %v5215 = vmul.f32 %v5079, %v5199
        %v5216 = vmul.f32 %v5080, %v5199
        %v5217 = vmul.f32 %v5081, %v5199
        %v5218 = vmul.f32 %v5082, %v5199
        %v5219 = vmul.f32 %v5083, %v5199
        %v5220 = vmul.f32 %v5084, %v5199
        %v5221 = vmul.f32 %v5085, %v5199
        %v5222 = vmul.f32 %v5086, %v5199
        %v5223 = vmul.f32 %v5087, %v5199
        %v5224 = vmul.f32 %v5088, %v5199
        %v5225 = vmul.f32 %v5089, %v5199
        %v5226 = vmul.f32 %v5090, %v5199
        %v5227 = vmul.f32 %v5091, %v5199
        %v5228 = vmul.f32 %v5092, %v5199
        %v5229 = vmul.f32 %v5093, %v5199
        %v5230 = vmul.f32 %v5094, %v5199
        %v5231 = vmul.f32 %v5095, %v5199
        %v5232 = vadd.f32 %v5163, %v5200
        %v5233 = vadd.f32 %v5164, %v5201
        %v5234 = vadd.f32 %v5165, %v5202
        %v5235 = vadd.f32 %v5166, %v5203
        %v5236 = vadd.f32 %v5167, %v5204
        %v5237 = vadd.f32 %v5168, %v5205
        %v5238 = vadd.f32 %v5169, %v5206
        %v5239 = vadd.f32 %v5170, %v5207
        %v5240 = vadd.f32 %v5171, %v5208
        %v5241 = vadd.f32 %v5172, %v5209
        %v5242 = vadd.f32 %v5173, %v5210
        %v5243 = vadd.f32 %v5174, %v5211
        %v5244 = vadd.f32 %v5175, %v5212
        %v5245 = vadd.f32 %v5176, %v5213
        %v5246 = vadd.f32 %v5177, %v5214
        %v5247 = vadd.f32 %v5178, %v5215
        %v5248 = vadd.f32 %v5179, %v5216
        %v5249 = vadd.f32 %v5180, %v5217
        %v5250 = vadd.f32 %v5181, %v5218
        %v5251 = vadd.f32 %v5182, %v5219
        %v5252 = vadd.f32 %v5183, %v5220
        %v5253 = vadd.f32 %v5184, %v5221
        %v5254 = vadd.f32 %v5185, %v5222
        %v5255 = vadd.f32 %v5186, %v5223
        %v5256 = vadd.f32 %v5187, %v5224
        %v5257 = vadd.f32 %v5188, %v5225
        %v5258 = vadd.f32 %v5189, %v5226
        %v5259 = vadd.f32 %v5190, %v5227
        %v5260 = vadd.f32 %v5191, %v5228
        %v5261 = vadd.f32 %v5192, %v5229
        %v5262 = vadd.f32 %v5193, %v5230
        %v5263 = vadd.f32 %v5194, %v5231
        %v5264 = vld [vmem:[#allocation6 + $0x10] sm:$0x1]
        %v5265 = vlaneseq
        %v5266 = vshrl.u32 %v5265, 7
        %v5267 = vsub.s32 0, %v5266
        %v5268 = vrot.slane %v5264, %v5267
        %v5269 = vmul.f32 %v5070, %v5268
        %v5270 = vmul.f32 %v5071, %v5268
        %v5271 = vmul.f32 %v5072, %v5268
        %v5272 = vmul.f32 %v5073, %v5268
        %v5273 = vmul.f32 %v5074, %v5268
        %v5274 = vmul.f32 %v5075, %v5268
        %v5275 = vmul.f32 %v5076, %v5268
        %v5276 = vmul.f32 %v5077, %v5268
        %v5277 = vmul.f32 %v5078, %v5268
        %v5278 = vmul.f32 %v5079, %v5268
        %v5279 = vmul.f32 %v5080, %v5268
        %v5280 = vmul.f32 %v5081, %v5268
        %v5281 = vmul.f32 %v5082, %v5268
        %v5282 = vmul.f32 %v5083, %v5268
        %v5283 = vmul.f32 %v5084, %v5268
        %v5284 = vmul.f32 %v5085, %v5268
        %v5285 = vmul.f32 %v5086, %v5268
        %v5286 = vmul.f32 %v5087, %v5268
        %v5287 = vmul.f32 %v5088, %v5268
        %v5288 = vmul.f32 %v5089, %v5268
        %v5289 = vmul.f32 %v5090, %v5268
        %v5290 = vmul.f32 %v5091, %v5268
        %v5291 = vmul.f32 %v5092, %v5268
        %v5292 = vmul.f32 %v5093, %v5268
        %v5293 = vmul.f32 %v5094, %v5268
        %v5294 = vmul.f32 %v5095, %v5268
        %v5295 = vmul.f32 %v5096, %v5268
        %v5296 = vmul.f32 %v5097, %v5268
        %v5297 = vmul.f32 %v5098, %v5268
        %v5298 = vmul.f32 %v5099, %v5268
        %v5299 = vmul.f32 %v5100, %v5268
        %v5300 = vmul.f32 %v5101, %v5268
        %v5301 = vadd.f32 %v5232, %v5269
        %v5302 = vadd.f32 %v5233, %v5270
        %v5303 = vadd.f32 %v5234, %v5271
        %v5304 = vadd.f32 %v5235, %v5272
        %v5305 = vadd.f32 %v5236, %v5273
        %v5306 = vadd.f32 %v5237, %v5274
        %v5307 = vadd.f32 %v5238, %v5275
        %v5308 = vadd.f32 %v5239, %v5276
        %v5309 = vadd.f32 %v5240, %v5277
        %v5310 = vadd.f32 %v5241, %v5278
        %v5311 = vadd.f32 %v5242, %v5279
        %v5312 = vadd.f32 %v5243, %v5280
        %v5313 = vadd.f32 %v5244, %v5281
        %v5314 = vadd.f32 %v5245, %v5282
        %v5315 = vadd.f32 %v5246, %v5283
        %v5316 = vadd.f32 %v5247, %v5284
        %v5317 = vadd.f32 %v5248, %v5285
        %v5318 = vadd.f32 %v5249, %v5286
        %v5319 = vadd.f32 %v5250, %v5287
        %v5320 = vadd.f32 %v5251, %v5288
        %v5321 = vadd.f32 %v5252, %v5289
        %v5322 = vadd.f32 %v5253, %v5290
        %v5323 = vadd.f32 %v5254, %v5291
        %v5324 = vadd.f32 %v5255, %v5292
        %v5325 = vadd.f32 %v5256, %v5293
        %v5326 = vadd.f32 %v5257, %v5294
        %v5327 = vadd.f32 %v5258, %v5295
        %v5328 = vadd.f32 %v5259, %v5296
        %v5329 = vadd.f32 %v5260, %v5297
        %v5330 = vadd.f32 %v5261, %v5298
        %v5331 = vadd.f32 %v5262, %v5299
        %v5332 = vadd.f32 %v5263, %v5300
        %v5333 = vld [vmem:[#allocation6 + $0x17] sm:$0x1]
        %v5334 = vlaneseq
        %v5335 = vshrl.u32 %v5334, 7
        %v5336 = vsub.s32 0, %v5335
        %v5337 = vrot.slane %v5333, %v5336
        %v5338 = vmul.f32 %v5076, %v5337
        %v5339 = vmul.f32 %v5077, %v5337
        %v5340 = vmul.f32 %v5078, %v5337
        %v5341 = vmul.f32 %v5079, %v5337
        %v5342 = vmul.f32 %v5080, %v5337
        %v5343 = vmul.f32 %v5081, %v5337
        %v5344 = vmul.f32 %v5082, %v5337
        %v5345 = vmul.f32 %v5083, %v5337
        %v5346 = vmul.f32 %v5084, %v5337
        %v5347 = vmul.f32 %v5085, %v5337
        %v5348 = vmul.f32 %v5086, %v5337
        %v5349 = vmul.f32 %v5087, %v5337
        %v5350 = vmul.f32 %v5088, %v5337
        %v5351 = vmul.f32 %v5089, %v5337
        %v5352 = vmul.f32 %v5090, %v5337
        %v5353 = vmul.f32 %v5091, %v5337
        %v5354 = vmul.f32 %v5092, %v5337
        %v5355 = vmul.f32 %v5093, %v5337
        %v5356 = vmul.f32 %v5094, %v5337
        %v5357 = vmul.f32 %v5095, %v5337
        %v5358 = vmul.f32 %v5096, %v5337
        %v5359 = vmul.f32 %v5097, %v5337
        %v5360 = vmul.f32 %v5098, %v5337
        %v5361 = vmul.f32 %v5099, %v5337
        %v5362 = vmul.f32 %v5100, %v5337
        %v5363 = vmul.f32 %v5101, %v5337
        %v5364 = vmul.f32 %v5102, %v5337
        %v5365 = vmul.f32 %v5103, %v5337
        %v5366 = vmul.f32 %v5104, %v5337
        %v5367 = vmul.f32 %v5105, %v5337
        %v5368 = vmul.f32 %v5106, %v5337
        %v5369 = vmul.f32 %v5107, %v5337
        %v5370 = vadd.f32 %v5301, %v5338
        %v5371 = vadd.f32 %v5302, %v5339
        %v5372 = vadd.f32 %v5303, %v5340
        %v5373 = vadd.f32 %v5304, %v5341
        %v5374 = vadd.f32 %v5305, %v5342
        %v5375 = vadd.f32 %v5306, %v5343
        %v5376 = vadd.f32 %v5307, %v5344
        %v5377 = vadd.f32 %v5308, %v5345
        %v5378 = vadd.f32 %v5309, %v5346
        %v5379 = vadd.f32 %v5310, %v5347
        %v5380 = vadd.f32 %v5311, %v5348
        %v5381 = vadd.f32 %v5312, %v5349
        %v5382 = vadd.f32 %v5313, %v5350
        %v5383 = vadd.f32 %v5314, %v5351
        %v5384 = vadd.f32 %v5315, %v5352
        %v5385 = vadd.f32 %v5316, %v5353
        %v5386 = vadd.f32 %v5317, %v5354
        %v5387 = vadd.f32 %v5318, %v5355
        %v5388 = vadd.f32 %v5319, %v5356
        %v5389 = vadd.f32 %v5320, %v5357
        %v5390 = vadd.f32 %v5321, %v5358
        %v5391 = vadd.f32 %v5322, %v5359
        %v5392 = vadd.f32 %v5323, %v5360
        %v5393 = vadd.f32 %v5324, %v5361
        %v5394 = vadd.f32 %v5325, %v5362
        %v5395 = vadd.f32 %v5326, %v5363
        %v5396 = vadd.f32 %v5327, %v5364
        %v5397 = vadd.f32 %v5328, %v5365
        %v5398 = vadd.f32 %v5329, %v5366
        %v5399 = vadd.f32 %v5330, %v5367
        %v5400 = vadd.f32 %v5331, %v5368
        %v5401 = vadd.f32 %v5332, %v5369
        %v5402 = vld [vmem:[#allocation6 + $0x1e] sm:$0x1]
        %v5403 = vlaneseq
        %v5404 = vshrl.u32 %v5403, 7
        %v5405 = vsub.s32 0, %v5404
        %v5406 = vrot.slane %v5402, %v5405
        %v5407 = vmul.f32 %v5082, %v5406
        %v5408 = vmul.f32 %v5083, %v5406
        %v5409 = vmul.f32 %v5084, %v5406
        %v5410 = vmul.f32 %v5085, %v5406
        %v5411 = vmul.f32 %v5086, %v5406
        %v5412 = vmul.f32 %v5087, %v5406
        %v5413 = vmul.f32 %v5088, %v5406
        %v5414 = vmul.f32 %v5089, %v5406
        %v5415 = vmul.f32 %v5090, %v5406
        %v5416 = vmul.f32 %v5091, %v5406
        %v5417 = vmul.f32 %v5092, %v5406
        %v5418 = vmul.f32 %v5093, %v5406
        %v5419 = vmul.f32 %v5094, %v5406
        %v5420 = vmul.f32 %v5095, %v5406
        %v5421 = vmul.f32 %v5096, %v5406
        %v5422 = vmul.f32 %v5097, %v5406
        %v5423 = vmul.f32 %v5098, %v5406
        %v5424 = vmul.f32 %v5099, %v5406
        %v5425 = vmul.f32 %v5100, %v5406
        %v5426 = vmul.f32 %v5101, %v5406
        %v5427 = vmul.f32 %v5102, %v5406
        %v5428 = vmul.f32 %v5103, %v5406
        %v5429 = vmul.f32 %v5104, %v5406
        %v5430 = vmul.f32 %v5105, %v5406
        %v5431 = vmul.f32 %v5106, %v5406
        %v5432 = vmul.f32 %v5107, %v5406
        %v5433 = vmul.f32 %v5108, %v5406
        %v5434 = vmul.f32 %v5109, %v5406
        %v5435 = vmul.f32 %v5110, %v5406
        %v5436 = vmul.f32 %v5111, %v5406
        %v5437 = vmul.f32 %v5112, %v5406
        %v5438 = vmul.f32 %v5113, %v5406
        %v5439 = vadd.f32 %v5370, %v5407
        %v5440 = vadd.f32 %v5371, %v5408
        %v5441 = vadd.f32 %v5372, %v5409
        %v5442 = vadd.f32 %v5373, %v5410
        %v5443 = vadd.f32 %v5374, %v5411
        %v5444 = vadd.f32 %v5375, %v5412
        %v5445 = vadd.f32 %v5376, %v5413
        %v5446 = vadd.f32 %v5377, %v5414
        %v5447 = vadd.f32 %v5378, %v5415
        %v5448 = vadd.f32 %v5379, %v5416
        %v5449 = vadd.f32 %v5380, %v5417
        %v5450 = vadd.f32 %v5381, %v5418
        %v5451 = vadd.f32 %v5382, %v5419
        %v5452 = vadd.f32 %v5383, %v5420
        %v5453 = vadd.f32 %v5384, %v5421
        %v5454 = vadd.f32 %v5385, %v5422
        %v5455 = vadd.f32 %v5386, %v5423
        %v5456 = vadd.f32 %v5387, %v5424
        %v5457 = vadd.f32 %v5388, %v5425
        %v5458 = vadd.f32 %v5389, %v5426
        %v5459 = vadd.f32 %v5390, %v5427
        %v5460 = vadd.f32 %v5391, %v5428
        %v5461 = vadd.f32 %v5392, %v5429
        %v5462 = vadd.f32 %v5393, %v5430
        %v5463 = vadd.f32 %v5394, %v5431
        %v5464 = vadd.f32 %v5395, %v5432
        %v5465 = vadd.f32 %v5396, %v5433
        %v5466 = vadd.f32 %v5397, %v5434
        %v5467 = vadd.f32 %v5398, %v5435
        %v5468 = vadd.f32 %v5399, %v5436
        %v5469 = vadd.f32 %v5400, %v5437
        %v5470 = vadd.f32 %v5401, %v5438
        %v5471 = vld [vmem:[#allocation6 + $0x25] sm:$0x1]
        %v5472 = vlaneseq
        %v5473 = vshrl.u32 %v5472, 7
        %v5474 = vsub.s32 0, %v5473
        %v5475 = vrot.slane %v5471, %v5474
        %v5476 = vmul.f32 %v5088, %v5475
        %v5477 = vmul.f32 %v5089, %v5475
        %v5478 = vmul.f32 %v5090, %v5475
        %v5479 = vmul.f32 %v5091, %v5475
        %v5480 = vmul.f32 %v5092, %v5475
        %v5481 = vmul.f32 %v5093, %v5475
        %v5482 = vmul.f32 %v5094, %v5475
        %v5483 = vmul.f32 %v5095, %v5475
        %v5484 = vmul.f32 %v5096, %v5475
        %v5485 = vmul.f32 %v5097, %v5475
        %v5486 = vmul.f32 %v5098, %v5475
        %v5487 = vmul.f32 %v5099, %v5475
        %v5488 = vmul.f32 %v5100, %v5475
        %v5489 = vmul.f32 %v5101, %v5475
        %v5490 = vmul.f32 %v5102, %v5475
        %v5491 = vmul.f32 %v5103, %v5475
        %v5492 = vmul.f32 %v5104, %v5475
        %v5493 = vmul.f32 %v5105, %v5475
        %v5494 = vmul.f32 %v5106, %v5475
        %v5495 = vmul.f32 %v5107, %v5475
        %v5496 = vmul.f32 %v5108, %v5475
        %v5497 = vmul.f32 %v5109, %v5475
        %v5498 = vmul.f32 %v5110, %v5475
        %v5499 = vmul.f32 %v5111, %v5475
        %v5500 = vmul.f32 %v5112, %v5475
        %v5501 = vmul.f32 %v5113, %v5475
        %v5502 = vmul.f32 %v5114, %v5475
        %v5503 = vmul.f32 %v5115, %v5475
        %v5504 = vmul.f32 %v5116, %v5475
        %v5505 = vmul.f32 %v5117, %v5475
        %v5506 = vmul.f32 %v5118, %v5475
        %v5507 = vmul.f32 %v5119, %v5475
        %v5508 = vadd.f32 %v5439, %v5476
        %v5509 = vadd.f32 %v5440, %v5477
        %v5510 = vadd.f32 %v5441, %v5478
        %v5511 = vadd.f32 %v5442, %v5479
        %v5512 = vadd.f32 %v5443, %v5480
        %v5513 = vadd.f32 %v5444, %v5481
        %v5514 = vadd.f32 %v5445, %v5482
        %v5515 = vadd.f32 %v5446, %v5483
        %v5516 = vadd.f32 %v5447, %v5484
        %v5517 = vadd.f32 %v5448, %v5485
        %v5518 = vadd.f32 %v5449, %v5486
        %v5519 = vadd.f32 %v5450, %v5487
        %v5520 = vadd.f32 %v5451, %v5488
        %v5521 = vadd.f32 %v5452, %v5489
        %v5522 = vadd.f32 %v5453, %v5490
        %v5523 = vadd.f32 %v5454, %v5491
        %v5524 = vadd.f32 %v5455, %v5492
        %v5525 = vadd.f32 %v5456, %v5493
        %v5526 = vadd.f32 %v5457, %v5494
        %v5527 = vadd.f32 %v5458, %v5495
        %v5528 = vadd.f32 %v5459, %v5496
        %v5529 = vadd.f32 %v5460, %v5497
        %v5530 = vadd.f32 %v5461, %v5498
        %v5531 = vadd.f32 %v5462, %v5499
        %v5532 = vadd.f32 %v5463, %v5500
        %v5533 = vadd.f32 %v5464, %v5501
        %v5534 = vadd.f32 %v5465, %v5502
        %v5535 = vadd.f32 %v5466, %v5503
        %v5536 = vadd.f32 %v5467, %v5504
        %v5537 = vadd.f32 %v5468, %v5505
        %v5538 = vadd.f32 %v5469, %v5506
        %v5539 = vadd.f32 %v5470, %v5507
        %v5540 = vld [vmem:[#allocation6 + $0x2c] sm:$0x1]
        %v5541 = vlaneseq
        %v5542 = vshrl.u32 %v5541, 7
        %v5543 = vsub.s32 0, %v5542
        %v5544 = vrot.slane %v5540, %v5543
        %v5545 = vmul.f32 %v5094, %v5544
        %v5546 = vmul.f32 %v5095, %v5544
        %v5547 = vmul.f32 %v5096, %v5544
        %v5548 = vmul.f32 %v5097, %v5544
        %v5549 = vmul.f32 %v5098, %v5544
        %v5550 = vmul.f32 %v5099, %v5544
        %v5551 = vmul.f32 %v5100, %v5544
        %v5552 = vmul.f32 %v5101, %v5544
        %v5553 = vmul.f32 %v5102, %v5544
        %v5554 = vmul.f32 %v5103, %v5544
        %v5555 = vmul.f32 %v5104, %v5544
        %v5556 = vmul.f32 %v5105, %v5544
        %v5557 = vmul.f32 %v5106, %v5544
        %v5558 = vmul.f32 %v5107, %v5544
        %v5559 = vmul.f32 %v5108, %v5544
        %v5560 = vmul.f32 %v5109, %v5544
        %v5561 = vmul.f32 %v5110, %v5544
        %v5562 = vmul.f32 %v5111, %v5544
        %v5563 = vmul.f32 %v5112, %v5544
        %v5564 = vmul.f32 %v5113, %v5544
        %v5565 = vmul.f32 %v5114, %v5544
        %v5566 = vmul.f32 %v5115, %v5544
        %v5567 = vmul.f32 %v5116, %v5544
        %v5568 = vmul.f32 %v5117, %v5544
        %v5569 = vmul.f32 %v5118, %v5544
        %v5570 = vmul.f32 %v5119, %v5544
        %v5571 = vmul.f32 %v5120, %v5544
        %v5572 = vmul.f32 %v5121, %v5544
        %v5573 = vmul.f32 %v5122, %v5544
        %v5574 = vmul.f32 %v5123, %v5544
        %v5575 = vmul.f32 %v5124, %v5544
        %v5576 = vmul.f32 %v5125, %v5544
        %v5577 = vadd.f32 %v5508, %v5545
        %v5578 = vadd.f32 %v5509, %v5546
        %v5579 = vadd.f32 %v5510, %v5547
        %v5580 = vadd.f32 %v5511, %v5548
        %v5581 = vadd.f32 %v5512, %v5549
        %v5582 = vadd.f32 %v5513, %v5550
        %v5583 = vadd.f32 %v5514, %v5551
        %v5584 = vadd.f32 %v5515, %v5552
        %v5585 = vadd.f32 %v5516, %v5553
        %v5586 = vadd.f32 %v5517, %v5554
        %v5587 = vadd.f32 %v5518, %v5555
        %v5588 = vadd.f32 %v5519, %v5556
        %v5589 = vadd.f32 %v5520, %v5557
        %v5590 = vadd.f32 %v5521, %v5558
        %v5591 = vadd.f32 %v5522, %v5559
        %v5592 = vadd.f32 %v5523, %v5560
        %v5593 = vadd.f32 %v5524, %v5561
        %v5594 = vadd.f32 %v5525, %v5562
        %v5595 = vadd.f32 %v5526, %v5563
        %v5596 = vadd.f32 %v5527, %v5564
        %v5597 = vadd.f32 %v5528, %v5565
        %v5598 = vadd.f32 %v5529, %v5566
        %v5599 = vadd.f32 %v5530, %v5567
        %v5600 = vadd.f32 %v5531, %v5568
        %v5601 = vadd.f32 %v5532, %v5569
        %v5602 = vadd.f32 %v5533, %v5570
        %v5603 = vadd.f32 %v5534, %v5571
        %v5604 = vadd.f32 %v5535, %v5572
        %v5605 = vadd.f32 %v5536, %v5573
        %v5606 = vadd.f32 %v5537, %v5574
        %v5607 = vadd.f32 %v5538, %v5575
        %v5608 = vadd.f32 %v5539, %v5576
        %v5609 = vld [vmem:[#allocation3 + $0x10] sm:$0xff]
        %v5610 = vld [vmem:[#allocation3 + $0x18] sm:$0xff]
        %v5611 = vld [vmem:[#allocation3 + $0x40] sm:$0xff]
        %v5612 = vld [vmem:[#allocation3 + $0x48] sm:$0xff]
        %v5613 = vld [vmem:[#allocation3 + $0x70] sm:$0xff]
        %v5614 = vld [vmem:[#allocation3 + $0x78] sm:$0xff]
        %v5615 = vld [vmem:[#allocation3 + $0xa0] sm:$0xff]
        %v5616 = vld [vmem:[#allocation3 + $0xa8] sm:$0xff]
        %v5617 = vld [vmem:[#allocation3 + $0xd0] sm:$0xff]
        %v5618 = vld [vmem:[#allocation3 + $0xd8] sm:$0xff]
        %v5619 = vld [vmem:[#allocation3 + $0x100] sm:$0xff]
        %v5620 = vld [vmem:[#allocation3 + $0x108] sm:$0xff]
        %v5621 = vld [vmem:[#allocation3 + $0x130] sm:$0xff]
        %v5622 = vld [vmem:[#allocation3 + $0x138] sm:$0xff]
        %v5623 = vld [vmem:[#allocation3 + $0x160] sm:$0xff]
        %v5624 = vld [vmem:[#allocation3 + $0x168] sm:$0xff]
        %v5625 = vld [vmem:[#allocation3 + $0x190] sm:$0xff]
        %v5626 = vld [vmem:[#allocation3 + $0x198] sm:$0xff]
        %v5627 = vld [vmem:[#allocation3 + $0x1c0] sm:$0xff]
        %v5628 = vld [vmem:[#allocation3 + $0x1c8] sm:$0xff]
        %v5629 = vld [vmem:[#allocation3 + $0x1f0] sm:$0xff]
        %v5630 = vld [vmem:[#allocation3 + $0x1f8] sm:$0xff]
        %v5631 = vld [vmem:[#allocation3 + $0x220] sm:$0xff]
        %v5632 = vld [vmem:[#allocation3 + $0x228] sm:$0xff]
        %v5633 = vld [vmem:[#allocation3 + $0x250] sm:$0xff]
        %v5634 = vld [vmem:[#allocation3 + $0x258] sm:$0xff]
        %v5635 = vld [vmem:[#allocation3 + $0x280] sm:$0xff]
        %v5636 = vld [vmem:[#allocation3 + $0x288] sm:$0xff]
        %v5637 = vld [vmem:[#allocation3 + $0x2b0] sm:$0xff]
        %v5638 = vld [vmem:[#allocation3 + $0x2b8] sm:$0xff]
        %v5639 = vld [vmem:[#allocation3 + $0x2e0] sm:$0xff]
        %v5640 = vld [vmem:[#allocation3 + $0x2e8] sm:$0xff]
        %v5641 = vld [vmem:[#allocation3 + $0x310] sm:$0xff]
        %v5642 = vld [vmem:[#allocation3 + $0x318] sm:$0xff]
        %v5643 = vld [vmem:[#allocation3 + $0x340] sm:$0xff]
        %v5644 = vld [vmem:[#allocation3 + $0x348] sm:$0xff]
        %v5645 = vld [vmem:[#allocation3 + $0x370] sm:$0xff]
        %v5646 = vld [vmem:[#allocation3 + $0x378] sm:$0xff]
        %v5647 = vld [vmem:[#allocation3 + $0x3a0] sm:$0xff]
        %v5648 = vld [vmem:[#allocation3 + $0x3a8] sm:$0xff]
        %v5649 = vld [vmem:[#allocation3 + $0x3d0] sm:$0xff]
        %v5650 = vld [vmem:[#allocation3 + $0x3d8] sm:$0xff]
        %v5651 = vld [vmem:[#allocation3 + $0x400] sm:$0xff]
        %v5652 = vld [vmem:[#allocation3 + $0x408] sm:$0xff]
        %v5653 = vld [vmem:[#allocation3 + $0x430] sm:$0xff]
        %v5654 = vld [vmem:[#allocation3 + $0x438] sm:$0xff]
        %v5655 = vld [vmem:[#allocation3 + $0x460] sm:$0xff]
        %v5656 = vld [vmem:[#allocation3 + $0x468] sm:$0xff]
        %v5657 = vld [vmem:[#allocation3 + $0x490] sm:$0xff]
        %v5658 = vld [vmem:[#allocation3 + $0x498] sm:$0xff]
        %v5659 = vld [vmem:[#allocation3 + $0x4c0] sm:$0xff]
        %v5660 = vld [vmem:[#allocation3 + $0x4c8] sm:$0xff]
        %v5661 = vld [vmem:[#allocation3 + $0x4f0] sm:$0xff]
        %v5662 = vld [vmem:[#allocation3 + $0x4f8] sm:$0xff]
        %v5663 = vld [vmem:[#allocation3 + $0x520] sm:$0xff]
        %v5664 = vld [vmem:[#allocation3 + $0x528] sm:$0xff]
        %v5665 = vld [vmem:[#allocation3 + $0x550] sm:$0xff]
        %v5666 = vld [vmem:[#allocation3 + $0x558] sm:$0xff]
        %v5667 = vld [vmem:[#allocation3 + $0x580] sm:$0xff]
        %v5668 = vld [vmem:[#allocation3 + $0x588] sm:$0xff]
        %v5669 = vld [vmem:[#allocation3 + $0x5b0] sm:$0xff]
        %v5670 = vld [vmem:[#allocation3 + $0x5b8] sm:$0xff]
        %v5671 = vld [vmem:[#allocation3 + $0x5e0] sm:$0xff]
        %v5672 = vld [vmem:[#allocation3 + $0x5e8] sm:$0xff]
        %v5673 = vld [vmem:[#allocation3 + $0x610] sm:$0xff]
        %v5674 = vld [vmem:[#allocation3 + $0x618] sm:$0xff]
        %v5675 = vld [vmem:[#allocation3 + $0x640] sm:$0xff]
        %v5676 = vld [vmem:[#allocation3 + $0x648] sm:$0xff]
        %v5677 = vld [vmem:[#allocation6 + $0x3] sm:$0x1]
        %v5678 = vlaneseq
        %v5679 = vshrl.u32 %v5678, 7
        %v5680 = vsub.s32 0, %v5679
        %v5681 = vrot.slane %v5677, %v5680
        %v5682 = vmul.f32 %v5609, %v5681
        %v5683 = vmul.f32 %v5610, %v5681
        %v5684 = vmul.f32 %v5611, %v5681
        %v5685 = vmul.f32 %v5612, %v5681
        %v5686 = vmul.f32 %v5613, %v5681
        %v5687 = vmul.f32 %v5614, %v5681
        %v5688 = vmul.f32 %v5615, %v5681
        %v5689 = vmul.f32 %v5616, %v5681
        %v5690 = vmul.f32 %v5617, %v5681
        %v5691 = vmul.f32 %v5618, %v5681
        %v5692 = vmul.f32 %v5619, %v5681
        %v5693 = vmul.f32 %v5620, %v5681
        %v5694 = vmul.f32 %v5621, %v5681
        %v5695 = vmul.f32 %v5622, %v5681
        %v5696 = vmul.f32 %v5623, %v5681
        %v5697 = vmul.f32 %v5624, %v5681
        %v5698 = vmul.f32 %v5625, %v5681
        %v5699 = vmul.f32 %v5626, %v5681
        %v5700 = vmul.f32 %v5627, %v5681
        %v5701 = vmul.f32 %v5628, %v5681
        %v5702 = vmul.f32 %v5629, %v5681
        %v5703 = vmul.f32 %v5630, %v5681
        %v5704 = vmul.f32 %v5631, %v5681
        %v5705 = vmul.f32 %v5632, %v5681
        %v5706 = vmul.f32 %v5633, %v5681
        %v5707 = vmul.f32 %v5634, %v5681
        %v5708 = vmul.f32 %v5635, %v5681
        %v5709 = vmul.f32 %v5636, %v5681
        %v5710 = vmul.f32 %v5637, %v5681
        %v5711 = vmul.f32 %v5638, %v5681
        %v5712 = vmul.f32 %v5639, %v5681
        %v5713 = vmul.f32 %v5640, %v5681
        %v5714 = vadd.f32 %v5577, %v5682
        %v5715 = vadd.f32 %v5578, %v5683
        %v5716 = vadd.f32 %v5579, %v5684
        %v5717 = vadd.f32 %v5580, %v5685
        %v5718 = vadd.f32 %v5581, %v5686
        %v5719 = vadd.f32 %v5582, %v5687
        %v5720 = vadd.f32 %v5583, %v5688
        %v5721 = vadd.f32 %v5584, %v5689
        %v5722 = vadd.f32 %v5585, %v5690
        %v5723 = vadd.f32 %v5586, %v5691
        %v5724 = vadd.f32 %v5587, %v5692
        %v5725 = vadd.f32 %v5588, %v5693
        %v5726 = vadd.f32 %v5589, %v5694
        %v5727 = vadd.f32 %v5590, %v5695
        %v5728 = vadd.f32 %v5591, %v5696
        %v5729 = vadd.f32 %v5592, %v5697
        %v5730 = vadd.f32 %v5593, %v5698
        %v5731 = vadd.f32 %v5594, %v5699
        %v5732 = vadd.f32 %v5595, %v5700
        %v5733 = vadd.f32 %v5596, %v5701
        %v5734 = vadd.f32 %v5597, %v5702
        %v5735 = vadd.f32 %v5598, %v5703
        %v5736 = vadd.f32 %v5599, %v5704
        %v5737 = vadd.f32 %v5600, %v5705
        %v5738 = vadd.f32 %v5601, %v5706
        %v5739 = vadd.f32 %v5602, %v5707
        %v5740 = vadd.f32 %v5603, %v5708
        %v5741 = vadd.f32 %v5604, %v5709
        %v5742 = vadd.f32 %v5605, %v5710
        %v5743 = vadd.f32 %v5606, %v5711
        %v5744 = vadd.f32 %v5607, %v5712
        %v5745 = vadd.f32 %v5608, %v5713
        %v5746 = vld [vmem:[#allocation6 + $0xa] sm:$0x1]
        %v5747 = vlaneseq
        %v5748 = vshrl.u32 %v5747, 7
        %v5749 = vsub.s32 0, %v5748
        %v5750 = vrot.slane %v5746, %v5749
        %v5751 = vmul.f32 %v5615, %v5750
        %v5752 = vmul.f32 %v5616, %v5750
        %v5753 = vmul.f32 %v5617, %v5750
        %v5754 = vmul.f32 %v5618, %v5750
        %v5755 = vmul.f32 %v5619, %v5750
        %v5756 = vmul.f32 %v5620, %v5750
        %v5757 = vmul.f32 %v5621, %v5750
        %v5758 = vmul.f32 %v5622, %v5750
        %v5759 = vmul.f32 %v5623, %v5750
        %v5760 = vmul.f32 %v5624, %v5750
        %v5761 = vmul.f32 %v5625, %v5750
        %v5762 = vmul.f32 %v5626, %v5750
        %v5763 = vmul.f32 %v5627, %v5750
        %v5764 = vmul.f32 %v5628, %v5750
        %v5765 = vmul.f32 %v5629, %v5750
        %v5766 = vmul.f32 %v5630, %v5750
        %v5767 = vmul.f32 %v5631, %v5750
        %v5768 = vmul.f32 %v5632, %v5750
        %v5769 = vmul.f32 %v5633, %v5750
        %v5770 = vmul.f32 %v5634, %v5750
        %v5771 = vmul.f32 %v5635, %v5750
        %v5772 = vmul.f32 %v5636, %v5750
        %v5773 = vmul.f32 %v5637, %v5750
        %v5774 = vmul.f32 %v5638, %v5750
        %v5775 = vmul.f32 %v5639, %v5750
        %v5776 = vmul.f32 %v5640, %v5750
        %v5777 = vmul.f32 %v5641, %v5750
        %v5778 = vmul.f32 %v5642, %v5750
        %v5779 = vmul.f32 %v5643, %v5750
        %v5780 = vmul.f32 %v5644, %v5750
        %v5781 = vmul.f32 %v5645, %v5750
        %v5782 = vmul.f32 %v5646, %v5750
        %v5783 = vadd.f32 %v5714, %v5751
        %v5784 = vadd.f32 %v5715, %v5752
        %v5785 = vadd.f32 %v5716, %v5753
        %v5786 = vadd.f32 %v5717, %v5754
        %v5787 = vadd.f32 %v5718, %v5755
        %v5788 = vadd.f32 %v5719, %v5756
        %v5789 = vadd.f32 %v5720, %v5757
        %v5790 = vadd.f32 %v5721, %v5758
        %v5791 = vadd.f32 %v5722, %v5759
        %v5792 = vadd.f32 %v5723, %v5760
        %v5793 = vadd.f32 %v5724, %v5761
        %v5794 = vadd.f32 %v5725, %v5762
        %v5795 = vadd.f32 %v5726, %v5763
        %v5796 = vadd.f32 %v5727, %v5764
        %v5797 = vadd.f32 %v5728, %v5765
        %v5798 = vadd.f32 %v5729, %v5766
        %v5799 = vadd.f32 %v5730, %v5767
        %v5800 = vadd.f32 %v5731, %v5768
        %v5801 = vadd.f32 %v5732, %v5769
        %v5802 = vadd.f32 %v5733, %v5770
        %v5803 = vadd.f32 %v5734, %v5771
        %v5804 = vadd.f32 %v5735, %v5772
        %v5805 = vadd.f32 %v5736, %v5773
        %v5806 = vadd.f32 %v5737, %v5774
        %v5807 = vadd.f32 %v5738, %v5775
        %v5808 = vadd.f32 %v5739, %v5776
        %v5809 = vadd.f32 %v5740, %v5777
        %v5810 = vadd.f32 %v5741, %v5778
        %v5811 = vadd.f32 %v5742, %v5779
        %v5812 = vadd.f32 %v5743, %v5780
        %v5813 = vadd.f32 %v5744, %v5781
        %v5814 = vadd.f32 %v5745, %v5782
        %v5815 = vld [vmem:[#allocation6 + $0x11] sm:$0x1]
        %v5816 = vlaneseq
        %v5817 = vshrl.u32 %v5816, 7
        %v5818 = vsub.s32 0, %v5817
        %v5819 = vrot.slane %v5815, %v5818
        %v5820 = vmul.f32 %v5621, %v5819
        %v5821 = vmul.f32 %v5622, %v5819
        %v5822 = vmul.f32 %v5623, %v5819
        %v5823 = vmul.f32 %v5624, %v5819
        %v5824 = vmul.f32 %v5625, %v5819
        %v5825 = vmul.f32 %v5626, %v5819
        %v5826 = vmul.f32 %v5627, %v5819
        %v5827 = vmul.f32 %v5628, %v5819
        %v5828 = vmul.f32 %v5629, %v5819
        %v5829 = vmul.f32 %v5630, %v5819
        %v5830 = vmul.f32 %v5631, %v5819
        %v5831 = vmul.f32 %v5632, %v5819
        %v5832 = vmul.f32 %v5633, %v5819
        %v5833 = vmul.f32 %v5634, %v5819
        %v5834 = vmul.f32 %v5635, %v5819
        %v5835 = vmul.f32 %v5636, %v5819
        %v5836 = vmul.f32 %v5637, %v5819
        %v5837 = vmul.f32 %v5638, %v5819
        %v5838 = vmul.f32 %v5639, %v5819
        %v5839 = vmul.f32 %v5640, %v5819
        %v5840 = vmul.f32 %v5641, %v5819
        %v5841 = vmul.f32 %v5642, %v5819
        %v5842 = vmul.f32 %v5643, %v5819
        %v5843 = vmul.f32 %v5644, %v5819
        %v5844 = vmul.f32 %v5645, %v5819
        %v5845 = vmul.f32 %v5646, %v5819
        %v5846 = vmul.f32 %v5647, %v5819
        %v5847 = vmul.f32 %v5648, %v5819
        %v5848 = vmul.f32 %v5649, %v5819
        %v5849 = vmul.f32 %v5650, %v5819
        %v5850 = vmul.f32 %v5651, %v5819
        %v5851 = vmul.f32 %v5652, %v5819
        %v5852 = vadd.f32 %v5783, %v5820
        %v5853 = vadd.f32 %v5784, %v5821
        %v5854 = vadd.f32 %v5785, %v5822
        %v5855 = vadd.f32 %v5786, %v5823
        %v5856 = vadd.f32 %v5787, %v5824
        %v5857 = vadd.f32 %v5788, %v5825
        %v5858 = vadd.f32 %v5789, %v5826
        %v5859 = vadd.f32 %v5790, %v5827
        %v5860 = vadd.f32 %v5791, %v5828
        %v5861 = vadd.f32 %v5792, %v5829
        %v5862 = vadd.f32 %v5793, %v5830
        %v5863 = vadd.f32 %v5794, %v5831
        %v5864 = vadd.f32 %v5795, %v5832
        %v5865 = vadd.f32 %v5796, %v5833
        %v5866 = vadd.f32 %v5797, %v5834
        %v5867 = vadd.f32 %v5798, %v5835
        %v5868 = vadd.f32 %v5799, %v5836
        %v5869 = vadd.f32 %v5800, %v5837
        %v5870 = vadd.f32 %v5801, %v5838
        %v5871 = vadd.f32 %v5802, %v5839
        %v5872 = vadd.f32 %v5803, %v5840
        %v5873 = vadd.f32 %v5804, %v5841
        %v5874 = vadd.f32 %v5805, %v5842
        %v5875 = vadd.f32 %v5806, %v5843
        %v5876 = vadd.f32 %v5807, %v5844
        %v5877 = vadd.f32 %v5808, %v5845
        %v5878 = vadd.f32 %v5809, %v5846
        %v5879 = vadd.f32 %v5810, %v5847
        %v5880 = vadd.f32 %v5811, %v5848
        %v5881 = vadd.f32 %v5812, %v5849
        %v5882 = vadd.f32 %v5813, %v5850
        %v5883 = vadd.f32 %v5814, %v5851
        %v5884 = vld [vmem:[#allocation6 + $0x18] sm:$0x1]
        %v5885 = vlaneseq
        %v5886 = vshrl.u32 %v5885, 7
        %v5887 = vsub.s32 0, %v5886
        %v5888 = vrot.slane %v5884, %v5887
        %v5889 = vmul.f32 %v5627, %v5888
        %v5890 = vmul.f32 %v5628, %v5888
        %v5891 = vmul.f32 %v5629, %v5888
        %v5892 = vmul.f32 %v5630, %v5888
        %v5893 = vmul.f32 %v5631, %v5888
        %v5894 = vmul.f32 %v5632, %v5888
        %v5895 = vmul.f32 %v5633, %v5888
        %v5896 = vmul.f32 %v5634, %v5888
        %v5897 = vmul.f32 %v5635, %v5888
        %v5898 = vmul.f32 %v5636, %v5888
        %v5899 = vmul.f32 %v5637, %v5888
        %v5900 = vmul.f32 %v5638, %v5888
        %v5901 = vmul.f32 %v5639, %v5888
        %v5902 = vmul.f32 %v5640, %v5888
        %v5903 = vmul.f32 %v5641, %v5888
        %v5904 = vmul.f32 %v5642, %v5888
        %v5905 = vmul.f32 %v5643, %v5888
        %v5906 = vmul.f32 %v5644, %v5888
        %v5907 = vmul.f32 %v5645, %v5888
        %v5908 = vmul.f32 %v5646, %v5888
        %v5909 = vmul.f32 %v5647, %v5888
        %v5910 = vmul.f32 %v5648, %v5888
        %v5911 = vmul.f32 %v5649, %v5888
        %v5912 = vmul.f32 %v5650, %v5888
        %v5913 = vmul.f32 %v5651, %v5888
        %v5914 = vmul.f32 %v5652, %v5888
        %v5915 = vmul.f32 %v5653, %v5888
        %v5916 = vmul.f32 %v5654, %v5888
        %v5917 = vmul.f32 %v5655, %v5888
        %v5918 = vmul.f32 %v5656, %v5888
        %v5919 = vmul.f32 %v5657, %v5888
        %v5920 = vmul.f32 %v5658, %v5888
        %v5921 = vadd.f32 %v5852, %v5889
        %v5922 = vadd.f32 %v5853, %v5890
        %v5923 = vadd.f32 %v5854, %v5891
        %v5924 = vadd.f32 %v5855, %v5892
        %v5925 = vadd.f32 %v5856, %v5893
        %v5926 = vadd.f32 %v5857, %v5894
        %v5927 = vadd.f32 %v5858, %v5895
        %v5928 = vadd.f32 %v5859, %v5896
        %v5929 = vadd.f32 %v5860, %v5897
        %v5930 = vadd.f32 %v5861, %v5898
        %v5931 = vadd.f32 %v5862, %v5899
        %v5932 = vadd.f32 %v5863, %v5900
        %v5933 = vadd.f32 %v5864, %v5901
        %v5934 = vadd.f32 %v5865, %v5902
        %v5935 = vadd.f32 %v5866, %v5903
        %v5936 = vadd.f32 %v5867, %v5904
        %v5937 = vadd.f32 %v5868, %v5905
        %v5938 = vadd.f32 %v5869, %v5906
        %v5939 = vadd.f32 %v5870, %v5907
        %v5940 = vadd.f32 %v5871, %v5908
        %v5941 = vadd.f32 %v5872, %v5909
        %v5942 = vadd.f32 %v5873, %v5910
        %v5943 = vadd.f32 %v5874, %v5911
        %v5944 = vadd.f32 %v5875, %v5912
        %v5945 = vadd.f32 %v5876, %v5913
        %v5946 = vadd.f32 %v5877, %v5914
        %v5947 = vadd.f32 %v5878, %v5915
        %v5948 = vadd.f32 %v5879, %v5916
        %v5949 = vadd.f32 %v5880, %v5917
        %v5950 = vadd.f32 %v5881, %v5918
        %v5951 = vadd.f32 %v5882, %v5919
        %v5952 = vadd.f32 %v5883, %v5920
        %v5953 = vld [vmem:[#allocation6 + $0x1f] sm:$0x1]
        %v5954 = vlaneseq
        %v5955 = vshrl.u32 %v5954, 7
        %v5956 = vsub.s32 0, %v5955
        %v5957 = vrot.slane %v5953, %v5956
        %v5958 = vmul.f32 %v5633, %v5957
        %v5959 = vmul.f32 %v5634, %v5957
        %v5960 = vmul.f32 %v5635, %v5957
        %v5961 = vmul.f32 %v5636, %v5957
        %v5962 = vmul.f32 %v5637, %v5957
        %v5963 = vmul.f32 %v5638, %v5957
        %v5964 = vmul.f32 %v5639, %v5957
        %v5965 = vmul.f32 %v5640, %v5957
        %v5966 = vmul.f32 %v5641, %v5957
        %v5967 = vmul.f32 %v5642, %v5957
        %v5968 = vmul.f32 %v5643, %v5957
        %v5969 = vmul.f32 %v5644, %v5957
        %v5970 = vmul.f32 %v5645, %v5957
        %v5971 = vmul.f32 %v5646, %v5957
        %v5972 = vmul.f32 %v5647, %v5957
        %v5973 = vmul.f32 %v5648, %v5957
        %v5974 = vmul.f32 %v5649, %v5957
        %v5975 = vmul.f32 %v5650, %v5957
        %v5976 = vmul.f32 %v5651, %v5957
        %v5977 = vmul.f32 %v5652, %v5957
        %v5978 = vmul.f32 %v5653, %v5957
        %v5979 = vmul.f32 %v5654, %v5957
        %v5980 = vmul.f32 %v5655, %v5957
        %v5981 = vmul.f32 %v5656, %v5957
        %v5982 = vmul.f32 %v5657, %v5957
        %v5983 = vmul.f32 %v5658, %v5957
        %v5984 = vmul.f32 %v5659, %v5957
        %v5985 = vmul.f32 %v5660, %v5957
        %v5986 = vmul.f32 %v5661, %v5957
        %v5987 = vmul.f32 %v5662, %v5957
        %v5988 = vmul.f32 %v5663, %v5957
        %v5989 = vmul.f32 %v5664, %v5957
        %v5990 = vadd.f32 %v5921, %v5958
        %v5991 = vadd.f32 %v5922, %v5959
        %v5992 = vadd.f32 %v5923, %v5960
        %v5993 = vadd.f32 %v5924, %v5961
        %v5994 = vadd.f32 %v5925, %v5962
        %v5995 = vadd.f32 %v5926, %v5963
        %v5996 = vadd.f32 %v5927, %v5964
        %v5997 = vadd.f32 %v5928, %v5965
        %v5998 = vadd.f32 %v5929, %v5966
        %v5999 = vadd.f32 %v5930, %v5967
        %v6000 = vadd.f32 %v5931, %v5968
        %v6001 = vadd.f32 %v5932, %v5969
        %v6002 = vadd.f32 %v5933, %v5970
        %v6003 = vadd.f32 %v5934, %v5971
        %v6004 = vadd.f32 %v5935, %v5972
        %v6005 = vadd.f32 %v5936, %v5973
        %v6006 = vadd.f32 %v5937, %v5974
        %v6007 = vadd.f32 %v5938, %v5975
        %v6008 = vadd.f32 %v5939, %v5976
        %v6009 = vadd.f32 %v5940, %v5977
        %v6010 = vadd.f32 %v5941, %v5978
        %v6011 = vadd.f32 %v5942, %v5979
        %v6012 = vadd.f32 %v5943, %v5980
        %v6013 = vadd.f32 %v5944, %v5981
        %v6014 = vadd.f32 %v5945, %v5982
        %v6015 = vadd.f32 %v5946, %v5983
        %v6016 = vadd.f32 %v5947, %v5984
        %v6017 = vadd.f32 %v5948, %v5985
        %v6018 = vadd.f32 %v5949, %v5986
        %v6019 = vadd.f32 %v5950, %v5987
        %v6020 = vadd.f32 %v5951, %v5988
        %v6021 = vadd.f32 %v5952, %v5989
        %v6022 = vld [vmem:[#allocation6 + $0x26] sm:$0x1]
        %v6023 = vlaneseq
        %v6024 = vshrl.u32 %v6023, 7
        %v6025 = vsub.s32 0, %v6024
        %v6026 = vrot.slane %v6022, %v6025
        %v6027 = vmul.f32 %v5639, %v6026
        %v6028 = vmul.f32 %v5640, %v6026
        %v6029 = vmul.f32 %v5641, %v6026
        %v6030 = vmul.f32 %v5642, %v6026
        %v6031 = vmul.f32 %v5643, %v6026
        %v6032 = vmul.f32 %v5644, %v6026
        %v6033 = vmul.f32 %v5645, %v6026
        %v6034 = vmul.f32 %v5646, %v6026
        %v6035 = vmul.f32 %v5647, %v6026
        %v6036 = vmul.f32 %v5648, %v6026
        %v6037 = vmul.f32 %v5649, %v6026
        %v6038 = vmul.f32 %v5650, %v6026
        %v6039 = vmul.f32 %v5651, %v6026
        %v6040 = vmul.f32 %v5652, %v6026
        %v6041 = vmul.f32 %v5653, %v6026
        %v6042 = vmul.f32 %v5654, %v6026
        %v6043 = vmul.f32 %v5655, %v6026
        %v6044 = vmul.f32 %v5656, %v6026
        %v6045 = vmul.f32 %v5657, %v6026
        %v6046 = vmul.f32 %v5658, %v6026
        %v6047 = vmul.f32 %v5659, %v6026
        %v6048 = vmul.f32 %v5660, %v6026
        %v6049 = vmul.f32 %v5661, %v6026
        %v6050 = vmul.f32 %v5662, %v6026
        %v6051 = vmul.f32 %v5663, %v6026
        %v6052 = vmul.f32 %v5664, %v6026
        %v6053 = vmul.f32 %v5665, %v6026
        %v6054 = vmul.f32 %v5666, %v6026
        %v6055 = vmul.f32 %v5667, %v6026
        %v6056 = vmul.f32 %v5668, %v6026
        %v6057 = vmul.f32 %v5669, %v6026
        %v6058 = vmul.f32 %v5670, %v6026
        %v6059 = vadd.f32 %v5990, %v6027
        %v6060 = vadd.f32 %v5991, %v6028
        %v6061 = vadd.f32 %v5992, %v6029
        %v6062 = vadd.f32 %v5993, %v6030
        %v6063 = vadd.f32 %v5994, %v6031
        %v6064 = vadd.f32 %v5995, %v6032
        %v6065 = vadd.f32 %v5996, %v6033
        %v6066 = vadd.f32 %v5997, %v6034
        %v6067 = vadd.f32 %v5998, %v6035
        %v6068 = vadd.f32 %v5999, %v6036
        %v6069 = vadd.f32 %v6000, %v6037
        %v6070 = vadd.f32 %v6001, %v6038
        %v6071 = vadd.f32 %v6002, %v6039
        %v6072 = vadd.f32 %v6003, %v6040
        %v6073 = vadd.f32 %v6004, %v6041
        %v6074 = vadd.f32 %v6005, %v6042
        %v6075 = vadd.f32 %v6006, %v6043
        %v6076 = vadd.f32 %v6007, %v6044
        %v6077 = vadd.f32 %v6008, %v6045
        %v6078 = vadd.f32 %v6009, %v6046
        %v6079 = vadd.f32 %v6010, %v6047
        %v6080 = vadd.f32 %v6011, %v6048
        %v6081 = vadd.f32 %v6012, %v6049
        %v6082 = vadd.f32 %v6013, %v6050
        %v6083 = vadd.f32 %v6014, %v6051
        %v6084 = vadd.f32 %v6015, %v6052
        %v6085 = vadd.f32 %v6016, %v6053
        %v6086 = vadd.f32 %v6017, %v6054
        %v6087 = vadd.f32 %v6018, %v6055
        %v6088 = vadd.f32 %v6019, %v6056
        %v6089 = vadd.f32 %v6020, %v6057
        %v6090 = vadd.f32 %v6021, %v6058
        %v6091 = vld [vmem:[#allocation6 + $0x2d] sm:$0x1]
        %v6092 = vlaneseq
        %v6093 = vshrl.u32 %v6092, 7
        %v6094 = vsub.s32 0, %v6093
        %v6095 = vrot.slane %v6091, %v6094
        %v6096 = vmul.f32 %v5645, %v6095
        %v6097 = vmul.f32 %v5646, %v6095
        %v6098 = vmul.f32 %v5647, %v6095
        %v6099 = vmul.f32 %v5648, %v6095
        %v6100 = vmul.f32 %v5649, %v6095
        %v6101 = vmul.f32 %v5650, %v6095
        %v6102 = vmul.f32 %v5651, %v6095
        %v6103 = vmul.f32 %v5652, %v6095
        %v6104 = vmul.f32 %v5653, %v6095
        %v6105 = vmul.f32 %v5654, %v6095
        %v6106 = vmul.f32 %v5655, %v6095
        %v6107 = vmul.f32 %v5656, %v6095
        %v6108 = vmul.f32 %v5657, %v6095
        %v6109 = vmul.f32 %v5658, %v6095
        %v6110 = vmul.f32 %v5659, %v6095
        %v6111 = vmul.f32 %v5660, %v6095
        %v6112 = vmul.f32 %v5661, %v6095
        %v6113 = vmul.f32 %v5662, %v6095
        %v6114 = vmul.f32 %v5663, %v6095
        %v6115 = vmul.f32 %v5664, %v6095
        %v6116 = vmul.f32 %v5665, %v6095
        %v6117 = vmul.f32 %v5666, %v6095
        %v6118 = vmul.f32 %v5667, %v6095
        %v6119 = vmul.f32 %v5668, %v6095
        %v6120 = vmul.f32 %v5669, %v6095
        %v6121 = vmul.f32 %v5670, %v6095
        %v6122 = vmul.f32 %v5671, %v6095
        %v6123 = vmul.f32 %v5672, %v6095
        %v6124 = vmul.f32 %v5673, %v6095
        %v6125 = vmul.f32 %v5674, %v6095
        %v6126 = vmul.f32 %v5675, %v6095
        %v6127 = vmul.f32 %v5676, %v6095
        %v6128 = vadd.f32 %v6059, %v6096
        %v6129 = vadd.f32 %v6060, %v6097
        %v6130 = vadd.f32 %v6061, %v6098
        %v6131 = vadd.f32 %v6062, %v6099
        %v6132 = vadd.f32 %v6063, %v6100
        %v6133 = vadd.f32 %v6064, %v6101
        %v6134 = vadd.f32 %v6065, %v6102
        %v6135 = vadd.f32 %v6066, %v6103
        %v6136 = vadd.f32 %v6067, %v6104
        %v6137 = vadd.f32 %v6068, %v6105
        %v6138 = vadd.f32 %v6069, %v6106
        %v6139 = vadd.f32 %v6070, %v6107
        %v6140 = vadd.f32 %v6071, %v6108
        %v6141 = vadd.f32 %v6072, %v6109
        %v6142 = vadd.f32 %v6073, %v6110
        %v6143 = vadd.f32 %v6074, %v6111
        %v6144 = vadd.f32 %v6075, %v6112
        %v6145 = vadd.f32 %v6076, %v6113
        %v6146 = vadd.f32 %v6077, %v6114
        %v6147 = vadd.f32 %v6078, %v6115
        %v6148 = vadd.f32 %v6079, %v6116
        %v6149 = vadd.f32 %v6080, %v6117
        %v6150 = vadd.f32 %v6081, %v6118
        %v6151 = vadd.f32 %v6082, %v6119
        %v6152 = vadd.f32 %v6083, %v6120
        %v6153 = vadd.f32 %v6084, %v6121
        %v6154 = vadd.f32 %v6085, %v6122
        %v6155 = vadd.f32 %v6086, %v6123
        %v6156 = vadd.f32 %v6087, %v6124
        %v6157 = vadd.f32 %v6088, %v6125
        %v6158 = vadd.f32 %v6089, %v6126
        %v6159 = vadd.f32 %v6090, %v6127
        %v6160 = vld [vmem:[#allocation3 + $0x13] sm:$0xff]
        %v6161 = vld [vmem:[#allocation3 + $0x1b] sm:$0xff]
        %v6162 = vld [vmem:[#allocation3 + $0x43] sm:$0xff]
        %v6163 = vld [vmem:[#allocation3 + $0x4b] sm:$0xff]
        %v6164 = vld [vmem:[#allocation3 + $0x73] sm:$0xff]
        %v6165 = vld [vmem:[#allocation3 + $0x7b] sm:$0xff]
        %v6166 = vld [vmem:[#allocation3 + $0xa3] sm:$0xff]
        %v6167 = vld [vmem:[#allocation3 + $0xab] sm:$0xff]
        %v6168 = vld [vmem:[#allocation3 + $0xd3] sm:$0xff]
        %v6169 = vld [vmem:[#allocation3 + $0xdb] sm:$0xff]
        %v6170 = vld [vmem:[#allocation3 + $0x103] sm:$0xff]
        %v6171 = vld [vmem:[#allocation3 + $0x10b] sm:$0xff]
        %v6172 = vld [vmem:[#allocation3 + $0x133] sm:$0xff]
        %v6173 = vld [vmem:[#allocation3 + $0x13b] sm:$0xff]
        %v6174 = vld [vmem:[#allocation3 + $0x163] sm:$0xff]
        %v6175 = vld [vmem:[#allocation3 + $0x16b] sm:$0xff]
        %v6176 = vld [vmem:[#allocation3 + $0x193] sm:$0xff]
        %v6177 = vld [vmem:[#allocation3 + $0x19b] sm:$0xff]
        %v6178 = vld [vmem:[#allocation3 + $0x1c3] sm:$0xff]
        %v6179 = vld [vmem:[#allocation3 + $0x1cb] sm:$0xff]
        %v6180 = vld [vmem:[#allocation3 + $0x1f3] sm:$0xff]
        %v6181 = vld [vmem:[#allocation3 + $0x1fb] sm:$0xff]
        %v6182 = vld [vmem:[#allocation3 + $0x223] sm:$0xff]
        %v6183 = vld [vmem:[#allocation3 + $0x22b] sm:$0xff]
        %v6184 = vld [vmem:[#allocation3 + $0x253] sm:$0xff]
        %v6185 = vld [vmem:[#allocation3 + $0x25b] sm:$0xff]
        %v6186 = vld [vmem:[#allocation3 + $0x283] sm:$0xff]
        %v6187 = vld [vmem:[#allocation3 + $0x28b] sm:$0xff]
        %v6188 = vld [vmem:[#allocation3 + $0x2b3] sm:$0xff]
        %v6189 = vld [vmem:[#allocation3 + $0x2bb] sm:$0xff]
        %v6190 = vld [vmem:[#allocation3 + $0x2e3] sm:$0xff]
        %v6191 = vld [vmem:[#allocation3 + $0x2eb] sm:$0xff]
        %v6192 = vld [vmem:[#allocation3 + $0x313] sm:$0xff]
        %v6193 = vld [vmem:[#allocation3 + $0x31b] sm:$0xff]
        %v6194 = vld [vmem:[#allocation3 + $0x343] sm:$0xff]
        %v6195 = vld [vmem:[#allocation3 + $0x34b] sm:$0xff]
        %v6196 = vld [vmem:[#allocation3 + $0x373] sm:$0xff]
        %v6197 = vld [vmem:[#allocation3 + $0x37b] sm:$0xff]
        %v6198 = vld [vmem:[#allocation3 + $0x3a3] sm:$0xff]
        %v6199 = vld [vmem:[#allocation3 + $0x3ab] sm:$0xff]
        %v6200 = vld [vmem:[#allocation3 + $0x3d3] sm:$0xff]
        %v6201 = vld [vmem:[#allocation3 + $0x3db] sm:$0xff]
        %v6202 = vld [vmem:[#allocation3 + $0x403] sm:$0xff]
        %v6203 = vld [vmem:[#allocation3 + $0x40b] sm:$0xff]
        %v6204 = vld [vmem:[#allocation3 + $0x433] sm:$0xff]
        %v6205 = vld [vmem:[#allocation3 + $0x43b] sm:$0xff]
        %v6206 = vld [vmem:[#allocation3 + $0x463] sm:$0xff]
        %v6207 = vld [vmem:[#allocation3 + $0x46b] sm:$0xff]
        %v6208 = vld [vmem:[#allocation3 + $0x493] sm:$0xff]
        %v6209 = vld [vmem:[#allocation3 + $0x49b] sm:$0xff]
        %v6210 = vld [vmem:[#allocation3 + $0x4c3] sm:$0xff]
        %v6211 = vld [vmem:[#allocation3 + $0x4cb] sm:$0xff]
        %v6212 = vld [vmem:[#allocation3 + $0x4f3] sm:$0xff]
        %v6213 = vld [vmem:[#allocation3 + $0x4fb] sm:$0xff]
        %v6214 = vld [vmem:[#allocation3 + $0x523] sm:$0xff]
        %v6215 = vld [vmem:[#allocation3 + $0x52b] sm:$0xff]
        %v6216 = vld [vmem:[#allocation3 + $0x553] sm:$0xff]
        %v6217 = vld [vmem:[#allocation3 + $0x55b] sm:$0xff]
        %v6218 = vld [vmem:[#allocation3 + $0x583] sm:$0xff]
        %v6219 = vld [vmem:[#allocation3 + $0x58b] sm:$0xff]
        %v6220 = vld [vmem:[#allocation3 + $0x5b3] sm:$0xff]
        %v6221 = vld [vmem:[#allocation3 + $0x5bb] sm:$0xff]
        %v6222 = vld [vmem:[#allocation3 + $0x5e3] sm:$0xff]
        %v6223 = vld [vmem:[#allocation3 + $0x5eb] sm:$0xff]
        %v6224 = vld [vmem:[#allocation3 + $0x613] sm:$0xff]
        %v6225 = vld [vmem:[#allocation3 + $0x61b] sm:$0xff]
        %v6226 = vld [vmem:[#allocation3 + $0x643] sm:$0xff]
        %v6227 = vld [vmem:[#allocation3 + $0x64b] sm:$0xff]
        %v6228 = vld [vmem:[#allocation6 + $0x4] sm:$0x1]
        %v6229 = vlaneseq
        %v6230 = vshrl.u32 %v6229, 7
        %v6231 = vsub.s32 0, %v6230
        %v6232 = vrot.slane %v6228, %v6231
        %v6233 = vmul.f32 %v6160, %v6232
        %v6234 = vmul.f32 %v6161, %v6232
        %v6235 = vmul.f32 %v6162, %v6232
        %v6236 = vmul.f32 %v6163, %v6232
        %v6237 = vmul.f32 %v6164, %v6232
        %v6238 = vmul.f32 %v6165, %v6232
        %v6239 = vmul.f32 %v6166, %v6232
        %v6240 = vmul.f32 %v6167, %v6232
        %v6241 = vmul.f32 %v6168, %v6232
        %v6242 = vmul.f32 %v6169, %v6232
        %v6243 = vmul.f32 %v6170, %v6232
        %v6244 = vmul.f32 %v6171, %v6232
        %v6245 = vmul.f32 %v6172, %v6232
        %v6246 = vmul.f32 %v6173, %v6232
        %v6247 = vmul.f32 %v6174, %v6232
        %v6248 = vmul.f32 %v6175, %v6232
        %v6249 = vmul.f32 %v6176, %v6232
        %v6250 = vmul.f32 %v6177, %v6232
        %v6251 = vmul.f32 %v6178, %v6232
        %v6252 = vmul.f32 %v6179, %v6232
        %v6253 = vmul.f32 %v6180, %v6232
        %v6254 = vmul.f32 %v6181, %v6232
        %v6255 = vmul.f32 %v6182, %v6232
        %v6256 = vmul.f32 %v6183, %v6232
        %v6257 = vmul.f32 %v6184, %v6232
        %v6258 = vmul.f32 %v6185, %v6232
        %v6259 = vmul.f32 %v6186, %v6232
        %v6260 = vmul.f32 %v6187, %v6232
        %v6261 = vmul.f32 %v6188, %v6232
        %v6262 = vmul.f32 %v6189, %v6232
        %v6263 = vmul.f32 %v6190, %v6232
        %v6264 = vmul.f32 %v6191, %v6232
        %v6265 = vadd.f32 %v6128, %v6233
        %v6266 = vadd.f32 %v6129, %v6234
        %v6267 = vadd.f32 %v6130, %v6235
        %v6268 = vadd.f32 %v6131, %v6236
        %v6269 = vadd.f32 %v6132, %v6237
        %v6270 = vadd.f32 %v6133, %v6238
        %v6271 = vadd.f32 %v6134, %v6239
        %v6272 = vadd.f32 %v6135, %v6240
        %v6273 = vadd.f32 %v6136, %v6241
        %v6274 = vadd.f32 %v6137, %v6242
        %v6275 = vadd.f32 %v6138, %v6243
        %v6276 = vadd.f32 %v6139, %v6244
        %v6277 = vadd.f32 %v6140, %v6245
        %v6278 = vadd.f32 %v6141, %v6246
        %v6279 = vadd.f32 %v6142, %v6247
        %v6280 = vadd.f32 %v6143, %v6248
        %v6281 = vadd.f32 %v6144, %v6249
        %v6282 = vadd.f32 %v6145, %v6250
        %v6283 = vadd.f32 %v6146, %v6251
        %v6284 = vadd.f32 %v6147, %v6252
        %v6285 = vadd.f32 %v6148, %v6253
        %v6286 = vadd.f32 %v6149, %v6254
        %v6287 = vadd.f32 %v6150, %v6255
        %v6288 = vadd.f32 %v6151, %v6256
        %v6289 = vadd.f32 %v6152, %v6257
        %v6290 = vadd.f32 %v6153, %v6258
        %v6291 = vadd.f32 %v6154, %v6259
        %v6292 = vadd.f32 %v6155, %v6260
        %v6293 = vadd.f32 %v6156, %v6261
        %v6294 = vadd.f32 %v6157, %v6262
        %v6295 = vadd.f32 %v6158, %v6263
        %v6296 = vadd.f32 %v6159, %v6264
        %v6297 = vld [vmem:[#allocation6 + $0xb] sm:$0x1]
        %v6298 = vlaneseq
        %v6299 = vshrl.u32 %v6298, 7
        %v6300 = vsub.s32 0, %v6299
        %v6301 = vrot.slane %v6297, %v6300
        %v6302 = vmul.f32 %v6166, %v6301
        %v6303 = vmul.f32 %v6167, %v6301
        %v6304 = vmul.f32 %v6168, %v6301
        %v6305 = vmul.f32 %v6169, %v6301
        %v6306 = vmul.f32 %v6170, %v6301
        %v6307 = vmul.f32 %v6171, %v6301
        %v6308 = vmul.f32 %v6172, %v6301
        %v6309 = vmul.f32 %v6173, %v6301
        %v6310 = vmul.f32 %v6174, %v6301
        %v6311 = vmul.f32 %v6175, %v6301
        %v6312 = vmul.f32 %v6176, %v6301
        %v6313 = vmul.f32 %v6177, %v6301
        %v6314 = vmul.f32 %v6178, %v6301
        %v6315 = vmul.f32 %v6179, %v6301
        %v6316 = vmul.f32 %v6180, %v6301
        %v6317 = vmul.f32 %v6181, %v6301
        %v6318 = vmul.f32 %v6182, %v6301
        %v6319 = vmul.f32 %v6183, %v6301
        %v6320 = vmul.f32 %v6184, %v6301
        %v6321 = vmul.f32 %v6185, %v6301
        %v6322 = vmul.f32 %v6186, %v6301
        %v6323 = vmul.f32 %v6187, %v6301
        %v6324 = vmul.f32 %v6188, %v6301
        %v6325 = vmul.f32 %v6189, %v6301
        %v6326 = vmul.f32 %v6190, %v6301
        %v6327 = vmul.f32 %v6191, %v6301
        %v6328 = vmul.f32 %v6192, %v6301
        %v6329 = vmul.f32 %v6193, %v6301
        %v6330 = vmul.f32 %v6194, %v6301
        %v6331 = vmul.f32 %v6195, %v6301
        %v6332 = vmul.f32 %v6196, %v6301
        %v6333 = vmul.f32 %v6197, %v6301
        %v6334 = vadd.f32 %v6265, %v6302
        %v6335 = vadd.f32 %v6266, %v6303
        %v6336 = vadd.f32 %v6267, %v6304
        %v6337 = vadd.f32 %v6268, %v6305
        %v6338 = vadd.f32 %v6269, %v6306
        %v6339 = vadd.f32 %v6270, %v6307
        %v6340 = vadd.f32 %v6271, %v6308
        %v6341 = vadd.f32 %v6272, %v6309
        %v6342 = vadd.f32 %v6273, %v6310
        %v6343 = vadd.f32 %v6274, %v6311
        %v6344 = vadd.f32 %v6275, %v6312
        %v6345 = vadd.f32 %v6276, %v6313
        %v6346 = vadd.f32 %v6277, %v6314
        %v6347 = vadd.f32 %v6278, %v6315
        %v6348 = vadd.f32 %v6279, %v6316
        %v6349 = vadd.f32 %v6280, %v6317
        %v6350 = vadd.f32 %v6281, %v6318
        %v6351 = vadd.f32 %v6282, %v6319
        %v6352 = vadd.f32 %v6283, %v6320
        %v6353 = vadd.f32 %v6284, %v6321
        %v6354 = vadd.f32 %v6285, %v6322
        %v6355 = vadd.f32 %v6286, %v6323
        %v6356 = vadd.f32 %v6287, %v6324
        %v6357 = vadd.f32 %v6288, %v6325
        %v6358 = vadd.f32 %v6289, %v6326
        %v6359 = vadd.f32 %v6290, %v6327
        %v6360 = vadd.f32 %v6291, %v6328
        %v6361 = vadd.f32 %v6292, %v6329
        %v6362 = vadd.f32 %v6293, %v6330
        %v6363 = vadd.f32 %v6294, %v6331
        %v6364 = vadd.f32 %v6295, %v6332
        %v6365 = vadd.f32 %v6296, %v6333
        %v6366 = vld [vmem:[#allocation6 + $0x12] sm:$0x1]
        %v6367 = vlaneseq
        %v6368 = vshrl.u32 %v6367, 7
        %v6369 = vsub.s32 0, %v6368
        %v6370 = vrot.slane %v6366, %v6369
        %v6371 = vmul.f32 %v6172, %v6370
        %v6372 = vmul.f32 %v6173, %v6370
        %v6373 = vmul.f32 %v6174, %v6370
        %v6374 = vmul.f32 %v6175, %v6370
        %v6375 = vmul.f32 %v6176, %v6370
        %v6376 = vmul.f32 %v6177, %v6370
        %v6377 = vmul.f32 %v6178, %v6370
        %v6378 = vmul.f32 %v6179, %v6370
        %v6379 = vmul.f32 %v6180, %v6370
        %v6380 = vmul.f32 %v6181, %v6370
        %v6381 = vmul.f32 %v6182, %v6370
        %v6382 = vmul.f32 %v6183, %v6370
        %v6383 = vmul.f32 %v6184, %v6370
        %v6384 = vmul.f32 %v6185, %v6370
        %v6385 = vmul.f32 %v6186, %v6370
        %v6386 = vmul.f32 %v6187, %v6370
        %v6387 = vmul.f32 %v6188, %v6370
        %v6388 = vmul.f32 %v6189, %v6370
        %v6389 = vmul.f32 %v6190, %v6370
        %v6390 = vmul.f32 %v6191, %v6370
        %v6391 = vmul.f32 %v6192, %v6370
        %v6392 = vmul.f32 %v6193, %v6370
        %v6393 = vmul.f32 %v6194, %v6370
        %v6394 = vmul.f32 %v6195, %v6370
        %v6395 = vmul.f32 %v6196, %v6370
        %v6396 = vmul.f32 %v6197, %v6370
        %v6397 = vmul.f32 %v6198, %v6370
        %v6398 = vmul.f32 %v6199, %v6370
        %v6399 = vmul.f32 %v6200, %v6370
        %v6400 = vmul.f32 %v6201, %v6370
        %v6401 = vmul.f32 %v6202, %v6370
        %v6402 = vmul.f32 %v6203, %v6370
        %v6403 = vadd.f32 %v6334, %v6371
        %v6404 = vadd.f32 %v6335, %v6372
        %v6405 = vadd.f32 %v6336, %v6373
        %v6406 = vadd.f32 %v6337, %v6374
        %v6407 = vadd.f32 %v6338, %v6375
        %v6408 = vadd.f32 %v6339, %v6376
        %v6409 = vadd.f32 %v6340, %v6377
        %v6410 = vadd.f32 %v6341, %v6378
        %v6411 = vadd.f32 %v6342, %v6379
        %v6412 = vadd.f32 %v6343, %v6380
        %v6413 = vadd.f32 %v6344, %v6381
        %v6414 = vadd.f32 %v6345, %v6382
        %v6415 = vadd.f32 %v6346, %v6383
        %v6416 = vadd.f32 %v6347, %v6384
        %v6417 = vadd.f32 %v6348, %v6385
        %v6418 = vadd.f32 %v6349, %v6386
        %v6419 = vadd.f32 %v6350, %v6387
        %v6420 = vadd.f32 %v6351, %v6388
        %v6421 = vadd.f32 %v6352, %v6389
        %v6422 = vadd.f32 %v6353, %v6390
        %v6423 = vadd.f32 %v6354, %v6391
        %v6424 = vadd.f32 %v6355, %v6392
        %v6425 = vadd.f32 %v6356, %v6393
        %v6426 = vadd.f32 %v6357, %v6394
        %v6427 = vadd.f32 %v6358, %v6395
        %v6428 = vadd.f32 %v6359, %v6396
        %v6429 = vadd.f32 %v6360, %v6397
        %v6430 = vadd.f32 %v6361, %v6398
        %v6431 = vadd.f32 %v6362, %v6399
        %v6432 = vadd.f32 %v6363, %v6400
        %v6433 = vadd.f32 %v6364, %v6401
        %v6434 = vadd.f32 %v6365, %v6402
        %v6435 = vld [vmem:[#allocation6 + $0x19] sm:$0x1]
        %v6436 = vlaneseq
        %v6437 = vshrl.u32 %v6436, 7
        %v6438 = vsub.s32 0, %v6437
        %v6439 = vrot.slane %v6435, %v6438
        %v6440 = vmul.f32 %v6178, %v6439
        %v6441 = vmul.f32 %v6179, %v6439
        %v6442 = vmul.f32 %v6180, %v6439
        %v6443 = vmul.f32 %v6181, %v6439
        %v6444 = vmul.f32 %v6182, %v6439
        %v6445 = vmul.f32 %v6183, %v6439
        %v6446 = vmul.f32 %v6184, %v6439
        %v6447 = vmul.f32 %v6185, %v6439
        %v6448 = vmul.f32 %v6186, %v6439
        %v6449 = vmul.f32 %v6187, %v6439
        %v6450 = vmul.f32 %v6188, %v6439
        %v6451 = vmul.f32 %v6189, %v6439
        %v6452 = vmul.f32 %v6190, %v6439
        %v6453 = vmul.f32 %v6191, %v6439
        %v6454 = vmul.f32 %v6192, %v6439
        %v6455 = vmul.f32 %v6193, %v6439
        %v6456 = vmul.f32 %v6194, %v6439
        %v6457 = vmul.f32 %v6195, %v6439
        %v6458 = vmul.f32 %v6196, %v6439
        %v6459 = vmul.f32 %v6197, %v6439
        %v6460 = vmul.f32 %v6198, %v6439
        %v6461 = vmul.f32 %v6199, %v6439
        %v6462 = vmul.f32 %v6200, %v6439
        %v6463 = vmul.f32 %v6201, %v6439
        %v6464 = vmul.f32 %v6202, %v6439
        %v6465 = vmul.f32 %v6203, %v6439
        %v6466 = vmul.f32 %v6204, %v6439
        %v6467 = vmul.f32 %v6205, %v6439
        %v6468 = vmul.f32 %v6206, %v6439
        %v6469 = vmul.f32 %v6207, %v6439
        %v6470 = vmul.f32 %v6208, %v6439
        %v6471 = vmul.f32 %v6209, %v6439
        %v6472 = vadd.f32 %v6403, %v6440
        %v6473 = vadd.f32 %v6404, %v6441
        %v6474 = vadd.f32 %v6405, %v6442
        %v6475 = vadd.f32 %v6406, %v6443
        %v6476 = vadd.f32 %v6407, %v6444
        %v6477 = vadd.f32 %v6408, %v6445
        %v6478 = vadd.f32 %v6409, %v6446
        %v6479 = vadd.f32 %v6410, %v6447
        %v6480 = vadd.f32 %v6411, %v6448
        %v6481 = vadd.f32 %v6412, %v6449
        %v6482 = vadd.f32 %v6413, %v6450
        %v6483 = vadd.f32 %v6414, %v6451
        %v6484 = vadd.f32 %v6415, %v6452
        %v6485 = vadd.f32 %v6416, %v6453
        %v6486 = vadd.f32 %v6417, %v6454
        %v6487 = vadd.f32 %v6418, %v6455
        %v6488 = vadd.f32 %v6419, %v6456
        %v6489 = vadd.f32 %v6420, %v6457
        %v6490 = vadd.f32 %v6421, %v6458
        %v6491 = vadd.f32 %v6422, %v6459
        %v6492 = vadd.f32 %v6423, %v6460
        %v6493 = vadd.f32 %v6424, %v6461
        %v6494 = vadd.f32 %v6425, %v6462
        %v6495 = vadd.f32 %v6426, %v6463
        %v6496 = vadd.f32 %v6427, %v6464
        %v6497 = vadd.f32 %v6428, %v6465
        %v6498 = vadd.f32 %v6429, %v6466
        %v6499 = vadd.f32 %v6430, %v6467
        %v6500 = vadd.f32 %v6431, %v6468
        %v6501 = vadd.f32 %v6432, %v6469
        %v6502 = vadd.f32 %v6433, %v6470
        %v6503 = vadd.f32 %v6434, %v6471
        %v6504 = vld [vmem:[#allocation6 + $0x20] sm:$0x1]
        %v6505 = vlaneseq
        %v6506 = vshrl.u32 %v6505, 7
        %v6507 = vsub.s32 0, %v6506
        %v6508 = vrot.slane %v6504, %v6507
        %v6509 = vmul.f32 %v6184, %v6508
        %v6510 = vmul.f32 %v6185, %v6508
        %v6511 = vmul.f32 %v6186, %v6508
        %v6512 = vmul.f32 %v6187, %v6508
        %v6513 = vmul.f32 %v6188, %v6508
        %v6514 = vmul.f32 %v6189, %v6508
        %v6515 = vmul.f32 %v6190, %v6508
        %v6516 = vmul.f32 %v6191, %v6508
        %v6517 = vmul.f32 %v6192, %v6508
        %v6518 = vmul.f32 %v6193, %v6508
        %v6519 = vmul.f32 %v6194, %v6508
        %v6520 = vmul.f32 %v6195, %v6508
        %v6521 = vmul.f32 %v6196, %v6508
        %v6522 = vmul.f32 %v6197, %v6508
        %v6523 = vmul.f32 %v6198, %v6508
        %v6524 = vmul.f32 %v6199, %v6508
        %v6525 = vmul.f32 %v6200, %v6508
        %v6526 = vmul.f32 %v6201, %v6508
        %v6527 = vmul.f32 %v6202, %v6508
        %v6528 = vmul.f32 %v6203, %v6508
        %v6529 = vmul.f32 %v6204, %v6508
        %v6530 = vmul.f32 %v6205, %v6508
        %v6531 = vmul.f32 %v6206, %v6508
        %v6532 = vmul.f32 %v6207, %v6508
        %v6533 = vmul.f32 %v6208, %v6508
        %v6534 = vmul.f32 %v6209, %v6508
        %v6535 = vmul.f32 %v6210, %v6508
        %v6536 = vmul.f32 %v6211, %v6508
        %v6537 = vmul.f32 %v6212, %v6508
        %v6538 = vmul.f32 %v6213, %v6508
        %v6539 = vmul.f32 %v6214, %v6508
        %v6540 = vmul.f32 %v6215, %v6508
        %v6541 = vadd.f32 %v6472, %v6509
        %v6542 = vadd.f32 %v6473, %v6510
        %v6543 = vadd.f32 %v6474, %v6511
        %v6544 = vadd.f32 %v6475, %v6512
        %v6545 = vadd.f32 %v6476, %v6513
        %v6546 = vadd.f32 %v6477, %v6514
        %v6547 = vadd.f32 %v6478, %v6515
        %v6548 = vadd.f32 %v6479, %v6516
        %v6549 = vadd.f32 %v6480, %v6517
        %v6550 = vadd.f32 %v6481, %v6518
        %v6551 = vadd.f32 %v6482, %v6519
        %v6552 = vadd.f32 %v6483, %v6520
        %v6553 = vadd.f32 %v6484, %v6521
        %v6554 = vadd.f32 %v6485, %v6522
        %v6555 = vadd.f32 %v6486, %v6523
        %v6556 = vadd.f32 %v6487, %v6524
        %v6557 = vadd.f32 %v6488, %v6525
        %v6558 = vadd.f32 %v6489, %v6526
        %v6559 = vadd.f32 %v6490, %v6527
        %v6560 = vadd.f32 %v6491, %v6528
        %v6561 = vadd.f32 %v6492, %v6529
        %v6562 = vadd.f32 %v6493, %v6530
        %v6563 = vadd.f32 %v6494, %v6531
        %v6564 = vadd.f32 %v6495, %v6532
        %v6565 = vadd.f32 %v6496, %v6533
        %v6566 = vadd.f32 %v6497, %v6534
        %v6567 = vadd.f32 %v6498, %v6535
        %v6568 = vadd.f32 %v6499, %v6536
        %v6569 = vadd.f32 %v6500, %v6537
        %v6570 = vadd.f32 %v6501, %v6538
        %v6571 = vadd.f32 %v6502, %v6539
        %v6572 = vadd.f32 %v6503, %v6540
        %v6573 = vld [vmem:[#allocation6 + $0x27] sm:$0x1]
        %v6574 = vlaneseq
        %v6575 = vshrl.u32 %v6574, 7
        %v6576 = vsub.s32 0, %v6575
        %v6577 = vrot.slane %v6573, %v6576
        %v6578 = vmul.f32 %v6190, %v6577
        %v6579 = vmul.f32 %v6191, %v6577
        %v6580 = vmul.f32 %v6192, %v6577
        %v6581 = vmul.f32 %v6193, %v6577
        %v6582 = vmul.f32 %v6194, %v6577
        %v6583 = vmul.f32 %v6195, %v6577
        %v6584 = vmul.f32 %v6196, %v6577
        %v6585 = vmul.f32 %v6197, %v6577
        %v6586 = vmul.f32 %v6198, %v6577
        %v6587 = vmul.f32 %v6199, %v6577
        %v6588 = vmul.f32 %v6200, %v6577
        %v6589 = vmul.f32 %v6201, %v6577
        %v6590 = vmul.f32 %v6202, %v6577
        %v6591 = vmul.f32 %v6203, %v6577
        %v6592 = vmul.f32 %v6204, %v6577
        %v6593 = vmul.f32 %v6205, %v6577
        %v6594 = vmul.f32 %v6206, %v6577
        %v6595 = vmul.f32 %v6207, %v6577
        %v6596 = vmul.f32 %v6208, %v6577
        %v6597 = vmul.f32 %v6209, %v6577
        %v6598 = vmul.f32 %v6210, %v6577
        %v6599 = vmul.f32 %v6211, %v6577
        %v6600 = vmul.f32 %v6212, %v6577
        %v6601 = vmul.f32 %v6213, %v6577
        %v6602 = vmul.f32 %v6214, %v6577
        %v6603 = vmul.f32 %v6215, %v6577
        %v6604 = vmul.f32 %v6216, %v6577
        %v6605 = vmul.f32 %v6217, %v6577
        %v6606 = vmul.f32 %v6218, %v6577
        %v6607 = vmul.f32 %v6219, %v6577
        %v6608 = vmul.f32 %v6220, %v6577
        %v6609 = vmul.f32 %v6221, %v6577
        %v6610 = vadd.f32 %v6541, %v6578
        %v6611 = vadd.f32 %v6542, %v6579
        %v6612 = vadd.f32 %v6543, %v6580
        %v6613 = vadd.f32 %v6544, %v6581
        %v6614 = vadd.f32 %v6545, %v6582
        %v6615 = vadd.f32 %v6546, %v6583
        %v6616 = vadd.f32 %v6547, %v6584
        %v6617 = vadd.f32 %v6548, %v6585
        %v6618 = vadd.f32 %v6549, %v6586
        %v6619 = vadd.f32 %v6550, %v6587
        %v6620 = vadd.f32 %v6551, %v6588
        %v6621 = vadd.f32 %v6552, %v6589
        %v6622 = vadd.f32 %v6553, %v6590
        %v6623 = vadd.f32 %v6554, %v6591
        %v6624 = vadd.f32 %v6555, %v6592
        %v6625 = vadd.f32 %v6556, %v6593
        %v6626 = vadd.f32 %v6557, %v6594
        %v6627 = vadd.f32 %v6558, %v6595
        %v6628 = vadd.f32 %v6559, %v6596
        %v6629 = vadd.f32 %v6560, %v6597
        %v6630 = vadd.f32 %v6561, %v6598
        %v6631 = vadd.f32 %v6562, %v6599
        %v6632 = vadd.f32 %v6563, %v6600
        %v6633 = vadd.f32 %v6564, %v6601
        %v6634 = vadd.f32 %v6565, %v6602
        %v6635 = vadd.f32 %v6566, %v6603
        %v6636 = vadd.f32 %v6567, %v6604
        %v6637 = vadd.f32 %v6568, %v6605
        %v6638 = vadd.f32 %v6569, %v6606
        %v6639 = vadd.f32 %v6570, %v6607
        %v6640 = vadd.f32 %v6571, %v6608
        %v6641 = vadd.f32 %v6572, %v6609
        %v6642 = vld [vmem:[#allocation6 + $0x2e] sm:$0x1]
        %v6643 = vlaneseq
        %v6644 = vshrl.u32 %v6643, 7
        %v6645 = vsub.s32 0, %v6644
        %v6646 = vrot.slane %v6642, %v6645
        %v6647 = vmul.f32 %v6196, %v6646
        %v6648 = vmul.f32 %v6197, %v6646
        %v6649 = vmul.f32 %v6198, %v6646
        %v6650 = vmul.f32 %v6199, %v6646
        %v6651 = vmul.f32 %v6200, %v6646
        %v6652 = vmul.f32 %v6201, %v6646
        %v6653 = vmul.f32 %v6202, %v6646
        %v6654 = vmul.f32 %v6203, %v6646
        %v6655 = vmul.f32 %v6204, %v6646
        %v6656 = vmul.f32 %v6205, %v6646
        %v6657 = vmul.f32 %v6206, %v6646
        %v6658 = vmul.f32 %v6207, %v6646
        %v6659 = vmul.f32 %v6208, %v6646
        %v6660 = vmul.f32 %v6209, %v6646
        %v6661 = vmul.f32 %v6210, %v6646
        %v6662 = vmul.f32 %v6211, %v6646
        %v6663 = vmul.f32 %v6212, %v6646
        %v6664 = vmul.f32 %v6213, %v6646
        %v6665 = vmul.f32 %v6214, %v6646
        %v6666 = vmul.f32 %v6215, %v6646
        %v6667 = vmul.f32 %v6216, %v6646
        %v6668 = vmul.f32 %v6217, %v6646
        %v6669 = vmul.f32 %v6218, %v6646
        %v6670 = vmul.f32 %v6219, %v6646
        %v6671 = vmul.f32 %v6220, %v6646
        %v6672 = vmul.f32 %v6221, %v6646
        %v6673 = vmul.f32 %v6222, %v6646
        %v6674 = vmul.f32 %v6223, %v6646
        %v6675 = vmul.f32 %v6224, %v6646
        %v6676 = vmul.f32 %v6225, %v6646
        %v6677 = vmul.f32 %v6226, %v6646
        %v6678 = vmul.f32 %v6227, %v6646
        %v6679 = vadd.f32 %v6610, %v6647
        %v6680 = vadd.f32 %v6611, %v6648
        %v6681 = vadd.f32 %v6612, %v6649
        %v6682 = vadd.f32 %v6613, %v6650
        %v6683 = vadd.f32 %v6614, %v6651
        %v6684 = vadd.f32 %v6615, %v6652
        %v6685 = vadd.f32 %v6616, %v6653
        %v6686 = vadd.f32 %v6617, %v6654
        %v6687 = vadd.f32 %v6618, %v6655
        %v6688 = vadd.f32 %v6619, %v6656
        %v6689 = vadd.f32 %v6620, %v6657
        %v6690 = vadd.f32 %v6621, %v6658
        %v6691 = vadd.f32 %v6622, %v6659
        %v6692 = vadd.f32 %v6623, %v6660
        %v6693 = vadd.f32 %v6624, %v6661
        %v6694 = vadd.f32 %v6625, %v6662
        %v6695 = vadd.f32 %v6626, %v6663
        %v6696 = vadd.f32 %v6627, %v6664
        %v6697 = vadd.f32 %v6628, %v6665
        %v6698 = vadd.f32 %v6629, %v6666
        %v6699 = vadd.f32 %v6630, %v6667
        %v6700 = vadd.f32 %v6631, %v6668
        %v6701 = vadd.f32 %v6632, %v6669
        %v6702 = vadd.f32 %v6633, %v6670
        %v6703 = vadd.f32 %v6634, %v6671
        %v6704 = vadd.f32 %v6635, %v6672
        %v6705 = vadd.f32 %v6636, %v6673
        %v6706 = vadd.f32 %v6637, %v6674
        %v6707 = vadd.f32 %v6638, %v6675
        %v6708 = vadd.f32 %v6639, %v6676
        %v6709 = vadd.f32 %v6640, %v6677
        %v6710 = vadd.f32 %v6641, %v6678
        %v6711 = vld [vmem:[#allocation3 + $0x16] sm:$0xff]
        %v6712 = vld [vmem:[#allocation3 + $0x1e] sm:$0xff]
        %v6713 = vld [vmem:[#allocation3 + $0x46] sm:$0xff]
        %v6714 = vld [vmem:[#allocation3 + $0x4e] sm:$0xff]
        %v6715 = vld [vmem:[#allocation3 + $0x76] sm:$0xff]
        %v6716 = vld [vmem:[#allocation3 + $0x7e] sm:$0xff]
        %v6717 = vld [vmem:[#allocation3 + $0xa6] sm:$0xff]
        %v6718 = vld [vmem:[#allocation3 + $0xae] sm:$0xff]
        %v6719 = vld [vmem:[#allocation3 + $0xd6] sm:$0xff]
        %v6720 = vld [vmem:[#allocation3 + $0xde] sm:$0xff]
        %v6721 = vld [vmem:[#allocation3 + $0x106] sm:$0xff]
        %v6722 = vld [vmem:[#allocation3 + $0x10e] sm:$0xff]
        %v6723 = vld [vmem:[#allocation3 + $0x136] sm:$0xff]
        %v6724 = vld [vmem:[#allocation3 + $0x13e] sm:$0xff]
        %v6725 = vld [vmem:[#allocation3 + $0x166] sm:$0xff]
        %v6726 = vld [vmem:[#allocation3 + $0x16e] sm:$0xff]
        %v6727 = vld [vmem:[#allocation3 + $0x196] sm:$0xff]
        %v6728 = vld [vmem:[#allocation3 + $0x19e] sm:$0xff]
        %v6729 = vld [vmem:[#allocation3 + $0x1c6] sm:$0xff]
        %v6730 = vld [vmem:[#allocation3 + $0x1ce] sm:$0xff]
        %v6731 = vld [vmem:[#allocation3 + $0x1f6] sm:$0xff]
        %v6732 = vld [vmem:[#allocation3 + $0x1fe] sm:$0xff]
        %v6733 = vld [vmem:[#allocation3 + $0x226] sm:$0xff]
        %v6734 = vld [vmem:[#allocation3 + $0x22e] sm:$0xff]
        %v6735 = vld [vmem:[#allocation3 + $0x256] sm:$0xff]
        %v6736 = vld [vmem:[#allocation3 + $0x25e] sm:$0xff]
        %v6737 = vld [vmem:[#allocation3 + $0x286] sm:$0xff]
        %v6738 = vld [vmem:[#allocation3 + $0x28e] sm:$0xff]
        %v6739 = vld [vmem:[#allocation3 + $0x2b6] sm:$0xff]
        %v6740 = vld [vmem:[#allocation3 + $0x2be] sm:$0xff]
        %v6741 = vld [vmem:[#allocation3 + $0x2e6] sm:$0xff]
        %v6742 = vld [vmem:[#allocation3 + $0x2ee] sm:$0xff]
        %v6743 = vld [vmem:[#allocation3 + $0x316] sm:$0xff]
        %v6744 = vld [vmem:[#allocation3 + $0x31e] sm:$0xff]
        %v6745 = vld [vmem:[#allocation3 + $0x346] sm:$0xff]
        %v6746 = vld [vmem:[#allocation3 + $0x34e] sm:$0xff]
        %v6747 = vld [vmem:[#allocation3 + $0x376] sm:$0xff]
        %v6748 = vld [vmem:[#allocation3 + $0x37e] sm:$0xff]
        %v6749 = vld [vmem:[#allocation3 + $0x3a6] sm:$0xff]
        %v6750 = vld [vmem:[#allocation3 + $0x3ae] sm:$0xff]
        %v6751 = vld [vmem:[#allocation3 + $0x3d6] sm:$0xff]
        %v6752 = vld [vmem:[#allocation3 + $0x3de] sm:$0xff]
        %v6753 = vld [vmem:[#allocation3 + $0x406] sm:$0xff]
        %v6754 = vld [vmem:[#allocation3 + $0x40e] sm:$0xff]
        %v6755 = vld [vmem:[#allocation3 + $0x436] sm:$0xff]
        %v6756 = vld [vmem:[#allocation3 + $0x43e] sm:$0xff]
        %v6757 = vld [vmem:[#allocation3 + $0x466] sm:$0xff]
        %v6758 = vld [vmem:[#allocation3 + $0x46e] sm:$0xff]
        %v6759 = vld [vmem:[#allocation3 + $0x496] sm:$0xff]
        %v6760 = vld [vmem:[#allocation3 + $0x49e] sm:$0xff]
        %v6761 = vld [vmem:[#allocation3 + $0x4c6] sm:$0xff]
        %v6762 = vld [vmem:[#allocation3 + $0x4ce] sm:$0xff]
        %v6763 = vld [vmem:[#allocation3 + $0x4f6] sm:$0xff]
        %v6764 = vld [vmem:[#allocation3 + $0x4fe] sm:$0xff]
        %v6765 = vld [vmem:[#allocation3 + $0x526] sm:$0xff]
        %v6766 = vld [vmem:[#allocation3 + $0x52e] sm:$0xff]
        %v6767 = vld [vmem:[#allocation3 + $0x556] sm:$0xff]
        %v6768 = vld [vmem:[#allocation3 + $0x55e] sm:$0xff]
        %v6769 = vld [vmem:[#allocation3 + $0x586] sm:$0xff]
        %v6770 = vld [vmem:[#allocation3 + $0x58e] sm:$0xff]
        %v6771 = vld [vmem:[#allocation3 + $0x5b6] sm:$0xff]
        %v6772 = vld [vmem:[#allocation3 + $0x5be] sm:$0xff]
        %v6773 = vld [vmem:[#allocation3 + $0x5e6] sm:$0xff]
        %v6774 = vld [vmem:[#allocation3 + $0x5ee] sm:$0xff]
        %v6775 = vld [vmem:[#allocation3 + $0x616] sm:$0xff]
        %v6776 = vld [vmem:[#allocation3 + $0x61e] sm:$0xff]
        %v6777 = vld [vmem:[#allocation3 + $0x646] sm:$0xff]
        %v6778 = vld [vmem:[#allocation3 + $0x64e] sm:$0xff]
        %v6779 = vld [vmem:[#allocation6 + $0x5] sm:$0x1]
        %v6780 = vlaneseq
        %v6781 = vshrl.u32 %v6780, 7
        %v6782 = vsub.s32 0, %v6781
        %v6783 = vrot.slane %v6779, %v6782
        %v6784 = vmul.f32 %v6711, %v6783
        %v6785 = vmul.f32 %v6712, %v6783
        %v6786 = vmul.f32 %v6713, %v6783
        %v6787 = vmul.f32 %v6714, %v6783
        %v6788 = vmul.f32 %v6715, %v6783
        %v6789 = vmul.f32 %v6716, %v6783
        %v6790 = vmul.f32 %v6717, %v6783
        %v6791 = vmul.f32 %v6718, %v6783
        %v6792 = vmul.f32 %v6719, %v6783
        %v6793 = vmul.f32 %v6720, %v6783
        %v6794 = vmul.f32 %v6721, %v6783
        %v6795 = vmul.f32 %v6722, %v6783
        %v6796 = vmul.f32 %v6723, %v6783
        %v6797 = vmul.f32 %v6724, %v6783
        %v6798 = vmul.f32 %v6725, %v6783
        %v6799 = vmul.f32 %v6726, %v6783
        %v6800 = vmul.f32 %v6727, %v6783
        %v6801 = vmul.f32 %v6728, %v6783
        %v6802 = vmul.f32 %v6729, %v6783
        %v6803 = vmul.f32 %v6730, %v6783
        %v6804 = vmul.f32 %v6731, %v6783
        %v6805 = vmul.f32 %v6732, %v6783
        %v6806 = vmul.f32 %v6733, %v6783
        %v6807 = vmul.f32 %v6734, %v6783
        %v6808 = vmul.f32 %v6735, %v6783
        %v6809 = vmul.f32 %v6736, %v6783
        %v6810 = vmul.f32 %v6737, %v6783
        %v6811 = vmul.f32 %v6738, %v6783
        %v6812 = vmul.f32 %v6739, %v6783
        %v6813 = vmul.f32 %v6740, %v6783
        %v6814 = vmul.f32 %v6741, %v6783
        %v6815 = vmul.f32 %v6742, %v6783
        %v6816 = vadd.f32 %v6679, %v6784
        %v6817 = vadd.f32 %v6680, %v6785
        %v6818 = vadd.f32 %v6681, %v6786
        %v6819 = vadd.f32 %v6682, %v6787
        %v6820 = vadd.f32 %v6683, %v6788
        %v6821 = vadd.f32 %v6684, %v6789
        %v6822 = vadd.f32 %v6685, %v6790
        %v6823 = vadd.f32 %v6686, %v6791
        %v6824 = vadd.f32 %v6687, %v6792
        %v6825 = vadd.f32 %v6688, %v6793
        %v6826 = vadd.f32 %v6689, %v6794
        %v6827 = vadd.f32 %v6690, %v6795
        %v6828 = vadd.f32 %v6691, %v6796
        %v6829 = vadd.f32 %v6692, %v6797
        %v6830 = vadd.f32 %v6693, %v6798
        %v6831 = vadd.f32 %v6694, %v6799
        %v6832 = vadd.f32 %v6695, %v6800
        %v6833 = vadd.f32 %v6696, %v6801
        %v6834 = vadd.f32 %v6697, %v6802
        %v6835 = vadd.f32 %v6698, %v6803
        %v6836 = vadd.f32 %v6699, %v6804
        %v6837 = vadd.f32 %v6700, %v6805
        %v6838 = vadd.f32 %v6701, %v6806
        %v6839 = vadd.f32 %v6702, %v6807
        %v6840 = vadd.f32 %v6703, %v6808
        %v6841 = vadd.f32 %v6704, %v6809
        %v6842 = vadd.f32 %v6705, %v6810
        %v6843 = vadd.f32 %v6706, %v6811
        %v6844 = vadd.f32 %v6707, %v6812
        %v6845 = vadd.f32 %v6708, %v6813
        %v6846 = vadd.f32 %v6709, %v6814
        %v6847 = vadd.f32 %v6710, %v6815
        %v6848 = vld [vmem:[#allocation6 + $0xc] sm:$0x1]
        %v6849 = vlaneseq
        %v6850 = vshrl.u32 %v6849, 7
        %v6851 = vsub.s32 0, %v6850
        %v6852 = vrot.slane %v6848, %v6851
        %v6853 = vmul.f32 %v6717, %v6852
        %v6854 = vmul.f32 %v6718, %v6852
        %v6855 = vmul.f32 %v6719, %v6852
        %v6856 = vmul.f32 %v6720, %v6852
        %v6857 = vmul.f32 %v6721, %v6852
        %v6858 = vmul.f32 %v6722, %v6852
        %v6859 = vmul.f32 %v6723, %v6852
        %v6860 = vmul.f32 %v6724, %v6852
        %v6861 = vmul.f32 %v6725, %v6852
        %v6862 = vmul.f32 %v6726, %v6852
        %v6863 = vmul.f32 %v6727, %v6852
        %v6864 = vmul.f32 %v6728, %v6852
        %v6865 = vmul.f32 %v6729, %v6852
        %v6866 = vmul.f32 %v6730, %v6852
        %v6867 = vmul.f32 %v6731, %v6852
        %v6868 = vmul.f32 %v6732, %v6852
        %v6869 = vmul.f32 %v6733, %v6852
        %v6870 = vmul.f32 %v6734, %v6852
        %v6871 = vmul.f32 %v6735, %v6852
        %v6872 = vmul.f32 %v6736, %v6852
        %v6873 = vmul.f32 %v6737, %v6852
        %v6874 = vmul.f32 %v6738, %v6852
        %v6875 = vmul.f32 %v6739, %v6852
        %v6876 = vmul.f32 %v6740, %v6852
        %v6877 = vmul.f32 %v6741, %v6852
        %v6878 = vmul.f32 %v6742, %v6852
        %v6879 = vmul.f32 %v6743, %v6852
        %v6880 = vmul.f32 %v6744, %v6852
        %v6881 = vmul.f32 %v6745, %v6852
        %v6882 = vmul.f32 %v6746, %v6852
        %v6883 = vmul.f32 %v6747, %v6852
        %v6884 = vmul.f32 %v6748, %v6852
        %v6885 = vadd.f32 %v6816, %v6853
        %v6886 = vadd.f32 %v6817, %v6854
        %v6887 = vadd.f32 %v6818, %v6855
        %v6888 = vadd.f32 %v6819, %v6856
        %v6889 = vadd.f32 %v6820, %v6857
        %v6890 = vadd.f32 %v6821, %v6858
        %v6891 = vadd.f32 %v6822, %v6859
        %v6892 = vadd.f32 %v6823, %v6860
        %v6893 = vadd.f32 %v6824, %v6861
        %v6894 = vadd.f32 %v6825, %v6862
        %v6895 = vadd.f32 %v6826, %v6863
        %v6896 = vadd.f32 %v6827, %v6864
        %v6897 = vadd.f32 %v6828, %v6865
        %v6898 = vadd.f32 %v6829, %v6866
        %v6899 = vadd.f32 %v6830, %v6867
        %v6900 = vadd.f32 %v6831, %v6868
        %v6901 = vadd.f32 %v6832, %v6869
        %v6902 = vadd.f32 %v6833, %v6870
        %v6903 = vadd.f32 %v6834, %v6871
        %v6904 = vadd.f32 %v6835, %v6872
        %v6905 = vadd.f32 %v6836, %v6873
        %v6906 = vadd.f32 %v6837, %v6874
        %v6907 = vadd.f32 %v6838, %v6875
        %v6908 = vadd.f32 %v6839, %v6876
        %v6909 = vadd.f32 %v6840, %v6877
        %v6910 = vadd.f32 %v6841, %v6878
        %v6911 = vadd.f32 %v6842, %v6879
        %v6912 = vadd.f32 %v6843, %v6880
        %v6913 = vadd.f32 %v6844, %v6881
        %v6914 = vadd.f32 %v6845, %v6882
        %v6915 = vadd.f32 %v6846, %v6883
        %v6916 = vadd.f32 %v6847, %v6884
        %v6917 = vld [vmem:[#allocation6 + $0x13] sm:$0x1]
        %v6918 = vlaneseq
        %v6919 = vshrl.u32 %v6918, 7
        %v6920 = vsub.s32 0, %v6919
        %v6921 = vrot.slane %v6917, %v6920
        %v6922 = vmul.f32 %v6723, %v6921
        %v6923 = vmul.f32 %v6724, %v6921
        %v6924 = vmul.f32 %v6725, %v6921
        %v6925 = vmul.f32 %v6726, %v6921
        %v6926 = vmul.f32 %v6727, %v6921
        %v6927 = vmul.f32 %v6728, %v6921
        %v6928 = vmul.f32 %v6729, %v6921
        %v6929 = vmul.f32 %v6730, %v6921
        %v6930 = vmul.f32 %v6731, %v6921
        %v6931 = vmul.f32 %v6732, %v6921
        %v6932 = vmul.f32 %v6733, %v6921
        %v6933 = vmul.f32 %v6734, %v6921
        %v6934 = vmul.f32 %v6735, %v6921
        %v6935 = vmul.f32 %v6736, %v6921
        %v6936 = vmul.f32 %v6737, %v6921
        %v6937 = vmul.f32 %v6738, %v6921
        %v6938 = vmul.f32 %v6739, %v6921
        %v6939 = vmul.f32 %v6740, %v6921
        %v6940 = vmul.f32 %v6741, %v6921
        %v6941 = vmul.f32 %v6742, %v6921
        %v6942 = vmul.f32 %v6743, %v6921
        %v6943 = vmul.f32 %v6744, %v6921
        %v6944 = vmul.f32 %v6745, %v6921
        %v6945 = vmul.f32 %v6746, %v6921
        %v6946 = vmul.f32 %v6747, %v6921
        %v6947 = vmul.f32 %v6748, %v6921
        %v6948 = vmul.f32 %v6749, %v6921
        %v6949 = vmul.f32 %v6750, %v6921
        %v6950 = vmul.f32 %v6751, %v6921
        %v6951 = vmul.f32 %v6752, %v6921
        %v6952 = vmul.f32 %v6753, %v6921
        %v6953 = vmul.f32 %v6754, %v6921
        %v6954 = vadd.f32 %v6885, %v6922
        %v6955 = vadd.f32 %v6886, %v6923
        %v6956 = vadd.f32 %v6887, %v6924
        %v6957 = vadd.f32 %v6888, %v6925
        %v6958 = vadd.f32 %v6889, %v6926
        %v6959 = vadd.f32 %v6890, %v6927
        %v6960 = vadd.f32 %v6891, %v6928
        %v6961 = vadd.f32 %v6892, %v6929
        %v6962 = vadd.f32 %v6893, %v6930
        %v6963 = vadd.f32 %v6894, %v6931
        %v6964 = vadd.f32 %v6895, %v6932
        %v6965 = vadd.f32 %v6896, %v6933
        %v6966 = vadd.f32 %v6897, %v6934
        %v6967 = vadd.f32 %v6898, %v6935
        %v6968 = vadd.f32 %v6899, %v6936
        %v6969 = vadd.f32 %v6900, %v6937
        %v6970 = vadd.f32 %v6901, %v6938
        %v6971 = vadd.f32 %v6902, %v6939
        %v6972 = vadd.f32 %v6903, %v6940
        %v6973 = vadd.f32 %v6904, %v6941
        %v6974 = vadd.f32 %v6905, %v6942
        %v6975 = vadd.f32 %v6906, %v6943
        %v6976 = vadd.f32 %v6907, %v6944
        %v6977 = vadd.f32 %v6908, %v6945
        %v6978 = vadd.f32 %v6909, %v6946
        %v6979 = vadd.f32 %v6910, %v6947
        %v6980 = vadd.f32 %v6911, %v6948
        %v6981 = vadd.f32 %v6912, %v6949
        %v6982 = vadd.f32 %v6913, %v6950
        %v6983 = vadd.f32 %v6914, %v6951
        %v6984 = vadd.f32 %v6915, %v6952
        %v6985 = vadd.f32 %v6916, %v6953
        %v6986 = vld [vmem:[#allocation6 + $0x1a] sm:$0x1]
        %v6987 = vlaneseq
        %v6988 = vshrl.u32 %v6987, 7
        %v6989 = vsub.s32 0, %v6988
        %v6990 = vrot.slane %v6986, %v6989
        %v6991 = vmul.f32 %v6729, %v6990
        %v6992 = vmul.f32 %v6730, %v6990
        %v6993 = vmul.f32 %v6731, %v6990
        %v6994 = vmul.f32 %v6732, %v6990
        %v6995 = vmul.f32 %v6733, %v6990
        %v6996 = vmul.f32 %v6734, %v6990
        %v6997 = vmul.f32 %v6735, %v6990
        %v6998 = vmul.f32 %v6736, %v6990
        %v6999 = vmul.f32 %v6737, %v6990
        %v7000 = vmul.f32 %v6738, %v6990
        %v7001 = vmul.f32 %v6739, %v6990
        %v7002 = vmul.f32 %v6740, %v6990
        %v7003 = vmul.f32 %v6741, %v6990
        %v7004 = vmul.f32 %v6742, %v6990
        %v7005 = vmul.f32 %v6743, %v6990
        %v7006 = vmul.f32 %v6744, %v6990
        %v7007 = vmul.f32 %v6745, %v6990
        %v7008 = vmul.f32 %v6746, %v6990
        %v7009 = vmul.f32 %v6747, %v6990
        %v7010 = vmul.f32 %v6748, %v6990
        %v7011 = vmul.f32 %v6749, %v6990
        %v7012 = vmul.f32 %v6750, %v6990
        %v7013 = vmul.f32 %v6751, %v6990
        %v7014 = vmul.f32 %v6752, %v6990
        %v7015 = vmul.f32 %v6753, %v6990
        %v7016 = vmul.f32 %v6754, %v6990
        %v7017 = vmul.f32 %v6755, %v6990
        %v7018 = vmul.f32 %v6756, %v6990
        %v7019 = vmul.f32 %v6757, %v6990
        %v7020 = vmul.f32 %v6758, %v6990
        %v7021 = vmul.f32 %v6759, %v6990
        %v7022 = vmul.f32 %v6760, %v6990
        %v7023 = vadd.f32 %v6954, %v6991
        %v7024 = vadd.f32 %v6955, %v6992
        %v7025 = vadd.f32 %v6956, %v6993
        %v7026 = vadd.f32 %v6957, %v6994
        %v7027 = vadd.f32 %v6958, %v6995
        %v7028 = vadd.f32 %v6959, %v6996
        %v7029 = vadd.f32 %v6960, %v6997
        %v7030 = vadd.f32 %v6961, %v6998
        %v7031 = vadd.f32 %v6962, %v6999
        %v7032 = vadd.f32 %v6963, %v7000
        %v7033 = vadd.f32 %v6964, %v7001
        %v7034 = vadd.f32 %v6965, %v7002
        %v7035 = vadd.f32 %v6966, %v7003
        %v7036 = vadd.f32 %v6967, %v7004
        %v7037 = vadd.f32 %v6968, %v7005
        %v7038 = vadd.f32 %v6969, %v7006
        %v7039 = vadd.f32 %v6970, %v7007
        %v7040 = vadd.f32 %v6971, %v7008
        %v7041 = vadd.f32 %v6972, %v7009
        %v7042 = vadd.f32 %v6973, %v7010
        %v7043 = vadd.f32 %v6974, %v7011
        %v7044 = vadd.f32 %v6975, %v7012
        %v7045 = vadd.f32 %v6976, %v7013
        %v7046 = vadd.f32 %v6977, %v7014
        %v7047 = vadd.f32 %v6978, %v7015
        %v7048 = vadd.f32 %v6979, %v7016
        %v7049 = vadd.f32 %v6980, %v7017
        %v7050 = vadd.f32 %v6981, %v7018
        %v7051 = vadd.f32 %v6982, %v7019
        %v7052 = vadd.f32 %v6983, %v7020
        %v7053 = vadd.f32 %v6984, %v7021
        %v7054 = vadd.f32 %v6985, %v7022
        %v7055 = vld [vmem:[#allocation6 + $0x21] sm:$0x1]
        %v7056 = vlaneseq
        %v7057 = vshrl.u32 %v7056, 7
        %v7058 = vsub.s32 0, %v7057
        %v7059 = vrot.slane %v7055, %v7058
        %v7060 = vmul.f32 %v6735, %v7059
        %v7061 = vmul.f32 %v6736, %v7059
        %v7062 = vmul.f32 %v6737, %v7059
        %v7063 = vmul.f32 %v6738, %v7059
        %v7064 = vmul.f32 %v6739, %v7059
        %v7065 = vmul.f32 %v6740, %v7059
        %v7066 = vmul.f32 %v6741, %v7059
        %v7067 = vmul.f32 %v6742, %v7059
        %v7068 = vmul.f32 %v6743, %v7059
        %v7069 = vmul.f32 %v6744, %v7059
        %v7070 = vmul.f32 %v6745, %v7059
        %v7071 = vmul.f32 %v6746, %v7059
        %v7072 = vmul.f32 %v6747, %v7059
        %v7073 = vmul.f32 %v6748, %v7059
        %v7074 = vmul.f32 %v6749, %v7059
        %v7075 = vmul.f32 %v6750, %v7059
        %v7076 = vmul.f32 %v6751, %v7059
        %v7077 = vmul.f32 %v6752, %v7059
        %v7078 = vmul.f32 %v6753, %v7059
        %v7079 = vmul.f32 %v6754, %v7059
        %v7080 = vmul.f32 %v6755, %v7059
        %v7081 = vmul.f32 %v6756, %v7059
        %v7082 = vmul.f32 %v6757, %v7059
        %v7083 = vmul.f32 %v6758, %v7059
        %v7084 = vmul.f32 %v6759, %v7059
        %v7085 = vmul.f32 %v6760, %v7059
        %v7086 = vmul.f32 %v6761, %v7059
        %v7087 = vmul.f32 %v6762, %v7059
        %v7088 = vmul.f32 %v6763, %v7059
        %v7089 = vmul.f32 %v6764, %v7059
        %v7090 = vmul.f32 %v6765, %v7059
        %v7091 = vmul.f32 %v6766, %v7059
        %v7092 = vadd.f32 %v7023, %v7060
        %v7093 = vadd.f32 %v7024, %v7061
        %v7094 = vadd.f32 %v7025, %v7062
        %v7095 = vadd.f32 %v7026, %v7063
        %v7096 = vadd.f32 %v7027, %v7064
        %v7097 = vadd.f32 %v7028, %v7065
        %v7098 = vadd.f32 %v7029, %v7066
        %v7099 = vadd.f32 %v7030, %v7067
        %v7100 = vadd.f32 %v7031, %v7068
        %v7101 = vadd.f32 %v7032, %v7069
        %v7102 = vadd.f32 %v7033, %v7070
        %v7103 = vadd.f32 %v7034, %v7071
        %v7104 = vadd.f32 %v7035, %v7072
        %v7105 = vadd.f32 %v7036, %v7073
        %v7106 = vadd.f32 %v7037, %v7074
        %v7107 = vadd.f32 %v7038, %v7075
        %v7108 = vadd.f32 %v7039, %v7076
        %v7109 = vadd.f32 %v7040, %v7077
        %v7110 = vadd.f32 %v7041, %v7078
        %v7111 = vadd.f32 %v7042, %v7079
        %v7112 = vadd.f32 %v7043, %v7080
        %v7113 = vadd.f32 %v7044, %v7081
        %v7114 = vadd.f32 %v7045, %v7082
        %v7115 = vadd.f32 %v7046, %v7083
        %v7116 = vadd.f32 %v7047, %v7084
        %v7117 = vadd.f32 %v7048, %v7085
        %v7118 = vadd.f32 %v7049, %v7086
        %v7119 = vadd.f32 %v7050, %v7087
        %v7120 = vadd.f32 %v7051, %v7088
        %v7121 = vadd.f32 %v7052, %v7089
        %v7122 = vadd.f32 %v7053, %v7090
        %v7123 = vadd.f32 %v7054, %v7091
        %v7124 = vld [vmem:[#allocation6 + $0x28] sm:$0x1]
        %v7125 = vlaneseq
        %v7126 = vshrl.u32 %v7125, 7
        %v7127 = vsub.s32 0, %v7126
        %v7128 = vrot.slane %v7124, %v7127
        %v7129 = vmul.f32 %v6741, %v7128
        %v7130 = vmul.f32 %v6742, %v7128
        %v7131 = vmul.f32 %v6743, %v7128
        %v7132 = vmul.f32 %v6744, %v7128
        %v7133 = vmul.f32 %v6745, %v7128
        %v7134 = vmul.f32 %v6746, %v7128
        %v7135 = vmul.f32 %v6747, %v7128
        %v7136 = vmul.f32 %v6748, %v7128
        %v7137 = vmul.f32 %v6749, %v7128
        %v7138 = vmul.f32 %v6750, %v7128
        %v7139 = vmul.f32 %v6751, %v7128
        %v7140 = vmul.f32 %v6752, %v7128
        %v7141 = vmul.f32 %v6753, %v7128
        %v7142 = vmul.f32 %v6754, %v7128
        %v7143 = vmul.f32 %v6755, %v7128
        %v7144 = vmul.f32 %v6756, %v7128
        %v7145 = vmul.f32 %v6757, %v7128
        %v7146 = vmul.f32 %v6758, %v7128
        %v7147 = vmul.f32 %v6759, %v7128
        %v7148 = vmul.f32 %v6760, %v7128
        %v7149 = vmul.f32 %v6761, %v7128
        %v7150 = vmul.f32 %v6762, %v7128
        %v7151 = vmul.f32 %v6763, %v7128
        %v7152 = vmul.f32 %v6764, %v7128
        %v7153 = vmul.f32 %v6765, %v7128
        %v7154 = vmul.f32 %v6766, %v7128
        %v7155 = vmul.f32 %v6767, %v7128
        %v7156 = vmul.f32 %v6768, %v7128
        %v7157 = vmul.f32 %v6769, %v7128
        %v7158 = vmul.f32 %v6770, %v7128
        %v7159 = vmul.f32 %v6771, %v7128
        %v7160 = vmul.f32 %v6772, %v7128
        %v7161 = vadd.f32 %v7092, %v7129
        %v7162 = vadd.f32 %v7093, %v7130
        %v7163 = vadd.f32 %v7094, %v7131
        %v7164 = vadd.f32 %v7095, %v7132
        %v7165 = vadd.f32 %v7096, %v7133
        %v7166 = vadd.f32 %v7097, %v7134
        %v7167 = vadd.f32 %v7098, %v7135
        %v7168 = vadd.f32 %v7099, %v7136
        %v7169 = vadd.f32 %v7100, %v7137
        %v7170 = vadd.f32 %v7101, %v7138
        %v7171 = vadd.f32 %v7102, %v7139
        %v7172 = vadd.f32 %v7103, %v7140
        %v7173 = vadd.f32 %v7104, %v7141
        %v7174 = vadd.f32 %v7105, %v7142
        %v7175 = vadd.f32 %v7106, %v7143
        %v7176 = vadd.f32 %v7107, %v7144
        %v7177 = vadd.f32 %v7108, %v7145
        %v7178 = vadd.f32 %v7109, %v7146
        %v7179 = vadd.f32 %v7110, %v7147
        %v7180 = vadd.f32 %v7111, %v7148
        %v7181 = vadd.f32 %v7112, %v7149
        %v7182 = vadd.f32 %v7113, %v7150
        %v7183 = vadd.f32 %v7114, %v7151
        %v7184 = vadd.f32 %v7115, %v7152
        %v7185 = vadd.f32 %v7116, %v7153
        %v7186 = vadd.f32 %v7117, %v7154
        %v7187 = vadd.f32 %v7118, %v7155
        %v7188 = vadd.f32 %v7119, %v7156
        %v7189 = vadd.f32 %v7120, %v7157
        %v7190 = vadd.f32 %v7121, %v7158
        %v7191 = vadd.f32 %v7122, %v7159
        %v7192 = vadd.f32 %v7123, %v7160
        %v7193 = vld [vmem:[#allocation6 + $0x2f] sm:$0x1]
        %v7194 = vlaneseq
        %v7195 = vshrl.u32 %v7194, 7
        %v7196 = vsub.s32 0, %v7195
        %v7197 = vrot.slane %v7193, %v7196
        %v7198 = vmul.f32 %v6747, %v7197
        %v7199 = vmul.f32 %v6748, %v7197
        %v7200 = vmul.f32 %v6749, %v7197
        %v7201 = vmul.f32 %v6750, %v7197
        %v7202 = vmul.f32 %v6751, %v7197
        %v7203 = vmul.f32 %v6752, %v7197
        %v7204 = vmul.f32 %v6753, %v7197
        %v7205 = vmul.f32 %v6754, %v7197
        %v7206 = vmul.f32 %v6755, %v7197
        %v7207 = vmul.f32 %v6756, %v7197
        %v7208 = vmul.f32 %v6757, %v7197
        %v7209 = vmul.f32 %v6758, %v7197
        %v7210 = vmul.f32 %v6759, %v7197
        %v7211 = vmul.f32 %v6760, %v7197
        %v7212 = vmul.f32 %v6761, %v7197
        %v7213 = vmul.f32 %v6762, %v7197
        %v7214 = vmul.f32 %v6763, %v7197
        %v7215 = vmul.f32 %v6764, %v7197
        %v7216 = vmul.f32 %v6765, %v7197
        %v7217 = vmul.f32 %v6766, %v7197
        %v7218 = vmul.f32 %v6767, %v7197
        %v7219 = vmul.f32 %v6768, %v7197
        %v7220 = vmul.f32 %v6769, %v7197
        %v7221 = vmul.f32 %v6770, %v7197
        %v7222 = vmul.f32 %v6771, %v7197
        %v7223 = vmul.f32 %v6772, %v7197
        %v7224 = vmul.f32 %v6773, %v7197
        %v7225 = vmul.f32 %v6774, %v7197
        %v7226 = vmul.f32 %v6775, %v7197
        %v7227 = vmul.f32 %v6776, %v7197
        %v7228 = vmul.f32 %v6777, %v7197
        %v7229 = vmul.f32 %v6778, %v7197
        %v7230 = vadd.f32 %v7161, %v7198
        %v7231 = vadd.f32 %v7162, %v7199
        %v7232 = vadd.f32 %v7163, %v7200
        %v7233 = vadd.f32 %v7164, %v7201
        %v7234 = vadd.f32 %v7165, %v7202
        %v7235 = vadd.f32 %v7166, %v7203
        %v7236 = vadd.f32 %v7167, %v7204
        %v7237 = vadd.f32 %v7168, %v7205
        %v7238 = vadd.f32 %v7169, %v7206
        %v7239 = vadd.f32 %v7170, %v7207
        %v7240 = vadd.f32 %v7171, %v7208
        %v7241 = vadd.f32 %v7172, %v7209
        %v7242 = vadd.f32 %v7173, %v7210
        %v7243 = vadd.f32 %v7174, %v7211
        %v7244 = vadd.f32 %v7175, %v7212
        %v7245 = vadd.f32 %v7176, %v7213
        %v7246 = vadd.f32 %v7177, %v7214
        %v7247 = vadd.f32 %v7178, %v7215
        %v7248 = vadd.f32 %v7179, %v7216
        %v7249 = vadd.f32 %v7180, %v7217
        %v7250 = vadd.f32 %v7181, %v7218
        %v7251 = vadd.f32 %v7182, %v7219
        %v7252 = vadd.f32 %v7183, %v7220
        %v7253 = vadd.f32 %v7184, %v7221
        %v7254 = vadd.f32 %v7185, %v7222
        %v7255 = vadd.f32 %v7186, %v7223
        %v7256 = vadd.f32 %v7187, %v7224
        %v7257 = vadd.f32 %v7188, %v7225
        %v7258 = vadd.f32 %v7189, %v7226
        %v7259 = vadd.f32 %v7190, %v7227
        %v7260 = vadd.f32 %v7191, %v7228
        %v7261 = vadd.f32 %v7192, %v7229
        %v7262 = vld [vmem:[#allocation3 + $0x19] sm:$0xff]
        %v7263 = vld [vmem:[#allocation3 + $0x21] sm:$0xff]
        %v7264 = vld [vmem:[#allocation3 + $0x49] sm:$0xff]
        %v7265 = vld [vmem:[#allocation3 + $0x51] sm:$0xff]
        %v7266 = vld [vmem:[#allocation3 + $0x79] sm:$0xff]
        %v7267 = vld [vmem:[#allocation3 + $0x81] sm:$0xff]
        %v7268 = vld [vmem:[#allocation3 + $0xa9] sm:$0xff]
        %v7269 = vld [vmem:[#allocation3 + $0xb1] sm:$0xff]
        %v7270 = vld [vmem:[#allocation3 + $0xd9] sm:$0xff]
        %v7271 = vld [vmem:[#allocation3 + $0xe1] sm:$0xff]
        %v7272 = vld [vmem:[#allocation3 + $0x109] sm:$0xff]
        %v7273 = vld [vmem:[#allocation3 + $0x111] sm:$0xff]
        %v7274 = vld [vmem:[#allocation3 + $0x139] sm:$0xff]
        %v7275 = vld [vmem:[#allocation3 + $0x141] sm:$0xff]
        %v7276 = vld [vmem:[#allocation3 + $0x169] sm:$0xff]
        %v7277 = vld [vmem:[#allocation3 + $0x171] sm:$0xff]
        %v7278 = vld [vmem:[#allocation3 + $0x199] sm:$0xff]
        %v7279 = vld [vmem:[#allocation3 + $0x1a1] sm:$0xff]
        %v7280 = vld [vmem:[#allocation3 + $0x1c9] sm:$0xff]
        %v7281 = vld [vmem:[#allocation3 + $0x1d1] sm:$0xff]
        %v7282 = vld [vmem:[#allocation3 + $0x1f9] sm:$0xff]
        %v7283 = vld [vmem:[#allocation3 + $0x201] sm:$0xff]
        %v7284 = vld [vmem:[#allocation3 + $0x229] sm:$0xff]
        %v7285 = vld [vmem:[#allocation3 + $0x231] sm:$0xff]
        %v7286 = vld [vmem:[#allocation3 + $0x259] sm:$0xff]
        %v7287 = vld [vmem:[#allocation3 + $0x261] sm:$0xff]
        %v7288 = vld [vmem:[#allocation3 + $0x289] sm:$0xff]
        %v7289 = vld [vmem:[#allocation3 + $0x291] sm:$0xff]
        %v7290 = vld [vmem:[#allocation3 + $0x2b9] sm:$0xff]
        %v7291 = vld [vmem:[#allocation3 + $0x2c1] sm:$0xff]
        %v7292 = vld [vmem:[#allocation3 + $0x2e9] sm:$0xff]
        %v7293 = vld [vmem:[#allocation3 + $0x2f1] sm:$0xff]
        %v7294 = vld [vmem:[#allocation3 + $0x319] sm:$0xff]
        %v7295 = vld [vmem:[#allocation3 + $0x321] sm:$0xff]
        %v7296 = vld [vmem:[#allocation3 + $0x349] sm:$0xff]
        %v7297 = vld [vmem:[#allocation3 + $0x351] sm:$0xff]
        %v7298 = vld [vmem:[#allocation3 + $0x379] sm:$0xff]
        %v7299 = vld [vmem:[#allocation3 + $0x381] sm:$0xff]
        %v7300 = vld [vmem:[#allocation3 + $0x3a9] sm:$0xff]
        %v7301 = vld [vmem:[#allocation3 + $0x3b1] sm:$0xff]
        %v7302 = vld [vmem:[#allocation3 + $0x3d9] sm:$0xff]
        %v7303 = vld [vmem:[#allocation3 + $0x3e1] sm:$0xff]
        %v7304 = vld [vmem:[#allocation3 + $0x409] sm:$0xff]
        %v7305 = vld [vmem:[#allocation3 + $0x411] sm:$0xff]
        %v7306 = vld [vmem:[#allocation3 + $0x439] sm:$0xff]
        %v7307 = vld [vmem:[#allocation3 + $0x441] sm:$0xff]
        %v7308 = vld [vmem:[#allocation3 + $0x469] sm:$0xff]
        %v7309 = vld [vmem:[#allocation3 + $0x471] sm:$0xff]
        %v7310 = vld [vmem:[#allocation3 + $0x499] sm:$0xff]
        %v7311 = vld [vmem:[#allocation3 + $0x4a1] sm:$0xff]
        %v7312 = vld [vmem:[#allocation3 + $0x4c9] sm:$0xff]
        %v7313 = vld [vmem:[#allocation3 + $0x4d1] sm:$0xff]
        %v7314 = vld [vmem:[#allocation3 + $0x4f9] sm:$0xff]
        %v7315 = vld [vmem:[#allocation3 + $0x501] sm:$0xff]
        %v7316 = vld [vmem:[#allocation3 + $0x529] sm:$0xff]
        %v7317 = vld [vmem:[#allocation3 + $0x531] sm:$0xff]
        %v7318 = vld [vmem:[#allocation3 + $0x559] sm:$0xff]
        %v7319 = vld [vmem:[#allocation3 + $0x561] sm:$0xff]
        %v7320 = vld [vmem:[#allocation3 + $0x589] sm:$0xff]
        %v7321 = vld [vmem:[#allocation3 + $0x591] sm:$0xff]
        %v7322 = vld [vmem:[#allocation3 + $0x5b9] sm:$0xff]
        %v7323 = vld [vmem:[#allocation3 + $0x5c1] sm:$0xff]
        %v7324 = vld [vmem:[#allocation3 + $0x5e9] sm:$0xff]
        %v7325 = vld [vmem:[#allocation3 + $0x5f1] sm:$0xff]
        %v7326 = vld [vmem:[#allocation3 + $0x619] sm:$0xff]
        %v7327 = vld [vmem:[#allocation3 + $0x621] sm:$0xff]
        %v7328 = vld [vmem:[#allocation3 + $0x649] sm:$0xff]
        %v7329 = vld [vmem:[#allocation3 + $0x651] sm:$0xff]
        %v7330 = vld [vmem:[#allocation6 + $0x6] sm:$0x1]
        %v7331 = vlaneseq
        %v7332 = vshrl.u32 %v7331, 7
        %v7333 = vsub.s32 0, %v7332
        %v7334 = vrot.slane %v7330, %v7333
        %v7335 = vmul.f32 %v7262, %v7334
        %v7336 = vmul.f32 %v7263, %v7334
        %v7337 = vmul.f32 %v7264, %v7334
        %v7338 = vmul.f32 %v7265, %v7334
        %v7339 = vmul.f32 %v7266, %v7334
        %v7340 = vmul.f32 %v7267, %v7334
        %v7341 = vmul.f32 %v7268, %v7334
        %v7342 = vmul.f32 %v7269, %v7334
        %v7343 = vmul.f32 %v7270, %v7334
        %v7344 = vmul.f32 %v7271, %v7334
        %v7345 = vmul.f32 %v7272, %v7334
        %v7346 = vmul.f32 %v7273, %v7334
        %v7347 = vmul.f32 %v7274, %v7334
        %v7348 = vmul.f32 %v7275, %v7334
        %v7349 = vmul.f32 %v7276, %v7334
        %v7350 = vmul.f32 %v7277, %v7334
        %v7351 = vmul.f32 %v7278, %v7334
        %v7352 = vmul.f32 %v7279, %v7334
        %v7353 = vmul.f32 %v7280, %v7334
        %v7354 = vmul.f32 %v7281, %v7334
        %v7355 = vmul.f32 %v7282, %v7334
        %v7356 = vmul.f32 %v7283, %v7334
        %v7357 = vmul.f32 %v7284, %v7334
        %v7358 = vmul.f32 %v7285, %v7334
        %v7359 = vmul.f32 %v7286, %v7334
        %v7360 = vmul.f32 %v7287, %v7334
        %v7361 = vmul.f32 %v7288, %v7334
        %v7362 = vmul.f32 %v7289, %v7334
        %v7363 = vmul.f32 %v7290, %v7334
        %v7364 = vmul.f32 %v7291, %v7334
        %v7365 = vmul.f32 %v7292, %v7334
        %v7366 = vmul.f32 %v7293, %v7334
        %v7367 = vadd.f32 %v7230, %v7335
        %v7368 = vadd.f32 %v7231, %v7336
        %v7369 = vadd.f32 %v7232, %v7337
        %v7370 = vadd.f32 %v7233, %v7338
        %v7371 = vadd.f32 %v7234, %v7339
        %v7372 = vadd.f32 %v7235, %v7340
        %v7373 = vadd.f32 %v7236, %v7341
        %v7374 = vadd.f32 %v7237, %v7342
        %v7375 = vadd.f32 %v7238, %v7343
        %v7376 = vadd.f32 %v7239, %v7344
        %v7377 = vadd.f32 %v7240, %v7345
        %v7378 = vadd.f32 %v7241, %v7346
        %v7379 = vadd.f32 %v7242, %v7347
        %v7380 = vadd.f32 %v7243, %v7348
        %v7381 = vadd.f32 %v7244, %v7349
        %v7382 = vadd.f32 %v7245, %v7350
        %v7383 = vadd.f32 %v7246, %v7351
        %v7384 = vadd.f32 %v7247, %v7352
        %v7385 = vadd.f32 %v7248, %v7353
        %v7386 = vadd.f32 %v7249, %v7354
        %v7387 = vadd.f32 %v7250, %v7355
        %v7388 = vadd.f32 %v7251, %v7356
        %v7389 = vadd.f32 %v7252, %v7357
        %v7390 = vadd.f32 %v7253, %v7358
        %v7391 = vadd.f32 %v7254, %v7359
        %v7392 = vadd.f32 %v7255, %v7360
        %v7393 = vadd.f32 %v7256, %v7361
        %v7394 = vadd.f32 %v7257, %v7362
        %v7395 = vadd.f32 %v7258, %v7363
        %v7396 = vadd.f32 %v7259, %v7364
        %v7397 = vadd.f32 %v7260, %v7365
        %v7398 = vadd.f32 %v7261, %v7366
        %v7399 = vld [vmem:[#allocation6 + $0xd] sm:$0x1]
        %v7400 = vlaneseq
        %v7401 = vshrl.u32 %v7400, 7
        %v7402 = vsub.s32 0, %v7401
        %v7403 = vrot.slane %v7399, %v7402
        %v7404 = vmul.f32 %v7268, %v7403
        %v7405 = vmul.f32 %v7269, %v7403
        %v7406 = vmul.f32 %v7270, %v7403
        %v7407 = vmul.f32 %v7271, %v7403
        %v7408 = vmul.f32 %v7272, %v7403
        %v7409 = vmul.f32 %v7273, %v7403
        %v7410 = vmul.f32 %v7274, %v7403
        %v7411 = vmul.f32 %v7275, %v7403
        %v7412 = vmul.f32 %v7276, %v7403
        %v7413 = vmul.f32 %v7277, %v7403
        %v7414 = vmul.f32 %v7278, %v7403
        %v7415 = vmul.f32 %v7279, %v7403
        %v7416 = vmul.f32 %v7280, %v7403
        %v7417 = vmul.f32 %v7281, %v7403
        %v7418 = vmul.f32 %v7282, %v7403
        %v7419 = vmul.f32 %v7283, %v7403
        %v7420 = vmul.f32 %v7284, %v7403
        %v7421 = vmul.f32 %v7285, %v7403
        %v7422 = vmul.f32 %v7286, %v7403
        %v7423 = vmul.f32 %v7287, %v7403
        %v7424 = vmul.f32 %v7288, %v7403
        %v7425 = vmul.f32 %v7289, %v7403
        %v7426 = vmul.f32 %v7290, %v7403
        %v7427 = vmul.f32 %v7291, %v7403
        %v7428 = vmul.f32 %v7292, %v7403
        %v7429 = vmul.f32 %v7293, %v7403
        %v7430 = vmul.f32 %v7294, %v7403
        %v7431 = vmul.f32 %v7295, %v7403
        %v7432 = vmul.f32 %v7296, %v7403
        %v7433 = vmul.f32 %v7297, %v7403
        %v7434 = vmul.f32 %v7298, %v7403
        %v7435 = vmul.f32 %v7299, %v7403
        %v7436 = vadd.f32 %v7367, %v7404
        %v7437 = vadd.f32 %v7368, %v7405
        %v7438 = vadd.f32 %v7369, %v7406
        %v7439 = vadd.f32 %v7370, %v7407
        %v7440 = vadd.f32 %v7371, %v7408
        %v7441 = vadd.f32 %v7372, %v7409
        %v7442 = vadd.f32 %v7373, %v7410
        %v7443 = vadd.f32 %v7374, %v7411
        %v7444 = vadd.f32 %v7375, %v7412
        %v7445 = vadd.f32 %v7376, %v7413
        %v7446 = vadd.f32 %v7377, %v7414
        %v7447 = vadd.f32 %v7378, %v7415
        %v7448 = vadd.f32 %v7379, %v7416
        %v7449 = vadd.f32 %v7380, %v7417
        %v7450 = vadd.f32 %v7381, %v7418
        %v7451 = vadd.f32 %v7382, %v7419
        %v7452 = vadd.f32 %v7383, %v7420
        %v7453 = vadd.f32 %v7384, %v7421
        %v7454 = vadd.f32 %v7385, %v7422
        %v7455 = vadd.f32 %v7386, %v7423
        %v7456 = vadd.f32 %v7387, %v7424
        %v7457 = vadd.f32 %v7388, %v7425
        %v7458 = vadd.f32 %v7389, %v7426
        %v7459 = vadd.f32 %v7390, %v7427
        %v7460 = vadd.f32 %v7391, %v7428
        %v7461 = vadd.f32 %v7392, %v7429
        %v7462 = vadd.f32 %v7393, %v7430
        %v7463 = vadd.f32 %v7394, %v7431
        %v7464 = vadd.f32 %v7395, %v7432
        %v7465 = vadd.f32 %v7396, %v7433
        %v7466 = vadd.f32 %v7397, %v7434
        %v7467 = vadd.f32 %v7398, %v7435
        %v7468 = vld [vmem:[#allocation6 + $0x14] sm:$0x1]
        %v7469 = vlaneseq
        %v7470 = vshrl.u32 %v7469, 7
        %v7471 = vsub.s32 0, %v7470
        %v7472 = vrot.slane %v7468, %v7471
        %v7473 = vmul.f32 %v7274, %v7472
        %v7474 = vmul.f32 %v7275, %v7472
        %v7475 = vmul.f32 %v7276, %v7472
        %v7476 = vmul.f32 %v7277, %v7472
        %v7477 = vmul.f32 %v7278, %v7472
        %v7478 = vmul.f32 %v7279, %v7472
        %v7479 = vmul.f32 %v7280, %v7472
        %v7480 = vmul.f32 %v7281, %v7472
        %v7481 = vmul.f32 %v7282, %v7472
        %v7482 = vmul.f32 %v7283, %v7472
        %v7483 = vmul.f32 %v7284, %v7472
        %v7484 = vmul.f32 %v7285, %v7472
        %v7485 = vmul.f32 %v7286, %v7472
        %v7486 = vmul.f32 %v7287, %v7472
        %v7487 = vmul.f32 %v7288, %v7472
        %v7488 = vmul.f32 %v7289, %v7472
        %v7489 = vmul.f32 %v7290, %v7472
        %v7490 = vmul.f32 %v7291, %v7472
        %v7491 = vmul.f32 %v7292, %v7472
        %v7492 = vmul.f32 %v7293, %v7472
        %v7493 = vmul.f32 %v7294, %v7472
        %v7494 = vmul.f32 %v7295, %v7472
        %v7495 = vmul.f32 %v7296, %v7472
        %v7496 = vmul.f32 %v7297, %v7472
        %v7497 = vmul.f32 %v7298, %v7472
        %v7498 = vmul.f32 %v7299, %v7472
        %v7499 = vmul.f32 %v7300, %v7472
        %v7500 = vmul.f32 %v7301, %v7472
        %v7501 = vmul.f32 %v7302, %v7472
        %v7502 = vmul.f32 %v7303, %v7472
        %v7503 = vmul.f32 %v7304, %v7472
        %v7504 = vmul.f32 %v7305, %v7472
        %v7505 = vadd.f32 %v7436, %v7473
        %v7506 = vadd.f32 %v7437, %v7474
        %v7507 = vadd.f32 %v7438, %v7475
        %v7508 = vadd.f32 %v7439, %v7476
        %v7509 = vadd.f32 %v7440, %v7477
        %v7510 = vadd.f32 %v7441, %v7478
        %v7511 = vadd.f32 %v7442, %v7479
        %v7512 = vadd.f32 %v7443, %v7480
        %v7513 = vadd.f32 %v7444, %v7481
        %v7514 = vadd.f32 %v7445, %v7482
        %v7515 = vadd.f32 %v7446, %v7483
        %v7516 = vadd.f32 %v7447, %v7484
        %v7517 = vadd.f32 %v7448, %v7485
        %v7518 = vadd.f32 %v7449, %v7486
        %v7519 = vadd.f32 %v7450, %v7487
        %v7520 = vadd.f32 %v7451, %v7488
        %v7521 = vadd.f32 %v7452, %v7489
        %v7522 = vadd.f32 %v7453, %v7490
        %v7523 = vadd.f32 %v7454, %v7491
        %v7524 = vadd.f32 %v7455, %v7492
        %v7525 = vadd.f32 %v7456, %v7493
        %v7526 = vadd.f32 %v7457, %v7494
        %v7527 = vadd.f32 %v7458, %v7495
        %v7528 = vadd.f32 %v7459, %v7496
        %v7529 = vadd.f32 %v7460, %v7497
        %v7530 = vadd.f32 %v7461, %v7498
        %v7531 = vadd.f32 %v7462, %v7499
        %v7532 = vadd.f32 %v7463, %v7500
        %v7533 = vadd.f32 %v7464, %v7501
        %v7534 = vadd.f32 %v7465, %v7502
        %v7535 = vadd.f32 %v7466, %v7503
        %v7536 = vadd.f32 %v7467, %v7504
        %v7537 = vld [vmem:[#allocation6 + $0x1b] sm:$0x1]
        %v7538 = vlaneseq
        %v7539 = vshrl.u32 %v7538, 7
        %v7540 = vsub.s32 0, %v7539
        %v7541 = vrot.slane %v7537, %v7540
        %v7542 = vmul.f32 %v7280, %v7541
        %v7543 = vmul.f32 %v7281, %v7541
        %v7544 = vmul.f32 %v7282, %v7541
        %v7545 = vmul.f32 %v7283, %v7541
        %v7546 = vmul.f32 %v7284, %v7541
        %v7547 = vmul.f32 %v7285, %v7541
        %v7548 = vmul.f32 %v7286, %v7541
        %v7549 = vmul.f32 %v7287, %v7541
        %v7550 = vmul.f32 %v7288, %v7541
        %v7551 = vmul.f32 %v7289, %v7541
        %v7552 = vmul.f32 %v7290, %v7541
        %v7553 = vmul.f32 %v7291, %v7541
        %v7554 = vmul.f32 %v7292, %v7541
        %v7555 = vmul.f32 %v7293, %v7541
        %v7556 = vmul.f32 %v7294, %v7541
        %v7557 = vmul.f32 %v7295, %v7541
        %v7558 = vmul.f32 %v7296, %v7541
        %v7559 = vmul.f32 %v7297, %v7541
        %v7560 = vmul.f32 %v7298, %v7541
        %v7561 = vmul.f32 %v7299, %v7541
        %v7562 = vmul.f32 %v7300, %v7541
        %v7563 = vmul.f32 %v7301, %v7541
        %v7564 = vmul.f32 %v7302, %v7541
        %v7565 = vmul.f32 %v7303, %v7541
        %v7566 = vmul.f32 %v7304, %v7541
        %v7567 = vmul.f32 %v7305, %v7541
        %v7568 = vmul.f32 %v7306, %v7541
        %v7569 = vmul.f32 %v7307, %v7541
        %v7570 = vmul.f32 %v7308, %v7541
        %v7571 = vmul.f32 %v7309, %v7541
        %v7572 = vmul.f32 %v7310, %v7541
        %v7573 = vmul.f32 %v7311, %v7541
        %v7574 = vadd.f32 %v7505, %v7542
        %v7575 = vadd.f32 %v7506, %v7543
        %v7576 = vadd.f32 %v7507, %v7544
        %v7577 = vadd.f32 %v7508, %v7545
        %v7578 = vadd.f32 %v7509, %v7546
        %v7579 = vadd.f32 %v7510, %v7547
        %v7580 = vadd.f32 %v7511, %v7548
        %v7581 = vadd.f32 %v7512, %v7549
        %v7582 = vadd.f32 %v7513, %v7550
        %v7583 = vadd.f32 %v7514, %v7551
        %v7584 = vadd.f32 %v7515, %v7552
        %v7585 = vadd.f32 %v7516, %v7553
        %v7586 = vadd.f32 %v7517, %v7554
        %v7587 = vadd.f32 %v7518, %v7555
        %v7588 = vadd.f32 %v7519, %v7556
        %v7589 = vadd.f32 %v7520, %v7557
        %v7590 = vadd.f32 %v7521, %v7558
        %v7591 = vadd.f32 %v7522, %v7559
        %v7592 = vadd.f32 %v7523, %v7560
        %v7593 = vadd.f32 %v7524, %v7561
        %v7594 = vadd.f32 %v7525, %v7562
        %v7595 = vadd.f32 %v7526, %v7563
        %v7596 = vadd.f32 %v7527, %v7564
        %v7597 = vadd.f32 %v7528, %v7565
        %v7598 = vadd.f32 %v7529, %v7566
        %v7599 = vadd.f32 %v7530, %v7567
        %v7600 = vadd.f32 %v7531, %v7568
        %v7601 = vadd.f32 %v7532, %v7569
        %v7602 = vadd.f32 %v7533, %v7570
        %v7603 = vadd.f32 %v7534, %v7571
        %v7604 = vadd.f32 %v7535, %v7572
        %v7605 = vadd.f32 %v7536, %v7573
        %v7606 = vld [vmem:[#allocation6 + $0x22] sm:$0x1]
        %v7607 = vlaneseq
        %v7608 = vshrl.u32 %v7607, 7
        %v7609 = vsub.s32 0, %v7608
        %v7610 = vrot.slane %v7606, %v7609
        %v7611 = vmul.f32 %v7286, %v7610
        %v7612 = vmul.f32 %v7287, %v7610
        %v7613 = vmul.f32 %v7288, %v7610
        %v7614 = vmul.f32 %v7289, %v7610
        %v7615 = vmul.f32 %v7290, %v7610
        %v7616 = vmul.f32 %v7291, %v7610
        %v7617 = vmul.f32 %v7292, %v7610
        %v7618 = vmul.f32 %v7293, %v7610
        %v7619 = vmul.f32 %v7294, %v7610
        %v7620 = vmul.f32 %v7295, %v7610
        %v7621 = vmul.f32 %v7296, %v7610
        %v7622 = vmul.f32 %v7297, %v7610
        %v7623 = vmul.f32 %v7298, %v7610
        %v7624 = vmul.f32 %v7299, %v7610
        %v7625 = vmul.f32 %v7300, %v7610
        %v7626 = vmul.f32 %v7301, %v7610
        %v7627 = vmul.f32 %v7302, %v7610
        %v7628 = vmul.f32 %v7303, %v7610
        %v7629 = vmul.f32 %v7304, %v7610
        %v7630 = vmul.f32 %v7305, %v7610
        %v7631 = vmul.f32 %v7306, %v7610
        %v7632 = vmul.f32 %v7307, %v7610
        %v7633 = vmul.f32 %v7308, %v7610
        %v7634 = vmul.f32 %v7309, %v7610
        %v7635 = vmul.f32 %v7310, %v7610
        %v7636 = vmul.f32 %v7311, %v7610
        %v7637 = vmul.f32 %v7312, %v7610
        %v7638 = vmul.f32 %v7313, %v7610
        %v7639 = vmul.f32 %v7314, %v7610
        %v7640 = vmul.f32 %v7315, %v7610
        %v7641 = vmul.f32 %v7316, %v7610
        %v7642 = vmul.f32 %v7317, %v7610
        %v7643 = vadd.f32 %v7574, %v7611
        %v7644 = vadd.f32 %v7575, %v7612
        %v7645 = vadd.f32 %v7576, %v7613
        %v7646 = vadd.f32 %v7577, %v7614
        %v7647 = vadd.f32 %v7578, %v7615
        %v7648 = vadd.f32 %v7579, %v7616
        %v7649 = vadd.f32 %v7580, %v7617
        %v7650 = vadd.f32 %v7581, %v7618
        %v7651 = vadd.f32 %v7582, %v7619
        %v7652 = vadd.f32 %v7583, %v7620
        %v7653 = vadd.f32 %v7584, %v7621
        %v7654 = vadd.f32 %v7585, %v7622
        %v7655 = vadd.f32 %v7586, %v7623
        %v7656 = vadd.f32 %v7587, %v7624
        %v7657 = vadd.f32 %v7588, %v7625
        %v7658 = vadd.f32 %v7589, %v7626
        %v7659 = vadd.f32 %v7590, %v7627
        %v7660 = vadd.f32 %v7591, %v7628
        %v7661 = vadd.f32 %v7592, %v7629
        %v7662 = vadd.f32 %v7593, %v7630
        %v7663 = vadd.f32 %v7594, %v7631
        %v7664 = vadd.f32 %v7595, %v7632
        %v7665 = vadd.f32 %v7596, %v7633
        %v7666 = vadd.f32 %v7597, %v7634
        %v7667 = vadd.f32 %v7598, %v7635
        %v7668 = vadd.f32 %v7599, %v7636
        %v7669 = vadd.f32 %v7600, %v7637
        %v7670 = vadd.f32 %v7601, %v7638
        %v7671 = vadd.f32 %v7602, %v7639
        %v7672 = vadd.f32 %v7603, %v7640
        %v7673 = vadd.f32 %v7604, %v7641
        %v7674 = vadd.f32 %v7605, %v7642
        %v7675 = vld [vmem:[#allocation6 + $0x29] sm:$0x1]
        %v7676 = vlaneseq
        %v7677 = vshrl.u32 %v7676, 7
        %v7678 = vsub.s32 0, %v7677
        %v7679 = vrot.slane %v7675, %v7678
        %v7680 = vmul.f32 %v7292, %v7679
        %v7681 = vmul.f32 %v7293, %v7679
        %v7682 = vmul.f32 %v7294, %v7679
        %v7683 = vmul.f32 %v7295, %v7679
        %v7684 = vmul.f32 %v7296, %v7679
        %v7685 = vmul.f32 %v7297, %v7679
        %v7686 = vmul.f32 %v7298, %v7679
        %v7687 = vmul.f32 %v7299, %v7679
        %v7688 = vmul.f32 %v7300, %v7679
        %v7689 = vmul.f32 %v7301, %v7679
        %v7690 = vmul.f32 %v7302, %v7679
        %v7691 = vmul.f32 %v7303, %v7679
        %v7692 = vmul.f32 %v7304, %v7679
        %v7693 = vmul.f32 %v7305, %v7679
        %v7694 = vmul.f32 %v7306, %v7679
        %v7695 = vmul.f32 %v7307, %v7679
        %v7696 = vmul.f32 %v7308, %v7679
        %v7697 = vmul.f32 %v7309, %v7679
        %v7698 = vmul.f32 %v7310, %v7679
        %v7699 = vmul.f32 %v7311, %v7679
        %v7700 = vmul.f32 %v7312, %v7679
        %v7701 = vmul.f32 %v7313, %v7679
        %v7702 = vmul.f32 %v7314, %v7679
        %v7703 = vmul.f32 %v7315, %v7679
        %v7704 = vmul.f32 %v7316, %v7679
        %v7705 = vmul.f32 %v7317, %v7679
        %v7706 = vmul.f32 %v7318, %v7679
        %v7707 = vmul.f32 %v7319, %v7679
        %v7708 = vmul.f32 %v7320, %v7679
        %v7709 = vmul.f32 %v7321, %v7679
        %v7710 = vmul.f32 %v7322, %v7679
        %v7711 = vmul.f32 %v7323, %v7679
        %v7712 = vadd.f32 %v7643, %v7680
        %v7713 = vadd.f32 %v7644, %v7681
        %v7714 = vadd.f32 %v7645, %v7682
        %v7715 = vadd.f32 %v7646, %v7683
        %v7716 = vadd.f32 %v7647, %v7684
        %v7717 = vadd.f32 %v7648, %v7685
        %v7718 = vadd.f32 %v7649, %v7686
        %v7719 = vadd.f32 %v7650, %v7687
        %v7720 = vadd.f32 %v7651, %v7688
        %v7721 = vadd.f32 %v7652, %v7689
        %v7722 = vadd.f32 %v7653, %v7690
        %v7723 = vadd.f32 %v7654, %v7691
        %v7724 = vadd.f32 %v7655, %v7692
        %v7725 = vadd.f32 %v7656, %v7693
        %v7726 = vadd.f32 %v7657, %v7694
        %v7727 = vadd.f32 %v7658, %v7695
        %v7728 = vadd.f32 %v7659, %v7696
        %v7729 = vadd.f32 %v7660, %v7697
        %v7730 = vadd.f32 %v7661, %v7698
        %v7731 = vadd.f32 %v7662, %v7699
        %v7732 = vadd.f32 %v7663, %v7700
        %v7733 = vadd.f32 %v7664, %v7701
        %v7734 = vadd.f32 %v7665, %v7702
        %v7735 = vadd.f32 %v7666, %v7703
        %v7736 = vadd.f32 %v7667, %v7704
        %v7737 = vadd.f32 %v7668, %v7705
        %v7738 = vadd.f32 %v7669, %v7706
        %v7739 = vadd.f32 %v7670, %v7707
        %v7740 = vadd.f32 %v7671, %v7708
        %v7741 = vadd.f32 %v7672, %v7709
        %v7742 = vadd.f32 %v7673, %v7710
        %v7743 = vadd.f32 %v7674, %v7711
        %v7744 = vld [vmem:[#allocation6 + $0x30] sm:$0x1]
        %v7745 = vlaneseq
        %v7746 = vshrl.u32 %v7745, 7
        %v7747 = vsub.s32 0, %v7746
        %v7748 = vrot.slane %v7744, %v7747
        %v7749 = vmul.f32 %v7298, %v7748
        %v7750 = vmul.f32 %v7299, %v7748
        %v7751 = vmul.f32 %v7300, %v7748
        %v7752 = vmul.f32 %v7301, %v7748
        %v7753 = vmul.f32 %v7302, %v7748
        %v7754 = vmul.f32 %v7303, %v7748
        %v7755 = vmul.f32 %v7304, %v7748
        %v7756 = vmul.f32 %v7305, %v7748
        %v7757 = vmul.f32 %v7306, %v7748
        %v7758 = vmul.f32 %v7307, %v7748
        %v7759 = vmul.f32 %v7308, %v7748
        %v7760 = vmul.f32 %v7309, %v7748
        %v7761 = vmul.f32 %v7310, %v7748
        %v7762 = vmul.f32 %v7311, %v7748
        %v7763 = vmul.f32 %v7312, %v7748
        %v7764 = vmul.f32 %v7313, %v7748
        %v7765 = vmul.f32 %v7314, %v7748
        %v7766 = vmul.f32 %v7315, %v7748
        %v7767 = vmul.f32 %v7316, %v7748
        %v7768 = vmul.f32 %v7317, %v7748
        %v7769 = vmul.f32 %v7318, %v7748
        %v7770 = vmul.f32 %v7319, %v7748
        %v7771 = vmul.f32 %v7320, %v7748
        %v7772 = vmul.f32 %v7321, %v7748
        %v7773 = vmul.f32 %v7322, %v7748
        %v7774 = vmul.f32 %v7323, %v7748
        %v7775 = vmul.f32 %v7324, %v7748
        %v7776 = vmul.f32 %v7325, %v7748
        %v7777 = vmul.f32 %v7326, %v7748
        %v7778 = vmul.f32 %v7327, %v7748
        %v7779 = vmul.f32 %v7328, %v7748
        %v7780 = vmul.f32 %v7329, %v7748
        %v7781 = vadd.f32 %v7712, %v7749
        %v7782 = vadd.f32 %v7713, %v7750
        %v7783 = vadd.f32 %v7714, %v7751
        %v7784 = vadd.f32 %v7715, %v7752
        %v7785 = vadd.f32 %v7716, %v7753
        %v7786 = vadd.f32 %v7717, %v7754
        %v7787 = vadd.f32 %v7718, %v7755
        %v7788 = vadd.f32 %v7719, %v7756
        %v7789 = vadd.f32 %v7720, %v7757
        %v7790 = vadd.f32 %v7721, %v7758
        %v7791 = vadd.f32 %v7722, %v7759
        %v7792 = vadd.f32 %v7723, %v7760
        %v7793 = vadd.f32 %v7724, %v7761
        %v7794 = vadd.f32 %v7725, %v7762
        %v7795 = vadd.f32 %v7726, %v7763
        %v7796 = vadd.f32 %v7727, %v7764
        %v7797 = vadd.f32 %v7728, %v7765
        %v7798 = vadd.f32 %v7729, %v7766
        %v7799 = vadd.f32 %v7730, %v7767
        %v7800 = vadd.f32 %v7731, %v7768
        %v7801 = vadd.f32 %v7732, %v7769
        %v7802 = vadd.f32 %v7733, %v7770
        %v7803 = vadd.f32 %v7734, %v7771
        %v7804 = vadd.f32 %v7735, %v7772
        %v7805 = vadd.f32 %v7736, %v7773
        %v7806 = vadd.f32 %v7737, %v7774
        %v7807 = vadd.f32 %v7738, %v7775
        %v7808 = vadd.f32 %v7739, %v7776
        %v7809 = vadd.f32 %v7740, %v7777
        %v7810 = vadd.f32 %v7741, %v7778
        %v7811 = vadd.f32 %v7742, %v7779
        %v7812 = vadd.f32 %v7743, %v7780
        %v7813 = vld [vmem:[#allocation7] sm:$0x1]
        %v7815 = vlaneseq
        %v7816 = vshrl.u32 %v7815, 7
        %v7817 = vsub.s32 0, %v7816
        %v7818 = vrot.slane %v7813, %v7817
        %v7820 = vadd.f32 %v7781, %v7818
        %v7821 = vadd.f32 %v7782, %v7818
        %v7822 = vadd.f32 %v7783, %v7818
        %v7823 = vadd.f32 %v7784, %v7818
        %v7824 = vadd.f32 %v7785, %v7818
        %v7825 = vadd.f32 %v7786, %v7818
        %v7826 = vadd.f32 %v7787, %v7818
        %v7827 = vadd.f32 %v7788, %v7818
        %v7828 = vadd.f32 %v7789, %v7818
        %v7829 = vadd.f32 %v7790, %v7818
        %v7830 = vadd.f32 %v7791, %v7818
        %v7831 = vadd.f32 %v7792, %v7818
        %v7832 = vadd.f32 %v7793, %v7818
        %v7833 = vadd.f32 %v7794, %v7818
        %v7834 = vadd.f32 %v7795, %v7818
        %v7835 = vadd.f32 %v7796, %v7818
        %v7836 = vadd.f32 %v7797, %v7818
        %v7837 = vadd.f32 %v7798, %v7818
        %v7838 = vadd.f32 %v7799, %v7818
        %v7839 = vadd.f32 %v7800, %v7818
        %v7840 = vadd.f32 %v7801, %v7818
        %v7841 = vadd.f32 %v7802, %v7818
        %v7842 = vadd.f32 %v7803, %v7818
        %v7843 = vadd.f32 %v7804, %v7818
        %v7844 = vadd.f32 %v7805, %v7818
        %v7845 = vadd.f32 %v7806, %v7818
        %v7846 = vadd.f32 %v7807, %v7818
        %v7847 = vadd.f32 %v7808, %v7818
        %v7848 = vadd.f32 %v7809, %v7818
        %v7849 = vadd.f32 %v7810, %v7818
        %v7850 = vadd.f32 %v7811, %v7818
        %v7851 = vadd.f32 %v7812, %v7818
        %v7852 = vmul.f32 %v7820, 0.5
        %v7853 = vmul.f32 %v7821, 0.5
        %v7854 = vmul.f32 %v7822, 0.5
        %v7855 = vmul.f32 %v7823, 0.5
        %v7856 = vmul.f32 %v7824, 0.5
        %v7857 = vmul.f32 %v7825, 0.5
        %v7858 = vmul.f32 %v7826, 0.5
        %v7859 = vmul.f32 %v7827, 0.5
        %v7860 = vmul.f32 %v7828, 0.5
        %v7861 = vmul.f32 %v7829, 0.5
        %v7862 = vmul.f32 %v7830, 0.5
        %v7863 = vmul.f32 %v7831, 0.5
        %v7864 = vmul.f32 %v7832, 0.5
        %v7865 = vmul.f32 %v7833, 0.5
        %v7866 = vmul.f32 %v7834, 0.5
        %v7867 = vmul.f32 %v7835, 0.5
        %v7868 = vmul.f32 %v7836, 0.5
        %v7869 = vmul.f32 %v7837, 0.5
        %v7870 = vmul.f32 %v7838, 0.5
        %v7871 = vmul.f32 %v7839, 0.5
        %v7872 = vmul.f32 %v7840, 0.5
        %v7873 = vmul.f32 %v7841, 0.5
        %v7874 = vmul.f32 %v7842, 0.5
        %v7875 = vmul.f32 %v7843, 0.5
        %v7876 = vmul.f32 %v7844, 0.5
        %v7877 = vmul.f32 %v7845, 0.5
        %v7878 = vmul.f32 %v7846, 0.5
        %v7879 = vmul.f32 %v7847, 0.5
        %v7880 = vmul.f32 %v7848, 0.5
        %v7881 = vmul.f32 %v7849, 0.5
        %v7882 = vmul.f32 %v7850, 0.5
        %v7883 = vmul.f32 %v7851, 0.5
        %v7884 = vmul.f32 %v7820, 0.70710677
        %v7885 = vmul.f32 %v7821, 0.70710677
        %v7886 = vmul.f32 %v7822, 0.70710677
        %v7887 = vmul.f32 %v7823, 0.70710677
        %v7888 = vmul.f32 %v7824, 0.70710677
        %v7889 = vmul.f32 %v7825, 0.70710677
        %v7890 = vmul.f32 %v7826, 0.70710677
        %v7891 = vmul.f32 %v7827, 0.70710677
        %v7892 = vmul.f32 %v7828, 0.70710677
        %v7893 = vmul.f32 %v7829, 0.70710677
        %v7894 = vmul.f32 %v7830, 0.70710677
        %v7895 = vmul.f32 %v7831, 0.70710677
        %v7896 = vmul.f32 %v7832, 0.70710677
        %v7897 = vmul.f32 %v7833, 0.70710677
        %v7898 = vmul.f32 %v7834, 0.70710677
        %v7899 = vmul.f32 %v7835, 0.70710677
        %v7900 = vmul.f32 %v7836, 0.70710677
        %v7901 = vmul.f32 %v7837, 0.70710677
        %v7902 = vmul.f32 %v7838, 0.70710677
        %v7903 = vmul.f32 %v7839, 0.70710677
        %v7904 = vmul.f32 %v7840, 0.70710677
        %v7905 = vmul.f32 %v7841, 0.70710677
        %v7906 = vmul.f32 %v7842, 0.70710677
        %v7907 = vmul.f32 %v7843, 0.70710677
        %v7908 = vmul.f32 %v7844, 0.70710677
        %v7909 = vmul.f32 %v7845, 0.70710677
        %v7910 = vmul.f32 %v7846, 0.70710677
        %v7911 = vmul.f32 %v7847, 0.70710677
        %v7912 = vmul.f32 %v7848, 0.70710677
        %v7913 = vmul.f32 %v7849, 0.70710677
        %v7914 = vmul.f32 %v7850, 0.70710677
        %v7915 = vmul.f32 %v7851, 0.70710677
        %vm7916 = vcmp.ge.f32.partialorder %v7884, 0.0
        %vm7917 = vcmp.ge.f32.partialorder %v7885, 0.0
        %vm7918 = vcmp.ge.f32.partialorder %v7886, 0.0
        %vm7919 = vcmp.ge.f32.partialorder %v7887, 0.0
        %vm7920 = vcmp.ge.f32.partialorder %v7888, 0.0
        %vm7921 = vcmp.ge.f32.partialorder %v7889, 0.0
        %vm7922 = vcmp.ge.f32.partialorder %v7890, 0.0
        %vm7923 = vcmp.ge.f32.partialorder %v7891, 0.0
        %vm7924 = vcmp.ge.f32.partialorder %v7892, 0.0
        %vm7925 = vcmp.ge.f32.partialorder %v7893, 0.0
        %vm7926 = vcmp.ge.f32.partialorder %v7894, 0.0
        %vm7927 = vcmp.ge.f32.partialorder %v7895, 0.0
        %vm7928 = vcmp.ge.f32.partialorder %v7896, 0.0
        %vm7929 = vcmp.ge.f32.partialorder %v7897, 0.0
        %vm7930 = vcmp.ge.f32.partialorder %v7898, 0.0
        %vm7931 = vcmp.ge.f32.partialorder %v7899, 0.0
        %vm7932 = vcmp.ge.f32.partialorder %v7900, 0.0
        %vm7933 = vcmp.ge.f32.partialorder %v7901, 0.0
        %vm7934 = vcmp.ge.f32.partialorder %v7902, 0.0
        %vm7935 = vcmp.ge.f32.partialorder %v7903, 0.0
        %vm7936 = vcmp.ge.f32.partialorder %v7904, 0.0
        %vm7937 = vcmp.ge.f32.partialorder %v7905, 0.0
        %vm7938 = vcmp.ge.f32.partialorder %v7906, 0.0
        %vm7939 = vcmp.ge.f32.partialorder %v7907, 0.0
        %vm7940 = vcmp.ge.f32.partialorder %v7908, 0.0
        %vm7941 = vcmp.ge.f32.partialorder %v7909, 0.0
        %vm7942 = vcmp.ge.f32.partialorder %v7910, 0.0
        %vm7943 = vcmp.ge.f32.partialorder %v7911, 0.0
        %vm7944 = vcmp.ge.f32.partialorder %v7912, 0.0
        %vm7945 = vcmp.ge.f32.partialorder %v7913, 0.0
        %vm7946 = vcmp.ge.f32.partialorder %v7914, 0.0
        %vm7947 = vcmp.ge.f32.partialorder %v7915, 0.0
        %v7948 = vsel %vm7916, 1.0, -1.0
        %v7949 = vsel %vm7917, 1.0, -1.0
        %v7950 = vsel %vm7918, 1.0, -1.0
        %v7951 = vsel %vm7919, 1.0, -1.0
        %v7952 = vsel %vm7920, 1.0, -1.0
        %v7953 = vsel %vm7921, 1.0, -1.0
        %v7954 = vsel %vm7922, 1.0, -1.0
        %v7955 = vsel %vm7923, 1.0, -1.0
        %v7956 = vsel %vm7924, 1.0, -1.0
        %v7957 = vsel %vm7925, 1.0, -1.0
        %v7958 = vsel %vm7926, 1.0, -1.0
        %v7959 = vsel %vm7927, 1.0, -1.0
        %v7960 = vsel %vm7928, 1.0, -1.0
        %v7961 = vsel %vm7929, 1.0, -1.0
        %v7962 = vsel %vm7930, 1.0, -1.0
        %v7963 = vsel %vm7931, 1.0, -1.0
        %v7964 = vsel %vm7932, 1.0, -1.0
        %v7965 = vsel %vm7933, 1.0, -1.0
        %v7966 = vsel %vm7934, 1.0, -1.0
        %v7967 = vsel %vm7935, 1.0, -1.0
        %v7968 = vsel %vm7936, 1.0, -1.0
        %v7969 = vsel %vm7937, 1.0, -1.0
        %v7970 = vsel %vm7938, 1.0, -1.0
        %v7971 = vsel %vm7939, 1.0, -1.0
        %v7972 = vsel %vm7940, 1.0, -1.0
        %v7973 = vsel %vm7941, 1.0, -1.0
        %v7974 = vsel %vm7942, 1.0, -1.0
        %v7975 = vsel %vm7943, 1.0, -1.0
        %v7976 = vsel %vm7944, 1.0, -1.0
        %v7977 = vsel %vm7945, 1.0, -1.0
        %v7978 = vsel %vm7946, 1.0, -1.0
        %v7979 = vsel %vm7947, 1.0, -1.0
        %v7980 = vand.u32 2147483647, %v7884
        %v7981 = vand.u32 2147483647, %v7885
        %v7982 = vand.u32 2147483647, %v7886
        %v7983 = vand.u32 2147483647, %v7887
        %v7984 = vand.u32 2147483647, %v7888
        %v7985 = vand.u32 2147483647, %v7889
        %v7986 = vand.u32 2147483647, %v7890
        %v7987 = vand.u32 2147483647, %v7891
        %v7988 = vand.u32 2147483647, %v7892
        %v7989 = vand.u32 2147483647, %v7893
        %v7990 = vand.u32 2147483647, %v7894
        %v7991 = vand.u32 2147483647, %v7895
        %v7992 = vand.u32 2147483647, %v7896
        %v7993 = vand.u32 2147483647, %v7897
        %v7994 = vand.u32 2147483647, %v7898
        %v7995 = vand.u32 2147483647, %v7899
        %v7996 = vand.u32 2147483647, %v7900
        %v7997 = vand.u32 2147483647, %v7901
        %v7998 = vand.u32 2147483647, %v7902
        %v7999 = vand.u32 2147483647, %v7903
        %v8000 = vand.u32 2147483647, %v7904
        %v8001 = vand.u32 2147483647, %v7905
        %v8002 = vand.u32 2147483647, %v7906
        %v8003 = vand.u32 2147483647, %v7907
        %v8004 = vand.u32 2147483647, %v7908
        %v8005 = vand.u32 2147483647, %v7909
        %v8006 = vand.u32 2147483647, %v7910
        %v8007 = vand.u32 2147483647, %v7911
        %v8008 = vand.u32 2147483647, %v7912
        %v8009 = vand.u32 2147483647, %v7913
        %v8010 = vand.u32 2147483647, %v7914
        %v8011 = vand.u32 2147483647, %v7915
        %v8012 = vmul.f32 %v7980, 0.3275911
        %v8013 = vmul.f32 %v7981, 0.3275911
        %v8014 = vmul.f32 %v7982, 0.3275911
        %v8015 = vmul.f32 %v7983, 0.3275911
        %v8016 = vmul.f32 %v7984, 0.3275911
        %v8017 = vmul.f32 %v7985, 0.3275911
        %v8018 = vmul.f32 %v7986, 0.3275911
        %v8019 = vmul.f32 %v7987, 0.3275911
        %v8020 = vmul.f32 %v7988, 0.3275911
        %v8021 = vmul.f32 %v7989, 0.3275911
        %v8022 = vmul.f32 %v7990, 0.3275911
        %v8023 = vmul.f32 %v7991, 0.3275911
        %v8024 = vmul.f32 %v7992, 0.3275911
        %v8025 = vmul.f32 %v7993, 0.3275911
        %v8026 = vmul.f32 %v7994, 0.3275911
        %v8027 = vmul.f32 %v7995, 0.3275911
        %v8028 = vmul.f32 %v7996, 0.3275911
        %v8029 = vmul.f32 %v7997, 0.3275911
        %v8030 = vmul.f32 %v7998, 0.3275911
        %v8031 = vmul.f32 %v7999, 0.3275911
        %v8032 = vmul.f32 %v8000, 0.3275911
        %v8033 = vmul.f32 %v8001, 0.3275911
        %v8034 = vmul.f32 %v8002, 0.3275911
        %v8035 = vmul.f32 %v8003, 0.3275911
        %v8036 = vmul.f32 %v8004, 0.3275911
        %v8037 = vmul.f32 %v8005, 0.3275911
        %v8038 = vmul.f32 %v8006, 0.3275911
        %v8039 = vmul.f32 %v8007, 0.3275911
        %v8040 = vmul.f32 %v8008, 0.3275911
        %v8041 = vmul.f32 %v8009, 0.3275911
        %v8042 = vmul.f32 %v8010, 0.3275911
        %v8043 = vmul.f32 %v8011, 0.3275911
        %v8044 = vadd.f32 %v8012, 1.0
        %v8045 = vadd.f32 %v8013, 1.0
        %v8046 = vadd.f32 %v8014, 1.0
        %v8047 = vadd.f32 %v8015, 1.0
        %v8048 = vadd.f32 %v8016, 1.0
        %v8049 = vadd.f32 %v8017, 1.0
        %v8050 = vadd.f32 %v8018, 1.0
        %v8051 = vadd.f32 %v8019, 1.0
        %v8052 = vadd.f32 %v8020, 1.0
        %v8053 = vadd.f32 %v8021, 1.0
        %v8054 = vadd.f32 %v8022, 1.0
        %v8055 = vadd.f32 %v8023, 1.0
        %v8056 = vadd.f32 %v8024, 1.0
        %v8057 = vadd.f32 %v8025, 1.0
        %v8058 = vadd.f32 %v8026, 1.0
        %v8059 = vadd.f32 %v8027, 1.0
        %v8060 = vadd.f32 %v8028, 1.0
        %v8061 = vadd.f32 %v8029, 1.0
        %v8062 = vadd.f32 %v8030, 1.0
        %v8063 = vadd.f32 %v8031, 1.0
        %v8064 = vadd.f32 %v8032, 1.0
        %v8065 = vadd.f32 %v8033, 1.0
        %v8066 = vadd.f32 %v8034, 1.0
        %v8067 = vadd.f32 %v8035, 1.0
        %v8068 = vadd.f32 %v8036, 1.0
        %v8069 = vadd.f32 %v8037, 1.0
        %v8070 = vadd.f32 %v8038, 1.0
        %v8071 = vadd.f32 %v8039, 1.0
        %v8072 = vadd.f32 %v8040, 1.0
        %v8073 = vadd.f32 %v8041, 1.0
        %v8074 = vadd.f32 %v8042, 1.0
        %v8075 = vadd.f32 %v8043, 1.0
        %v8076 = vrcp.pop %v8044
        %v8077 = vrcp.pop %v8045
        %v8078 = vrcp.pop %v8046
        %v8079 = vrcp.pop %v8047
        %v8080 = vrcp.pop %v8048
        %v8081 = vrcp.pop %v8049
        %v8082 = vrcp.pop %v8050
        %v8083 = vrcp.pop %v8051
        %v8084 = vrcp.pop %v8052
        %v8085 = vrcp.pop %v8053
        %v8086 = vrcp.pop %v8054
        %v8087 = vrcp.pop %v8055
        %v8088 = vrcp.pop %v8056
        %v8089 = vrcp.pop %v8057
        %v8090 = vrcp.pop %v8058
        %v8091 = vrcp.pop %v8059
        %v8092 = vrcp.pop %v8060
        %v8093 = vrcp.pop %v8061
        %v8094 = vrcp.pop %v8062
        %v8095 = vrcp.pop %v8063
        %v8096 = vrcp.pop %v8064
        %v8097 = vrcp.pop %v8065
        %v8098 = vrcp.pop %v8066
        %v8099 = vrcp.pop %v8067
        %v8100 = vrcp.pop %v8068
        %v8101 = vrcp.pop %v8069
        %v8102 = vrcp.pop %v8070
        %v8103 = vrcp.pop %v8071
        %v8104 = vrcp.pop %v8072
        %v8105 = vrcp.pop %v8073
        %v8106 = vrcp.pop %v8074
        %v8107 = vrcp.pop %v8075
        %v8108 = vmul.f32 %v8044, %v8076
        %v8109 = vmul.f32 %v8045, %v8077
        %v8110 = vmul.f32 %v8046, %v8078
        %v8111 = vmul.f32 %v8047, %v8079
        %v8112 = vmul.f32 %v8048, %v8080
        %v8113 = vmul.f32 %v8049, %v8081
        %v8114 = vmul.f32 %v8050, %v8082
        %v8115 = vmul.f32 %v8051, %v8083
        %v8116 = vmul.f32 %v8052, %v8084
        %v8117 = vmul.f32 %v8053, %v8085
        %v8118 = vmul.f32 %v8054, %v8086
        %v8119 = vmul.f32 %v8055, %v8087
        %v8120 = vmul.f32 %v8056, %v8088
        %v8121 = vmul.f32 %v8057, %v8089
        %v8122 = vmul.f32 %v8058, %v8090
        %v8123 = vmul.f32 %v8059, %v8091
        %v8124 = vmul.f32 %v8060, %v8092
        %v8125 = vmul.f32 %v8061, %v8093
        %v8126 = vmul.f32 %v8062, %v8094
        %v8127 = vmul.f32 %v8063, %v8095
        %v8128 = vmul.f32 %v8064, %v8096
        %v8129 = vmul.f32 %v8065, %v8097
        %v8130 = vmul.f32 %v8066, %v8098
        %v8131 = vmul.f32 %v8067, %v8099
        %v8132 = vmul.f32 %v8068, %v8100
        %v8133 = vmul.f32 %v8069, %v8101
        %v8134 = vmul.f32 %v8070, %v8102
        %v8135 = vmul.f32 %v8071, %v8103
        %v8136 = vmul.f32 %v8072, %v8104
        %v8137 = vmul.f32 %v8073, %v8105
        %v8138 = vmul.f32 %v8074, %v8106
        %v8139 = vmul.f32 %v8075, %v8107
        %v8140 = vsub.f32 2.0, %v8108
        %v8141 = vsub.f32 2.0, %v8109
        %v8142 = vsub.f32 2.0, %v8110
        %v8143 = vsub.f32 2.0, %v8111
        %v8144 = vsub.f32 2.0, %v8112
        %v8145 = vsub.f32 2.0, %v8113
        %v8146 = vsub.f32 2.0, %v8114
        %v8147 = vsub.f32 2.0, %v8115
        %v8148 = vsub.f32 2.0, %v8116
        %v8149 = vsub.f32 2.0, %v8117
        %v8150 = vsub.f32 2.0, %v8118
        %v8151 = vsub.f32 2.0, %v8119
        %v8152 = vsub.f32 2.0, %v8120
        %v8153 = vsub.f32 2.0, %v8121
        %v8154 = vsub.f32 2.0, %v8122
        %v8155 = vsub.f32 2.0, %v8123
        %v8156 = vsub.f32 2.0, %v8124
        %v8157 = vsub.f32 2.0, %v8125
        %v8158 = vsub.f32 2.0, %v8126
        %v8159 = vsub.f32 2.0, %v8127
        %v8160 = vsub.f32 2.0, %v8128
        %v8161 = vsub.f32 2.0, %v8129
        %v8162 = vsub.f32 2.0, %v8130
        %v8163 = vsub.f32 2.0, %v8131
        %v8164 = vsub.f32 2.0, %v8132
        %v8165 = vsub.f32 2.0, %v8133
        %v8166 = vsub.f32 2.0, %v8134
        %v8167 = vsub.f32 2.0, %v8135
        %v8168 = vsub.f32 2.0, %v8136
        %v8169 = vsub.f32 2.0, %v8137
        %v8170 = vsub.f32 2.0, %v8138
        %v8171 = vsub.f32 2.0, %v8139
        %v8172 = vmul.f32 %v8076, %v8140
        %v8173 = vmul.f32 %v8077, %v8141
        %v8174 = vmul.f32 %v8078, %v8142
        %v8175 = vmul.f32 %v8079, %v8143
        %v8176 = vmul.f32 %v8080, %v8144
        %v8177 = vmul.f32 %v8081, %v8145
        %v8178 = vmul.f32 %v8082, %v8146
        %v8179 = vmul.f32 %v8083, %v8147
        %v8180 = vmul.f32 %v8084, %v8148
        %v8181 = vmul.f32 %v8085, %v8149
        %v8182 = vmul.f32 %v8086, %v8150
        %v8183 = vmul.f32 %v8087, %v8151
        %v8184 = vmul.f32 %v8088, %v8152
        %v8185 = vmul.f32 %v8089, %v8153
        %v8186 = vmul.f32 %v8090, %v8154
        %v8187 = vmul.f32 %v8091, %v8155
        %v8188 = vmul.f32 %v8092, %v8156
        %v8189 = vmul.f32 %v8093, %v8157
        %v8190 = vmul.f32 %v8094, %v8158
        %v8191 = vmul.f32 %v8095, %v8159
        %v8192 = vmul.f32 %v8096, %v8160
        %v8193 = vmul.f32 %v8097, %v8161
        %v8194 = vmul.f32 %v8098, %v8162
        %v8195 = vmul.f32 %v8099, %v8163
        %v8196 = vmul.f32 %v8100, %v8164
        %v8197 = vmul.f32 %v8101, %v8165
        %v8198 = vmul.f32 %v8102, %v8166
        %v8199 = vmul.f32 %v8103, %v8167
        %v8200 = vmul.f32 %v8104, %v8168
        %v8201 = vmul.f32 %v8105, %v8169
        %v8202 = vmul.f32 %v8106, %v8170
        %v8203 = vmul.f32 %v8107, %v8171
        %v8204 = vmul.f32 %v8172, 1.0614054
        %v8205 = vmul.f32 %v8173, 1.0614054
        %v8206 = vmul.f32 %v8174, 1.0614054
        %v8207 = vmul.f32 %v8175, 1.0614054
        %v8208 = vmul.f32 %v8176, 1.0614054
        %v8209 = vmul.f32 %v8177, 1.0614054
        %v8210 = vmul.f32 %v8178, 1.0614054
        %v8211 = vmul.f32 %v8179, 1.0614054
        %v8212 = vmul.f32 %v8180, 1.0614054
        %v8213 = vmul.f32 %v8181, 1.0614054
        %v8214 = vmul.f32 %v8182, 1.0614054
        %v8215 = vmul.f32 %v8183, 1.0614054
        %v8216 = vmul.f32 %v8184, 1.0614054
        %v8217 = vmul.f32 %v8185, 1.0614054
        %v8218 = vmul.f32 %v8186, 1.0614054
        %v8219 = vmul.f32 %v8187, 1.0614054
        %v8220 = vmul.f32 %v8188, 1.0614054
        %v8221 = vmul.f32 %v8189, 1.0614054
        %v8222 = vmul.f32 %v8190, 1.0614054
        %v8223 = vmul.f32 %v8191, 1.0614054
        %v8224 = vmul.f32 %v8192, 1.0614054
        %v8225 = vmul.f32 %v8193, 1.0614054
        %v8226 = vmul.f32 %v8194, 1.0614054
        %v8227 = vmul.f32 %v8195, 1.0614054
        %v8228 = vmul.f32 %v8196, 1.0614054
        %v8229 = vmul.f32 %v8197, 1.0614054
        %v8230 = vmul.f32 %v8198, 1.0614054
        %v8231 = vmul.f32 %v8199, 1.0614054
        %v8232 = vmul.f32 %v8200, 1.0614054
        %v8233 = vmul.f32 %v8201, 1.0614054
        %v8234 = vmul.f32 %v8202, 1.0614054
        %v8235 = vmul.f32 %v8203, 1.0614054
        %v8236 = vadd.f32 %v8204, -1.4531521
        %v8237 = vadd.f32 %v8205, -1.4531521
        %v8238 = vadd.f32 %v8206, -1.4531521
        %v8239 = vadd.f32 %v8207, -1.4531521
        %v8240 = vadd.f32 %v8208, -1.4531521
        %v8241 = vadd.f32 %v8209, -1.4531521
        %v8242 = vadd.f32 %v8210, -1.4531521
        %v8243 = vadd.f32 %v8211, -1.4531521
        %v8244 = vadd.f32 %v8212, -1.4531521
        %v8245 = vadd.f32 %v8213, -1.4531521
        %v8246 = vadd.f32 %v8214, -1.4531521
        %v8247 = vadd.f32 %v8215, -1.4531521
        %v8248 = vadd.f32 %v8216, -1.4531521
        %v8249 = vadd.f32 %v8217, -1.4531521
        %v8250 = vadd.f32 %v8218, -1.4531521
        %v8251 = vadd.f32 %v8219, -1.4531521
        %v8252 = vadd.f32 %v8220, -1.4531521
        %v8253 = vadd.f32 %v8221, -1.4531521
        %v8254 = vadd.f32 %v8222, -1.4531521
        %v8255 = vadd.f32 %v8223, -1.4531521
        %v8256 = vadd.f32 %v8224, -1.4531521
        %v8257 = vadd.f32 %v8225, -1.4531521
        %v8258 = vadd.f32 %v8226, -1.4531521
        %v8259 = vadd.f32 %v8227, -1.4531521
        %v8260 = vadd.f32 %v8228, -1.4531521
        %v8261 = vadd.f32 %v8229, -1.4531521
        %v8262 = vadd.f32 %v8230, -1.4531521
        %v8263 = vadd.f32 %v8231, -1.4531521
        %v8264 = vadd.f32 %v8232, -1.4531521
        %v8265 = vadd.f32 %v8233, -1.4531521
        %v8266 = vadd.f32 %v8234, -1.4531521
        %v8267 = vadd.f32 %v8235, -1.4531521
        %v8268 = vmul.f32 %v8236, %v8172
        %v8269 = vmul.f32 %v8237, %v8173
        %v8270 = vmul.f32 %v8238, %v8174
        %v8271 = vmul.f32 %v8239, %v8175
        %v8272 = vmul.f32 %v8240, %v8176
        %v8273 = vmul.f32 %v8241, %v8177
        %v8274 = vmul.f32 %v8242, %v8178
        %v8275 = vmul.f32 %v8243, %v8179
        %v8276 = vmul.f32 %v8244, %v8180
        %v8277 = vmul.f32 %v8245, %v8181
        %v8278 = vmul.f32 %v8246, %v8182
        %v8279 = vmul.f32 %v8247, %v8183
        %v8280 = vmul.f32 %v8248, %v8184
        %v8281 = vmul.f32 %v8249, %v8185
        %v8282 = vmul.f32 %v8250, %v8186
        %v8283 = vmul.f32 %v8251, %v8187
        %v8284 = vmul.f32 %v8252, %v8188
        %v8285 = vmul.f32 %v8253, %v8189
        %v8286 = vmul.f32 %v8254, %v8190
        %v8287 = vmul.f32 %v8255, %v8191
        %v8288 = vmul.f32 %v8256, %v8192
        %v8289 = vmul.f32 %v8257, %v8193
        %v8290 = vmul.f32 %v8258, %v8194
        %v8291 = vmul.f32 %v8259, %v8195
        %v8292 = vmul.f32 %v8260, %v8196
        %v8293 = vmul.f32 %v8261, %v8197
        %v8294 = vmul.f32 %v8262, %v8198
        %v8295 = vmul.f32 %v8263, %v8199
        %v8296 = vmul.f32 %v8264, %v8200
        %v8297 = vmul.f32 %v8265, %v8201
        %v8298 = vmul.f32 %v8266, %v8202
        %v8299 = vmul.f32 %v8267, %v8203
        %v8300 = vadd.f32 %v8268, 1.4214138
        %v8301 = vadd.f32 %v8269, 1.4214138
        %v8302 = vadd.f32 %v8270, 1.4214138
        %v8303 = vadd.f32 %v8271, 1.4214138
        %v8304 = vadd.f32 %v8272, 1.4214138
        %v8305 = vadd.f32 %v8273, 1.4214138
        %v8306 = vadd.f32 %v8274, 1.4214138
        %v8307 = vadd.f32 %v8275, 1.4214138
        %v8308 = vadd.f32 %v8276, 1.4214138
        %v8309 = vadd.f32 %v8277, 1.4214138
        %v8310 = vadd.f32 %v8278, 1.4214138
        %v8311 = vadd.f32 %v8279, 1.4214138
        %v8312 = vadd.f32 %v8280, 1.4214138
        %v8313 = vadd.f32 %v8281, 1.4214138
        %v8314 = vadd.f32 %v8282, 1.4214138
        %v8315 = vadd.f32 %v8283, 1.4214138
        %v8316 = vadd.f32 %v8284, 1.4214138
        %v8317 = vadd.f32 %v8285, 1.4214138
        %v8318 = vadd.f32 %v8286, 1.4214138
        %v8319 = vadd.f32 %v8287, 1.4214138
        %v8320 = vadd.f32 %v8288, 1.4214138
        %v8321 = vadd.f32 %v8289, 1.4214138
        %v8322 = vadd.f32 %v8290, 1.4214138
        %v8323 = vadd.f32 %v8291, 1.4214138
        %v8324 = vadd.f32 %v8292, 1.4214138
        %v8325 = vadd.f32 %v8293, 1.4214138
        %v8326 = vadd.f32 %v8294, 1.4214138
        %v8327 = vadd.f32 %v8295, 1.4214138
        %v8328 = vadd.f32 %v8296, 1.4214138
        %v8329 = vadd.f32 %v8297, 1.4214138
        %v8330 = vadd.f32 %v8298, 1.4214138
        %v8331 = vadd.f32 %v8299, 1.4214138
        %v8332 = vmul.f32 %v8300, %v8172
        %v8333 = vmul.f32 %v8301, %v8173
        %v8334 = vmul.f32 %v8302, %v8174
        %v8335 = vmul.f32 %v8303, %v8175
        %v8336 = vmul.f32 %v8304, %v8176
        %v8337 = vmul.f32 %v8305, %v8177
        %v8338 = vmul.f32 %v8306, %v8178
        %v8339 = vmul.f32 %v8307, %v8179
        %v8340 = vmul.f32 %v8308, %v8180
        %v8341 = vmul.f32 %v8309, %v8181
        %v8342 = vmul.f32 %v8310, %v8182
        %v8343 = vmul.f32 %v8311, %v8183
        %v8344 = vmul.f32 %v8312, %v8184
        %v8345 = vmul.f32 %v8313, %v8185
        %v8346 = vmul.f32 %v8314, %v8186
        %v8347 = vmul.f32 %v8315, %v8187
        %v8348 = vmul.f32 %v8316, %v8188
        %v8349 = vmul.f32 %v8317, %v8189
        %v8350 = vmul.f32 %v8318, %v8190
        %v8351 = vmul.f32 %v8319, %v8191
        %v8352 = vmul.f32 %v8320, %v8192
        %v8353 = vmul.f32 %v8321, %v8193
        %v8354 = vmul.f32 %v8322, %v8194
        %v8355 = vmul.f32 %v8323, %v8195
        %v8356 = vmul.f32 %v8324, %v8196
        %v8357 = vmul.f32 %v8325, %v8197
        %v8358 = vmul.f32 %v8326, %v8198
        %v8359 = vmul.f32 %v8327, %v8199
        %v8360 = vmul.f32 %v8328, %v8200
        %v8361 = vmul.f32 %v8329, %v8201
        %v8362 = vmul.f32 %v8330, %v8202
        %v8363 = vmul.f32 %v8331, %v8203
        %v8364 = vadd.f32 %v8332, -0.28449672
        %v8365 = vadd.f32 %v8333, -0.28449672
        %v8366 = vadd.f32 %v8334, -0.28449672
        %v8367 = vadd.f32 %v8335, -0.28449672
        %v8368 = vadd.f32 %v8336, -0.28449672
        %v8369 = vadd.f32 %v8337, -0.28449672
        %v8370 = vadd.f32 %v8338, -0.28449672
        %v8371 = vadd.f32 %v8339, -0.28449672
        %v8372 = vadd.f32 %v8340, -0.28449672
        %v8373 = vadd.f32 %v8341, -0.28449672
        %v8374 = vadd.f32 %v8342, -0.28449672
        %v8375 = vadd.f32 %v8343, -0.28449672
        %v8376 = vadd.f32 %v8344, -0.28449672
        %v8377 = vadd.f32 %v8345, -0.28449672
        %v8378 = vadd.f32 %v8346, -0.28449672
        %v8379 = vadd.f32 %v8347, -0.28449672
        %v8380 = vadd.f32 %v8348, -0.28449672
        %v8381 = vadd.f32 %v8349, -0.28449672
        %v8382 = vadd.f32 %v8350, -0.28449672
        %v8383 = vadd.f32 %v8351, -0.28449672
        %v8384 = vadd.f32 %v8352, -0.28449672
        %v8385 = vadd.f32 %v8353, -0.28449672
        %v8386 = vadd.f32 %v8354, -0.28449672
        %v8387 = vadd.f32 %v8355, -0.28449672
        %v8388 = vadd.f32 %v8356, -0.28449672
        %v8389 = vadd.f32 %v8357, -0.28449672
        %v8390 = vadd.f32 %v8358, -0.28449672
        %v8391 = vadd.f32 %v8359, -0.28449672
        %v8392 = vadd.f32 %v8360, -0.28449672
        %v8393 = vadd.f32 %v8361, -0.28449672
        %v8394 = vadd.f32 %v8362, -0.28449672
        %v8395 = vadd.f32 %v8363, -0.28449672
        %v8396 = vmul.f32 %v8364, %v8172
        %v8397 = vmul.f32 %v8365, %v8173
        %v8398 = vmul.f32 %v8366, %v8174
        %v8399 = vmul.f32 %v8367, %v8175
        %v8400 = vmul.f32 %v8368, %v8176
        %v8401 = vmul.f32 %v8369, %v8177
        %v8402 = vmul.f32 %v8370, %v8178
        %v8403 = vmul.f32 %v8371, %v8179
        %v8404 = vmul.f32 %v8372, %v8180
        %v8405 = vmul.f32 %v8373, %v8181
        %v8406 = vmul.f32 %v8374, %v8182
        %v8407 = vmul.f32 %v8375, %v8183
        %v8408 = vmul.f32 %v8376, %v8184
        %v8409 = vmul.f32 %v8377, %v8185
        %v8410 = vmul.f32 %v8378, %v8186
        %v8411 = vmul.f32 %v8379, %v8187
        %v8412 = vmul.f32 %v8380, %v8188
        %v8413 = vmul.f32 %v8381, %v8189
        %v8414 = vmul.f32 %v8382, %v8190
        %v8415 = vmul.f32 %v8383, %v8191
        %v8416 = vmul.f32 %v8384, %v8192
        %v8417 = vmul.f32 %v8385, %v8193
        %v8418 = vmul.f32 %v8386, %v8194
        %v8419 = vmul.f32 %v8387, %v8195
        %v8420 = vmul.f32 %v8388, %v8196
        %v8421 = vmul.f32 %v8389, %v8197
        %v8422 = vmul.f32 %v8390, %v8198
        %v8423 = vmul.f32 %v8391, %v8199
        %v8424 = vmul.f32 %v8392, %v8200
        %v8425 = vmul.f32 %v8393, %v8201
        %v8426 = vmul.f32 %v8394, %v8202
        %v8427 = vmul.f32 %v8395, %v8203
        %v8428 = vadd.f32 %v8396, 0.2548296
        %v8429 = vadd.f32 %v8397, 0.2548296
        %v8430 = vadd.f32 %v8398, 0.2548296
        %v8431 = vadd.f32 %v8399, 0.2548296
        %v8432 = vadd.f32 %v8400, 0.2548296
        %v8433 = vadd.f32 %v8401, 0.2548296
        %v8434 = vadd.f32 %v8402, 0.2548296
        %v8435 = vadd.f32 %v8403, 0.2548296
        %v8436 = vadd.f32 %v8404, 0.2548296
        %v8437 = vadd.f32 %v8405, 0.2548296
        %v8438 = vadd.f32 %v8406, 0.2548296
        %v8439 = vadd.f32 %v8407, 0.2548296
        %v8440 = vadd.f32 %v8408, 0.2548296
        %v8441 = vadd.f32 %v8409, 0.2548296
        %v8442 = vadd.f32 %v8410, 0.2548296
        %v8443 = vadd.f32 %v8411, 0.2548296
        %v8444 = vadd.f32 %v8412, 0.2548296
        %v8445 = vadd.f32 %v8413, 0.2548296
        %v8446 = vadd.f32 %v8414, 0.2548296
        %v8447 = vadd.f32 %v8415, 0.2548296
        %v8448 = vadd.f32 %v8416, 0.2548296
        %v8449 = vadd.f32 %v8417, 0.2548296
        %v8450 = vadd.f32 %v8418, 0.2548296
        %v8451 = vadd.f32 %v8419, 0.2548296
        %v8452 = vadd.f32 %v8420, 0.2548296
        %v8453 = vadd.f32 %v8421, 0.2548296
        %v8454 = vadd.f32 %v8422, 0.2548296
        %v8455 = vadd.f32 %v8423, 0.2548296
        %v8456 = vadd.f32 %v8424, 0.2548296
        %v8457 = vadd.f32 %v8425, 0.2548296
        %v8458 = vadd.f32 %v8426, 0.2548296
        %v8459 = vadd.f32 %v8427, 0.2548296
        %v8460 = vmul.f32 %v8428, %v8172
        %v8461 = vmul.f32 %v8429, %v8173
        %v8462 = vmul.f32 %v8430, %v8174
        %v8463 = vmul.f32 %v8431, %v8175
        %v8464 = vmul.f32 %v8432, %v8176
        %v8465 = vmul.f32 %v8433, %v8177
        %v8466 = vmul.f32 %v8434, %v8178
        %v8467 = vmul.f32 %v8435, %v8179
        %v8468 = vmul.f32 %v8436, %v8180
        %v8469 = vmul.f32 %v8437, %v8181
        %v8470 = vmul.f32 %v8438, %v8182
        %v8471 = vmul.f32 %v8439, %v8183
        %v8472 = vmul.f32 %v8440, %v8184
        %v8473 = vmul.f32 %v8441, %v8185
        %v8474 = vmul.f32 %v8442, %v8186
        %v8475 = vmul.f32 %v8443, %v8187
        %v8476 = vmul.f32 %v8444, %v8188
        %v8477 = vmul.f32 %v8445, %v8189
        %v8478 = vmul.f32 %v8446, %v8190
        %v8479 = vmul.f32 %v8447, %v8191
        %v8480 = vmul.f32 %v8448, %v8192
        %v8481 = vmul.f32 %v8449, %v8193
        %v8482 = vmul.f32 %v8450, %v8194
        %v8483 = vmul.f32 %v8451, %v8195
        %v8484 = vmul.f32 %v8452, %v8196
        %v8485 = vmul.f32 %v8453, %v8197
        %v8486 = vmul.f32 %v8454, %v8198
        %v8487 = vmul.f32 %v8455, %v8199
        %v8488 = vmul.f32 %v8456, %v8200
        %v8489 = vmul.f32 %v8457, %v8201
        %v8490 = vmul.f32 %v8458, %v8202
        %v8491 = vmul.f32 %v8459, %v8203
        %v8492 = vsub.f32 0.0, %v7980
        %v8493 = vsub.f32 0.0, %v7981
        %v8494 = vsub.f32 0.0, %v7982
        %v8495 = vsub.f32 0.0, %v7983
        %v8496 = vsub.f32 0.0, %v7984
        %v8497 = vsub.f32 0.0, %v7985
        %v8498 = vsub.f32 0.0, %v7986
        %v8499 = vsub.f32 0.0, %v7987
        %v8500 = vsub.f32 0.0, %v7988
        %v8501 = vsub.f32 0.0, %v7989
        %v8502 = vsub.f32 0.0, %v7990
        %v8503 = vsub.f32 0.0, %v7991
        %v8504 = vsub.f32 0.0, %v7992
        %v8505 = vsub.f32 0.0, %v7993
        %v8506 = vsub.f32 0.0, %v7994
        %v8507 = vsub.f32 0.0, %v7995
        %v8508 = vsub.f32 0.0, %v7996
        %v8509 = vsub.f32 0.0, %v7997
        %v8510 = vsub.f32 0.0, %v7998
        %v8511 = vsub.f32 0.0, %v7999
        %v8512 = vsub.f32 0.0, %v8000
        %v8513 = vsub.f32 0.0, %v8001
        %v8514 = vsub.f32 0.0, %v8002
        %v8515 = vsub.f32 0.0, %v8003
        %v8516 = vsub.f32 0.0, %v8004
        %v8517 = vsub.f32 0.0, %v8005
        %v8518 = vsub.f32 0.0, %v8006
        %v8519 = vsub.f32 0.0, %v8007
        %v8520 = vsub.f32 0.0, %v8008
        %v8521 = vsub.f32 0.0, %v8009
        %v8522 = vsub.f32 0.0, %v8010
        %v8523 = vsub.f32 0.0, %v8011
        %v8524 = vmul.f32 %v8492, %v7980
        %v8525 = vmul.f32 %v8493, %v7981
        %v8526 = vmul.f32 %v8494, %v7982
        %v8527 = vmul.f32 %v8495, %v7983
        %v8528 = vmul.f32 %v8496, %v7984
        %v8529 = vmul.f32 %v8497, %v7985
        %v8530 = vmul.f32 %v8498, %v7986
        %v8531 = vmul.f32 %v8499, %v7987
        %v8532 = vmul.f32 %v8500, %v7988
        %v8533 = vmul.f32 %v8501, %v7989
        %v8534 = vmul.f32 %v8502, %v7990
        %v8535 = vmul.f32 %v8503, %v7991
        %v8536 = vmul.f32 %v8504, %v7992
        %v8537 = vmul.f32 %v8505, %v7993
        %v8538 = vmul.f32 %v8506, %v7994
        %v8539 = vmul.f32 %v8507, %v7995
        %v8540 = vmul.f32 %v8508, %v7996
        %v8541 = vmul.f32 %v8509, %v7997
        %v8542 = vmul.f32 %v8510, %v7998
        %v8543 = vmul.f32 %v8511, %v7999
        %v8544 = vmul.f32 %v8512, %v8000
        %v8545 = vmul.f32 %v8513, %v8001
        %v8546 = vmul.f32 %v8514, %v8002
        %v8547 = vmul.f32 %v8515, %v8003
        %v8548 = vmul.f32 %v8516, %v8004
        %v8549 = vmul.f32 %v8517, %v8005
        %v8550 = vmul.f32 %v8518, %v8006
        %v8551 = vmul.f32 %v8519, %v8007
        %v8552 = vmul.f32 %v8520, %v8008
        %v8553 = vmul.f32 %v8521, %v8009
        %v8554 = vmul.f32 %v8522, %v8010
        %v8555 = vmul.f32 %v8523, %v8011
        %v8556 = vmul.f32 %v8524, 1.442695
        %v8557 = vpow.pop %v8556
        %v8558 = vmul.f32 %v8525, 1.442695
        %v8559 = vpow.pop %v8558
        %v8560 = vmul.f32 %v8526, 1.442695
        %v8561 = vpow.pop %v8560
        %v8562 = vmul.f32 %v8527, 1.442695
        %v8563 = vpow.pop %v8562
        %v8564 = vmul.f32 %v8528, 1.442695
        %v8565 = vpow.pop %v8564
        %v8566 = vmul.f32 %v8529, 1.442695
        %v8567 = vpow.pop %v8566
        %v8568 = vmul.f32 %v8530, 1.442695
        %v8569 = vpow.pop %v8568
        %v8570 = vmul.f32 %v8531, 1.442695
        %v8571 = vpow.pop %v8570
        %v8572 = vmul.f32 %v8532, 1.442695
        %v8573 = vpow.pop %v8572
        %v8574 = vmul.f32 %v8533, 1.442695
        %v8575 = vpow.pop %v8574
        %v8576 = vmul.f32 %v8534, 1.442695
        %v8577 = vpow.pop %v8576
        %v8578 = vmul.f32 %v8535, 1.442695
        %v8579 = vpow.pop %v8578
        %v8580 = vmul.f32 %v8536, 1.442695
        %v8581 = vpow.pop %v8580
        %v8582 = vmul.f32 %v8537, 1.442695
        %v8583 = vpow.pop %v8582
        %v8584 = vmul.f32 %v8538, 1.442695
        %v8585 = vpow.pop %v8584
        %v8586 = vmul.f32 %v8539, 1.442695
        %v8587 = vpow.pop %v8586
        %v8588 = vmul.f32 %v8540, 1.442695
        %v8589 = vpow.pop %v8588
        %v8590 = vmul.f32 %v8541, 1.442695
        %v8591 = vpow.pop %v8590
        %v8592 = vmul.f32 %v8542, 1.442695
        %v8593 = vpow.pop %v8592
        %v8594 = vmul.f32 %v8543, 1.442695
        %v8595 = vpow.pop %v8594
        %v8596 = vmul.f32 %v8544, 1.442695
        %v8597 = vpow.pop %v8596
        %v8598 = vmul.f32 %v8545, 1.442695
        %v8599 = vpow.pop %v8598
        %v8600 = vmul.f32 %v8546, 1.442695
        %v8601 = vpow.pop %v8600
        %v8602 = vmul.f32 %v8547, 1.442695
        %v8603 = vpow.pop %v8602
        %v8604 = vmul.f32 %v8548, 1.442695
        %v8605 = vpow.pop %v8604
        %v8606 = vmul.f32 %v8549, 1.442695
        %v8607 = vpow.pop %v8606
        %v8608 = vmul.f32 %v8550, 1.442695
        %v8609 = vpow.pop %v8608
        %v8610 = vmul.f32 %v8551, 1.442695
        %v8611 = vpow.pop %v8610
        %v8612 = vmul.f32 %v8552, 1.442695
        %v8613 = vpow.pop %v8612
        %v8614 = vmul.f32 %v8553, 1.442695
        %v8615 = vpow.pop %v8614
        %v8616 = vmul.f32 %v8554, 1.442695
        %v8617 = vpow.pop %v8616
        %v8618 = vmul.f32 %v8555, 1.442695
        %v8619 = vpow.pop %v8618
        %v8620 = vmul.f32 %v8460, %v8557
        %v8621 = vmul.f32 %v8461, %v8559
        %v8622 = vmul.f32 %v8462, %v8561
        %v8623 = vmul.f32 %v8463, %v8563
        %v8624 = vmul.f32 %v8464, %v8565
        %v8625 = vmul.f32 %v8465, %v8567
        %v8626 = vmul.f32 %v8466, %v8569
        %v8627 = vmul.f32 %v8467, %v8571
        %v8628 = vmul.f32 %v8468, %v8573
        %v8629 = vmul.f32 %v8469, %v8575
        %v8630 = vmul.f32 %v8470, %v8577
        %v8631 = vmul.f32 %v8471, %v8579
        %v8632 = vmul.f32 %v8472, %v8581
        %v8633 = vmul.f32 %v8473, %v8583
        %v8634 = vmul.f32 %v8474, %v8585
        %v8635 = vmul.f32 %v8475, %v8587
        %v8636 = vmul.f32 %v8476, %v8589
        %v8637 = vmul.f32 %v8477, %v8591
        %v8638 = vmul.f32 %v8478, %v8593
        %v8639 = vmul.f32 %v8479, %v8595
        %v8640 = vmul.f32 %v8480, %v8597
        %v8641 = vmul.f32 %v8481, %v8599
        %v8642 = vmul.f32 %v8482, %v8601
        %v8643 = vmul.f32 %v8483, %v8603
        %v8644 = vmul.f32 %v8484, %v8605
        %v8645 = vmul.f32 %v8485, %v8607
        %v8646 = vmul.f32 %v8486, %v8609
        %v8647 = vmul.f32 %v8487, %v8611
        %v8648 = vmul.f32 %v8488, %v8613
        %v8649 = vmul.f32 %v8489, %v8615
        %v8650 = vmul.f32 %v8490, %v8617
        %v8651 = vmul.f32 %v8491, %v8619
        %v8652 = vsub.f32 1.0, %v8620
        %v8653 = vsub.f32 1.0, %v8621
        %v8654 = vsub.f32 1.0, %v8622
        %v8655 = vsub.f32 1.0, %v8623
        %v8656 = vsub.f32 1.0, %v8624
        %v8657 = vsub.f32 1.0, %v8625
        %v8658 = vsub.f32 1.0, %v8626
        %v8659 = vsub.f32 1.0, %v8627
        %v8660 = vsub.f32 1.0, %v8628
        %v8661 = vsub.f32 1.0, %v8629
        %v8662 = vsub.f32 1.0, %v8630
        %v8663 = vsub.f32 1.0, %v8631
        %v8664 = vsub.f32 1.0, %v8632
        %v8665 = vsub.f32 1.0, %v8633
        %v8666 = vsub.f32 1.0, %v8634
        %v8667 = vsub.f32 1.0, %v8635
        %v8668 = vsub.f32 1.0, %v8636
        %v8669 = vsub.f32 1.0, %v8637
        %v8670 = vsub.f32 1.0, %v8638
        %v8671 = vsub.f32 1.0, %v8639
        %v8672 = vsub.f32 1.0, %v8640
        %v8673 = vsub.f32 1.0, %v8641
        %v8674 = vsub.f32 1.0, %v8642
        %v8675 = vsub.f32 1.0, %v8643
        %v8676 = vsub.f32 1.0, %v8644
        %v8677 = vsub.f32 1.0, %v8645
        %v8678 = vsub.f32 1.0, %v8646
        %v8679 = vsub.f32 1.0, %v8647
        %v8680 = vsub.f32 1.0, %v8648
        %v8681 = vsub.f32 1.0, %v8649
        %v8682 = vsub.f32 1.0, %v8650
        %v8683 = vsub.f32 1.0, %v8651
        %v8684 = vmul.f32 %v7948, %v8652
        %v8685 = vmul.f32 %v7949, %v8653
        %v8686 = vmul.f32 %v7950, %v8654
        %v8687 = vmul.f32 %v7951, %v8655
        %v8688 = vmul.f32 %v7952, %v8656
        %v8689 = vmul.f32 %v7953, %v8657
        %v8690 = vmul.f32 %v7954, %v8658
        %v8691 = vmul.f32 %v7955, %v8659
        %v8692 = vmul.f32 %v7956, %v8660
        %v8693 = vmul.f32 %v7957, %v8661
        %v8694 = vmul.f32 %v7958, %v8662
        %v8695 = vmul.f32 %v7959, %v8663
        %v8696 = vmul.f32 %v7960, %v8664
        %v8697 = vmul.f32 %v7961, %v8665
        %v8698 = vmul.f32 %v7962, %v8666
        %v8699 = vmul.f32 %v7963, %v8667
        %v8700 = vmul.f32 %v7964, %v8668
        %v8701 = vmul.f32 %v7965, %v8669
        %v8702 = vmul.f32 %v7966, %v8670
        %v8703 = vmul.f32 %v7967, %v8671
        %v8704 = vmul.f32 %v7968, %v8672
        %v8705 = vmul.f32 %v7969, %v8673
        %v8706 = vmul.f32 %v7970, %v8674
        %v8707 = vmul.f32 %v7971, %v8675
        %v8708 = vmul.f32 %v7972, %v8676
        %v8709 = vmul.f32 %v7973, %v8677
        %v8710 = vmul.f32 %v7974, %v8678
        %v8711 = vmul.f32 %v7975, %v8679
        %v8712 = vmul.f32 %v7976, %v8680
        %v8713 = vmul.f32 %v7977, %v8681
        %v8714 = vmul.f32 %v7978, %v8682
        %v8715 = vmul.f32 %v7979, %v8683
        %v8716 = vadd.f32 %v8684, 1.0
        %v8717 = vadd.f32 %v8685, 1.0
        %v8718 = vadd.f32 %v8686, 1.0
        %v8719 = vadd.f32 %v8687, 1.0
        %v8720 = vadd.f32 %v8688, 1.0
        %v8721 = vadd.f32 %v8689, 1.0
        %v8722 = vadd.f32 %v8690, 1.0
        %v8723 = vadd.f32 %v8691, 1.0
        %v8724 = vadd.f32 %v8692, 1.0
        %v8725 = vadd.f32 %v8693, 1.0
        %v8726 = vadd.f32 %v8694, 1.0
        %v8727 = vadd.f32 %v8695, 1.0
        %v8728 = vadd.f32 %v8696, 1.0
        %v8729 = vadd.f32 %v8697, 1.0
        %v8730 = vadd.f32 %v8698, 1.0
        %v8731 = vadd.f32 %v8699, 1.0
        %v8732 = vadd.f32 %v8700, 1.0
        %v8733 = vadd.f32 %v8701, 1.0
        %v8734 = vadd.f32 %v8702, 1.0
        %v8735 = vadd.f32 %v8703, 1.0
        %v8736 = vadd.f32 %v8704, 1.0
        %v8737 = vadd.f32 %v8705, 1.0
        %v8738 = vadd.f32 %v8706, 1.0
        %v8739 = vadd.f32 %v8707, 1.0
        %v8740 = vadd.f32 %v8708, 1.0
        %v8741 = vadd.f32 %v8709, 1.0
        %v8742 = vadd.f32 %v8710, 1.0
        %v8743 = vadd.f32 %v8711, 1.0
        %v8744 = vadd.f32 %v8712, 1.0
        %v8745 = vadd.f32 %v8713, 1.0
        %v8746 = vadd.f32 %v8714, 1.0
        %v8747 = vadd.f32 %v8715, 1.0
        %v8748 = vmul.f32 %v7852, %v8716
        %v8749 = vmul.f32 %v7853, %v8717
        %v8750 = vmul.f32 %v7854, %v8718
        %v8751 = vmul.f32 %v7855, %v8719
        %v8752 = vmul.f32 %v7856, %v8720
        %v8753 = vmul.f32 %v7857, %v8721
        %v8754 = vmul.f32 %v7858, %v8722
        %v8755 = vmul.f32 %v7859, %v8723
        %v8756 = vmul.f32 %v7860, %v8724
        %v8757 = vmul.f32 %v7861, %v8725
        %v8758 = vmul.f32 %v7862, %v8726
        %v8759 = vmul.f32 %v7863, %v8727
        %v8760 = vmul.f32 %v7864, %v8728
        %v8761 = vmul.f32 %v7865, %v8729
        %v8762 = vmul.f32 %v7866, %v8730
        %v8763 = vmul.f32 %v7867, %v8731
        %v8764 = vmul.f32 %v7868, %v8732
        %v8765 = vmul.f32 %v7869, %v8733
        %v8766 = vmul.f32 %v7870, %v8734
        %v8767 = vmul.f32 %v7871, %v8735
        %v8768 = vmul.f32 %v7872, %v8736
        %v8769 = vmul.f32 %v7873, %v8737
        %v8770 = vmul.f32 %v7874, %v8738
        %v8771 = vmul.f32 %v7875, %v8739
        %v8772 = vmul.f32 %v7876, %v8740
        %v8773 = vmul.f32 %v7877, %v8741
        %v8774 = vmul.f32 %v7878, %v8742
        %v8775 = vmul.f32 %v7879, %v8743
        %v8776 = vmul.f32 %v7880, %v8744
        %v8777 = vmul.f32 %v7881, %v8745
        %v8778 = vmul.f32 %v7882, %v8746
        %v8779 = vmul.f32 %v7883, %v8747
        %v8780 = vld [vmem:[%s9] sm:$0xff]
        %v8781 = vld [vmem:[%s9 + $0x8] sm:$0xff]
        %v8782 = vld [vmem:[%s9 + $0x10] sm:$0xff]
        %v8783 = vld [vmem:[%s9 + $0x18] sm:$0xff]
        %v8784 = vld [vmem:[%s9 + $0x20] sm:$0xff]
        %v8785 = vld [vmem:[%s9 + $0x28] sm:$0xff]
        %v8786 = vld [vmem:[%s9 + $0x30] sm:$0xff]
        %v8787 = vld [vmem:[%s9 + $0x38] sm:$0xff]
        %v8788 = vld [vmem:[%s9 + $0x40] sm:$0xff]
        %v8789 = vld [vmem:[%s9 + $0x48] sm:$0xff]
        %v8790 = vld [vmem:[%s9 + $0x50] sm:$0xff]
        %v8791 = vld [vmem:[%s9 + $0x58] sm:$0xff]
        %v8792 = vld [vmem:[%s9 + $0x60] sm:$0xff]
        %v8793 = vld [vmem:[%s9 + $0x68] sm:$0xff]
        %v8794 = vld [vmem:[%s9 + $0x70] sm:$0xff]
        %v8795 = vld [vmem:[%s9 + $0x78] sm:$0xff]
        %v8796 = vld [vmem:[%s10] sm:$0x1]
        %v8798 = vlaneseq
        %v8799 = vshrl.u32 %v8798, 7
        %v8800 = vsub.s32 0, %v8799
        %v8801 = vrot.slane %v8796, %v8800
        %8803 = vmatprep.subr.mxu0 0.0
        %8804 = vmatpush1.msra.mxu0 %v8795
        %8805 = vmatprep.subr.mxu0 0.0
        %8806 = vmatpush1.msra.mxu0 %v8794
        %8807 = vmatprep.subr.mxu0 0.0
        %8808 = vmatpush1.msra.mxu0 %v8793
        %8809 = vmatprep.subr.mxu0 0.0
        %8810 = vmatpush1.msra.mxu0 %v8792
        %8811 = vmatprep.subr.mxu0 0.0
        %8812 = vmatpush1.msra.mxu0 %v8791
        %8813 = vmatprep.subr.mxu0 0.0
        %8814 = vmatpush1.msra.mxu0 %v8790
        %8815 = vmatprep.subr.mxu0 0.0
        %8816 = vmatpush1.msra.mxu0 %v8789
        %8817 = vmatprep.subr.mxu0 0.0
        %8818 = vmatpush1.msra.mxu0 %v8788
        %8819 = vmatprep.subr.mxu0 0.0
        %8820 = vmatpush1.msra.mxu0 %v8787
        %8821 = vmatprep.subr.mxu0 0.0
        %8822 = vmatpush1.msra.mxu0 %v8786
        %8823 = vmatprep.subr.mxu0 0.0
        %8824 = vmatpush1.msra.mxu0 %v8785
        %8825 = vmatprep.subr.mxu0 0.0
        %8826 = vmatpush1.msra.mxu0 %v8784
        %8827 = vmatprep.subr.mxu0 0.0
        %8828 = vmatpush1.msra.mxu0 %v8783
        %8829 = vmatprep.subr.mxu0 0.0
        %8830 = vmatpush1.msra.mxu0 %v8782
        %8831 = vmatprep.subr.mxu0 0.0
        %8832 = vmatpush1.msra.mxu0 %v8781
        %8833 = vmatprep.subr.mxu0 0.0
        %8834 = vmatpush1.msra.mxu0 %v8780
        %8835 = vmatprep.subr.mxu0 0.0
        %8836 = vmatpush2.msra.mxu0 0.0
        %8837 = vmatprep.subr.mxu0 0.0
        %8838 = vmatpush2.msra.mxu0 0.0
        %8839 = vmatprep.subr.mxu0 0.0
        %8840 = vmatpush2.msra.mxu0 0.0
        %8841 = vmatprep.subr.mxu0 0.0
        %8842 = vmatpush2.msra.mxu0 0.0
        %8843 = vmatprep.subr.mxu0 0.0
        %8844 = vmatpush2.msra.mxu0 0.0
        %8845 = vmatprep.subr.mxu0 0.0
        %8846 = vmatpush2.msra.mxu0 0.0
        %8847 = vmatprep.subr.mxu0 0.0
        %8848 = vmatpush2.msra.mxu0 0.0
        %8849 = vmatprep.subr.mxu0 0.0
        %8850 = vmatpush2.msra.mxu0 0.0
        %8851 = vmatprep.subr.mxu0 0.0
        %8852 = vmatpush2.msra.mxu0 0.0
        %8853 = vmatprep.subr.mxu0 0.0
        %8854 = vmatpush2.msra.mxu0 0.0
        %8855 = vmatprep.subr.mxu0 0.0
        %8856 = vmatpush2.msra.mxu0 0.0
        %8857 = vmatprep.subr.mxu0 0.0
        %8858 = vmatpush2.msra.mxu0 0.0
        %8859 = vmatprep.subr.mxu0 0.0
        %8860 = vmatpush2.msra.mxu0 0.0
        %8861 = vmatprep.subr.mxu0 0.0
        %8862 = vmatpush2.msra.mxu0 0.0
        %8863 = vmatprep.subr.mxu0 0.0
        %8864 = vmatpush2.msra.mxu0 0.0
        %8865 = vmatprep.subr.mxu0 0.0
        %8866 = vmatpush2.msra.mxu0 0.0
        %8867 = vmatprep.mubr.f32.mxu0 0.0
        %8868 = vmatmul.mubr.f32.gmra.mxu0 %v8748
        %v8869 = vpop.f32.mrf.mxu0
        %v8870 = vadd.f32 %v8801, %v8869
        %v8871 = vpop.f32.mrf.mxu0
        %8872 = vmatprep.mubr.f32.mxu0 0.0
        %8873 = vmatmul.mubr.f32.gmra.mxu0 %v8749
        %v8874 = vpop.f32.mrf.mxu0
        %v8875 = vadd.f32 %v8801, %v8874
        %v8876 = vpop.f32.mrf.mxu0
        %8877 = vmatprep.mubr.f32.mxu0 0.0
        %8878 = vmatmul.mubr.f32.gmra.mxu0 %v8750
        %v8879 = vpop.f32.mrf.mxu0
        %v8880 = vadd.f32 %v8801, %v8879
        %v8881 = vpop.f32.mrf.mxu0
        %8882 = vmatprep.mubr.f32.mxu0 0.0
        %8883 = vmatmul.mubr.f32.gmra.mxu0 %v8751
        %v8884 = vpop.f32.mrf.mxu0
        %v8885 = vadd.f32 %v8801, %v8884
        %v8886 = vpop.f32.mrf.mxu0
        %8887 = vmatprep.mubr.f32.mxu0 0.0
        %8888 = vmatmul.mubr.f32.gmra.mxu0 %v8752
        %v8889 = vpop.f32.mrf.mxu0
        %v8890 = vadd.f32 %v8801, %v8889
        %v8891 = vpop.f32.mrf.mxu0
        %8892 = vmatprep.mubr.f32.mxu0 0.0
        %8893 = vmatmul.mubr.f32.gmra.mxu0 %v8753
        %v8894 = vpop.f32.mrf.mxu0
        %v8895 = vadd.f32 %v8801, %v8894
        %v8896 = vpop.f32.mrf.mxu0
        %8897 = vmatprep.mubr.f32.mxu0 0.0
        %8898 = vmatmul.mubr.f32.gmra.mxu0 %v8754
        %v8899 = vpop.f32.mrf.mxu0
        %v8900 = vadd.f32 %v8801, %v8899
        %v8901 = vpop.f32.mrf.mxu0
        %8902 = vmatprep.mubr.f32.mxu0 0.0
        %8903 = vmatmul.mubr.f32.gmra.mxu0 %v8755
        %v8904 = vpop.f32.mrf.mxu0
        %v8905 = vadd.f32 %v8801, %v8904
        %v8906 = vpop.f32.mrf.mxu0
        %8907 = vmatprep.mubr.f32.mxu0 0.0
        %8908 = vmatmul.mubr.f32.gmra.mxu0 %v8756
        %v8909 = vpop.f32.mrf.mxu0
        %v8910 = vadd.f32 %v8801, %v8909
        %v8911 = vpop.f32.mrf.mxu0
        %8912 = vmatprep.mubr.f32.mxu0 0.0
        %8913 = vmatmul.mubr.f32.gmra.mxu0 %v8757
        %v8914 = vpop.f32.mrf.mxu0
        %v8915 = vadd.f32 %v8801, %v8914
        %v8916 = vpop.f32.mrf.mxu0
        %8917 = vmatprep.mubr.f32.mxu0 0.0
        %8918 = vmatmul.mubr.f32.gmra.mxu0 %v8758
        %v8919 = vpop.f32.mrf.mxu0
        %v8920 = vadd.f32 %v8801, %v8919
        %v8921 = vpop.f32.mrf.mxu0
        %8922 = vmatprep.mubr.f32.mxu0 0.0
        %8923 = vmatmul.mubr.f32.gmra.mxu0 %v8759
        %v8924 = vpop.f32.mrf.mxu0
        %v8925 = vadd.f32 %v8801, %v8924
        %v8926 = vpop.f32.mrf.mxu0
        %8927 = vmatprep.mubr.f32.mxu0 0.0
        %8928 = vmatmul.mubr.f32.gmra.mxu0 %v8760
        %v8929 = vpop.f32.mrf.mxu0
        %v8930 = vadd.f32 %v8801, %v8929
        %v8931 = vpop.f32.mrf.mxu0
        %8932 = vmatprep.mubr.f32.mxu0 0.0
        %8933 = vmatmul.mubr.f32.gmra.mxu0 %v8761
        %v8934 = vpop.f32.mrf.mxu0
        %v8935 = vadd.f32 %v8801, %v8934
        %v8936 = vpop.f32.mrf.mxu0
        %8937 = vmatprep.mubr.f32.mxu0 0.0
        %8938 = vmatmul.mubr.f32.gmra.mxu0 %v8762
        %v8939 = vpop.f32.mrf.mxu0
        %v8940 = vadd.f32 %v8801, %v8939
        %v8941 = vpop.f32.mrf.mxu0
        %8942 = vmatprep.mubr.f32.mxu0 0.0
        %8943 = vmatmul.mubr.f32.gmra.mxu0 %v8763
        %v8944 = vpop.f32.mrf.mxu0
        %v8945 = vadd.f32 %v8801, %v8944
        %v8946 = vpop.f32.mrf.mxu0
        %8947 = vmatprep.mubr.f32.mxu0 0.0
        %8948 = vmatmul.mubr.f32.gmra.mxu0 %v8764
        %v8949 = vpop.f32.mrf.mxu0
        %v8950 = vadd.f32 %v8801, %v8949
        %v8951 = vpop.f32.mrf.mxu0
        %8952 = vmatprep.mubr.f32.mxu0 0.0
        %8953 = vmatmul.mubr.f32.gmra.mxu0 %v8765
        %v8954 = vpop.f32.mrf.mxu0
        %v8955 = vadd.f32 %v8801, %v8954
        %v8956 = vpop.f32.mrf.mxu0
        %8957 = vmatprep.mubr.f32.mxu0 0.0
        %8958 = vmatmul.mubr.f32.gmra.mxu0 %v8766
        %v8959 = vpop.f32.mrf.mxu0
        %v8960 = vadd.f32 %v8801, %v8959
        %v8961 = vpop.f32.mrf.mxu0
        %8962 = vmatprep.mubr.f32.mxu0 0.0
        %8963 = vmatmul.mubr.f32.gmra.mxu0 %v8767
        %v8964 = vpop.f32.mrf.mxu0
        %v8965 = vadd.f32 %v8801, %v8964
        %v8966 = vpop.f32.mrf.mxu0
        %8967 = vmatprep.mubr.f32.mxu0 0.0
        %8968 = vmatmul.mubr.f32.gmra.mxu0 %v8768
        %v8969 = vpop.f32.mrf.mxu0
        %v8970 = vadd.f32 %v8801, %v8969
        %v8971 = vpop.f32.mrf.mxu0
        %8972 = vmatprep.mubr.f32.mxu0 0.0
        %8973 = vmatmul.mubr.f32.gmra.mxu0 %v8769
        %v8974 = vpop.f32.mrf.mxu0
        %v8975 = vadd.f32 %v8801, %v8974
        %v8976 = vpop.f32.mrf.mxu0
        %8977 = vmatprep.mubr.f32.mxu0 0.0
        %8978 = vmatmul.mubr.f32.gmra.mxu0 %v8770
        %v8979 = vpop.f32.mrf.mxu0
        %v8980 = vadd.f32 %v8801, %v8979
        %v8981 = vpop.f32.mrf.mxu0
        %8982 = vmatprep.mubr.f32.mxu0 0.0
        %8983 = vmatmul.mubr.f32.gmra.mxu0 %v8771
        %v8984 = vpop.f32.mrf.mxu0
        %v8985 = vadd.f32 %v8801, %v8984
        %v8986 = vpop.f32.mrf.mxu0
        %8987 = vmatprep.mubr.f32.mxu0 0.0
        %8988 = vmatmul.mubr.f32.gmra.mxu0 %v8772
        %v8989 = vpop.f32.mrf.mxu0
        %v8990 = vadd.f32 %v8801, %v8989
        %v8991 = vpop.f32.mrf.mxu0
        %8992 = vmatprep.mubr.f32.mxu0 0.0
        %8993 = vmatmul.mubr.f32.gmra.mxu0 %v8773
        %v8994 = vpop.f32.mrf.mxu0
        %v8995 = vadd.f32 %v8801, %v8994
        %v8996 = vpop.f32.mrf.mxu0
        %8997 = vmatprep.mubr.f32.mxu0 0.0
        %8998 = vmatmul.mubr.f32.gmra.mxu0 %v8774
        %v8999 = vpop.f32.mrf.mxu0
        %v9000 = vadd.f32 %v8801, %v8999
        %v9001 = vpop.f32.mrf.mxu0
        %9002 = vmatprep.mubr.f32.mxu0 0.0
        %9003 = vmatmul.mubr.f32.gmra.mxu0 %v8775
        %v9004 = vpop.f32.mrf.mxu0
        %v9005 = vadd.f32 %v8801, %v9004
        %v9006 = vpop.f32.mrf.mxu0
        %9007 = vmatprep.mubr.f32.mxu0 0.0
        %9008 = vmatmul.mubr.f32.gmra.mxu0 %v8776
        %v9009 = vpop.f32.mrf.mxu0
        %v9010 = vadd.f32 %v8801, %v9009
        %v9011 = vpop.f32.mrf.mxu0
        %9012 = vmatprep.mubr.f32.mxu0 0.0
        %9013 = vmatmul.mubr.f32.gmra.mxu0 %v8777
        %v9014 = vpop.f32.mrf.mxu0
        %v9015 = vadd.f32 %v8801, %v9014
        %v9016 = vpop.f32.mrf.mxu0
        %9017 = vmatprep.mubr.f32.mxu0 0.0
        %9018 = vmatmul.mubr.f32.gmra.mxu0 %v8778
        %v9019 = vpop.f32.mrf.mxu0
        %v9020 = vadd.f32 %v8801, %v9019
        %v9021 = vpop.f32.mrf.mxu0
        %9022 = vmatprep.mubr.f32.mxu0 0.0
        %9023 = vmatmul.mubr.f32.gmra.mxu0 %v8779
        %v9024 = vpop.f32.mrf.mxu0
        %v9025 = vadd.f32 %v8801, %v9024
        %v9026 = vpop.f32.mrf.mxu0
        %9027 = vdwg.mxu0
        %v9028 = vmul.f32 %v385, %v8870
        %v9029 = vmul.f32 %v386, %v8875
        %v9030 = vmul.f32 %v387, %v8880
        %v9031 = vmul.f32 %v388, %v8885
        %v9032 = vmul.f32 %v389, %v8890
        %v9033 = vmul.f32 %v390, %v8895
        %v9034 = vmul.f32 %v391, %v8900
        %v9035 = vmul.f32 %v392, %v8905
        %v9036 = vmul.f32 %v393, %v8910
        %v9037 = vmul.f32 %v394, %v8915
        %v9038 = vmul.f32 %v395, %v8920
        %v9039 = vmul.f32 %v396, %v8925
        %v9040 = vmul.f32 %v397, %v8930
        %v9041 = vmul.f32 %v398, %v8935
        %v9042 = vmul.f32 %v399, %v8940
        %v9043 = vmul.f32 %v400, %v8945
        %v9044 = vmul.f32 %v401, %v8950
        %v9045 = vmul.f32 %v402, %v8955
        %v9046 = vmul.f32 %v403, %v8960
        %v9047 = vmul.f32 %v404, %v8965
        %v9048 = vmul.f32 %v405, %v8970
        %v9049 = vmul.f32 %v406, %v8975
        %v9050 = vmul.f32 %v407, %v8980
        %v9051 = vmul.f32 %v408, %v8985
        %v9052 = vmul.f32 %v409, %v8990
        %v9053 = vmul.f32 %v410, %v8995
        %v9054 = vmul.f32 %v411, %v9000
        %v9055 = vmul.f32 %v412, %v9005
        %v9056 = vmul.f32 %v413, %v9010
        %v9057 = vmul.f32 %v414, %v9015
        %v9058 = vmul.f32 %v415, %v9020
        %v9059 = vmul.f32 %v416, %v9025
        %9060 = vst [vmem:[%s379] sm:$0xff] %v9028
        %9061 = vst [vmem:[%s379 + $0x8] sm:$0xff] %v9029
        %9062 = vst [vmem:[%s379 + $0x10] sm:$0xff] %v9030
        %9063 = vst [vmem:[%s379 + $0x18] sm:$0xff] %v9031
        %9064 = vst [vmem:[%s379 + $0x20] sm:$0xff] %v9032
        %9065 = vst [vmem:[%s379 + $0x28] sm:$0xff] %v9033
        %9066 = vst [vmem:[%s379 + $0x30] sm:$0xff] %v9034
        %9067 = vst [vmem:[%s379 + $0x38] sm:$0xff] %v9035
        %9068 = vst [vmem:[%s379 + $0x40] sm:$0xff] %v9036
        %9069 = vst [vmem:[%s379 + $0x48] sm:$0xff] %v9037
        %9070 = vst [vmem:[%s379 + $0x50] sm:$0xff] %v9038
        %9071 = vst [vmem:[%s379 + $0x58] sm:$0xff] %v9039
        %9072 = vst [vmem:[%s379 + $0x60] sm:$0xff] %v9040
        %9073 = vst [vmem:[%s379 + $0x68] sm:$0xff] %v9041
        %9074 = vst [vmem:[%s379 + $0x70] sm:$0xff] %v9042
        %9075 = vst [vmem:[%s379 + $0x78] sm:$0xff] %v9043
        %9076 = vst [vmem:[%s379 + $0x80] sm:$0xff] %v9044
        %9077 = vst [vmem:[%s379 + $0x88] sm:$0xff] %v9045
        %9078 = vst [vmem:[%s379 + $0x90] sm:$0xff] %v9046
        %9079 = vst [vmem:[%s379 + $0x98] sm:$0xff] %v9047
        %9080 = vst [vmem:[%s379 + $0xa0] sm:$0xff] %v9048
        %9081 = vst [vmem:[%s379 + $0xa8] sm:$0xff] %v9049
        %9082 = vst [vmem:[%s379 + $0xb0] sm:$0xff] %v9050
        %9083 = vst [vmem:[%s379 + $0xb8] sm:$0xff] %v9051
        %9084 = vst [vmem:[%s379 + $0xc0] sm:$0xff] %v9052
        %9085 = vst [vmem:[%s379 + $0xc8] sm:$0xff] %v9053
        %9086 = vst [vmem:[%s379 + $0xd0] sm:$0xff] %v9054
        %9087 = vst [vmem:[%s379 + $0xd8] sm:$0xff] %v9055
        %9088 = vst [vmem:[%s379 + $0xe0] sm:$0xff] %v9056
        %9089 = vst [vmem:[%s379 + $0xe8] sm:$0xff] %v9057
        %9090 = vst [vmem:[%s379 + $0xf0] sm:$0xff] %v9058
        %9091 = vst [vmem:[%s379 + $0xf8] sm:$0xff] %v9059
        %s9092 = sand.u32 %s269, 1
        %s9093 = scalar_lea.sflag [#allocation9], %s9092
        %s9094 = sand.u32 %s269, 1
        %s9095 = smul.addr %s9094, 256
        %s9096 = scalar_lea.vmem [#allocation8], %s9095
        // Predicated region
        $region65: #{tpu_custom_call.1} parent=63 // pred_check
          %p9097 = pneg %p279
        $region66: #{tpu_custom_call.1} parent=63 // pred_check_branch
          %9099 = sbr.rel (%p9097) target = $region68
        $region67: #{tpu_custom_call.1} parent=63 // pred_region
          %s9101 = ssub.s32 4096, 4096
          %9102 = vsyncadd %s9093, %s9101
          %s9103 = smul.addr %s25, 32
          %s9104 = smul.addr %s9103, 128
          %s9105 = scalar_lea.hbm %s11, %s9104
          %s9106 = sshll.u32 %s9096, 4
          %s9107 = int_to_ptr.vmem [resolvable:$true] %s9106
          %9112 = dma.vmem_to_hbm [thread:$0]  %s9107, 4096, %s9105, %s9093, 128, 128, 8
        $region68: #{tpu_custom_call.1} parent=63 // pred_fallthru
          _
      $region64: #{tpu_custom_call.1} parent=5 // pred_fallthru
        _
      %p9113 = scmp.le.s32.totalorder 2, %s20
      // Predicated region
      $region69: #{tpu_custom_call.1} parent=5 // pred_check
        %p9114 = pneg %p9113
      $region70: #{tpu_custom_call.1} parent=5 // pred_check_branch
        %9116 = sbr.rel (%p9114) target = $region72
      $region71: #{tpu_custom_call.1} parent=5 // pred_region
        %s9117 = ssub.s32 %s20, 2
        // Predicated region
        $region73: #{tpu_custom_call.1} parent=71 // pred_check
          %p9118 = pneg %p285
        $region74: #{tpu_custom_call.1} parent=71 // pred_check_branch
          %9120 = sbr.rel (%p9118) target = $region76
        $region75: #{tpu_custom_call.1} parent=71 // pred_region
          %s9121 = sand.u32 %s270, 1
          %s9122 = scalar_lea.sflag [#allocation9], %s9121
          %s9123 = sand.u32 %s270, 1
          %s9124 = smul.addr %s9123, 256
          %s9125 = scalar_lea.vmem [#allocation8], %s9124
          %9126 = dma.done %s9122, 4096
        $region76: #{tpu_custom_call.1} parent=71 // pred_fallthru
          _
      $region72: #{tpu_custom_call.1} parent=5 // pred_fallthru
        _
    $region6: #{tpu_custom_call.1} parent=1 // loop_footer
      %s24 = sadd.s32 1, %s20
    $region7: #{tpu_custom_call.1} parent=1 // loop_footer_branch
      %19 = sbr.rel target = $region3
    $region8: #{tpu_custom_call.1} parent=1 // loop_exit
      _
    %9127 = vsyncpa [#allocation9], 1
    %s9128 = scalar_lea.sflag [#allocation9], 1
    %9129 = vsyncpa %s9128, 1

</llo_original>
